<compile_context>
chip_gen: v7x
topology: tpu7x:2x2x1
jax: 0.10.0
libtpu: 0.0.40
codegen_flags: <defaults>
</compile_context>

<pallas_src>
import numpy as np
import jax
import jax.numpy as jnp
from jax import lax
from jax.experimental import pallas as pl
from jax.experimental.pallas import tpu as pltpu

_KH = _KW = 4          # all convs are 4x4
_KK = _KH * _KW
_C1_PAD = 128          # conv1 Cout padded 64 -> 128
_ALPHA = 0.2           # LeakyReLU slope


def _leaky(y):
    return jnp.where(y >= 0, y, _ALPHA * y)


# ---------------------------------------------------------------------------
# Trace-time constants: 0/1 gather ("selection") matrices, PIXEL-major /
# TAP-minor rows, so (S @ act).reshape(m, kk*C) is the im2col patch matrix.
# Out-of-bounds (zero-padding) taps are all-zero rows.
# ---------------------------------------------------------------------------
def _selection_matrix(h, w, kh, kw, stride, pad):
    oh = (h + 2 * pad - kh) // stride + 1
    ow = (w + 2 * pad - kw) // stride + 1
    kk = kh * kw
    oy = np.arange(oh)[:, None, None]
    ox = np.arange(ow)[None, :, None]
    k = np.arange(kk)[None, None, :]
    ki, kj = k // kw, k % kw
    iy = np.broadcast_to(stride * oy + ki - pad, (oh, ow, kk)).reshape(-1)
    ix = np.broadcast_to(stride * ox + kj - pad, (oh, ow, kk)).reshape(-1)
    valid = (iy >= 0) & (iy < h) & (ix >= 0) & (ix < w)
    cols = iy * w + ix
    sel = np.zeros((oh * ow * kk, h * w), dtype=np.float32)
    rows = np.arange(oh * ow * kk)
    sel[rows[valid], cols[valid]] = 1.0
    return sel


_SEL2 = _selection_matrix(16, 16, _KH, _KW, 2, 1)   # (1024, 256)
_SEL3 = _selection_matrix(8, 8, _KH, _KW, 2, 1)     # (256, 64)


# ---------------------------------------------------------------------------
# Fused kernel: conv1+conv2+conv3 (GEMM + bias + LeakyReLU each) + conv4
# (full-map weighted reduction).  One grid step == B batch samples.
# ---------------------------------------------------------------------------
def _disc_fused_kernel(p1_ref, w1_ref, b1_ref, s2_ref, w2_ref, b2_ref,
                       s3_ref, w3_ref, b3_ref, w4_ref, b4_ref, o_ref,
                       a1_scr, p2_scr, a2_scr, p3_scr):
    B = o_ref.shape[1]
    c1 = w1_ref.shape[1]                 # 128 (padded conv1 Cout)
    c2 = w2_ref.shape[1]                 # 128
    c3 = w3_ref.shape[1]                 # 256
    n1 = s2_ref.shape[1]                 # 256 conv1-output pixels / sample
    m2 = s2_ref.shape[0] // _KK          # 64  conv2-output pixels / sample
    n2 = s3_ref.shape[1]                 # 64
    m3 = s3_ref.shape[0] // _KK          # 16  conv3-output pixels / sample

    # ---- Layer 1: batched im2col GEMM (M = B*256, K = 48, N = 128) --------
    y1 = jnp.dot(p1_ref[...], w1_ref[...], preferred_element_type=jnp.float32)
    a1_scr[...] = _leaky(y1 + b1_ref[...]).astype(jnp.bfloat16)

    # ---- Layer 2: per-sample gather into VMEM scratch, one batched GEMM ---
    def _gather2(b, carry):
        src = pl.multiple_of(b * n1, n1)
        dst = pl.multiple_of(b * m2, m2)
        g = jnp.dot(s2_ref[...], a1_scr[pl.ds(src, n1), :],
                    preferred_element_type=jnp.float32)
        # pixel-major/tap-minor rows -> single retiling reshape (no concat)
        p2_scr[pl.ds(dst, m2), :] = g.astype(jnp.bfloat16).reshape(m2, _KK * c1)
        return carry
    lax.fori_loop(0, B, _gather2, 0, unroll=True)

    y2 = jnp.dot(p2_scr[...], w2_ref[...], preferred_element_type=jnp.float32)
    a2_scr[...] = _leaky(y2 + b2_ref[...]).astype(jnp.bfloat16)

    # ---- Layer 3 -----------------------------------------------------------
    def _gather3(b, carry):
        src = pl.multiple_of(b * n2, n2)
        dst = pl.multiple_of(b * m3, m3)
        g = jnp.dot(s3_ref[...], a2_scr[pl.ds(src, n2), :],
                    preferred_element_type=jnp.float32)
        p3_scr[pl.ds(dst, m3), :] = g.astype(jnp.bfloat16).reshape(m3, _KK * c2)
        return carry
    lax.fori_loop(0, B, _gather3, 0, unroll=True)

    y3 = jnp.dot(p3_scr[...], w3_ref[...], preferred_element_type=jnp.float32)
    a3 = _leaky(y3 + b3_ref[...])                       # (B*16, 256) f32

    # ---- Layer 4: 4x4 valid conv, Cout=1  ==  VPU multiply + reduction ----
    prod = a3.reshape(B, m3, c3) * w4_ref[...][None, :, :]   # (B, 16, 256)
    red = jnp.sum(jnp.sum(prod, axis=2), axis=1, keepdims=True)   # (B, 1)
    out = red + b4_ref[...]                                       # (B, 1)
    o_ref[...] = jnp.broadcast_to(out.reshape(1, B, 1),
                                  o_ref.shape).astype(o_ref.dtype)


# ---------------------------------------------------------------------------
# Host-side prep
# ---------------------------------------------------------------------------
def _perm_weight(w):
    """(Cout, Cin, KH, KW) -> (KH*KW*Cin, Cout): tap-major / channel-minor K."""
    co, ci, kh, kw = w.shape
    return jnp.transpose(w, (2, 3, 1, 0)).reshape(kh * kw * ci, co)


def pack_params(params):
    """One-time weight repack (hoisted out of the per-call path)."""
    (w1, b1), (w2, b2), (w3, b3), (w4, b4) = params
    c1 = w1.shape[0]                                           # 64
    # conv1: K = 4*4*3 = 48 (unpadded), Cout zero-padded 64 -> 128.
    w1p = jnp.pad(_perm_weight(w1), ((0, 0), (0, _C1_PAD - c1))
                  ).astype(jnp.bfloat16)                       # (48, 128)
    b1p = jnp.pad(b1, (0, _C1_PAD - c1)).reshape(1, -1).astype(jnp.float32)
    # conv2: interleave zero rows so K ordering is (tap, padded-channel).
    w2p = _perm_weight(w2).reshape(_KK, c1, -1)                # (16, 64, 128)
    w2p = jnp.pad(w2p, ((0, 0), (0, _C1_PAD - c1), (0, 0)))
    w2p = w2p.reshape(_KK * _C1_PAD, -1).astype(jnp.bfloat16)  # (2048, 128)
    b2r = b2.reshape(1, -1).astype(jnp.float32)
    w3p = _perm_weight(w3).astype(jnp.bfloat16)                # (2048, 256)
    b3r = b3.reshape(1, -1).astype(jnp.float32)
    w4k = _perm_weight(w4).reshape(_KK, w4.shape[1]).astype(jnp.float32)  # (16,256)
    b4r = b4.reshape(1, 1).astype(jnp.float32)
    return (w1p, b1p, w2p, b2r, w3p, b3r, w4k, b4r)


def _layer1_patches(x):
    """NCHW input -> channels-last im2col patches (K = 48, unpadded)."""
    n, c, h, w = x.shape
    oh, ow = h // 2, w // 2
    xh = jnp.transpose(x, (0, 2, 3, 1))                        # one-time NHWC
    xp = jnp.pad(xh, ((0, 0), (1, 1), (1, 1), (0, 0)))
    cols = []
    for i in range(_KH):
        for j in range(_KW):
            cols.append(xp[:, i:i + 2 * oh:2, j:j + 2 * ow:2, :])
    p = jnp.concatenate(cols, axis=-1).reshape(n, oh * ow, _KK * c)
    return p.astype(jnp.bfloat16)                              # (N, 256, 48)


def _batch_block(n):
    """Samples per grid step (largest divisor of n up to 8)."""
    for b in (8, 4, 2, 1):
        if n % b == 0:
            return b
    return 1


# ---------------------------------------------------------------------------
# Forward pass
# ---------------------------------------------------------------------------
@jax.jit
def discriminator_forward(x, packed):
    w1p, b1p, w2p, b2r, w3p, b3r, w4k, b4r = packed
    n, c, h, w = x.shape
    assert (c, h, w) == (3, 32, 32)

    p1 = _layer1_patches(x)                                    # (n, 256, 48)
    m1 = p1.shape[1]
    k1 = p1.shape[2]
    p1 = p1.reshape(n * m1, k1)                                # (n*256, 48)

    B = _batch_block(n)
    steps = n // B

    s2 = jnp.asarray(_SEL2, jnp.bfloat16)                      # (1024, 256)
    s3 = jnp.asarray(_SEL3, jnp.bfloat16)                      # (256, 64)
    m2, m3 = s2.shape[0] // _KK, s3.shape[0] // _KK
    c1, c2, c3 = w1p.shape[1], w2p.shape[1], w3p.shape[1]

    operands = (p1, w1p, b1p, s2, w2p, b2r, s3, w3p, b3r, w4k, b4r)

    flops_per_sample = 2 * (
        m1 * k1 * c1                               # layer-1 GEMM
        + s2.shape[0] * s2.shape[1] * c1           # layer-2 gather
        + m2 * w2p.shape[0] * c2                   # layer-2 GEMM
        + s3.shape[0] * s3.shape[1] * c2           # layer-3 gather
        + m3 * w3p.shape[0] * c3                   # layer-3 GEMM
        + m3 * c3)                                 # layer-4 reduce
    bytes_accessed = sum(int(np.prod(a.shape)) * a.dtype.itemsize
                         for a in operands) + steps * B * 128 * 4

    out = pl.pallas_call(
        _disc_fused_kernel,
        out_shape=jax.ShapeDtypeStruct((steps, B, 128), jnp.float32),
        grid=(steps,),
        in_specs=[
            pl.BlockSpec((B * m1, k1), lambda i: (i, 0)),      # streamed patches
            pl.BlockSpec(w1p.shape, lambda i: (0, 0)),
            pl.BlockSpec(b1p.shape, lambda i: (0, 0)),
            pl.BlockSpec(s2.shape, lambda i: (0, 0)),
            pl.BlockSpec(w2p.shape, lambda i: (0, 0)),
            pl.BlockSpec(b2r.shape, lambda i: (0, 0)),
            pl.BlockSpec(s3.shape, lambda i: (0, 0)),
            pl.BlockSpec(w3p.shape, lambda i: (0, 0)),
            pl.BlockSpec(b3r.shape, lambda i: (0, 0)),
            pl.BlockSpec(w4k.shape, lambda i: (0, 0)),
            pl.BlockSpec(b4r.shape, lambda i: (0, 0)),
        ],
        out_specs=pl.BlockSpec((1, B, 128), lambda i: (i, 0, 0)),
        scratch_shapes=[
            pltpu.VMEM((B * m1, c1), jnp.bfloat16),            # a1
            pltpu.VMEM((B * m2, _KK * c1), jnp.bfloat16),      # p2 patches
            pltpu.VMEM((B * m2, c2), jnp.bfloat16),            # a2
            pltpu.VMEM((B * m3, _KK * c2), jnp.bfloat16),      # p3 patches
        ],
        compiler_params=pltpu.CompilerParams(
            dimension_semantics=("parallel",),
            vmem_limit_bytes=32 * 1024 * 1024),
        cost_estimate=pl.CostEstimate(
            flops=int(n * flops_per_sample), transcendentals=0,
            bytes_accessed=int(bytes_accessed)),
    )(*operands)
    return out[:, :, 0].reshape(-1)                            # == .view(-1)


# ---------------------------------------------------------------------------
# Parameters (deterministic, PyTorch-default-like uniform init)
# ---------------------------------------------------------------------------
def init_params(key):
    specs = [
        (64, 3, 4, 4),
        (128, 64, 4, 4),
        (256, 128, 4, 4),
        (1, 256, 4, 4),
    ]
    params = []
    for spec in specs:
        key, kw_, kb_ = jax.random.split(key, 3)
        fan_in = spec[1] * spec[2] * spec[3]
        bound = 1.0 / (fan_in ** 0.5)
        w = jax.random.uniform(kw_, spec, jnp.float32, -bound, bound)
        b = jax.random.uniform(kb_, (spec[0],), jnp.float32, -bound, bound)
        params.append((w, b))
    return params


# Pure-JAX (f32 XLA conv) reference, for the correctness check only.
def _ref_forward(x, params):
    h = x
    strides = [(2, 2), (2, 2), (2, 2), (1, 1)]
    pads = [((1, 1), (1, 1))] * 3 + [((0, 0), (0, 0))]
    for i, (w, b) in enumerate(params):
        h = jax.lax.conv_general_dilated(
            h, w, strides[i], pads[i],
            dimension_numbers=("NCHW", "OIHW", "NCHW"))
        h = h + b[None, :, None, None]
        if i < 3:
            h = jnp.where(h >= 0, h, 0.2 * h)
    return h.reshape(-1)


if __name__ == "__main__":
    key = jax.random.PRNGKey(0)
    k_x, k_p = jax.random.split(key)
    # Smallest input where the final 4x4 valid conv reduces to 1x1: 32x32.
    x = jax.random.normal(k_x, (2, 3, 32, 32), dtype=jnp.float32)
    params = init_params(k_p)
    packed = pack_params(params)                 # one-time weight repack

    out = jax.block_until_ready(discriminator_forward(x, packed))
    ref = jax.block_until_ready(_ref_forward(x, params))

    assert out.shape == (2,), out.shape
    # Kernel uses bf16 MXU operands (f32 accumulation / f32 epilogue); compare
    # against the pure-f32 XLA reference with a bf16-level tolerance.
    assert jnp.allclose(out, ref, atol=1e-2, rtol=1e-2), (out, ref)

    print("KERNEL_OK")
</pallas_src>

<mosaic_0001>
module attributes {stable_mosaic.version = 11 : i64} {
  func.func @_disc_fused_kernel(%arg0: i32, %arg1: memref<512x48xbf16, #tpu.memory_space<vmem>>, %arg2: memref<48x128xbf16, #tpu.memory_space<vmem>>, %arg3: memref<1x128xf32, #tpu.memory_space<vmem>>, %arg4: memref<1024x256xbf16, #tpu.memory_space<vmem>>, %arg5: memref<2048x128xbf16, #tpu.memory_space<vmem>>, %arg6: memref<1x128xf32, #tpu.memory_space<vmem>>, %arg7: memref<256x64xbf16, #tpu.memory_space<vmem>>, %arg8: memref<2048x256xbf16, #tpu.memory_space<vmem>>, %arg9: memref<1x256xf32, #tpu.memory_space<vmem>>, %arg10: memref<16x256xf32, #tpu.memory_space<vmem>>, %arg11: memref<1x1xf32, #tpu.memory_space<vmem>>, %arg12: memref<1x2x128xf32, #tpu.memory_space<vmem>>, %arg13: memref<512x128xbf16, #tpu.memory_space<vmem>>, %arg14: memref<128x2048xbf16, #tpu.memory_space<vmem>>, %arg15: memref<128x128xbf16, #tpu.memory_space<vmem>>, %arg16: memref<32x2048xbf16, #tpu.memory_space<vmem>>) attributes {dimension_semantics = [#tpu.dimension_semantics<parallel>], iteration_bounds = array<i64: 1>, scalar_prefetch = 0 : i64, scratch_operands = 4 : i64, tpu.core_type = #tpu.core_type<tc>, window_params = [{transform_indices = @transform_0, window_bounds = array<i64: 512, 48>}, {pipeline_mode = #tpu.pipeline_mode<synchronous>, transform_indices = @transform_1, window_bounds = array<i64: 48, 128>}, {pipeline_mode = #tpu.pipeline_mode<synchronous>, transform_indices = @transform_2, window_bounds = array<i64: 1, 128>}, {pipeline_mode = #tpu.pipeline_mode<synchronous>, transform_indices = @transform_3, window_bounds = array<i64: 1024, 256>}, {pipeline_mode = #tpu.pipeline_mode<synchronous>, transform_indices = @transform_4, window_bounds = array<i64: 2048, 128>}, {pipeline_mode = #tpu.pipeline_mode<synchronous>, transform_indices = @transform_5, window_bounds = array<i64: 1, 128>}, {pipeline_mode = #tpu.pipeline_mode<synchronous>, transform_indices = @transform_6, window_bounds = array<i64: 256, 64>}, {pipeline_mode = #tpu.pipeline_mode<synchronous>, transform_indices = @transform_7, window_bounds = array<i64: 2048, 256>}, {pipeline_mode = #tpu.pipeline_mode<synchronous>, transform_indices = @transform_8, window_bounds = array<i64: 1, 256>}, {pipeline_mode = #tpu.pipeline_mode<synchronous>, transform_indices = @transform_9, window_bounds = array<i64: 16, 256>}, {pipeline_mode = #tpu.pipeline_mode<synchronous>, transform_indices = @transform_10, window_bounds = array<i64: 1, 1>}, {transform_indices = @transform_11, window_bounds = array<i64: 1, 2, 128>}]} {
    %c0 = arith.constant 0 : index
    %c0_0 = arith.constant 0 : index
    %0 = vector.load %arg1[%c0, %c0_0] : memref<512x48xbf16, #tpu.memory_space<vmem>>, vector<512x48xbf16>
    %c0_1 = arith.constant 0 : index
    %c0_2 = arith.constant 0 : index
    %1 = vector.load %arg2[%c0_1, %c0_2] : memref<48x128xbf16, #tpu.memory_space<vmem>>, vector<48x128xbf16>
    %cst = arith.constant dense<0.000000e+00> : vector<512x128xf32>
    %2 = tpu.matmul %0, %1, %cst {dimension_numbers = #tpu.dot_dimension_numbers<[1], [0], [0], [1], [0, 0, 1, 1], [], []>} : vector<512x48xbf16>, vector<48x128xbf16>, vector<512x128xf32> -> vector<512x128xf32>
    %c0_3 = arith.constant 0 : index
    %c0_4 = arith.constant 0 : index
    %3 = vector.load %arg3[%c0_3, %c0_4] : memref<1x128xf32, #tpu.memory_space<vmem>>, vector<1x128xf32>
    %4 = vector.broadcast %3 : vector<1x128xf32> to vector<512x128xf32>
    %5 = arith.addf %2, %4 : vector<512x128xf32>
    %cst_5 = arith.constant 0.000000e+00 : f32
    %6 = vector.broadcast %cst_5 : f32 to vector<512x128xf32>
    %7 = arith.cmpf oge, %5, %6 : vector<512x128xf32>
    %cst_6 = arith.constant 2.000000e-01 : f32
    %8 = vector.broadcast %cst_6 : f32 to vector<512x128xf32>
    %9 = arith.mulf %8, %5 : vector<512x128xf32>
    %10 = arith.select %7, %5, %9 : vector<512x128xi1>, vector<512x128xf32>
    %11 = arith.truncf %10 : vector<512x128xf32> to vector<512x128xbf16>
    %c0_7 = arith.constant 0 : index
    %c0_8 = arith.constant 0 : index
    %12 = vector.load %arg13[%c0_7, %c0_8] : memref<512x128xbf16, #tpu.memory_space<vmem>>, vector<512x128xbf16>
    tpu.vector_store %arg13[%c0_7, %c0_8], %11 {strides = array<i32>} : memref<512x128xbf16, #tpu.memory_space<vmem>>, vector<512x128xbf16>,
    %c0_i32 = arith.constant 0 : i32
    %c256_i32 = arith.constant 256 : i32
    %13 = arith.muli %c0_i32, %c256_i32 : i32
    %14 = tpu.assume_multiple %13, 256 : i32
    %c64_i32 = arith.constant 64 : i32
    %15 = arith.muli %c0_i32, %c64_i32 : i32
    %16 = tpu.assume_multiple %15, 64 : i32
    %c0_9 = arith.constant 0 : index
    %c0_10 = arith.constant 0 : index
    %17 = vector.load %arg4[%c0_9, %c0_10] : memref<1024x256xbf16, #tpu.memory_space<vmem>>, vector<1024x256xbf16>
    %18 = arith.index_cast %14 : i32 to index
    %c0_11 = arith.constant 0 : index
    %19 = vector.load %arg13[%18, %c0_11] : memref<512x128xbf16, #tpu.memory_space<vmem>>, vector<256x128xbf16>
    %cst_12 = arith.constant dense<0.000000e+00> : vector<1024x128xf32>
    %20 = tpu.matmul %17, %19, %cst_12 {dimension_numbers = #tpu.dot_dimension_numbers<[1], [0], [0], [1], [0, 0, 1, 1], [], []>} : vector<1024x256xbf16>, vector<256x128xbf16>, vector<1024x128xf32> -> vector<1024x128xf32>
    %21 = arith.truncf %20 : vector<1024x128xf32> to vector<1024x128xbf16>
    %22 = vector.shape_cast %21 : vector<1024x128xbf16> to vector<64x2048xbf16>
    %23 = arith.index_cast %16 : i32 to index
    %c0_13 = arith.constant 0 : index
    %24 = vector.load %arg14[%23, %c0_13] : memref<128x2048xbf16, #tpu.memory_space<vmem>>, vector<64x2048xbf16>
    tpu.vector_store %arg14[%23, %c0_13], %22 {strides = array<i32>} : memref<128x2048xbf16, #tpu.memory_space<vmem>>, vector<64x2048xbf16>,
    %c1_i32 = arith.constant 1 : i32
    %c256_i32_14 = arith.constant 256 : i32
    %25 = arith.muli %c1_i32, %c256_i32_14 : i32
    %26 = tpu.assume_multiple %25, 256 : i32
    %c64_i32_15 = arith.constant 64 : i32
    %27 = arith.muli %c1_i32, %c64_i32_15 : i32
    %28 = tpu.assume_multiple %27, 64 : i32
    %c0_16 = arith.constant 0 : index
    %c0_17 = arith.constant 0 : index
    %29 = vector.load %arg4[%c0_16, %c0_17] : memref<1024x256xbf16, #tpu.memory_space<vmem>>, vector<1024x256xbf16>
    %30 = arith.index_cast %26 : i32 to index
    %c0_18 = arith.constant 0 : index
    %31 = vector.load %arg13[%30, %c0_18] : memref<512x128xbf16, #tpu.memory_space<vmem>>, vector<256x128xbf16>
    %cst_19 = arith.constant dense<0.000000e+00> : vector<1024x128xf32>
    %32 = tpu.matmul %29, %31, %cst_19 {dimension_numbers = #tpu.dot_dimension_numbers<[1], [0], [0], [1], [0, 0, 1, 1], [], []>} : vector<1024x256xbf16>, vector<256x128xbf16>, vector<1024x128xf32> -> vector<1024x128xf32>
    %33 = arith.truncf %32 : vector<1024x128xf32> to vector<1024x128xbf16>
    %34 = vector.shape_cast %33 : vector<1024x128xbf16> to vector<64x2048xbf16>
    %35 = arith.index_cast %28 : i32 to index
    %c0_20 = arith.constant 0 : index
    %36 = vector.load %arg14[%35, %c0_20] : memref<128x2048xbf16, #tpu.memory_space<vmem>>, vector<64x2048xbf16>
    tpu.vector_store %arg14[%35, %c0_20], %34 {strides = array<i32>} : memref<128x2048xbf16, #tpu.memory_space<vmem>>, vector<64x2048xbf16>,
    %c2_i32 = arith.constant 2 : i32
    %c0_21 = arith.constant 0 : index
    %c0_22 = arith.constant 0 : index
    %37 = vector.load %arg14[%c0_21, %c0_22] : memref<128x2048xbf16, #tpu.memory_space<vmem>>, vector<128x2048xbf16>
    %c0_23 = arith.constant 0 : index
    %c0_24 = arith.constant 0 : index
    %38 = vector.load %arg5[%c0_23, %c0_24] : memref<2048x128xbf16, #tpu.memory_space<vmem>>, vector<2048x128xbf16>
    %cst_25 = arith.constant dense<0.000000e+00> : vector<128x128xf32>
    %39 = tpu.matmul %37, %38, %cst_25 {dimension_numbers = #tpu.dot_dimension_numbers<[1], [0], [0], [1], [0, 0, 1, 1], [], []>} : vector<128x2048xbf16>, vector<2048x128xbf16>, vector<128x128xf32> -> vector<128x128xf32>
    %c0_26 = arith.constant 0 : index
    %c0_27 = arith.constant 0 : index
    %40 = vector.load %arg6[%c0_26, %c0_27] : memref<1x128xf32, #tpu.memory_space<vmem>>, vector<1x128xf32>
    %41 = vector.broadcast %40 : vector<1x128xf32> to vector<128x128xf32>
    %42 = arith.addf %39, %41 : vector<128x128xf32>
    %cst_28 = arith.constant 0.000000e+00 : f32
    %43 = vector.broadcast %cst_28 : f32 to vector<128x128xf32>
    %44 = arith.cmpf oge, %42, %43 : vector<128x128xf32>
    %cst_29 = arith.constant 2.000000e-01 : f32
    %45 = vector.broadcast %cst_29 : f32 to vector<128x128xf32>
    %46 = arith.mulf %45, %42 : vector<128x128xf32>
    %47 = arith.select %44, %42, %46 : vector<128x128xi1>, vector<128x128xf32>
    %48 = arith.truncf %47 : vector<128x128xf32> to vector<128x128xbf16>
    %c0_30 = arith.constant 0 : index
    %c0_31 = arith.constant 0 : index
    %49 = vector.load %arg15[%c0_30, %c0_31] : memref<128x128xbf16, #tpu.memory_space<vmem>>, vector<128x128xbf16>
    tpu.vector_store %arg15[%c0_30, %c0_31], %48 {strides = array<i32>} : memref<128x128xbf16, #tpu.memory_space<vmem>>, vector<128x128xbf16>,
    %c0_i32_32 = arith.constant 0 : i32
    %c64_i32_33 = arith.constant 64 : i32
    %50 = arith.muli %c0_i32_32, %c64_i32_33 : i32
    %51 = tpu.assume_multiple %50, 64 : i32
    %c16_i32 = arith.constant 16 : i32
    %52 = arith.muli %c0_i32_32, %c16_i32 : i32
    %53 = tpu.assume_multiple %52, 16 : i32
    %c0_34 = arith.constant 0 : index
    %c0_35 = arith.constant 0 : index
    %54 = vector.load %arg7[%c0_34, %c0_35] : memref<256x64xbf16, #tpu.memory_space<vmem>>, vector<256x64xbf16>
    %55 = arith.index_cast %51 : i32 to index
    %c0_36 = arith.constant 0 : index
    %56 = vector.load %arg15[%55, %c0_36] : memref<128x128xbf16, #tpu.memory_space<vmem>>, vector<64x128xbf16>
    %cst_37 = arith.constant dense<0.000000e+00> : vector<256x128xf32>
    %57 = tpu.matmul %54, %56, %cst_37 {dimension_numbers = #tpu.dot_dimension_numbers<[1], [0], [0], [1], [0, 0, 1, 1], [], []>} : vector<256x64xbf16>, vector<64x128xbf16>, vector<256x128xf32> -> vector<256x128xf32>
    %58 = arith.truncf %57 : vector<256x128xf32> to vector<256x128xbf16>
    %59 = vector.shape_cast %58 : vector<256x128xbf16> to vector<16x2048xbf16>
    %60 = arith.index_cast %53 : i32 to index
    %c0_38 = arith.constant 0 : index
    %61 = vector.load %arg16[%60, %c0_38] : memref<32x2048xbf16, #tpu.memory_space<vmem>>, vector<16x2048xbf16>
    tpu.vector_store %arg16[%60, %c0_38], %59 {strides = array<i32>} : memref<32x2048xbf16, #tpu.memory_space<vmem>>, vector<16x2048xbf16>,
    %c1_i32_39 = arith.constant 1 : i32
    %c64_i32_40 = arith.constant 64 : i32
    %62 = arith.muli %c1_i32_39, %c64_i32_40 : i32
    %63 = tpu.assume_multiple %62, 64 : i32
    %c16_i32_41 = arith.constant 16 : i32
    %64 = arith.muli %c1_i32_39, %c16_i32_41 : i32
    %65 = tpu.assume_multiple %64, 16 : i32
    %c0_42 = arith.constant 0 : index
    %c0_43 = arith.constant 0 : index
    %66 = vector.load %arg7[%c0_42, %c0_43] : memref<256x64xbf16, #tpu.memory_space<vmem>>, vector<256x64xbf16>
    %67 = arith.index_cast %63 : i32 to index
    %c0_44 = arith.constant 0 : index
    %68 = vector.load %arg15[%67, %c0_44] : memref<128x128xbf16, #tpu.memory_space<vmem>>, vector<64x128xbf16>
    %cst_45 = arith.constant dense<0.000000e+00> : vector<256x128xf32>
    %69 = tpu.matmul %66, %68, %cst_45 {dimension_numbers = #tpu.dot_dimension_numbers<[1], [0], [0], [1], [0, 0, 1, 1], [], []>} : vector<256x64xbf16>, vector<64x128xbf16>, vector<256x128xf32> -> vector<256x128xf32>
    %70 = arith.truncf %69 : vector<256x128xf32> to vector<256x128xbf16>
    %71 = vector.shape_cast %70 : vector<256x128xbf16> to vector<16x2048xbf16>
    %72 = arith.index_cast %65 : i32 to index
    %c0_46 = arith.constant 0 : index
    %73 = vector.load %arg16[%72, %c0_46] : memref<32x2048xbf16, #tpu.memory_space<vmem>>, vector<16x2048xbf16>
    tpu.vector_store %arg16[%72, %c0_46], %71 {strides = array<i32>} : memref<32x2048xbf16, #tpu.memory_space<vmem>>, vector<16x2048xbf16>,
    %c2_i32_47 = arith.constant 2 : i32
    %c0_48 = arith.constant 0 : index
    %c0_49 = arith.constant 0 : index
    %74 = vector.load %arg16[%c0_48, %c0_49] : memref<32x2048xbf16, #tpu.memory_space<vmem>>, vector<32x2048xbf16>
    %c0_50 = arith.constant 0 : index
    %c0_51 = arith.constant 0 : index
    %75 = vector.load %arg8[%c0_50, %c0_51] : memref<2048x256xbf16, #tpu.memory_space<vmem>>, vector<2048x256xbf16>
    %cst_52 = arith.constant dense<0.000000e+00> : vector<32x256xf32>
    %76 = tpu.matmul %74, %75, %cst_52 {dimension_numbers = #tpu.dot_dimension_numbers<[1], [0], [0], [1], [0, 0, 1, 1], [], []>} : vector<32x2048xbf16>, vector<2048x256xbf16>, vector<32x256xf32> -> vector<32x256xf32>
    %c0_53 = arith.constant 0 : index
    %c0_54 = arith.constant 0 : index
    %77 = vector.load %arg9[%c0_53, %c0_54] : memref<1x256xf32, #tpu.memory_space<vmem>>, vector<1x256xf32>
    %78 = vector.broadcast %77 : vector<1x256xf32> to vector<32x256xf32>
    %79 = arith.addf %76, %78 : vector<32x256xf32>
    %cst_55 = arith.constant 0.000000e+00 : f32
    %80 = vector.broadcast %cst_55 : f32 to vector<32x256xf32>
    %81 = arith.cmpf oge, %79, %80 : vector<32x256xf32>
    %cst_56 = arith.constant 2.000000e-01 : f32
    %82 = vector.broadcast %cst_56 : f32 to vector<32x256xf32>
    %83 = arith.mulf %82, %79 : vector<32x256xf32>
    %84 = arith.select %81, %79, %83 : vector<32x256xi1>, vector<32x256xf32>
    %85 = vector.shape_cast %84 : vector<32x256xf32> to vector<2x16x256xf32>
    %c0_57 = arith.constant 0 : index
    %c0_58 = arith.constant 0 : index
    %86 = vector.load %arg10[%c0_57, %c0_58] : memref<16x256xf32, #tpu.memory_space<vmem>>, vector<16x256xf32>
    %87 = vector.shape_cast %86 : vector<16x256xf32> to vector<1x16x256xf32>
    %88 = vector.broadcast %87 : vector<1x16x256xf32> to vector<2x16x256xf32>
    %89 = arith.mulf %85, %88 : vector<2x16x256xf32>
    %cst_59 = arith.constant dense<0.000000e+00> : vector<2x16xf32>
    %90 = vector.multi_reduction <add>, %89, %cst_59 [2] : vector<2x16x256xf32> to vector<2x16xf32>
    %cst_60 = arith.constant dense<0.000000e+00> : vector<2xf32>
    %91 = vector.multi_reduction <add>, %90, %cst_60 [1] : vector<2x16xf32> to vector<2xf32>
    %92 = vector.shape_cast %91 : vector<2xf32> to vector<2x1xf32>
    %c0_61 = arith.constant 0 : index
    %c0_62 = arith.constant 0 : index
    %93 = vector.load %arg11[%c0_61, %c0_62] : memref<1x1xf32, #tpu.memory_space<vmem>>, vector<1x1xf32>
    %94 = vector.broadcast %93 : vector<1x1xf32> to vector<2x1xf32>
    %95 = arith.addf %92, %94 : vector<2x1xf32>
    %96 = vector.shape_cast %95 : vector<2x1xf32> to vector<1x2x1xf32>
    %97 = vector.shape_cast %96 : vector<1x2x1xf32> to vector<1x2x1xf32>
    %98 = vector.broadcast %97 : vector<1x2x1xf32> to vector<1x2x128xf32>
    %c0_63 = arith.constant 0 : index
    %c0_64 = arith.constant 0 : index
    %c0_65 = arith.constant 0 : index
    %99 = vector.load %arg12[%c0_63, %c0_64, %c0_65] : memref<1x2x128xf32, #tpu.memory_space<vmem>>, vector<1x2x128xf32>
    tpu.vector_store %arg12[%c0_63, %c0_64, %c0_65], %98 {strides = array<i32>} : memref<1x2x128xf32, #tpu.memory_space<vmem>>, vector<1x2x128xf32>,
    return
  }
  func.func @transform_0(%arg0: i32) -> (i32, i32) {
    %c0_i32 = arith.constant 0 : i32
    %c0_i32_0 = arith.constant 0 : i32
    return %arg0, %c0_i32 : i32, i32
  }
  func.func @transform_1(%arg0: i32) -> (i32, i32) {
    %c0_i32 = arith.constant 0 : i32
    %c0_i32_0 = arith.constant 0 : i32
    %c0_i32_1 = arith.constant 0 : i32
    return %c0_i32, %c0_i32_0 : i32, i32
  }
  func.func @transform_2(%arg0: i32) -> (i32, i32) {
    %c0_i32 = arith.constant 0 : i32
    %c0_i32_0 = arith.constant 0 : i32
    %c0_i32_1 = arith.constant 0 : i32
    return %c0_i32, %c0_i32_0 : i32, i32
  }
  func.func @transform_3(%arg0: i32) -> (i32, i32) {
    %c0_i32 = arith.constant 0 : i32
    %c0_i32_0 = arith.constant 0 : i32
    %c0_i32_1 = arith.constant 0 : i32
    return %c0_i32, %c0_i32_0 : i32, i32
  }
  func.func @transform_4(%arg0: i32) -> (i32, i32) {
    %c0_i32 = arith.constant 0 : i32
    %c0_i32_0 = arith.constant 0 : i32
    %c0_i32_1 = arith.constant 0 : i32
    return %c0_i32, %c0_i32_0 : i32, i32
  }
  func.func @transform_5(%arg0: i32) -> (i32, i32) {
    %c0_i32 = arith.constant 0 : i32
    %c0_i32_0 = arith.constant 0 : i32
    %c0_i32_1 = arith.constant 0 : i32
    return %c0_i32, %c0_i32_0 : i32, i32
  }
  func.func @transform_6(%arg0: i32) -> (i32, i32) {
    %c0_i32 = arith.constant 0 : i32
    %c0_i32_0 = arith.constant 0 : i32
    %c0_i32_1 = arith.constant 0 : i32
    return %c0_i32, %c0_i32_0 : i32, i32
  }
  func.func @transform_7(%arg0: i32) -> (i32, i32) {
    %c0_i32 = arith.constant 0 : i32
    %c0_i32_0 = arith.constant 0 : i32
    %c0_i32_1 = arith.constant 0 : i32
    return %c0_i32, %c0_i32_0 : i32, i32
  }
  func.func @transform_8(%arg0: i32) -> (i32, i32) {
    %c0_i32 = arith.constant 0 : i32
    %c0_i32_0 = arith.constant 0 : i32
    %c0_i32_1 = arith.constant 0 : i32
    return %c0_i32, %c0_i32_0 : i32, i32
  }
  func.func @transform_9(%arg0: i32) -> (i32, i32) {
    %c0_i32 = arith.constant 0 : i32
    %c0_i32_0 = arith.constant 0 : i32
    %c0_i32_1 = arith.constant 0 : i32
    return %c0_i32, %c0_i32_0 : i32, i32
  }
  func.func @transform_10(%arg0: i32) -> (i32, i32) {
    %c0_i32 = arith.constant 0 : i32
    %c0_i32_0 = arith.constant 0 : i32
    %c0_i32_1 = arith.constant 0 : i32
    return %c0_i32, %c0_i32_0 : i32, i32
  }
  func.func @transform_11(%arg0: i32) -> (i32, i32, i32) {
    %c0_i32 = arith.constant 0 : i32
    %c0_i32_0 = arith.constant 0 : i32
    %c0_i32_1 = arith.constant 0 : i32
    return %arg0, %c0_i32, %c0_i32_0 : i32, i32, i32
  }
}

</mosaic_0001>

<llo_original>
// kernel: discriminator_forward.1
$region0: #{discriminator_forward.1}
  #allocation0 [shape = 'u32[]', space=smem, size = 0x4, offset = 0x4, fixed_abs, tag = 'smem constant byte address 0x4 - core index']
  #allocation1 [shape = 'u32[144,128]{1,0:T(1,128)}', space=vmem, size = 0x12000, scoped, tag = 'internal scratch']
  #allocation2 [shape = 'bf16[512,128]{1,0:T(16,128)(2,1)}', space=vmem, size = 0x20000, scoped, tag = 'scratch operand']
  #allocation3 [shape = 'bf16[128,2048]{1,0:T(16,128)(2,1)}', space=vmem, size = 0x80000, scoped, tag = 'scratch operand']
  #allocation4 [shape = 'bf16[128,128]{1,0:T(16,128)(2,1)}', space=vmem, size = 0x8000, scoped, tag = 'scratch operand']
  #allocation5 [shape = 'bf16[32,2048]{1,0:T(16,128)(2,1)}', space=vmem, size = 0x20000, scoped, tag = 'scratch operand']
  #allocation6 [shape = 'f32[1,1]{1,0:T(1,128)S(1)}', space=vmem, size = 0x200, scoped, tag = 'scoped memory for discriminator_forward.1']
  %s0 = inlined_call_operand.vmem [shape: bf16[512,48], index: 0, kind: input, shape index: {}]
  %s1 = inlined_call_operand.vmem [shape: bf16[48,128], index: 1, kind: input, shape index: {}]
  %s2 = inlined_call_operand.vmem [shape: f32[1,128], index: 2, kind: input, shape index: {}]
  %s3 = inlined_call_operand.vmem [shape: bf16[1024,256], index: 3, kind: input, shape index: {}]
  %s4 = inlined_call_operand.vmem [shape: bf16[2048,128], index: 4, kind: input, shape index: {}]
  %s5 = inlined_call_operand.vmem [shape: f32[1,128], index: 5, kind: input, shape index: {}]
  %s6 = inlined_call_operand.vmem [shape: bf16[256,64], index: 6, kind: input, shape index: {}]
  %s7 = inlined_call_operand.vmem [shape: bf16[2048,256], index: 7, kind: input, shape index: {}]
  %s8 = inlined_call_operand.vmem [shape: f32[1,256], index: 8, kind: input, shape index: {}]
  %s9 = inlined_call_operand.vmem [shape: f32[16,256], index: 9, kind: input, shape index: {}]
  %s10 = inlined_call_operand.<no memory space> [shape: f32[1,1], index: 10, kind: input, shape index: {}]
  %s11 = inlined_call_operand.vmem [shape: f32[1,2,128], index: 11, kind: output, shape index: {}]
  %s12 = sld [smem:[#allocation0]]
  $region54: #{discriminator_forward.1} parent=0
    _
  %s14 = ssub.s32 1, %s12
  %s15 = scalar_select 0, %s14, %s12
  %v16 = vstv %s10
  %17 = vst [vmem:[#allocation6] sm:$0x1] %v16
  // Predicated region
  $region2: #{discriminator_forward.1} parent=0 // pred_check
    _
  $region3: #{discriminator_forward.1} parent=0 // pred_check_branch
    %19 = sbr.rel (0) target = $region5
  $region4: #{discriminator_forward.1} parent=0 // pred_region
    _
  $region5: #{discriminator_forward.1} parent=0 // pred_fallthru
    _
  // Predicated region
  $region6: #{discriminator_forward.1} parent=0 // pred_check
    _
  $region7: #{discriminator_forward.1} parent=0 // pred_check_branch
    %21 = sbr.rel (0) target = $region9
  $region8: #{discriminator_forward.1} parent=0 // pred_region
    _
  $region9: #{discriminator_forward.1} parent=0 // pred_fallthru
    _
  // Predicated region
  $region10: #{discriminator_forward.1} parent=0 // pred_check
    _
  $region11: #{discriminator_forward.1} parent=0 // pred_check_branch
    %23 = sbr.rel (0) target = $region13
  $region12: #{discriminator_forward.1} parent=0 // pred_region
    _
  $region13: #{discriminator_forward.1} parent=0 // pred_fallthru
    _
  // Predicated region
  $region14: #{discriminator_forward.1} parent=0 // pred_check
    _
  $region15: #{discriminator_forward.1} parent=0 // pred_check_branch
    %25 = sbr.rel (0) target = $region17
  $region16: #{discriminator_forward.1} parent=0 // pred_region
    _
  $region17: #{discriminator_forward.1} parent=0 // pred_fallthru
    _
  // Predicated region
  $region18: #{discriminator_forward.1} parent=0 // pred_check
    _
  $region19: #{discriminator_forward.1} parent=0 // pred_check_branch
    %27 = sbr.rel (0) target = $region21
  $region20: #{discriminator_forward.1} parent=0 // pred_region
    _
  $region21: #{discriminator_forward.1} parent=0 // pred_fallthru
    _
  // Predicated region
  $region22: #{discriminator_forward.1} parent=0 // pred_check
    _
  $region23: #{discriminator_forward.1} parent=0 // pred_check_branch
    %29 = sbr.rel (0) target = $region25
  $region24: #{discriminator_forward.1} parent=0 // pred_region
    _
  $region25: #{discriminator_forward.1} parent=0 // pred_fallthru
    _
  // Predicated region
  $region26: #{discriminator_forward.1} parent=0 // pred_check
    _
  $region27: #{discriminator_forward.1} parent=0 // pred_check_branch
    %31 = sbr.rel (0) target = $region29
  $region28: #{discriminator_forward.1} parent=0 // pred_region
    _
  $region29: #{discriminator_forward.1} parent=0 // pred_fallthru
    _
  // Predicated region
  $region30: #{discriminator_forward.1} parent=0 // pred_check
    _
  $region31: #{discriminator_forward.1} parent=0 // pred_check_branch
    %33 = sbr.rel (0) target = $region33
  $region32: #{discriminator_forward.1} parent=0 // pred_region
    _
  $region33: #{discriminator_forward.1} parent=0 // pred_fallthru
    _
  // Predicated region
  $region34: #{discriminator_forward.1} parent=0 // pred_check
    _
  $region35: #{discriminator_forward.1} parent=0 // pred_check_branch
    %35 = sbr.rel (0) target = $region37
  $region36: #{discriminator_forward.1} parent=0 // pred_region
    _
  $region37: #{discriminator_forward.1} parent=0 // pred_fallthru
    _
  // Predicated region
  $region38: #{discriminator_forward.1} parent=0 // pred_check
    _
  $region39: #{discriminator_forward.1} parent=0 // pred_check_branch
    %37 = sbr.rel (0) target = $region41
  $region40: #{discriminator_forward.1} parent=0 // pred_region
    _
  $region41: #{discriminator_forward.1} parent=0 // pred_fallthru
    _
  // Predicated region
  $region42: #{discriminator_forward.1} parent=0 // pred_check
    _
  $region43: #{discriminator_forward.1} parent=0 // pred_check_branch
    %39 = sbr.rel (0) target = $region45
  $region44: #{discriminator_forward.1} parent=0 // pred_region
    _
  $region45: #{discriminator_forward.1} parent=0 // pred_fallthru
    _
  %v41 = vld [vmem:[%s0] sm:$0xf]
  %v42 = vld [vmem:[%s0 + $0x4] sm:$0xf]
  %v43 = vld [vmem:[%s0 + $0x8] sm:$0xf]
  %v44 = vld [vmem:[%s0 + $0xc] sm:$0xf]
  %v45 = vld [vmem:[%s0 + $0x10] sm:$0xf]
  %v46 = vld [vmem:[%s0 + $0x14] sm:$0xf]
  %v47 = vld [vmem:[%s0 + $0x18] sm:$0xf]
  %v48 = vld [vmem:[%s0 + $0x1c] sm:$0xf]
  %v49 = vld [vmem:[%s0 + $0x20] sm:$0xf]
  %v50 = vld [vmem:[%s0 + $0x24] sm:$0xf]
  %v51 = vld [vmem:[%s0 + $0x28] sm:$0xf]
  %v52 = vld [vmem:[%s0 + $0x2c] sm:$0xf]
  %v53 = vld [vmem:[%s0 + $0x30] sm:$0xf]
  %v54 = vld [vmem:[%s0 + $0x34] sm:$0xf]
  %v55 = vld [vmem:[%s0 + $0x38] sm:$0xf]
  %v56 = vld [vmem:[%s0 + $0x3c] sm:$0xf]
  %v57 = vld [vmem:[%s0 + $0x40] sm:$0xf]
  %v58 = vld [vmem:[%s0 + $0x44] sm:$0xf]
  %v59 = vld [vmem:[%s0 + $0x48] sm:$0xf]
  %v60 = vld [vmem:[%s0 + $0x4c] sm:$0xf]
  %v61 = vld [vmem:[%s0 + $0x50] sm:$0xf]
  %v62 = vld [vmem:[%s0 + $0x54] sm:$0xf]
  %v63 = vld [vmem:[%s0 + $0x58] sm:$0xf]
  %v64 = vld [vmem:[%s0 + $0x5c] sm:$0xf]
  %v65 = vld [vmem:[%s0 + $0x60] sm:$0xf]
  %v66 = vld [vmem:[%s0 + $0x64] sm:$0xf]
  %v67 = vld [vmem:[%s0 + $0x68] sm:$0xf]
  %v68 = vld [vmem:[%s0 + $0x6c] sm:$0xf]
  %v69 = vld [vmem:[%s0 + $0x70] sm:$0xf]
  %v70 = vld [vmem:[%s0 + $0x74] sm:$0xf]
  %v71 = vld [vmem:[%s0 + $0x78] sm:$0xf]
  %v72 = vld [vmem:[%s0 + $0x7c] sm:$0xf]
  %v73 = vld [vmem:[%s0 + $0x80] sm:$0xf]
  %v74 = vld [vmem:[%s0 + $0x84] sm:$0xf]
  %v75 = vld [vmem:[%s0 + $0x88] sm:$0xf]
  %v76 = vld [vmem:[%s0 + $0x8c] sm:$0xf]
  %v77 = vld [vmem:[%s0 + $0x90] sm:$0xf]
  %v78 = vld [vmem:[%s0 + $0x94] sm:$0xf]
  %v79 = vld [vmem:[%s0 + $0x98] sm:$0xf]
  %v80 = vld [vmem:[%s0 + $0x9c] sm:$0xf]
  %v81 = vld [vmem:[%s0 + $0xa0] sm:$0xf]
  %v82 = vld [vmem:[%s0 + $0xa4] sm:$0xf]
  %v83 = vld [vmem:[%s0 + $0xa8] sm:$0xf]
  %v84 = vld [vmem:[%s0 + $0xac] sm:$0xf]
  %v85 = vld [vmem:[%s0 + $0xb0] sm:$0xf]
  %v86 = vld [vmem:[%s0 + $0xb4] sm:$0xf]
  %v87 = vld [vmem:[%s0 + $0xb8] sm:$0xf]
  %v88 = vld [vmem:[%s0 + $0xbc] sm:$0xf]
  %v89 = vld [vmem:[%s0 + $0xc0] sm:$0xf]
  %v90 = vld [vmem:[%s0 + $0xc4] sm:$0xf]
  %v91 = vld [vmem:[%s0 + $0xc8] sm:$0xf]
  %v92 = vld [vmem:[%s0 + $0xcc] sm:$0xf]
  %v93 = vld [vmem:[%s0 + $0xd0] sm:$0xf]
  %v94 = vld [vmem:[%s0 + $0xd4] sm:$0xf]
  %v95 = vld [vmem:[%s0 + $0xd8] sm:$0xf]
  %v96 = vld [vmem:[%s0 + $0xdc] sm:$0xf]
  %v97 = vld [vmem:[%s0 + $0xe0] sm:$0xf]
  %v98 = vld [vmem:[%s0 + $0xe4] sm:$0xf]
  %v99 = vld [vmem:[%s0 + $0xe8] sm:$0xf]
  %v100 = vld [vmem:[%s0 + $0xec] sm:$0xf]
  %v101 = vld [vmem:[%s0 + $0xf0] sm:$0xf]
  %v102 = vld [vmem:[%s0 + $0xf4] sm:$0xf]
  %v103 = vld [vmem:[%s0 + $0xf8] sm:$0xf]
  %v104 = vld [vmem:[%s0 + $0xfc] sm:$0xf]
  %v105 = vld [vmem:[%s1] sm:$0xf]
  %v106 = vld [vmem:[%s1 + $0x4] sm:$0xf]
  %v107 = vld [vmem:[%s1 + $0x8] sm:$0xf]
  %v108 = vld [vmem:[%s1 + $0xc] sm:$0xf]
  %v109 = vld [vmem:[%s1 + $0x10] sm:$0xf]
  %v110 = vld [vmem:[%s1 + $0x14] sm:$0xf]
  %v111 = vld [vmem:[%s2] sm:$0x1]
  %v113 = vlaneseq
  %v114 = vshrl.u32 %v113, 7
  %v115 = vsub.s32 0, %v114
  %v116 = vrot.slane %v111, %v115
  %v182 = vunpack.c.l.b16 %v41
  %v183 = vunpack.c.l.b16 %v42
  %v184 = vunpack.c.l.b16 %v43
  %v185 = vunpack.c.l.b16 %v44
  %v186 = vunpack.c.l.b16 %v45
  %v187 = vunpack.c.l.b16 %v46
  %v188 = vunpack.c.l.b16 %v47
  %v189 = vunpack.c.l.b16 %v48
  %v190 = vunpack.c.l.b16 %v49
  %v191 = vunpack.c.l.b16 %v50
  %v192 = vunpack.c.l.b16 %v51
  %v193 = vunpack.c.l.b16 %v52
  %v194 = vunpack.c.l.b16 %v53
  %v195 = vunpack.c.l.b16 %v54
  %v196 = vunpack.c.l.b16 %v55
  %v197 = vunpack.c.l.b16 %v56
  %v198 = vunpack.c.l.b16 %v57
  %v199 = vunpack.c.l.b16 %v58
  %v200 = vunpack.c.l.b16 %v59
  %v201 = vunpack.c.l.b16 %v60
  %v202 = vunpack.c.l.b16 %v61
  %v203 = vunpack.c.l.b16 %v62
  %v204 = vunpack.c.l.b16 %v63
  %v205 = vunpack.c.l.b16 %v64
  %v206 = vunpack.c.l.b16 %v65
  %v207 = vunpack.c.l.b16 %v66
  %v208 = vunpack.c.l.b16 %v67
  %v209 = vunpack.c.l.b16 %v68
  %v210 = vunpack.c.l.b16 %v69
  %v211 = vunpack.c.l.b16 %v70
  %v212 = vunpack.c.l.b16 %v71
  %v213 = vunpack.c.l.b16 %v72
  %v214 = vunpack.c.l.b16 %v73
  %v215 = vunpack.c.l.b16 %v74
  %v216 = vunpack.c.l.b16 %v75
  %v217 = vunpack.c.l.b16 %v76
  %v218 = vunpack.c.l.b16 %v77
  %v219 = vunpack.c.l.b16 %v78
  %v220 = vunpack.c.l.b16 %v79
  %v221 = vunpack.c.l.b16 %v80
  %v222 = vunpack.c.l.b16 %v81
  %v223 = vunpack.c.l.b16 %v82
  %v224 = vunpack.c.l.b16 %v83
  %v225 = vunpack.c.l.b16 %v84
  %v226 = vunpack.c.l.b16 %v85
  %v227 = vunpack.c.l.b16 %v86
  %v228 = vunpack.c.l.b16 %v87
  %v229 = vunpack.c.l.b16 %v88
  %v230 = vunpack.c.l.b16 %v89
  %v231 = vunpack.c.l.b16 %v90
  %v232 = vunpack.c.l.b16 %v91
  %v233 = vunpack.c.l.b16 %v92
  %v234 = vunpack.c.l.b16 %v93
  %v235 = vunpack.c.l.b16 %v94
  %v236 = vunpack.c.l.b16 %v95
  %v237 = vunpack.c.l.b16 %v96
  %v238 = vunpack.c.l.b16 %v97
  %v239 = vunpack.c.l.b16 %v98
  %v240 = vunpack.c.l.b16 %v99
  %v241 = vunpack.c.l.b16 %v100
  %v242 = vunpack.c.l.b16 %v101
  %v243 = vunpack.c.l.b16 %v102
  %v244 = vunpack.c.l.b16 %v103
  %v245 = vunpack.c.l.b16 %v104
  %v246 = vpack.c.b16 %v183, %v182
  %v247 = vpack.c.b16 %v185, %v184
  %v248 = vpack.c.b16 %v187, %v186
  %v249 = vpack.c.b16 %v189, %v188
  %v250 = vpack.c.b16 %v191, %v190
  %v251 = vpack.c.b16 %v193, %v192
  %v252 = vpack.c.b16 %v195, %v194
  %v253 = vpack.c.b16 %v197, %v196
  %v254 = vpack.c.b16 %v199, %v198
  %v255 = vpack.c.b16 %v201, %v200
  %v256 = vpack.c.b16 %v203, %v202
  %v257 = vpack.c.b16 %v205, %v204
  %v258 = vpack.c.b16 %v207, %v206
  %v259 = vpack.c.b16 %v209, %v208
  %v260 = vpack.c.b16 %v211, %v210
  %v261 = vpack.c.b16 %v213, %v212
  %v262 = vpack.c.b16 %v215, %v214
  %v263 = vpack.c.b16 %v217, %v216
  %v264 = vpack.c.b16 %v219, %v218
  %v265 = vpack.c.b16 %v221, %v220
  %v266 = vpack.c.b16 %v223, %v222
  %v267 = vpack.c.b16 %v225, %v224
  %v268 = vpack.c.b16 %v227, %v226
  %v269 = vpack.c.b16 %v229, %v228
  %v270 = vpack.c.b16 %v231, %v230
  %v271 = vpack.c.b16 %v233, %v232
  %v272 = vpack.c.b16 %v235, %v234
  %v273 = vpack.c.b16 %v237, %v236
  %v274 = vpack.c.b16 %v239, %v238
  %v275 = vpack.c.b16 %v241, %v240
  %v276 = vpack.c.b16 %v243, %v242
  %v277 = vpack.c.b16 %v245, %v244
  %v284 = vunpack.c.l.b16 %v105
  %v285 = vunpack.c.l.b16 %v106
  %v286 = vunpack.c.l.b16 %v107
  %v287 = vunpack.c.l.b16 %v108
  %v288 = vunpack.c.l.b16 %v109
  %v289 = vunpack.c.l.b16 %v110
  %v290 = vpack.c.b16 %v285, %v284
  %v291 = vpack.c.b16 %v287, %v286
  %v292 = vpack.c.b16 %v289, %v288
  %vm296 = vcmask 392192
  %v298 = vsel %vm296, %v246, 0
  %v301 = vsel %vm296, %v247, 0
  %v304 = vsel %vm296, %v248, 0
  %v307 = vsel %vm296, %v249, 0
  %v310 = vsel %vm296, %v250, 0
  %v313 = vsel %vm296, %v251, 0
  %v316 = vsel %vm296, %v252, 0
  %v319 = vsel %vm296, %v253, 0
  %v322 = vsel %vm296, %v254, 0
  %v325 = vsel %vm296, %v255, 0
  %v328 = vsel %vm296, %v256, 0
  %v331 = vsel %vm296, %v257, 0
  %v334 = vsel %vm296, %v258, 0
  %v337 = vsel %vm296, %v259, 0
  %v340 = vsel %vm296, %v260, 0
  %v343 = vsel %vm296, %v261, 0
  %v346 = vsel %vm296, %v262, 0
  %v349 = vsel %vm296, %v263, 0
  %v352 = vsel %vm296, %v264, 0
  %v355 = vsel %vm296, %v265, 0
  %v358 = vsel %vm296, %v266, 0
  %v361 = vsel %vm296, %v267, 0
  %v364 = vsel %vm296, %v268, 0
  %v367 = vsel %vm296, %v269, 0
  %v370 = vsel %vm296, %v270, 0
  %v373 = vsel %vm296, %v271, 0
  %v376 = vsel %vm296, %v272, 0
  %v379 = vsel %vm296, %v273, 0
  %v382 = vsel %vm296, %v274, 0
  %v385 = vsel %vm296, %v275, 0
  %v388 = vsel %vm296, %v276, 0
  %v391 = vsel %vm296, %v277, 0
  %393 = vmatprep.subr.bf16.mxu0 0
  %394 = vmatpush1.bf16.msra.mxu0 %v290
  %395 = vmatprep.subr.bf16.mxu0 0
  %396 = vmatpush1.bf16.msra.mxu0 %v291
  %397 = vmatprep.subr.bf16.mxu0 0
  %398 = vmatpush1.bf16.msra.mxu0 %v292
  %399 = vmatprep.subr.bf16.mxu0 0
  %400 = vmatpush1.bf16.msra.mxu0 0
  %401 = vmatprep.subr.bf16.mxu0 0
  %402 = vmatpush1.bf16.msra.mxu0 0
  %403 = vmatprep.subr.bf16.mxu0 0
  %404 = vmatpush1.bf16.msra.mxu0 0
  %405 = vmatprep.subr.bf16.mxu0 0
  %406 = vmatpush1.bf16.msra.mxu0 0
  %407 = vmatprep.subr.bf16.mxu0 0
  %408 = vmatpush1.bf16.msra.mxu0 0
  %409 = vmatprep.subr.bf16.mxu0 0
  %410 = vmatpush1.bf16.msra.mxu0 0
  %411 = vmatprep.subr.bf16.mxu0 0
  %412 = vmatpush1.bf16.msra.mxu0 0
  %413 = vmatprep.subr.bf16.mxu0 0
  %414 = vmatpush1.bf16.msra.mxu0 0
  %415 = vmatprep.subr.bf16.mxu0 0
  %416 = vmatpush1.bf16.msra.mxu0 0
  %417 = vmatprep.subr.bf16.mxu0 0
  %418 = vmatpush1.bf16.msra.mxu0 0
  %419 = vmatprep.subr.bf16.mxu0 0
  %420 = vmatpush1.bf16.msra.mxu0 0
  %421 = vmatprep.subr.bf16.mxu0 0
  %422 = vmatpush1.bf16.msra.mxu0 0
  %423 = vmatprep.subr.bf16.mxu0 0
  %424 = vmatpush1.bf16.msra.mxu0 0
  %425 = vmatprep.mubr.bf16.mxu0 0
  %426 = vmatmul.mubr.bf16.gmra.mrb[0].mxu0 %v298
  %v427 = vpop.f32.mrb[0].mxu0
  %v428 = vadd.f32 %v116, %v427
  %v429 = vpop.f32.mrb[0].mxu0
  %v430 = vpop.f32.mrb[0].mxu0
  %v431 = vadd.f32 %v116, %v430
  %v432 = vpop.f32.mrb[0].mxu0
  %433 = vmatprep.mubr.bf16.mxu0 0
  %434 = vmatmul.mubr.bf16.gmra.mrb[0].mxu0 %v301
  %v435 = vpop.f32.mrb[0].mxu0
  %v436 = vadd.f32 %v116, %v435
  %v437 = vpop.f32.mrb[0].mxu0
  %v438 = vpop.f32.mrb[0].mxu0
  %v439 = vadd.f32 %v116, %v438
  %v440 = vpop.f32.mrb[0].mxu0
  %441 = vmatprep.mubr.bf16.mxu0 0
  %442 = vmatmul.mubr.bf16.gmra.mrb[0].mxu0 %v304
  %v443 = vpop.f32.mrb[0].mxu0
  %v444 = vadd.f32 %v116, %v443
  %v445 = vpop.f32.mrb[0].mxu0
  %v446 = vpop.f32.mrb[0].mxu0
  %v447 = vadd.f32 %v116, %v446
  %v448 = vpop.f32.mrb[0].mxu0
  %449 = vmatprep.mubr.bf16.mxu0 0
  %450 = vmatmul.mubr.bf16.gmra.mrb[0].mxu0 %v307
  %v451 = vpop.f32.mrb[0].mxu0
  %v452 = vadd.f32 %v116, %v451
  %v453 = vpop.f32.mrb[0].mxu0
  %v454 = vpop.f32.mrb[0].mxu0
  %v455 = vadd.f32 %v116, %v454
  %v456 = vpop.f32.mrb[0].mxu0
  %457 = vmatprep.mubr.bf16.mxu0 0
  %458 = vmatmul.mubr.bf16.gmra.mrb[0].mxu0 %v310
  %v459 = vpop.f32.mrb[0].mxu0
  %v460 = vadd.f32 %v116, %v459
  %v461 = vpop.f32.mrb[0].mxu0
  %v462 = vpop.f32.mrb[0].mxu0
  %v463 = vadd.f32 %v116, %v462
  %v464 = vpop.f32.mrb[0].mxu0
  %465 = vmatprep.mubr.bf16.mxu0 0
  %466 = vmatmul.mubr.bf16.gmra.mrb[0].mxu0 %v313
  %v467 = vpop.f32.mrb[0].mxu0
  %v468 = vadd.f32 %v116, %v467
  %v469 = vpop.f32.mrb[0].mxu0
  %v470 = vpop.f32.mrb[0].mxu0
  %v471 = vadd.f32 %v116, %v470
  %v472 = vpop.f32.mrb[0].mxu0
  %473 = vmatprep.mubr.bf16.mxu0 0
  %474 = vmatmul.mubr.bf16.gmra.mrb[0].mxu0 %v316
  %v475 = vpop.f32.mrb[0].mxu0
  %v476 = vadd.f32 %v116, %v475
  %v477 = vpop.f32.mrb[0].mxu0
  %v478 = vpop.f32.mrb[0].mxu0
  %v479 = vadd.f32 %v116, %v478
  %v480 = vpop.f32.mrb[0].mxu0
  %481 = vmatprep.mubr.bf16.mxu0 0
  %482 = vmatmul.mubr.bf16.gmra.mrb[0].mxu0 %v319
  %v483 = vpop.f32.mrb[0].mxu0
  %v484 = vadd.f32 %v116, %v483
  %v485 = vpop.f32.mrb[0].mxu0
  %v486 = vpop.f32.mrb[0].mxu0
  %v487 = vadd.f32 %v116, %v486
  %v488 = vpop.f32.mrb[0].mxu0
  %489 = vmatprep.mubr.bf16.mxu0 0
  %490 = vmatmul.mubr.bf16.gmra.mrb[0].mxu0 %v322
  %v491 = vpop.f32.mrb[0].mxu0
  %v492 = vadd.f32 %v116, %v491
  %v493 = vpop.f32.mrb[0].mxu0
  %v494 = vpop.f32.mrb[0].mxu0
  %v495 = vadd.f32 %v116, %v494
  %v496 = vpop.f32.mrb[0].mxu0
  %497 = vmatprep.mubr.bf16.mxu0 0
  %498 = vmatmul.mubr.bf16.gmra.mrb[0].mxu0 %v325
  %v499 = vpop.f32.mrb[0].mxu0
  %v500 = vadd.f32 %v116, %v499
  %v501 = vpop.f32.mrb[0].mxu0
  %v502 = vpop.f32.mrb[0].mxu0
  %v503 = vadd.f32 %v116, %v502
  %v504 = vpop.f32.mrb[0].mxu0
  %505 = vmatprep.mubr.bf16.mxu0 0
  %506 = vmatmul.mubr.bf16.gmra.mrb[0].mxu0 %v328
  %v507 = vpop.f32.mrb[0].mxu0
  %v508 = vadd.f32 %v116, %v507
  %v509 = vpop.f32.mrb[0].mxu0
  %v510 = vpop.f32.mrb[0].mxu0
  %v511 = vadd.f32 %v116, %v510
  %v512 = vpop.f32.mrb[0].mxu0
  %513 = vmatprep.mubr.bf16.mxu0 0
  %514 = vmatmul.mubr.bf16.gmra.mrb[0].mxu0 %v331
  %v515 = vpop.f32.mrb[0].mxu0
  %v516 = vadd.f32 %v116, %v515
  %v517 = vpop.f32.mrb[0].mxu0
  %v518 = vpop.f32.mrb[0].mxu0
  %v519 = vadd.f32 %v116, %v518
  %v520 = vpop.f32.mrb[0].mxu0
  %521 = vmatprep.mubr.bf16.mxu0 0
  %522 = vmatmul.mubr.bf16.gmra.mrb[0].mxu0 %v334
  %v523 = vpop.f32.mrb[0].mxu0
  %v524 = vadd.f32 %v116, %v523
  %v525 = vpop.f32.mrb[0].mxu0
  %v526 = vpop.f32.mrb[0].mxu0
  %v527 = vadd.f32 %v116, %v526
  %v528 = vpop.f32.mrb[0].mxu0
  %529 = vmatprep.mubr.bf16.mxu0 0
  %530 = vmatmul.mubr.bf16.gmra.mrb[0].mxu0 %v337
  %v531 = vpop.f32.mrb[0].mxu0
  %v532 = vadd.f32 %v116, %v531
  %v533 = vpop.f32.mrb[0].mxu0
  %v534 = vpop.f32.mrb[0].mxu0
  %v535 = vadd.f32 %v116, %v534
  %v536 = vpop.f32.mrb[0].mxu0
  %537 = vmatprep.mubr.bf16.mxu0 0
  %538 = vmatmul.mubr.bf16.gmra.mrb[0].mxu0 %v340
  %v539 = vpop.f32.mrb[0].mxu0
  %v540 = vadd.f32 %v116, %v539
  %v541 = vpop.f32.mrb[0].mxu0
  %v542 = vpop.f32.mrb[0].mxu0
  %v543 = vadd.f32 %v116, %v542
  %v544 = vpop.f32.mrb[0].mxu0
  %545 = vmatprep.mubr.bf16.mxu0 0
  %546 = vmatmul.mubr.bf16.gmra.mrb[0].mxu0 %v343
  %v547 = vpop.f32.mrb[0].mxu0
  %v548 = vadd.f32 %v116, %v547
  %v549 = vpop.f32.mrb[0].mxu0
  %v550 = vpop.f32.mrb[0].mxu0
  %v551 = vadd.f32 %v116, %v550
  %v552 = vpop.f32.mrb[0].mxu0
  %553 = vmatprep.mubr.bf16.mxu0 0
  %554 = vmatmul.mubr.bf16.gmra.mrb[0].mxu0 %v346
  %v555 = vpop.f32.mrb[0].mxu0
  %v556 = vadd.f32 %v116, %v555
  %v557 = vpop.f32.mrb[0].mxu0
  %v558 = vpop.f32.mrb[0].mxu0
  %v559 = vadd.f32 %v116, %v558
  %v560 = vpop.f32.mrb[0].mxu0
  %561 = vmatprep.mubr.bf16.mxu0 0
  %562 = vmatmul.mubr.bf16.gmra.mrb[0].mxu0 %v349
  %v563 = vpop.f32.mrb[0].mxu0
  %v564 = vadd.f32 %v116, %v563
  %v565 = vpop.f32.mrb[0].mxu0
  %v566 = vpop.f32.mrb[0].mxu0
  %v567 = vadd.f32 %v116, %v566
  %v568 = vpop.f32.mrb[0].mxu0
  %569 = vmatprep.mubr.bf16.mxu0 0
  %570 = vmatmul.mubr.bf16.gmra.mrb[0].mxu0 %v352
  %v571 = vpop.f32.mrb[0].mxu0
  %v572 = vadd.f32 %v116, %v571
  %v573 = vpop.f32.mrb[0].mxu0
  %v574 = vpop.f32.mrb[0].mxu0
  %v575 = vadd.f32 %v116, %v574
  %v576 = vpop.f32.mrb[0].mxu0
  %577 = vmatprep.mubr.bf16.mxu0 0
  %578 = vmatmul.mubr.bf16.gmra.mrb[0].mxu0 %v355
  %v579 = vpop.f32.mrb[0].mxu0
  %v580 = vadd.f32 %v116, %v579
  %v581 = vpop.f32.mrb[0].mxu0
  %v582 = vpop.f32.mrb[0].mxu0
  %v583 = vadd.f32 %v116, %v582
  %v584 = vpop.f32.mrb[0].mxu0
  %585 = vmatprep.mubr.bf16.mxu0 0
  %586 = vmatmul.mubr.bf16.gmra.mrb[0].mxu0 %v358
  %v587 = vpop.f32.mrb[0].mxu0
  %v588 = vadd.f32 %v116, %v587
  %v589 = vpop.f32.mrb[0].mxu0
  %v590 = vpop.f32.mrb[0].mxu0
  %v591 = vadd.f32 %v116, %v590
  %v592 = vpop.f32.mrb[0].mxu0
  %593 = vmatprep.mubr.bf16.mxu0 0
  %594 = vmatmul.mubr.bf16.gmra.mrb[0].mxu0 %v361
  %v595 = vpop.f32.mrb[0].mxu0
  %v596 = vadd.f32 %v116, %v595
  %v597 = vpop.f32.mrb[0].mxu0
  %v598 = vpop.f32.mrb[0].mxu0
  %v599 = vadd.f32 %v116, %v598
  %v600 = vpop.f32.mrb[0].mxu0
  %601 = vmatprep.mubr.bf16.mxu0 0
  %602 = vmatmul.mubr.bf16.gmra.mrb[0].mxu0 %v364
  %v603 = vpop.f32.mrb[0].mxu0
  %v604 = vadd.f32 %v116, %v603
  %v605 = vpop.f32.mrb[0].mxu0
  %v606 = vpop.f32.mrb[0].mxu0
  %v607 = vadd.f32 %v116, %v606
  %v608 = vpop.f32.mrb[0].mxu0
  %609 = vmatprep.mubr.bf16.mxu0 0
  %610 = vmatmul.mubr.bf16.gmra.mrb[0].mxu0 %v367
  %v611 = vpop.f32.mrb[0].mxu0
  %v612 = vadd.f32 %v116, %v611
  %v613 = vpop.f32.mrb[0].mxu0
  %v614 = vpop.f32.mrb[0].mxu0
  %v615 = vadd.f32 %v116, %v614
  %v616 = vpop.f32.mrb[0].mxu0
  %617 = vmatprep.mubr.bf16.mxu0 0
  %618 = vmatmul.mubr.bf16.gmra.mrb[0].mxu0 %v370
  %v619 = vpop.f32.mrb[0].mxu0
  %v620 = vadd.f32 %v116, %v619
  %v621 = vpop.f32.mrb[0].mxu0
  %v622 = vpop.f32.mrb[0].mxu0
  %v623 = vadd.f32 %v116, %v622
  %v624 = vpop.f32.mrb[0].mxu0
  %625 = vmatprep.mubr.bf16.mxu0 0
  %626 = vmatmul.mubr.bf16.gmra.mrb[0].mxu0 %v373
  %v627 = vpop.f32.mrb[0].mxu0
  %v628 = vadd.f32 %v116, %v627
  %v629 = vpop.f32.mrb[0].mxu0
  %v630 = vpop.f32.mrb[0].mxu0
  %v631 = vadd.f32 %v116, %v630
  %v632 = vpop.f32.mrb[0].mxu0
  %633 = vmatprep.mubr.bf16.mxu0 0
  %634 = vmatmul.mubr.bf16.gmra.mrb[0].mxu0 %v376
  %v635 = vpop.f32.mrb[0].mxu0
  %v636 = vadd.f32 %v116, %v635
  %v637 = vpop.f32.mrb[0].mxu0
  %v638 = vpop.f32.mrb[0].mxu0
  %v639 = vadd.f32 %v116, %v638
  %v640 = vpop.f32.mrb[0].mxu0
  %641 = vmatprep.mubr.bf16.mxu0 0
  %642 = vmatmul.mubr.bf16.gmra.mrb[0].mxu0 %v379
  %v643 = vpop.f32.mrb[0].mxu0
  %v644 = vadd.f32 %v116, %v643
  %v645 = vpop.f32.mrb[0].mxu0
  %v646 = vpop.f32.mrb[0].mxu0
  %v647 = vadd.f32 %v116, %v646
  %v648 = vpop.f32.mrb[0].mxu0
  %649 = vmatprep.mubr.bf16.mxu0 0
  %650 = vmatmul.mubr.bf16.gmra.mrb[0].mxu0 %v382
  %v651 = vpop.f32.mrb[0].mxu0
  %v652 = vadd.f32 %v116, %v651
  %v653 = vpop.f32.mrb[0].mxu0
  %v654 = vpop.f32.mrb[0].mxu0
  %v655 = vadd.f32 %v116, %v654
  %v656 = vpop.f32.mrb[0].mxu0
  %657 = vmatprep.mubr.bf16.mxu0 0
  %658 = vmatmul.mubr.bf16.gmra.mrb[0].mxu0 %v385
  %v659 = vpop.f32.mrb[0].mxu0
  %v660 = vadd.f32 %v116, %v659
  %v661 = vpop.f32.mrb[0].mxu0
  %v662 = vpop.f32.mrb[0].mxu0
  %v663 = vadd.f32 %v116, %v662
  %v664 = vpop.f32.mrb[0].mxu0
  %665 = vmatprep.mubr.bf16.mxu0 0
  %666 = vmatmul.mubr.bf16.gmra.mrb[0].mxu0 %v388
  %v667 = vpop.f32.mrb[0].mxu0
  %v668 = vadd.f32 %v116, %v667
  %v669 = vpop.f32.mrb[0].mxu0
  %v670 = vpop.f32.mrb[0].mxu0
  %v671 = vadd.f32 %v116, %v670
  %v672 = vpop.f32.mrb[0].mxu0
  %673 = vmatprep.mubr.bf16.mxu0 0
  %674 = vmatmul.mubr.bf16.gmra.mrb[0].mxu0 %v391
  %v675 = vpop.f32.mrb[0].mxu0
  %v676 = vadd.f32 %v116, %v675
  %v677 = vpop.f32.mrb[0].mxu0
  %v678 = vpop.f32.mrb[0].mxu0
  %v679 = vadd.f32 %v116, %v678
  %v680 = vpop.f32.mrb[0].mxu0
  %681 = vdwg.mxu0
  %vm682 = vcmp.ge.f32.partialorder %v428, 0.0
  %vm683 = vcmp.ge.f32.partialorder %v431, 0.0
  %vm684 = vcmp.ge.f32.partialorder %v436, 0.0
  %vm685 = vcmp.ge.f32.partialorder %v439, 0.0
  %vm686 = vcmp.ge.f32.partialorder %v444, 0.0
  %vm687 = vcmp.ge.f32.partialorder %v447, 0.0
  %vm688 = vcmp.ge.f32.partialorder %v452, 0.0
  %vm689 = vcmp.ge.f32.partialorder %v455, 0.0
  %vm690 = vcmp.ge.f32.partialorder %v460, 0.0
  %vm691 = vcmp.ge.f32.partialorder %v463, 0.0
  %vm692 = vcmp.ge.f32.partialorder %v468, 0.0
  %vm693 = vcmp.ge.f32.partialorder %v471, 0.0
  %vm694 = vcmp.ge.f32.partialorder %v476, 0.0
  %vm695 = vcmp.ge.f32.partialorder %v479, 0.0
  %vm696 = vcmp.ge.f32.partialorder %v484, 0.0
  %vm697 = vcmp.ge.f32.partialorder %v487, 0.0
  %vm698 = vcmp.ge.f32.partialorder %v492, 0.0
  %vm699 = vcmp.ge.f32.partialorder %v495, 0.0
  %vm700 = vcmp.ge.f32.partialorder %v500, 0.0
  %vm701 = vcmp.ge.f32.partialorder %v503, 0.0
  %vm702 = vcmp.ge.f32.partialorder %v508, 0.0
  %vm703 = vcmp.ge.f32.partialorder %v511, 0.0
  %vm704 = vcmp.ge.f32.partialorder %v516, 0.0
  %vm705 = vcmp.ge.f32.partialorder %v519, 0.0
  %vm706 = vcmp.ge.f32.partialorder %v524, 0.0
  %vm707 = vcmp.ge.f32.partialorder %v527, 0.0
  %vm708 = vcmp.ge.f32.partialorder %v532, 0.0
  %vm709 = vcmp.ge.f32.partialorder %v535, 0.0
  %vm710 = vcmp.ge.f32.partialorder %v540, 0.0
  %vm711 = vcmp.ge.f32.partialorder %v543, 0.0
  %vm712 = vcmp.ge.f32.partialorder %v548, 0.0
  %vm713 = vcmp.ge.f32.partialorder %v551, 0.0
  %vm714 = vcmp.ge.f32.partialorder %v556, 0.0
  %vm715 = vcmp.ge.f32.partialorder %v559, 0.0
  %vm716 = vcmp.ge.f32.partialorder %v564, 0.0
  %vm717 = vcmp.ge.f32.partialorder %v567, 0.0
  %vm718 = vcmp.ge.f32.partialorder %v572, 0.0
  %vm719 = vcmp.ge.f32.partialorder %v575, 0.0
  %vm720 = vcmp.ge.f32.partialorder %v580, 0.0
  %vm721 = vcmp.ge.f32.partialorder %v583, 0.0
  %vm722 = vcmp.ge.f32.partialorder %v588, 0.0
  %vm723 = vcmp.ge.f32.partialorder %v591, 0.0
  %vm724 = vcmp.ge.f32.partialorder %v596, 0.0
  %vm725 = vcmp.ge.f32.partialorder %v599, 0.0
  %vm726 = vcmp.ge.f32.partialorder %v604, 0.0
  %vm727 = vcmp.ge.f32.partialorder %v607, 0.0
  %vm728 = vcmp.ge.f32.partialorder %v612, 0.0
  %vm729 = vcmp.ge.f32.partialorder %v615, 0.0
  %vm730 = vcmp.ge.f32.partialorder %v620, 0.0
  %vm731 = vcmp.ge.f32.partialorder %v623, 0.0
  %vm732 = vcmp.ge.f32.partialorder %v628, 0.0
  %vm733 = vcmp.ge.f32.partialorder %v631, 0.0
  %vm734 = vcmp.ge.f32.partialorder %v636, 0.0
  %vm735 = vcmp.ge.f32.partialorder %v639, 0.0
  %vm736 = vcmp.ge.f32.partialorder %v644, 0.0
  %vm737 = vcmp.ge.f32.partialorder %v647, 0.0
  %vm738 = vcmp.ge.f32.partialorder %v652, 0.0
  %vm739 = vcmp.ge.f32.partialorder %v655, 0.0
  %vm740 = vcmp.ge.f32.partialorder %v660, 0.0
  %vm741 = vcmp.ge.f32.partialorder %v663, 0.0
  %vm742 = vcmp.ge.f32.partialorder %v668, 0.0
  %vm743 = vcmp.ge.f32.partialorder %v671, 0.0
  %vm744 = vcmp.ge.f32.partialorder %v676, 0.0
  %vm745 = vcmp.ge.f32.partialorder %v679, 0.0
  %v746 = vmul.f32 %v428, 0.2
  %v747 = vmul.f32 %v431, 0.2
  %v748 = vmul.f32 %v436, 0.2
  %v749 = vmul.f32 %v439, 0.2
  %v750 = vmul.f32 %v444, 0.2
  %v751 = vmul.f32 %v447, 0.2
  %v752 = vmul.f32 %v452, 0.2
  %v753 = vmul.f32 %v455, 0.2
  %v754 = vmul.f32 %v460, 0.2
  %v755 = vmul.f32 %v463, 0.2
  %v756 = vmul.f32 %v468, 0.2
  %v757 = vmul.f32 %v471, 0.2
  %v758 = vmul.f32 %v476, 0.2
  %v759 = vmul.f32 %v479, 0.2
  %v760 = vmul.f32 %v484, 0.2
  %v761 = vmul.f32 %v487, 0.2
  %v762 = vmul.f32 %v492, 0.2
  %v763 = vmul.f32 %v495, 0.2
  %v764 = vmul.f32 %v500, 0.2
  %v765 = vmul.f32 %v503, 0.2
  %v766 = vmul.f32 %v508, 0.2
  %v767 = vmul.f32 %v511, 0.2
  %v768 = vmul.f32 %v516, 0.2
  %v769 = vmul.f32 %v519, 0.2
  %v770 = vmul.f32 %v524, 0.2
  %v771 = vmul.f32 %v527, 0.2
  %v772 = vmul.f32 %v532, 0.2
  %v773 = vmul.f32 %v535, 0.2
  %v774 = vmul.f32 %v540, 0.2
  %v775 = vmul.f32 %v543, 0.2
  %v776 = vmul.f32 %v548, 0.2
  %v777 = vmul.f32 %v551, 0.2
  %v778 = vmul.f32 %v556, 0.2
  %v779 = vmul.f32 %v559, 0.2
  %v780 = vmul.f32 %v564, 0.2
  %v781 = vmul.f32 %v567, 0.2
  %v782 = vmul.f32 %v572, 0.2
  %v783 = vmul.f32 %v575, 0.2
  %v784 = vmul.f32 %v580, 0.2
  %v785 = vmul.f32 %v583, 0.2
  %v786 = vmul.f32 %v588, 0.2
  %v787 = vmul.f32 %v591, 0.2
  %v788 = vmul.f32 %v596, 0.2
  %v789 = vmul.f32 %v599, 0.2
  %v790 = vmul.f32 %v604, 0.2
  %v791 = vmul.f32 %v607, 0.2
  %v792 = vmul.f32 %v612, 0.2
  %v793 = vmul.f32 %v615, 0.2
  %v794 = vmul.f32 %v620, 0.2
  %v795 = vmul.f32 %v623, 0.2
  %v796 = vmul.f32 %v628, 0.2
  %v797 = vmul.f32 %v631, 0.2
  %v798 = vmul.f32 %v636, 0.2
  %v799 = vmul.f32 %v639, 0.2
  %v800 = vmul.f32 %v644, 0.2
  %v801 = vmul.f32 %v647, 0.2
  %v802 = vmul.f32 %v652, 0.2
  %v803 = vmul.f32 %v655, 0.2
  %v804 = vmul.f32 %v660, 0.2
  %v805 = vmul.f32 %v663, 0.2
  %v806 = vmul.f32 %v668, 0.2
  %v807 = vmul.f32 %v671, 0.2
  %v808 = vmul.f32 %v676, 0.2
  %v809 = vmul.f32 %v679, 0.2
  %v810 = vsel %vm682, %v428, %v746
  %v811 = vsel %vm683, %v431, %v747
  %v812 = vsel %vm684, %v436, %v748
  %v813 = vsel %vm685, %v439, %v749
  %v814 = vsel %vm686, %v444, %v750
  %v815 = vsel %vm687, %v447, %v751
  %v816 = vsel %vm688, %v452, %v752
  %v817 = vsel %vm689, %v455, %v753
  %v818 = vsel %vm690, %v460, %v754
  %v819 = vsel %vm691, %v463, %v755
  %v820 = vsel %vm692, %v468, %v756
  %v821 = vsel %vm693, %v471, %v757
  %v822 = vsel %vm694, %v476, %v758
  %v823 = vsel %vm695, %v479, %v759
  %v824 = vsel %vm696, %v484, %v760
  %v825 = vsel %vm697, %v487, %v761
  %v826 = vsel %vm698, %v492, %v762
  %v827 = vsel %vm699, %v495, %v763
  %v828 = vsel %vm700, %v500, %v764
  %v829 = vsel %vm701, %v503, %v765
  %v830 = vsel %vm702, %v508, %v766
  %v831 = vsel %vm703, %v511, %v767
  %v832 = vsel %vm704, %v516, %v768
  %v833 = vsel %vm705, %v519, %v769
  %v834 = vsel %vm706, %v524, %v770
  %v835 = vsel %vm707, %v527, %v771
  %v836 = vsel %vm708, %v532, %v772
  %v837 = vsel %vm709, %v535, %v773
  %v838 = vsel %vm710, %v540, %v774
  %v839 = vsel %vm711, %v543, %v775
  %v840 = vsel %vm712, %v548, %v776
  %v841 = vsel %vm713, %v551, %v777
  %v842 = vsel %vm714, %v556, %v778
  %v843 = vsel %vm715, %v559, %v779
  %v844 = vsel %vm716, %v564, %v780
  %v845 = vsel %vm717, %v567, %v781
  %v846 = vsel %vm718, %v572, %v782
  %v847 = vsel %vm719, %v575, %v783
  %v848 = vsel %vm720, %v580, %v784
  %v849 = vsel %vm721, %v583, %v785
  %v850 = vsel %vm722, %v588, %v786
  %v851 = vsel %vm723, %v591, %v787
  %v852 = vsel %vm724, %v596, %v788
  %v853 = vsel %vm725, %v599, %v789
  %v854 = vsel %vm726, %v604, %v790
  %v855 = vsel %vm727, %v607, %v791
  %v856 = vsel %vm728, %v612, %v792
  %v857 = vsel %vm729, %v615, %v793
  %v858 = vsel %vm730, %v620, %v794
  %v859 = vsel %vm731, %v623, %v795
  %v860 = vsel %vm732, %v628, %v796
  %v861 = vsel %vm733, %v631, %v797
  %v862 = vsel %vm734, %v636, %v798
  %v863 = vsel %vm735, %v639, %v799
  %v864 = vsel %vm736, %v644, %v800
  %v865 = vsel %vm737, %v647, %v801
  %v866 = vsel %vm738, %v652, %v802
  %v867 = vsel %vm739, %v655, %v803
  %v868 = vsel %vm740, %v660, %v804
  %v869 = vsel %vm741, %v663, %v805
  %v870 = vsel %vm742, %v668, %v806
  %v871 = vsel %vm743, %v671, %v807
  %v872 = vsel %vm744, %v676, %v808
  %v873 = vsel %vm745, %v679, %v809
  %v874 = vpack.c.bf16 %v811, %v810
  %v875 = vpack.c.bf16 %v813, %v812
  %v876 = vpack.c.bf16 %v815, %v814
  %v877 = vpack.c.bf16 %v817, %v816
  %v878 = vpack.c.bf16 %v819, %v818
  %v879 = vpack.c.bf16 %v821, %v820
  %v880 = vpack.c.bf16 %v823, %v822
  %v881 = vpack.c.bf16 %v825, %v824
  %v882 = vpack.c.bf16 %v827, %v826
  %v883 = vpack.c.bf16 %v829, %v828
  %v884 = vpack.c.bf16 %v831, %v830
  %v885 = vpack.c.bf16 %v833, %v832
  %v886 = vpack.c.bf16 %v835, %v834
  %v887 = vpack.c.bf16 %v837, %v836
  %v888 = vpack.c.bf16 %v839, %v838
  %v889 = vpack.c.bf16 %v841, %v840
  %v890 = vpack.c.bf16 %v843, %v842
  %v891 = vpack.c.bf16 %v845, %v844
  %v892 = vpack.c.bf16 %v847, %v846
  %v893 = vpack.c.bf16 %v849, %v848
  %v894 = vpack.c.bf16 %v851, %v850
  %v895 = vpack.c.bf16 %v853, %v852
  %v896 = vpack.c.bf16 %v855, %v854
  %v897 = vpack.c.bf16 %v857, %v856
  %v898 = vpack.c.bf16 %v859, %v858
  %v899 = vpack.c.bf16 %v861, %v860
  %v900 = vpack.c.bf16 %v863, %v862
  %v901 = vpack.c.bf16 %v865, %v864
  %v902 = vpack.c.bf16 %v867, %v866
  %v903 = vpack.c.bf16 %v869, %v868
  %v904 = vpack.c.bf16 %v871, %v870
  %v905 = vpack.c.bf16 %v873, %v872
  %906 = vst [vmem:[#allocation2] sm:$0xff] %v874
  %907 = vst [vmem:[#allocation2 + $0x8] sm:$0xff] %v875
  %908 = vst [vmem:[#allocation2 + $0x10] sm:$0xff] %v876
  %909 = vst [vmem:[#allocation2 + $0x18] sm:$0xff] %v877
  %910 = vst [vmem:[#allocation2 + $0x20] sm:$0xff] %v878
  %911 = vst [vmem:[#allocation2 + $0x28] sm:$0xff] %v879
  %912 = vst [vmem:[#allocation2 + $0x30] sm:$0xff] %v880
  %913 = vst [vmem:[#allocation2 + $0x38] sm:$0xff] %v881
  %914 = vst [vmem:[#allocation2 + $0x40] sm:$0xff] %v882
  %915 = vst [vmem:[#allocation2 + $0x48] sm:$0xff] %v883
  %916 = vst [vmem:[#allocation2 + $0x50] sm:$0xff] %v884
  %917 = vst [vmem:[#allocation2 + $0x58] sm:$0xff] %v885
  %918 = vst [vmem:[#allocation2 + $0x60] sm:$0xff] %v886
  %919 = vst [vmem:[#allocation2 + $0x68] sm:$0xff] %v887
  %920 = vst [vmem:[#allocation2 + $0x70] sm:$0xff] %v888
  %921 = vst [vmem:[#allocation2 + $0x78] sm:$0xff] %v889
  %922 = vst [vmem:[#allocation2 + $0x80] sm:$0xff] %v890
  %923 = vst [vmem:[#allocation2 + $0x88] sm:$0xff] %v891
  %924 = vst [vmem:[#allocation2 + $0x90] sm:$0xff] %v892
  %925 = vst [vmem:[#allocation2 + $0x98] sm:$0xff] %v893
  %926 = vst [vmem:[#allocation2 + $0xa0] sm:$0xff] %v894
  %927 = vst [vmem:[#allocation2 + $0xa8] sm:$0xff] %v895
  %928 = vst [vmem:[#allocation2 + $0xb0] sm:$0xff] %v896
  %929 = vst [vmem:[#allocation2 + $0xb8] sm:$0xff] %v897
  %930 = vst [vmem:[#allocation2 + $0xc0] sm:$0xff] %v898
  %931 = vst [vmem:[#allocation2 + $0xc8] sm:$0xff] %v899
  %932 = vst [vmem:[#allocation2 + $0xd0] sm:$0xff] %v900
  %933 = vst [vmem:[#allocation2 + $0xd8] sm:$0xff] %v901
  %934 = vst [vmem:[#allocation2 + $0xe0] sm:$0xff] %v902
  %935 = vst [vmem:[#allocation2 + $0xe8] sm:$0xff] %v903
  %936 = vst [vmem:[#allocation2 + $0xf0] sm:$0xff] %v904
  %937 = vst [vmem:[#allocation2 + $0xf8] sm:$0xff] %v905
  %v938 = vld [vmem:[%s3] sm:$0xff]
  %v939 = vld [vmem:[%s3 + $0x8] sm:$0xff]
  %v940 = vld [vmem:[%s3 + $0x10] sm:$0xff]
  %v941 = vld [vmem:[%s3 + $0x18] sm:$0xff]
  %v942 = vld [vmem:[%s3 + $0x20] sm:$0xff]
  %v943 = vld [vmem:[%s3 + $0x28] sm:$0xff]
  %v944 = vld [vmem:[%s3 + $0x30] sm:$0xff]
  %v945 = vld [vmem:[%s3 + $0x38] sm:$0xff]
  %v946 = vld [vmem:[%s3 + $0x40] sm:$0xff]
  %v947 = vld [vmem:[%s3 + $0x48] sm:$0xff]
  %v948 = vld [vmem:[%s3 + $0x50] sm:$0xff]
  %v949 = vld [vmem:[%s3 + $0x58] sm:$0xff]
  %v950 = vld [vmem:[%s3 + $0x60] sm:$0xff]
  %v951 = vld [vmem:[%s3 + $0x68] sm:$0xff]
  %v952 = vld [vmem:[%s3 + $0x70] sm:$0xff]
  %v953 = vld [vmem:[%s3 + $0x78] sm:$0xff]
  %v954 = vld [vmem:[%s3 + $0x80] sm:$0xff]
  %v955 = vld [vmem:[%s3 + $0x88] sm:$0xff]
  %v956 = vld [vmem:[%s3 + $0x90] sm:$0xff]
  %v957 = vld [vmem:[%s3 + $0x98] sm:$0xff]
  %v958 = vld [vmem:[%s3 + $0xa0] sm:$0xff]
  %v959 = vld [vmem:[%s3 + $0xa8] sm:$0xff]
  %v960 = vld [vmem:[%s3 + $0xb0] sm:$0xff]
  %v961 = vld [vmem:[%s3 + $0xb8] sm:$0xff]
  %v962 = vld [vmem:[%s3 + $0xc0] sm:$0xff]
  %v963 = vld [vmem:[%s3 + $0xc8] sm:$0xff]
  %v964 = vld [vmem:[%s3 + $0xd0] sm:$0xff]
  %v965 = vld [vmem:[%s3 + $0xd8] sm:$0xff]
  %v966 = vld [vmem:[%s3 + $0xe0] sm:$0xff]
  %v967 = vld [vmem:[%s3 + $0xe8] sm:$0xff]
  %v968 = vld [vmem:[%s3 + $0xf0] sm:$0xff]
  %v969 = vld [vmem:[%s3 + $0xf8] sm:$0xff]
  %v970 = vld [vmem:[%s3 + $0x100] sm:$0xff]
  %v971 = vld [vmem:[%s3 + $0x108] sm:$0xff]
  %v972 = vld [vmem:[%s3 + $0x110] sm:$0xff]
  %v973 = vld [vmem:[%s3 + $0x118] sm:$0xff]
  %v974 = vld [vmem:[%s3 + $0x120] sm:$0xff]
  %v975 = vld [vmem:[%s3 + $0x128] sm:$0xff]
  %v976 = vld [vmem:[%s3 + $0x130] sm:$0xff]
  %v977 = vld [vmem:[%s3 + $0x138] sm:$0xff]
  %v978 = vld [vmem:[%s3 + $0x140] sm:$0xff]
  %v979 = vld [vmem:[%s3 + $0x148] sm:$0xff]
  %v980 = vld [vmem:[%s3 + $0x150] sm:$0xff]
  %v981 = vld [vmem:[%s3 + $0x158] sm:$0xff]
  %v982 = vld [vmem:[%s3 + $0x160] sm:$0xff]
  %v983 = vld [vmem:[%s3 + $0x168] sm:$0xff]
  %v984 = vld [vmem:[%s3 + $0x170] sm:$0xff]
  %v985 = vld [vmem:[%s3 + $0x178] sm:$0xff]
  %v986 = vld [vmem:[%s3 + $0x180] sm:$0xff]
  %v987 = vld [vmem:[%s3 + $0x188] sm:$0xff]
  %v988 = vld [vmem:[%s3 + $0x190] sm:$0xff]
  %v989 = vld [vmem:[%s3 + $0x198] sm:$0xff]
  %v990 = vld [vmem:[%s3 + $0x1a0] sm:$0xff]
  %v991 = vld [vmem:[%s3 + $0x1a8] sm:$0xff]
  %v992 = vld [vmem:[%s3 + $0x1b0] sm:$0xff]
  %v993 = vld [vmem:[%s3 + $0x1b8] sm:$0xff]
  %v994 = vld [vmem:[%s3 + $0x1c0] sm:$0xff]
  %v995 = vld [vmem:[%s3 + $0x1c8] sm:$0xff]
  %v996 = vld [vmem:[%s3 + $0x1d0] sm:$0xff]
  %v997 = vld [vmem:[%s3 + $0x1d8] sm:$0xff]
  %v998 = vld [vmem:[%s3 + $0x1e0] sm:$0xff]
  %v999 = vld [vmem:[%s3 + $0x1e8] sm:$0xff]
  %v1000 = vld [vmem:[%s3 + $0x1f0] sm:$0xff]
  %v1001 = vld [vmem:[%s3 + $0x1f8] sm:$0xff]
  %v1002 = vld [vmem:[%s3 + $0x200] sm:$0xff]
  %v1003 = vld [vmem:[%s3 + $0x208] sm:$0xff]
  %v1004 = vld [vmem:[%s3 + $0x210] sm:$0xff]
  %v1005 = vld [vmem:[%s3 + $0x218] sm:$0xff]
  %v1006 = vld [vmem:[%s3 + $0x220] sm:$0xff]
  %v1007 = vld [vmem:[%s3 + $0x228] sm:$0xff]
  %v1008 = vld [vmem:[%s3 + $0x230] sm:$0xff]
  %v1009 = vld [vmem:[%s3 + $0x238] sm:$0xff]
  %v1010 = vld [vmem:[%s3 + $0x240] sm:$0xff]
  %v1011 = vld [vmem:[%s3 + $0x248] sm:$0xff]
  %v1012 = vld [vmem:[%s3 + $0x250] sm:$0xff]
  %v1013 = vld [vmem:[%s3 + $0x258] sm:$0xff]
  %v1014 = vld [vmem:[%s3 + $0x260] sm:$0xff]
  %v1015 = vld [vmem:[%s3 + $0x268] sm:$0xff]
  %v1016 = vld [vmem:[%s3 + $0x270] sm:$0xff]
  %v1017 = vld [vmem:[%s3 + $0x278] sm:$0xff]
  %v1018 = vld [vmem:[%s3 + $0x280] sm:$0xff]
  %v1019 = vld [vmem:[%s3 + $0x288] sm:$0xff]
  %v1020 = vld [vmem:[%s3 + $0x290] sm:$0xff]
  %v1021 = vld [vmem:[%s3 + $0x298] sm:$0xff]
  %v1022 = vld [vmem:[%s3 + $0x2a0] sm:$0xff]
  %v1023 = vld [vmem:[%s3 + $0x2a8] sm:$0xff]
  %v1024 = vld [vmem:[%s3 + $0x2b0] sm:$0xff]
  %v1025 = vld [vmem:[%s3 + $0x2b8] sm:$0xff]
  %v1026 = vld [vmem:[%s3 + $0x2c0] sm:$0xff]
  %v1027 = vld [vmem:[%s3 + $0x2c8] sm:$0xff]
  %v1028 = vld [vmem:[%s3 + $0x2d0] sm:$0xff]
  %v1029 = vld [vmem:[%s3 + $0x2d8] sm:$0xff]
  %v1030 = vld [vmem:[%s3 + $0x2e0] sm:$0xff]
  %v1031 = vld [vmem:[%s3 + $0x2e8] sm:$0xff]
  %v1032 = vld [vmem:[%s3 + $0x2f0] sm:$0xff]
  %v1033 = vld [vmem:[%s3 + $0x2f8] sm:$0xff]
  %v1034 = vld [vmem:[%s3 + $0x300] sm:$0xff]
  %v1035 = vld [vmem:[%s3 + $0x308] sm:$0xff]
  %v1036 = vld [vmem:[%s3 + $0x310] sm:$0xff]
  %v1037 = vld [vmem:[%s3 + $0x318] sm:$0xff]
  %v1038 = vld [vmem:[%s3 + $0x320] sm:$0xff]
  %v1039 = vld [vmem:[%s3 + $0x328] sm:$0xff]
  %v1040 = vld [vmem:[%s3 + $0x330] sm:$0xff]
  %v1041 = vld [vmem:[%s3 + $0x338] sm:$0xff]
  %v1042 = vld [vmem:[%s3 + $0x340] sm:$0xff]
  %v1043 = vld [vmem:[%s3 + $0x348] sm:$0xff]
  %v1044 = vld [vmem:[%s3 + $0x350] sm:$0xff]
  %v1045 = vld [vmem:[%s3 + $0x358] sm:$0xff]
  %v1046 = vld [vmem:[%s3 + $0x360] sm:$0xff]
  %v1047 = vld [vmem:[%s3 + $0x368] sm:$0xff]
  %v1048 = vld [vmem:[%s3 + $0x370] sm:$0xff]
  %v1049 = vld [vmem:[%s3 + $0x378] sm:$0xff]
  %v1050 = vld [vmem:[%s3 + $0x380] sm:$0xff]
  %v1051 = vld [vmem:[%s3 + $0x388] sm:$0xff]
  %v1052 = vld [vmem:[%s3 + $0x390] sm:$0xff]
  %v1053 = vld [vmem:[%s3 + $0x398] sm:$0xff]
  %v1054 = vld [vmem:[%s3 + $0x3a0] sm:$0xff]
  %v1055 = vld [vmem:[%s3 + $0x3a8] sm:$0xff]
  %v1056 = vld [vmem:[%s3 + $0x3b0] sm:$0xff]
  %v1057 = vld [vmem:[%s3 + $0x3b8] sm:$0xff]
  %v1058 = vld [vmem:[%s3 + $0x3c0] sm:$0xff]
  %v1059 = vld [vmem:[%s3 + $0x3c8] sm:$0xff]
  %v1060 = vld [vmem:[%s3 + $0x3d0] sm:$0xff]
  %v1061 = vld [vmem:[%s3 + $0x3d8] sm:$0xff]
  %v1062 = vld [vmem:[%s3 + $0x3e0] sm:$0xff]
  %v1063 = vld [vmem:[%s3 + $0x3e8] sm:$0xff]
  %v1064 = vld [vmem:[%s3 + $0x3f0] sm:$0xff]
  %v1065 = vld [vmem:[%s3 + $0x3f8] sm:$0xff]
  %v1066 = vld [vmem:[#allocation2] sm:$0xff]
  %v1067 = vld [vmem:[#allocation2 + $0x8] sm:$0xff]
  %v1068 = vld [vmem:[#allocation2 + $0x10] sm:$0xff]
  %v1069 = vld [vmem:[#allocation2 + $0x18] sm:$0xff]
  %v1070 = vld [vmem:[#allocation2 + $0x20] sm:$0xff]
  %v1071 = vld [vmem:[#allocation2 + $0x28] sm:$0xff]
  %v1072 = vld [vmem:[#allocation2 + $0x30] sm:$0xff]
  %v1073 = vld [vmem:[#allocation2 + $0x38] sm:$0xff]
  %v1074 = vld [vmem:[#allocation2 + $0x40] sm:$0xff]
  %v1075 = vld [vmem:[#allocation2 + $0x48] sm:$0xff]
  %v1076 = vld [vmem:[#allocation2 + $0x50] sm:$0xff]
  %v1077 = vld [vmem:[#allocation2 + $0x58] sm:$0xff]
  %v1078 = vld [vmem:[#allocation2 + $0x60] sm:$0xff]
  %v1079 = vld [vmem:[#allocation2 + $0x68] sm:$0xff]
  %v1080 = vld [vmem:[#allocation2 + $0x70] sm:$0xff]
  %v1081 = vld [vmem:[#allocation2 + $0x78] sm:$0xff]
  %v1210 = vunpack.c.l.b16 %v938
  %v1211 = vunpack.c.h.b16 %v938
  %v1212 = vunpack.c.l.b16 %v939
  %v1213 = vunpack.c.h.b16 %v939
  %v1214 = vunpack.c.l.b16 %v940
  %v1215 = vunpack.c.h.b16 %v940
  %v1216 = vunpack.c.l.b16 %v941
  %v1217 = vunpack.c.h.b16 %v941
  %v1218 = vunpack.c.l.b16 %v942
  %v1219 = vunpack.c.h.b16 %v942
  %v1220 = vunpack.c.l.b16 %v943
  %v1221 = vunpack.c.h.b16 %v943
  %v1222 = vunpack.c.l.b16 %v944
  %v1223 = vunpack.c.h.b16 %v944
  %v1224 = vunpack.c.l.b16 %v945
  %v1225 = vunpack.c.h.b16 %v945
  %v1226 = vunpack.c.l.b16 %v946
  %v1227 = vunpack.c.h.b16 %v946
  %v1228 = vunpack.c.l.b16 %v947
  %v1229 = vunpack.c.h.b16 %v947
  %v1230 = vunpack.c.l.b16 %v948
  %v1231 = vunpack.c.h.b16 %v948
  %v1232 = vunpack.c.l.b16 %v949
  %v1233 = vunpack.c.h.b16 %v949
  %v1234 = vunpack.c.l.b16 %v950
  %v1235 = vunpack.c.h.b16 %v950
  %v1236 = vunpack.c.l.b16 %v951
  %v1237 = vunpack.c.h.b16 %v951
  %v1238 = vunpack.c.l.b16 %v952
  %v1239 = vunpack.c.h.b16 %v952
  %v1240 = vunpack.c.l.b16 %v953
  %v1241 = vunpack.c.h.b16 %v953
  %v1242 = vunpack.c.l.b16 %v954
  %v1243 = vunpack.c.h.b16 %v954
  %v1244 = vunpack.c.l.b16 %v955
  %v1245 = vunpack.c.h.b16 %v955
  %v1246 = vunpack.c.l.b16 %v956
  %v1247 = vunpack.c.h.b16 %v956
  %v1248 = vunpack.c.l.b16 %v957
  %v1249 = vunpack.c.h.b16 %v957
  %v1250 = vunpack.c.l.b16 %v958
  %v1251 = vunpack.c.h.b16 %v958
  %v1252 = vunpack.c.l.b16 %v959
  %v1253 = vunpack.c.h.b16 %v959
  %v1254 = vunpack.c.l.b16 %v960
  %v1255 = vunpack.c.h.b16 %v960
  %v1256 = vunpack.c.l.b16 %v961
  %v1257 = vunpack.c.h.b16 %v961
  %v1258 = vunpack.c.l.b16 %v962
  %v1259 = vunpack.c.h.b16 %v962
  %v1260 = vunpack.c.l.b16 %v963
  %v1261 = vunpack.c.h.b16 %v963
  %v1262 = vunpack.c.l.b16 %v964
  %v1263 = vunpack.c.h.b16 %v964
  %v1264 = vunpack.c.l.b16 %v965
  %v1265 = vunpack.c.h.b16 %v965
  %v1266 = vunpack.c.l.b16 %v966
  %v1267 = vunpack.c.h.b16 %v966
  %v1268 = vunpack.c.l.b16 %v967
  %v1269 = vunpack.c.h.b16 %v967
  %v1270 = vunpack.c.l.b16 %v968
  %v1271 = vunpack.c.h.b16 %v968
  %v1272 = vunpack.c.l.b16 %v969
  %v1273 = vunpack.c.h.b16 %v969
  %v1274 = vunpack.c.l.b16 %v970
  %v1275 = vunpack.c.h.b16 %v970
  %v1276 = vunpack.c.l.b16 %v971
  %v1277 = vunpack.c.h.b16 %v971
  %v1278 = vunpack.c.l.b16 %v972
  %v1279 = vunpack.c.h.b16 %v972
  %v1280 = vunpack.c.l.b16 %v973
  %v1281 = vunpack.c.h.b16 %v973
  %v1282 = vunpack.c.l.b16 %v974
  %v1283 = vunpack.c.h.b16 %v974
  %v1284 = vunpack.c.l.b16 %v975
  %v1285 = vunpack.c.h.b16 %v975
  %v1286 = vunpack.c.l.b16 %v976
  %v1287 = vunpack.c.h.b16 %v976
  %v1288 = vunpack.c.l.b16 %v977
  %v1289 = vunpack.c.h.b16 %v977
  %v1290 = vunpack.c.l.b16 %v978
  %v1291 = vunpack.c.h.b16 %v978
  %v1292 = vunpack.c.l.b16 %v979
  %v1293 = vunpack.c.h.b16 %v979
  %v1294 = vunpack.c.l.b16 %v980
  %v1295 = vunpack.c.h.b16 %v980
  %v1296 = vunpack.c.l.b16 %v981
  %v1297 = vunpack.c.h.b16 %v981
  %v1298 = vunpack.c.l.b16 %v982
  %v1299 = vunpack.c.h.b16 %v982
  %v1300 = vunpack.c.l.b16 %v983
  %v1301 = vunpack.c.h.b16 %v983
  %v1302 = vunpack.c.l.b16 %v984
  %v1303 = vunpack.c.h.b16 %v984
  %v1304 = vunpack.c.l.b16 %v985
  %v1305 = vunpack.c.h.b16 %v985
  %v1306 = vunpack.c.l.b16 %v986
  %v1307 = vunpack.c.h.b16 %v986
  %v1308 = vunpack.c.l.b16 %v987
  %v1309 = vunpack.c.h.b16 %v987
  %v1310 = vunpack.c.l.b16 %v988
  %v1311 = vunpack.c.h.b16 %v988
  %v1312 = vunpack.c.l.b16 %v989
  %v1313 = vunpack.c.h.b16 %v989
  %v1314 = vunpack.c.l.b16 %v990
  %v1315 = vunpack.c.h.b16 %v990
  %v1316 = vunpack.c.l.b16 %v991
  %v1317 = vunpack.c.h.b16 %v991
  %v1318 = vunpack.c.l.b16 %v992
  %v1319 = vunpack.c.h.b16 %v992
  %v1320 = vunpack.c.l.b16 %v993
  %v1321 = vunpack.c.h.b16 %v993
  %v1322 = vunpack.c.l.b16 %v994
  %v1323 = vunpack.c.h.b16 %v994
  %v1324 = vunpack.c.l.b16 %v995
  %v1325 = vunpack.c.h.b16 %v995
  %v1326 = vunpack.c.l.b16 %v996
  %v1327 = vunpack.c.h.b16 %v996
  %v1328 = vunpack.c.l.b16 %v997
  %v1329 = vunpack.c.h.b16 %v997
  %v1330 = vunpack.c.l.b16 %v998
  %v1331 = vunpack.c.h.b16 %v998
  %v1332 = vunpack.c.l.b16 %v999
  %v1333 = vunpack.c.h.b16 %v999
  %v1334 = vunpack.c.l.b16 %v1000
  %v1335 = vunpack.c.h.b16 %v1000
  %v1336 = vunpack.c.l.b16 %v1001
  %v1337 = vunpack.c.h.b16 %v1001
  %v1338 = vunpack.c.l.b16 %v1002
  %v1339 = vunpack.c.h.b16 %v1002
  %v1340 = vunpack.c.l.b16 %v1003
  %v1341 = vunpack.c.h.b16 %v1003
  %v1342 = vunpack.c.l.b16 %v1004
  %v1343 = vunpack.c.h.b16 %v1004
  %v1344 = vunpack.c.l.b16 %v1005
  %v1345 = vunpack.c.h.b16 %v1005
  %v1346 = vunpack.c.l.b16 %v1006
  %v1347 = vunpack.c.h.b16 %v1006
  %v1348 = vunpack.c.l.b16 %v1007
  %v1349 = vunpack.c.h.b16 %v1007
  %v1350 = vunpack.c.l.b16 %v1008
  %v1351 = vunpack.c.h.b16 %v1008
  %v1352 = vunpack.c.l.b16 %v1009
  %v1353 = vunpack.c.h.b16 %v1009
  %v1354 = vunpack.c.l.b16 %v1010
  %v1355 = vunpack.c.h.b16 %v1010
  %v1356 = vunpack.c.l.b16 %v1011
  %v1357 = vunpack.c.h.b16 %v1011
  %v1358 = vunpack.c.l.b16 %v1012
  %v1359 = vunpack.c.h.b16 %v1012
  %v1360 = vunpack.c.l.b16 %v1013
  %v1361 = vunpack.c.h.b16 %v1013
  %v1362 = vunpack.c.l.b16 %v1014
  %v1363 = vunpack.c.h.b16 %v1014
  %v1364 = vunpack.c.l.b16 %v1015
  %v1365 = vunpack.c.h.b16 %v1015
  %v1366 = vunpack.c.l.b16 %v1016
  %v1367 = vunpack.c.h.b16 %v1016
  %v1368 = vunpack.c.l.b16 %v1017
  %v1369 = vunpack.c.h.b16 %v1017
  %v1370 = vunpack.c.l.b16 %v1018
  %v1371 = vunpack.c.h.b16 %v1018
  %v1372 = vunpack.c.l.b16 %v1019
  %v1373 = vunpack.c.h.b16 %v1019
  %v1374 = vunpack.c.l.b16 %v1020
  %v1375 = vunpack.c.h.b16 %v1020
  %v1376 = vunpack.c.l.b16 %v1021
  %v1377 = vunpack.c.h.b16 %v1021
  %v1378 = vunpack.c.l.b16 %v1022
  %v1379 = vunpack.c.h.b16 %v1022
  %v1380 = vunpack.c.l.b16 %v1023
  %v1381 = vunpack.c.h.b16 %v1023
  %v1382 = vunpack.c.l.b16 %v1024
  %v1383 = vunpack.c.h.b16 %v1024
  %v1384 = vunpack.c.l.b16 %v1025
  %v1385 = vunpack.c.h.b16 %v1025
  %v1386 = vunpack.c.l.b16 %v1026
  %v1387 = vunpack.c.h.b16 %v1026
  %v1388 = vunpack.c.l.b16 %v1027
  %v1389 = vunpack.c.h.b16 %v1027
  %v1390 = vunpack.c.l.b16 %v1028
  %v1391 = vunpack.c.h.b16 %v1028
  %v1392 = vunpack.c.l.b16 %v1029
  %v1393 = vunpack.c.h.b16 %v1029
  %v1394 = vunpack.c.l.b16 %v1030
  %v1395 = vunpack.c.h.b16 %v1030
  %v1396 = vunpack.c.l.b16 %v1031
  %v1397 = vunpack.c.h.b16 %v1031
  %v1398 = vunpack.c.l.b16 %v1032
  %v1399 = vunpack.c.h.b16 %v1032
  %v1400 = vunpack.c.l.b16 %v1033
  %v1401 = vunpack.c.h.b16 %v1033
  %v1402 = vunpack.c.l.b16 %v1034
  %v1403 = vunpack.c.h.b16 %v1034
  %v1404 = vunpack.c.l.b16 %v1035
  %v1405 = vunpack.c.h.b16 %v1035
  %v1406 = vunpack.c.l.b16 %v1036
  %v1407 = vunpack.c.h.b16 %v1036
  %v1408 = vunpack.c.l.b16 %v1037
  %v1409 = vunpack.c.h.b16 %v1037
  %v1410 = vunpack.c.l.b16 %v1038
  %v1411 = vunpack.c.h.b16 %v1038
  %v1412 = vunpack.c.l.b16 %v1039
  %v1413 = vunpack.c.h.b16 %v1039
  %v1414 = vunpack.c.l.b16 %v1040
  %v1415 = vunpack.c.h.b16 %v1040
  %v1416 = vunpack.c.l.b16 %v1041
  %v1417 = vunpack.c.h.b16 %v1041
  %v1418 = vunpack.c.l.b16 %v1042
  %v1419 = vunpack.c.h.b16 %v1042
  %v1420 = vunpack.c.l.b16 %v1043
  %v1421 = vunpack.c.h.b16 %v1043
  %v1422 = vunpack.c.l.b16 %v1044
  %v1423 = vunpack.c.h.b16 %v1044
  %v1424 = vunpack.c.l.b16 %v1045
  %v1425 = vunpack.c.h.b16 %v1045
  %v1426 = vunpack.c.l.b16 %v1046
  %v1427 = vunpack.c.h.b16 %v1046
  %v1428 = vunpack.c.l.b16 %v1047
  %v1429 = vunpack.c.h.b16 %v1047
  %v1430 = vunpack.c.l.b16 %v1048
  %v1431 = vunpack.c.h.b16 %v1048
  %v1432 = vunpack.c.l.b16 %v1049
  %v1433 = vunpack.c.h.b16 %v1049
  %v1434 = vunpack.c.l.b16 %v1050
  %v1435 = vunpack.c.h.b16 %v1050
  %v1436 = vunpack.c.l.b16 %v1051
  %v1437 = vunpack.c.h.b16 %v1051
  %v1438 = vunpack.c.l.b16 %v1052
  %v1439 = vunpack.c.h.b16 %v1052
  %v1440 = vunpack.c.l.b16 %v1053
  %v1441 = vunpack.c.h.b16 %v1053
  %v1442 = vunpack.c.l.b16 %v1054
  %v1443 = vunpack.c.h.b16 %v1054
  %v1444 = vunpack.c.l.b16 %v1055
  %v1445 = vunpack.c.h.b16 %v1055
  %v1446 = vunpack.c.l.b16 %v1056
  %v1447 = vunpack.c.h.b16 %v1056
  %v1448 = vunpack.c.l.b16 %v1057
  %v1449 = vunpack.c.h.b16 %v1057
  %v1450 = vunpack.c.l.b16 %v1058
  %v1451 = vunpack.c.h.b16 %v1058
  %v1452 = vunpack.c.l.b16 %v1059
  %v1453 = vunpack.c.h.b16 %v1059
  %v1454 = vunpack.c.l.b16 %v1060
  %v1455 = vunpack.c.h.b16 %v1060
  %v1456 = vunpack.c.l.b16 %v1061
  %v1457 = vunpack.c.h.b16 %v1061
  %v1458 = vunpack.c.l.b16 %v1062
  %v1459 = vunpack.c.h.b16 %v1062
  %v1460 = vunpack.c.l.b16 %v1063
  %v1461 = vunpack.c.h.b16 %v1063
  %v1462 = vunpack.c.l.b16 %v1064
  %v1463 = vunpack.c.h.b16 %v1064
  %v1464 = vunpack.c.l.b16 %v1065
  %v1465 = vunpack.c.h.b16 %v1065
  %v1466 = vpack.c.b16 %v1212, %v1210
  %v1467 = vpack.c.b16 %v1213, %v1211
  %v1468 = vpack.c.b16 %v1216, %v1214
  %v1469 = vpack.c.b16 %v1217, %v1215
  %v1470 = vpack.c.b16 %v1220, %v1218
  %v1471 = vpack.c.b16 %v1221, %v1219
  %v1472 = vpack.c.b16 %v1224, %v1222
  %v1473 = vpack.c.b16 %v1225, %v1223
  %v1474 = vpack.c.b16 %v1228, %v1226
  %v1475 = vpack.c.b16 %v1229, %v1227
  %v1476 = vpack.c.b16 %v1232, %v1230
  %v1477 = vpack.c.b16 %v1233, %v1231
  %v1478 = vpack.c.b16 %v1236, %v1234
  %v1479 = vpack.c.b16 %v1237, %v1235
  %v1480 = vpack.c.b16 %v1240, %v1238
  %v1481 = vpack.c.b16 %v1241, %v1239
  %v1482 = vpack.c.b16 %v1244, %v1242
  %v1483 = vpack.c.b16 %v1245, %v1243
  %v1484 = vpack.c.b16 %v1248, %v1246
  %v1485 = vpack.c.b16 %v1249, %v1247
  %v1486 = vpack.c.b16 %v1252, %v1250
  %v1487 = vpack.c.b16 %v1253, %v1251
  %v1488 = vpack.c.b16 %v1256, %v1254
  %v1489 = vpack.c.b16 %v1257, %v1255
  %v1490 = vpack.c.b16 %v1260, %v1258
  %v1491 = vpack.c.b16 %v1261, %v1259
  %v1492 = vpack.c.b16 %v1264, %v1262
  %v1493 = vpack.c.b16 %v1265, %v1263
  %v1494 = vpack.c.b16 %v1268, %v1266
  %v1495 = vpack.c.b16 %v1269, %v1267
  %v1496 = vpack.c.b16 %v1272, %v1270
  %v1497 = vpack.c.b16 %v1273, %v1271
  %v1498 = vpack.c.b16 %v1276, %v1274
  %v1499 = vpack.c.b16 %v1277, %v1275
  %v1500 = vpack.c.b16 %v1280, %v1278
  %v1501 = vpack.c.b16 %v1281, %v1279
  %v1502 = vpack.c.b16 %v1284, %v1282
  %v1503 = vpack.c.b16 %v1285, %v1283
  %v1504 = vpack.c.b16 %v1288, %v1286
  %v1505 = vpack.c.b16 %v1289, %v1287
  %v1506 = vpack.c.b16 %v1292, %v1290
  %v1507 = vpack.c.b16 %v1293, %v1291
  %v1508 = vpack.c.b16 %v1296, %v1294
  %v1509 = vpack.c.b16 %v1297, %v1295
  %v1510 = vpack.c.b16 %v1300, %v1298
  %v1511 = vpack.c.b16 %v1301, %v1299
  %v1512 = vpack.c.b16 %v1304, %v1302
  %v1513 = vpack.c.b16 %v1305, %v1303
  %v1514 = vpack.c.b16 %v1308, %v1306
  %v1515 = vpack.c.b16 %v1309, %v1307
  %v1516 = vpack.c.b16 %v1312, %v1310
  %v1517 = vpack.c.b16 %v1313, %v1311
  %v1518 = vpack.c.b16 %v1316, %v1314
  %v1519 = vpack.c.b16 %v1317, %v1315
  %v1520 = vpack.c.b16 %v1320, %v1318
  %v1521 = vpack.c.b16 %v1321, %v1319
  %v1522 = vpack.c.b16 %v1324, %v1322
  %v1523 = vpack.c.b16 %v1325, %v1323
  %v1524 = vpack.c.b16 %v1328, %v1326
  %v1525 = vpack.c.b16 %v1329, %v1327
  %v1526 = vpack.c.b16 %v1332, %v1330
  %v1527 = vpack.c.b16 %v1333, %v1331
  %v1528 = vpack.c.b16 %v1336, %v1334
  %v1529 = vpack.c.b16 %v1337, %v1335
  %v1530 = vpack.c.b16 %v1340, %v1338
  %v1531 = vpack.c.b16 %v1341, %v1339
  %v1532 = vpack.c.b16 %v1344, %v1342
  %v1533 = vpack.c.b16 %v1345, %v1343
  %v1534 = vpack.c.b16 %v1348, %v1346
  %v1535 = vpack.c.b16 %v1349, %v1347
  %v1536 = vpack.c.b16 %v1352, %v1350
  %v1537 = vpack.c.b16 %v1353, %v1351
  %v1538 = vpack.c.b16 %v1356, %v1354
  %v1539 = vpack.c.b16 %v1357, %v1355
  %v1540 = vpack.c.b16 %v1360, %v1358
  %v1541 = vpack.c.b16 %v1361, %v1359
  %v1542 = vpack.c.b16 %v1364, %v1362
  %v1543 = vpack.c.b16 %v1365, %v1363
  %v1544 = vpack.c.b16 %v1368, %v1366
  %v1545 = vpack.c.b16 %v1369, %v1367
  %v1546 = vpack.c.b16 %v1372, %v1370
  %v1547 = vpack.c.b16 %v1373, %v1371
  %v1548 = vpack.c.b16 %v1376, %v1374
  %v1549 = vpack.c.b16 %v1377, %v1375
  %v1550 = vpack.c.b16 %v1380, %v1378
  %v1551 = vpack.c.b16 %v1381, %v1379
  %v1552 = vpack.c.b16 %v1384, %v1382
  %v1553 = vpack.c.b16 %v1385, %v1383
  %v1554 = vpack.c.b16 %v1388, %v1386
  %v1555 = vpack.c.b16 %v1389, %v1387
  %v1556 = vpack.c.b16 %v1392, %v1390
  %v1557 = vpack.c.b16 %v1393, %v1391
  %v1558 = vpack.c.b16 %v1396, %v1394
  %v1559 = vpack.c.b16 %v1397, %v1395
  %v1560 = vpack.c.b16 %v1400, %v1398
  %v1561 = vpack.c.b16 %v1401, %v1399
  %v1562 = vpack.c.b16 %v1404, %v1402
  %v1563 = vpack.c.b16 %v1405, %v1403
  %v1564 = vpack.c.b16 %v1408, %v1406
  %v1565 = vpack.c.b16 %v1409, %v1407
  %v1566 = vpack.c.b16 %v1412, %v1410
  %v1567 = vpack.c.b16 %v1413, %v1411
  %v1568 = vpack.c.b16 %v1416, %v1414
  %v1569 = vpack.c.b16 %v1417, %v1415
  %v1570 = vpack.c.b16 %v1420, %v1418
  %v1571 = vpack.c.b16 %v1421, %v1419
  %v1572 = vpack.c.b16 %v1424, %v1422
  %v1573 = vpack.c.b16 %v1425, %v1423
  %v1574 = vpack.c.b16 %v1428, %v1426
  %v1575 = vpack.c.b16 %v1429, %v1427
  %v1576 = vpack.c.b16 %v1432, %v1430
  %v1577 = vpack.c.b16 %v1433, %v1431
  %v1578 = vpack.c.b16 %v1436, %v1434
  %v1579 = vpack.c.b16 %v1437, %v1435
  %v1580 = vpack.c.b16 %v1440, %v1438
  %v1581 = vpack.c.b16 %v1441, %v1439
  %v1582 = vpack.c.b16 %v1444, %v1442
  %v1583 = vpack.c.b16 %v1445, %v1443
  %v1584 = vpack.c.b16 %v1448, %v1446
  %v1585 = vpack.c.b16 %v1449, %v1447
  %v1586 = vpack.c.b16 %v1452, %v1450
  %v1587 = vpack.c.b16 %v1453, %v1451
  %v1588 = vpack.c.b16 %v1456, %v1454
  %v1589 = vpack.c.b16 %v1457, %v1455
  %v1590 = vpack.c.b16 %v1460, %v1458
  %v1591 = vpack.c.b16 %v1461, %v1459
  %v1592 = vpack.c.b16 %v1464, %v1462
  %v1593 = vpack.c.b16 %v1465, %v1463
  %1722 = vmatprep.subr.bf16.mxu0 0
  %1723 = vmatpush1.bf16.msra.mxu0 %v1066
  %1724 = vmatprep.subr.bf16.mxu0 0
  %1725 = vmatpush1.bf16.msra.mxu0 %v1067
  %1726 = vmatprep.subr.bf16.mxu0 0
  %1727 = vmatpush1.bf16.msra.mxu0 %v1068
  %1728 = vmatprep.subr.bf16.mxu0 0
  %1729 = vmatpush1.bf16.msra.mxu0 %v1069
  %1730 = vmatprep.subr.bf16.mxu0 0
  %1731 = vmatpush1.bf16.msra.mxu0 %v1070
  %1732 = vmatprep.subr.bf16.mxu0 0
  %1733 = vmatpush1.bf16.msra.mxu0 %v1071
  %1734 = vmatprep.subr.bf16.mxu0 0
  %1735 = vmatpush1.bf16.msra.mxu0 %v1072
  %1736 = vmatprep.subr.bf16.mxu0 0
  %1737 = vmatpush1.bf16.msra.mxu0 %v1073
  %1738 = vmatprep.subr.bf16.mxu0 0
  %1739 = vmatpush1.bf16.msra.mxu0 %v1074
  %1740 = vmatprep.subr.bf16.mxu0 0
  %1741 = vmatpush1.bf16.msra.mxu0 %v1075
  %1742 = vmatprep.subr.bf16.mxu0 0
  %1743 = vmatpush1.bf16.msra.mxu0 %v1076
  %1744 = vmatprep.subr.bf16.mxu0 0
  %1745 = vmatpush1.bf16.msra.mxu0 %v1077
  %1746 = vmatprep.subr.bf16.mxu0 0
  %1747 = vmatpush1.bf16.msra.mxu0 %v1078
  %1748 = vmatprep.subr.bf16.mxu0 0
  %1749 = vmatpush1.bf16.msra.mxu0 %v1079
  %1750 = vmatprep.subr.bf16.mxu0 0
  %1751 = vmatpush1.bf16.msra.mxu0 %v1080
  %1752 = vmatprep.subr.bf16.mxu0 0
  %1753 = vmatpush1.bf16.msra.mxu0 %v1081
  %1754 = vmatprep.mubr.bf16.mxu0 %v1467
  %1755 = vmatmul.mubr.bf16.gmra.mrb[0].mxu0 %v1466
  %v1756 = vpop.f32.mrb[0].mxu0
  %v1757 = vadd.f32 0.0, %v1756
  %v1758 = vpop.f32.mrb[0].mxu0
  %v1759 = vpop.f32.mrb[0].mxu0
  %v1760 = vadd.f32 0.0, %v1759
  %v1761 = vpop.f32.mrb[0].mxu0
  %1762 = vmatprep.mubr.bf16.mxu0 %v1469
  %1763 = vmatmul.mubr.bf16.gmra.mrb[0].mxu0 %v1468
  %v1764 = vpop.f32.mrb[0].mxu0
  %v1765 = vadd.f32 0.0, %v1764
  %v1766 = vpop.f32.mrb[0].mxu0
  %v1767 = vpop.f32.mrb[0].mxu0
  %v1768 = vadd.f32 0.0, %v1767
  %v1769 = vpop.f32.mrb[0].mxu0
  %1770 = vmatprep.mubr.bf16.mxu0 %v1471
  %1771 = vmatmul.mubr.bf16.gmra.mrb[0].mxu0 %v1470
  %v1772 = vpop.f32.mrb[0].mxu0
  %v1773 = vadd.f32 0.0, %v1772
  %v1774 = vpop.f32.mrb[0].mxu0
  %v1775 = vpop.f32.mrb[0].mxu0
  %v1776 = vadd.f32 0.0, %v1775
  %v1777 = vpop.f32.mrb[0].mxu0
  %1778 = vmatprep.mubr.bf16.mxu0 %v1473
  %1779 = vmatmul.mubr.bf16.gmra.mrb[0].mxu0 %v1472
  %v1780 = vpop.f32.mrb[0].mxu0
  %v1781 = vadd.f32 0.0, %v1780
  %v1782 = vpop.f32.mrb[0].mxu0
  %v1783 = vpop.f32.mrb[0].mxu0
  %v1784 = vadd.f32 0.0, %v1783
  %v1785 = vpop.f32.mrb[0].mxu0
  %1786 = vmatprep.mubr.bf16.mxu0 %v1475
  %1787 = vmatmul.mubr.bf16.gmra.mrb[0].mxu0 %v1474
  %v1788 = vpop.f32.mrb[0].mxu0
  %v1789 = vadd.f32 0.0, %v1788
  %v1790 = vpop.f32.mrb[0].mxu0
  %v1791 = vpop.f32.mrb[0].mxu0
  %v1792 = vadd.f32 0.0, %v1791
  %v1793 = vpop.f32.mrb[0].mxu0
  %1794 = vmatprep.mubr.bf16.mxu0 %v1477
  %1795 = vmatmul.mubr.bf16.gmra.mrb[0].mxu0 %v1476
  %v1796 = vpop.f32.mrb[0].mxu0
  %v1797 = vadd.f32 0.0, %v1796
  %v1798 = vpop.f32.mrb[0].mxu0
  %v1799 = vpop.f32.mrb[0].mxu0
  %v1800 = vadd.f32 0.0, %v1799
  %v1801 = vpop.f32.mrb[0].mxu0
  %1802 = vmatprep.mubr.bf16.mxu0 %v1479
  %1803 = vmatmul.mubr.bf16.gmra.mrb[0].mxu0 %v1478
  %v1804 = vpop.f32.mrb[0].mxu0
  %v1805 = vadd.f32 0.0, %v1804
  %v1806 = vpop.f32.mrb[0].mxu0
  %v1807 = vpop.f32.mrb[0].mxu0
  %v1808 = vadd.f32 0.0, %v1807
  %v1809 = vpop.f32.mrb[0].mxu0
  %1810 = vmatprep.mubr.bf16.mxu0 %v1481
  %1811 = vmatmul.mubr.bf16.gmra.mrb[0].mxu0 %v1480
  %v1812 = vpop.f32.mrb[0].mxu0
  %v1813 = vadd.f32 0.0, %v1812
  %v1814 = vpop.f32.mrb[0].mxu0
  %v1815 = vpop.f32.mrb[0].mxu0
  %v1816 = vadd.f32 0.0, %v1815
  %v1817 = vpop.f32.mrb[0].mxu0
  %1818 = vmatprep.mubr.bf16.mxu0 %v1483
  %1819 = vmatmul.mubr.bf16.gmra.mrb[0].mxu0 %v1482
  %v1820 = vpop.f32.mrb[0].mxu0
  %v1821 = vadd.f32 0.0, %v1820
  %v1822 = vpop.f32.mrb[0].mxu0
  %v1823 = vpop.f32.mrb[0].mxu0
  %v1824 = vadd.f32 0.0, %v1823
  %v1825 = vpop.f32.mrb[0].mxu0
  %1826 = vmatprep.mubr.bf16.mxu0 %v1485
  %1827 = vmatmul.mubr.bf16.gmra.mrb[0].mxu0 %v1484
  %v1828 = vpop.f32.mrb[0].mxu0
  %v1829 = vadd.f32 0.0, %v1828
  %v1830 = vpop.f32.mrb[0].mxu0
  %v1831 = vpop.f32.mrb[0].mxu0
  %v1832 = vadd.f32 0.0, %v1831
  %v1833 = vpop.f32.mrb[0].mxu0
  %1834 = vmatprep.mubr.bf16.mxu0 %v1487
  %1835 = vmatmul.mubr.bf16.gmra.mrb[0].mxu0 %v1486
  %v1836 = vpop.f32.mrb[0].mxu0
  %v1837 = vadd.f32 0.0, %v1836
  %v1838 = vpop.f32.mrb[0].mxu0
  %v1839 = vpop.f32.mrb[0].mxu0
  %v1840 = vadd.f32 0.0, %v1839
  %v1841 = vpop.f32.mrb[0].mxu0
  %1842 = vmatprep.mubr.bf16.mxu0 %v1489
  %1843 = vmatmul.mubr.bf16.gmra.mrb[0].mxu0 %v1488
  %v1844 = vpop.f32.mrb[0].mxu0
  %v1845 = vadd.f32 0.0, %v1844
  %v1846 = vpop.f32.mrb[0].mxu0
  %v1847 = vpop.f32.mrb[0].mxu0
  %v1848 = vadd.f32 0.0, %v1847
  %v1849 = vpop.f32.mrb[0].mxu0
  %1850 = vmatprep.mubr.bf16.mxu0 %v1491
  %1851 = vmatmul.mubr.bf16.gmra.mrb[0].mxu0 %v1490
  %v1852 = vpop.f32.mrb[0].mxu0
  %v1853 = vadd.f32 0.0, %v1852
  %v1854 = vpop.f32.mrb[0].mxu0
  %v1855 = vpop.f32.mrb[0].mxu0
  %v1856 = vadd.f32 0.0, %v1855
  %v1857 = vpop.f32.mrb[0].mxu0
  %1858 = vmatprep.mubr.bf16.mxu0 %v1493
  %1859 = vmatmul.mubr.bf16.gmra.mrb[0].mxu0 %v1492
  %v1860 = vpop.f32.mrb[0].mxu0
  %v1861 = vadd.f32 0.0, %v1860
  %v1862 = vpop.f32.mrb[0].mxu0
  %v1863 = vpop.f32.mrb[0].mxu0
  %v1864 = vadd.f32 0.0, %v1863
  %v1865 = vpop.f32.mrb[0].mxu0
  %1866 = vmatprep.mubr.bf16.mxu0 %v1495
  %1867 = vmatmul.mubr.bf16.gmra.mrb[0].mxu0 %v1494
  %v1868 = vpop.f32.mrb[0].mxu0
  %v1869 = vadd.f32 0.0, %v1868
  %v1870 = vpop.f32.mrb[0].mxu0
  %v1871 = vpop.f32.mrb[0].mxu0
  %v1872 = vadd.f32 0.0, %v1871
  %v1873 = vpop.f32.mrb[0].mxu0
  %1874 = vmatprep.mubr.bf16.mxu0 %v1497
  %1875 = vmatmul.mubr.bf16.gmra.mrb[0].mxu0 %v1496
  %v1876 = vpop.f32.mrb[0].mxu0
  %v1877 = vadd.f32 0.0, %v1876
  %v1878 = vpop.f32.mrb[0].mxu0
  %v1879 = vpop.f32.mrb[0].mxu0
  %v1880 = vadd.f32 0.0, %v1879
  %v1881 = vpop.f32.mrb[0].mxu0
  %1882 = vmatprep.mubr.bf16.mxu0 %v1499
  %1883 = vmatmul.mubr.bf16.gmra.mrb[0].mxu0 %v1498
  %v1884 = vpop.f32.mrb[0].mxu0
  %v1885 = vadd.f32 0.0, %v1884
  %v1886 = vpop.f32.mrb[0].mxu0
  %v1887 = vpop.f32.mrb[0].mxu0
  %v1888 = vadd.f32 0.0, %v1887
  %v1889 = vpop.f32.mrb[0].mxu0
  %1890 = vmatprep.mubr.bf16.mxu0 %v1501
  %1891 = vmatmul.mubr.bf16.gmra.mrb[0].mxu0 %v1500
  %v1892 = vpop.f32.mrb[0].mxu0
  %v1893 = vadd.f32 0.0, %v1892
  %v1894 = vpop.f32.mrb[0].mxu0
  %v1895 = vpop.f32.mrb[0].mxu0
  %v1896 = vadd.f32 0.0, %v1895
  %v1897 = vpop.f32.mrb[0].mxu0
  %1898 = vmatprep.mubr.bf16.mxu0 %v1503
  %1899 = vmatmul.mubr.bf16.gmra.mrb[0].mxu0 %v1502
  %v1900 = vpop.f32.mrb[0].mxu0
  %v1901 = vadd.f32 0.0, %v1900
  %v1902 = vpop.f32.mrb[0].mxu0
  %v1903 = vpop.f32.mrb[0].mxu0
  %v1904 = vadd.f32 0.0, %v1903
  %v1905 = vpop.f32.mrb[0].mxu0
  %1906 = vmatprep.mubr.bf16.mxu0 %v1505
  %1907 = vmatmul.mubr.bf16.gmra.mrb[0].mxu0 %v1504
  %v1908 = vpop.f32.mrb[0].mxu0
  %v1909 = vadd.f32 0.0, %v1908
  %v1910 = vpop.f32.mrb[0].mxu0
  %v1911 = vpop.f32.mrb[0].mxu0
  %v1912 = vadd.f32 0.0, %v1911
  %v1913 = vpop.f32.mrb[0].mxu0
  %1914 = vmatprep.mubr.bf16.mxu0 %v1507
  %1915 = vmatmul.mubr.bf16.gmra.mrb[0].mxu0 %v1506
  %v1916 = vpop.f32.mrb[0].mxu0
  %v1917 = vadd.f32 0.0, %v1916
  %v1918 = vpop.f32.mrb[0].mxu0
  %v1919 = vpop.f32.mrb[0].mxu0
  %v1920 = vadd.f32 0.0, %v1919
  %v1921 = vpop.f32.mrb[0].mxu0
  %1922 = vmatprep.mubr.bf16.mxu0 %v1509
  %1923 = vmatmul.mubr.bf16.gmra.mrb[0].mxu0 %v1508
  %v1924 = vpop.f32.mrb[0].mxu0
  %v1925 = vadd.f32 0.0, %v1924
  %v1926 = vpop.f32.mrb[0].mxu0
  %v1927 = vpop.f32.mrb[0].mxu0
  %v1928 = vadd.f32 0.0, %v1927
  %v1929 = vpop.f32.mrb[0].mxu0
  %1930 = vmatprep.mubr.bf16.mxu0 %v1511
  %1931 = vmatmul.mubr.bf16.gmra.mrb[0].mxu0 %v1510
  %v1932 = vpop.f32.mrb[0].mxu0
  %v1933 = vadd.f32 0.0, %v1932
  %v1934 = vpop.f32.mrb[0].mxu0
  %v1935 = vpop.f32.mrb[0].mxu0
  %v1936 = vadd.f32 0.0, %v1935
  %v1937 = vpop.f32.mrb[0].mxu0
  %1938 = vmatprep.mubr.bf16.mxu0 %v1513
  %1939 = vmatmul.mubr.bf16.gmra.mrb[0].mxu0 %v1512
  %v1940 = vpop.f32.mrb[0].mxu0
  %v1941 = vadd.f32 0.0, %v1940
  %v1942 = vpop.f32.mrb[0].mxu0
  %v1943 = vpop.f32.mrb[0].mxu0
  %v1944 = vadd.f32 0.0, %v1943
  %v1945 = vpop.f32.mrb[0].mxu0
  %1946 = vmatprep.mubr.bf16.mxu0 %v1515
  %1947 = vmatmul.mubr.bf16.gmra.mrb[0].mxu0 %v1514
  %v1948 = vpop.f32.mrb[0].mxu0
  %v1949 = vadd.f32 0.0, %v1948
  %v1950 = vpop.f32.mrb[0].mxu0
  %v1951 = vpop.f32.mrb[0].mxu0
  %v1952 = vadd.f32 0.0, %v1951
  %v1953 = vpop.f32.mrb[0].mxu0
  %1954 = vmatprep.mubr.bf16.mxu0 %v1517
  %1955 = vmatmul.mubr.bf16.gmra.mrb[0].mxu0 %v1516
  %v1956 = vpop.f32.mrb[0].mxu0
  %v1957 = vadd.f32 0.0, %v1956
  %v1958 = vpop.f32.mrb[0].mxu0
  %v1959 = vpop.f32.mrb[0].mxu0
  %v1960 = vadd.f32 0.0, %v1959
  %v1961 = vpop.f32.mrb[0].mxu0
  %1962 = vmatprep.mubr.bf16.mxu0 %v1519
  %1963 = vmatmul.mubr.bf16.gmra.mrb[0].mxu0 %v1518
  %v1964 = vpop.f32.mrb[0].mxu0
  %v1965 = vadd.f32 0.0, %v1964
  %v1966 = vpop.f32.mrb[0].mxu0
  %v1967 = vpop.f32.mrb[0].mxu0
  %v1968 = vadd.f32 0.0, %v1967
  %v1969 = vpop.f32.mrb[0].mxu0
  %1970 = vmatprep.mubr.bf16.mxu0 %v1521
  %1971 = vmatmul.mubr.bf16.gmra.mrb[0].mxu0 %v1520
  %v1972 = vpop.f32.mrb[0].mxu0
  %v1973 = vadd.f32 0.0, %v1972
  %v1974 = vpop.f32.mrb[0].mxu0
  %v1975 = vpop.f32.mrb[0].mxu0
  %v1976 = vadd.f32 0.0, %v1975
  %v1977 = vpop.f32.mrb[0].mxu0
  %1978 = vmatprep.mubr.bf16.mxu0 %v1523
  %1979 = vmatmul.mubr.bf16.gmra.mrb[0].mxu0 %v1522
  %v1980 = vpop.f32.mrb[0].mxu0
  %v1981 = vadd.f32 0.0, %v1980
  %v1982 = vpop.f32.mrb[0].mxu0
  %v1983 = vpop.f32.mrb[0].mxu0
  %v1984 = vadd.f32 0.0, %v1983
  %v1985 = vpop.f32.mrb[0].mxu0
  %1986 = vmatprep.mubr.bf16.mxu0 %v1525
  %1987 = vmatmul.mubr.bf16.gmra.mrb[0].mxu0 %v1524
  %v1988 = vpop.f32.mrb[0].mxu0
  %v1989 = vadd.f32 0.0, %v1988
  %v1990 = vpop.f32.mrb[0].mxu0
  %v1991 = vpop.f32.mrb[0].mxu0
  %v1992 = vadd.f32 0.0, %v1991
  %v1993 = vpop.f32.mrb[0].mxu0
  %1994 = vmatprep.mubr.bf16.mxu0 %v1527
  %1995 = vmatmul.mubr.bf16.gmra.mrb[0].mxu0 %v1526
  %v1996 = vpop.f32.mrb[0].mxu0
  %v1997 = vadd.f32 0.0, %v1996
  %v1998 = vpop.f32.mrb[0].mxu0
  %v1999 = vpop.f32.mrb[0].mxu0
  %v2000 = vadd.f32 0.0, %v1999
  %v2001 = vpop.f32.mrb[0].mxu0
  %2002 = vmatprep.mubr.bf16.mxu0 %v1529
  %2003 = vmatmul.mubr.bf16.gmra.mrb[0].mxu0 %v1528
  %v2004 = vpop.f32.mrb[0].mxu0
  %v2005 = vadd.f32 0.0, %v2004
  %v2006 = vpop.f32.mrb[0].mxu0
  %v2007 = vpop.f32.mrb[0].mxu0
  %v2008 = vadd.f32 0.0, %v2007
  %v2009 = vpop.f32.mrb[0].mxu0
  %2010 = vmatprep.mubr.bf16.mxu0 %v1531
  %2011 = vmatmul.mubr.bf16.gmra.mrb[0].mxu0 %v1530
  %v2012 = vpop.f32.mrb[0].mxu0
  %v2013 = vadd.f32 0.0, %v2012
  %v2014 = vpop.f32.mrb[0].mxu0
  %v2015 = vpop.f32.mrb[0].mxu0
  %v2016 = vadd.f32 0.0, %v2015
  %v2017 = vpop.f32.mrb[0].mxu0
  %2018 = vmatprep.mubr.bf16.mxu0 %v1533
  %2019 = vmatmul.mubr.bf16.gmra.mrb[0].mxu0 %v1532
  %v2020 = vpop.f32.mrb[0].mxu0
  %v2021 = vadd.f32 0.0, %v2020
  %v2022 = vpop.f32.mrb[0].mxu0
  %v2023 = vpop.f32.mrb[0].mxu0
  %v2024 = vadd.f32 0.0, %v2023
  %v2025 = vpop.f32.mrb[0].mxu0
  %2026 = vmatprep.mubr.bf16.mxu0 %v1535
  %2027 = vmatmul.mubr.bf16.gmra.mrb[0].mxu0 %v1534
  %v2028 = vpop.f32.mrb[0].mxu0
  %v2029 = vadd.f32 0.0, %v2028
  %v2030 = vpop.f32.mrb[0].mxu0
  %v2031 = vpop.f32.mrb[0].mxu0
  %v2032 = vadd.f32 0.0, %v2031
  %v2033 = vpop.f32.mrb[0].mxu0
  %2034 = vmatprep.mubr.bf16.mxu0 %v1537
  %2035 = vmatmul.mubr.bf16.gmra.mrb[0].mxu0 %v1536
  %v2036 = vpop.f32.mrb[0].mxu0
  %v2037 = vadd.f32 0.0, %v2036
  %v2038 = vpop.f32.mrb[0].mxu0
  %v2039 = vpop.f32.mrb[0].mxu0
  %v2040 = vadd.f32 0.0, %v2039
  %v2041 = vpop.f32.mrb[0].mxu0
  %2042 = vmatprep.mubr.bf16.mxu0 %v1539
  %2043 = vmatmul.mubr.bf16.gmra.mrb[0].mxu0 %v1538
  %v2044 = vpop.f32.mrb[0].mxu0
  %v2045 = vadd.f32 0.0, %v2044
  %v2046 = vpop.f32.mrb[0].mxu0
  %v2047 = vpop.f32.mrb[0].mxu0
  %v2048 = vadd.f32 0.0, %v2047
  %v2049 = vpop.f32.mrb[0].mxu0
  %2050 = vmatprep.mubr.bf16.mxu0 %v1541
  %2051 = vmatmul.mubr.bf16.gmra.mrb[0].mxu0 %v1540
  %v2052 = vpop.f32.mrb[0].mxu0
  %v2053 = vadd.f32 0.0, %v2052
  %v2054 = vpop.f32.mrb[0].mxu0
  %v2055 = vpop.f32.mrb[0].mxu0
  %v2056 = vadd.f32 0.0, %v2055
  %v2057 = vpop.f32.mrb[0].mxu0
  %2058 = vmatprep.mubr.bf16.mxu0 %v1543
  %2059 = vmatmul.mubr.bf16.gmra.mrb[0].mxu0 %v1542
  %v2060 = vpop.f32.mrb[0].mxu0
  %v2061 = vadd.f32 0.0, %v2060
  %v2062 = vpop.f32.mrb[0].mxu0
  %v2063 = vpop.f32.mrb[0].mxu0
  %v2064 = vadd.f32 0.0, %v2063
  %v2065 = vpop.f32.mrb[0].mxu0
  %2066 = vmatprep.mubr.bf16.mxu0 %v1545
  %2067 = vmatmul.mubr.bf16.gmra.mrb[0].mxu0 %v1544
  %v2068 = vpop.f32.mrb[0].mxu0
  %v2069 = vadd.f32 0.0, %v2068
  %v2070 = vpop.f32.mrb[0].mxu0
  %v2071 = vpop.f32.mrb[0].mxu0
  %v2072 = vadd.f32 0.0, %v2071
  %v2073 = vpop.f32.mrb[0].mxu0
  %2074 = vmatprep.mubr.bf16.mxu0 %v1547
  %2075 = vmatmul.mubr.bf16.gmra.mrb[0].mxu0 %v1546
  %v2076 = vpop.f32.mrb[0].mxu0
  %v2077 = vadd.f32 0.0, %v2076
  %v2078 = vpop.f32.mrb[0].mxu0
  %v2079 = vpop.f32.mrb[0].mxu0
  %v2080 = vadd.f32 0.0, %v2079
  %v2081 = vpop.f32.mrb[0].mxu0
  %2082 = vmatprep.mubr.bf16.mxu0 %v1549
  %2083 = vmatmul.mubr.bf16.gmra.mrb[0].mxu0 %v1548
  %v2084 = vpop.f32.mrb[0].mxu0
  %v2085 = vadd.f32 0.0, %v2084
  %v2086 = vpop.f32.mrb[0].mxu0
  %v2087 = vpop.f32.mrb[0].mxu0
  %v2088 = vadd.f32 0.0, %v2087
  %v2089 = vpop.f32.mrb[0].mxu0
  %2090 = vmatprep.mubr.bf16.mxu0 %v1551
  %2091 = vmatmul.mubr.bf16.gmra.mrb[0].mxu0 %v1550
  %v2092 = vpop.f32.mrb[0].mxu0
  %v2093 = vadd.f32 0.0, %v2092
  %v2094 = vpop.f32.mrb[0].mxu0
  %v2095 = vpop.f32.mrb[0].mxu0
  %v2096 = vadd.f32 0.0, %v2095
  %v2097 = vpop.f32.mrb[0].mxu0
  %2098 = vmatprep.mubr.bf16.mxu0 %v1553
  %2099 = vmatmul.mubr.bf16.gmra.mrb[0].mxu0 %v1552
  %v2100 = vpop.f32.mrb[0].mxu0
  %v2101 = vadd.f32 0.0, %v2100
  %v2102 = vpop.f32.mrb[0].mxu0
  %v2103 = vpop.f32.mrb[0].mxu0
  %v2104 = vadd.f32 0.0, %v2103
  %v2105 = vpop.f32.mrb[0].mxu0
  %2106 = vmatprep.mubr.bf16.mxu0 %v1555
  %2107 = vmatmul.mubr.bf16.gmra.mrb[0].mxu0 %v1554
  %v2108 = vpop.f32.mrb[0].mxu0
  %v2109 = vadd.f32 0.0, %v2108
  %v2110 = vpop.f32.mrb[0].mxu0
  %v2111 = vpop.f32.mrb[0].mxu0
  %v2112 = vadd.f32 0.0, %v2111
  %v2113 = vpop.f32.mrb[0].mxu0
  %2114 = vmatprep.mubr.bf16.mxu0 %v1557
  %2115 = vmatmul.mubr.bf16.gmra.mrb[0].mxu0 %v1556
  %v2116 = vpop.f32.mrb[0].mxu0
  %v2117 = vadd.f32 0.0, %v2116
  %v2118 = vpop.f32.mrb[0].mxu0
  %v2119 = vpop.f32.mrb[0].mxu0
  %v2120 = vadd.f32 0.0, %v2119
  %v2121 = vpop.f32.mrb[0].mxu0
  %2122 = vmatprep.mubr.bf16.mxu0 %v1559
  %2123 = vmatmul.mubr.bf16.gmra.mrb[0].mxu0 %v1558
  %v2124 = vpop.f32.mrb[0].mxu0
  %v2125 = vadd.f32 0.0, %v2124
  %v2126 = vpop.f32.mrb[0].mxu0
  %v2127 = vpop.f32.mrb[0].mxu0
  %v2128 = vadd.f32 0.0, %v2127
  %v2129 = vpop.f32.mrb[0].mxu0
  %2130 = vmatprep.mubr.bf16.mxu0 %v1561
  %2131 = vmatmul.mubr.bf16.gmra.mrb[0].mxu0 %v1560
  %v2132 = vpop.f32.mrb[0].mxu0
  %v2133 = vadd.f32 0.0, %v2132
  %v2134 = vpop.f32.mrb[0].mxu0
  %v2135 = vpop.f32.mrb[0].mxu0
  %v2136 = vadd.f32 0.0, %v2135
  %v2137 = vpop.f32.mrb[0].mxu0
  %2138 = vmatprep.mubr.bf16.mxu0 %v1563
  %2139 = vmatmul.mubr.bf16.gmra.mrb[0].mxu0 %v1562
  %v2140 = vpop.f32.mrb[0].mxu0
  %v2141 = vadd.f32 0.0, %v2140
  %v2142 = vpop.f32.mrb[0].mxu0
  %v2143 = vpop.f32.mrb[0].mxu0
  %v2144 = vadd.f32 0.0, %v2143
  %v2145 = vpop.f32.mrb[0].mxu0
  %2146 = vmatprep.mubr.bf16.mxu0 %v1565
  %2147 = vmatmul.mubr.bf16.gmra.mrb[0].mxu0 %v1564
  %v2148 = vpop.f32.mrb[0].mxu0
  %v2149 = vadd.f32 0.0, %v2148
  %v2150 = vpop.f32.mrb[0].mxu0
  %v2151 = vpop.f32.mrb[0].mxu0
  %v2152 = vadd.f32 0.0, %v2151
  %v2153 = vpop.f32.mrb[0].mxu0
  %2154 = vmatprep.mubr.bf16.mxu0 %v1567
  %2155 = vmatmul.mubr.bf16.gmra.mrb[0].mxu0 %v1566
  %v2156 = vpop.f32.mrb[0].mxu0
  %v2157 = vadd.f32 0.0, %v2156
  %v2158 = vpop.f32.mrb[0].mxu0
  %v2159 = vpop.f32.mrb[0].mxu0
  %v2160 = vadd.f32 0.0, %v2159
  %v2161 = vpop.f32.mrb[0].mxu0
  %2162 = vmatprep.mubr.bf16.mxu0 %v1569
  %2163 = vmatmul.mubr.bf16.gmra.mrb[0].mxu0 %v1568
  %v2164 = vpop.f32.mrb[0].mxu0
  %v2165 = vadd.f32 0.0, %v2164
  %v2166 = vpop.f32.mrb[0].mxu0
  %v2167 = vpop.f32.mrb[0].mxu0
  %v2168 = vadd.f32 0.0, %v2167
  %v2169 = vpop.f32.mrb[0].mxu0
  %2170 = vmatprep.mubr.bf16.mxu0 %v1571
  %2171 = vmatmul.mubr.bf16.gmra.mrb[0].mxu0 %v1570
  %v2172 = vpop.f32.mrb[0].mxu0
  %v2173 = vadd.f32 0.0, %v2172
  %v2174 = vpop.f32.mrb[0].mxu0
  %v2175 = vpop.f32.mrb[0].mxu0
  %v2176 = vadd.f32 0.0, %v2175
  %v2177 = vpop.f32.mrb[0].mxu0
  %2178 = vmatprep.mubr.bf16.mxu0 %v1573
  %2179 = vmatmul.mubr.bf16.gmra.mrb[0].mxu0 %v1572
  %v2180 = vpop.f32.mrb[0].mxu0
  %v2181 = vadd.f32 0.0, %v2180
  %v2182 = vpop.f32.mrb[0].mxu0
  %v2183 = vpop.f32.mrb[0].mxu0
  %v2184 = vadd.f32 0.0, %v2183
  %v2185 = vpop.f32.mrb[0].mxu0
  %2186 = vmatprep.mubr.bf16.mxu0 %v1575
  %2187 = vmatmul.mubr.bf16.gmra.mrb[0].mxu0 %v1574
  %v2188 = vpop.f32.mrb[0].mxu0
  %v2189 = vadd.f32 0.0, %v2188
  %v2190 = vpop.f32.mrb[0].mxu0
  %v2191 = vpop.f32.mrb[0].mxu0
  %v2192 = vadd.f32 0.0, %v2191
  %v2193 = vpop.f32.mrb[0].mxu0
  %2194 = vmatprep.mubr.bf16.mxu0 %v1577
  %2195 = vmatmul.mubr.bf16.gmra.mrb[0].mxu0 %v1576
  %v2196 = vpop.f32.mrb[0].mxu0
  %v2197 = vadd.f32 0.0, %v2196
  %v2198 = vpop.f32.mrb[0].mxu0
  %v2199 = vpop.f32.mrb[0].mxu0
  %v2200 = vadd.f32 0.0, %v2199
  %v2201 = vpop.f32.mrb[0].mxu0
  %2202 = vmatprep.mubr.bf16.mxu0 %v1579
  %2203 = vmatmul.mubr.bf16.gmra.mrb[0].mxu0 %v1578
  %v2204 = vpop.f32.mrb[0].mxu0
  %v2205 = vadd.f32 0.0, %v2204
  %v2206 = vpop.f32.mrb[0].mxu0
  %v2207 = vpop.f32.mrb[0].mxu0
  %v2208 = vadd.f32 0.0, %v2207
  %v2209 = vpop.f32.mrb[0].mxu0
  %2210 = vmatprep.mubr.bf16.mxu0 %v1581
  %2211 = vmatmul.mubr.bf16.gmra.mrb[0].mxu0 %v1580
  %v2212 = vpop.f32.mrb[0].mxu0
  %v2213 = vadd.f32 0.0, %v2212
  %v2214 = vpop.f32.mrb[0].mxu0
  %v2215 = vpop.f32.mrb[0].mxu0
  %v2216 = vadd.f32 0.0, %v2215
  %v2217 = vpop.f32.mrb[0].mxu0
  %2218 = vmatprep.mubr.bf16.mxu0 %v1583
  %2219 = vmatmul.mubr.bf16.gmra.mrb[0].mxu0 %v1582
  %v2220 = vpop.f32.mrb[0].mxu0
  %v2221 = vadd.f32 0.0, %v2220
  %v2222 = vpop.f32.mrb[0].mxu0
  %v2223 = vpop.f32.mrb[0].mxu0
  %v2224 = vadd.f32 0.0, %v2223
  %v2225 = vpop.f32.mrb[0].mxu0
  %2226 = vmatprep.mubr.bf16.mxu0 %v1585
  %2227 = vmatmul.mubr.bf16.gmra.mrb[0].mxu0 %v1584
  %v2228 = vpop.f32.mrb[0].mxu0
  %v2229 = vadd.f32 0.0, %v2228
  %v2230 = vpop.f32.mrb[0].mxu0
  %v2231 = vpop.f32.mrb[0].mxu0
  %v2232 = vadd.f32 0.0, %v2231
  %v2233 = vpop.f32.mrb[0].mxu0
  %2234 = vmatprep.mubr.bf16.mxu0 %v1587
  %2235 = vmatmul.mubr.bf16.gmra.mrb[0].mxu0 %v1586
  %v2236 = vpop.f32.mrb[0].mxu0
  %v2237 = vadd.f32 0.0, %v2236
  %v2238 = vpop.f32.mrb[0].mxu0
  %v2239 = vpop.f32.mrb[0].mxu0
  %v2240 = vadd.f32 0.0, %v2239
  %v2241 = vpop.f32.mrb[0].mxu0
  %2242 = vmatprep.mubr.bf16.mxu0 %v1589
  %2243 = vmatmul.mubr.bf16.gmra.mrb[0].mxu0 %v1588
  %v2244 = vpop.f32.mrb[0].mxu0
  %v2245 = vadd.f32 0.0, %v2244
  %v2246 = vpop.f32.mrb[0].mxu0
  %v2247 = vpop.f32.mrb[0].mxu0
  %v2248 = vadd.f32 0.0, %v2247
  %v2249 = vpop.f32.mrb[0].mxu0
  %2250 = vmatprep.mubr.bf16.mxu0 %v1591
  %2251 = vmatmul.mubr.bf16.gmra.mrb[0].mxu0 %v1590
  %v2252 = vpop.f32.mrb[0].mxu0
  %v2253 = vadd.f32 0.0, %v2252
  %v2254 = vpop.f32.mrb[0].mxu0
  %v2255 = vpop.f32.mrb[0].mxu0
  %v2256 = vadd.f32 0.0, %v2255
  %v2257 = vpop.f32.mrb[0].mxu0
  %2258 = vmatprep.mubr.bf16.mxu0 %v1593
  %2259 = vmatmul.mubr.bf16.gmra.mrb[0].mxu0 %v1592
  %v2260 = vpop.f32.mrb[0].mxu0
  %v2261 = vadd.f32 0.0, %v2260
  %v2262 = vpop.f32.mrb[0].mxu0
  %v2263 = vpop.f32.mrb[0].mxu0
  %v2264 = vadd.f32 0.0, %v2263
  %v2265 = vpop.f32.mrb[0].mxu0
  %2266 = vdwg.mxu0
  %v2267 = vpack.c.bf16 %v1760, %v1757
  %v2268 = vpack.c.bf16 %v1768, %v1765
  %v2269 = vpack.c.bf16 %v1776, %v1773
  %v2270 = vpack.c.bf16 %v1784, %v1781
  %v2271 = vpack.c.bf16 %v1792, %v1789
  %v2272 = vpack.c.bf16 %v1800, %v1797
  %v2273 = vpack.c.bf16 %v1808, %v1805
  %v2274 = vpack.c.bf16 %v1816, %v1813
  %v2275 = vpack.c.bf16 %v1824, %v1821
  %v2276 = vpack.c.bf16 %v1832, %v1829
  %v2277 = vpack.c.bf16 %v1840, %v1837
  %v2278 = vpack.c.bf16 %v1848, %v1845
  %v2279 = vpack.c.bf16 %v1856, %v1853
  %v2280 = vpack.c.bf16 %v1864, %v1861
  %v2281 = vpack.c.bf16 %v1872, %v1869
  %v2282 = vpack.c.bf16 %v1880, %v1877
  %v2283 = vpack.c.bf16 %v1888, %v1885
  %v2284 = vpack.c.bf16 %v1896, %v1893
  %v2285 = vpack.c.bf16 %v1904, %v1901
  %v2286 = vpack.c.bf16 %v1912, %v1909
  %v2287 = vpack.c.bf16 %v1920, %v1917
  %v2288 = vpack.c.bf16 %v1928, %v1925
  %v2289 = vpack.c.bf16 %v1936, %v1933
  %v2290 = vpack.c.bf16 %v1944, %v1941
  %v2291 = vpack.c.bf16 %v1952, %v1949
  %v2292 = vpack.c.bf16 %v1960, %v1957
  %v2293 = vpack.c.bf16 %v1968, %v1965
  %v2294 = vpack.c.bf16 %v1976, %v1973
  %v2295 = vpack.c.bf16 %v1984, %v1981
  %v2296 = vpack.c.bf16 %v1992, %v1989
  %v2297 = vpack.c.bf16 %v2000, %v1997
  %v2298 = vpack.c.bf16 %v2008, %v2005
  %v2299 = vpack.c.bf16 %v2016, %v2013
  %v2300 = vpack.c.bf16 %v2024, %v2021
  %v2301 = vpack.c.bf16 %v2032, %v2029
  %v2302 = vpack.c.bf16 %v2040, %v2037
  %v2303 = vpack.c.bf16 %v2048, %v2045
  %v2304 = vpack.c.bf16 %v2056, %v2053
  %v2305 = vpack.c.bf16 %v2064, %v2061
  %v2306 = vpack.c.bf16 %v2072, %v2069
  %v2307 = vpack.c.bf16 %v2080, %v2077
  %v2308 = vpack.c.bf16 %v2088, %v2085
  %v2309 = vpack.c.bf16 %v2096, %v2093
  %v2310 = vpack.c.bf16 %v2104, %v2101
  %v2311 = vpack.c.bf16 %v2112, %v2109
  %v2312 = vpack.c.bf16 %v2120, %v2117
  %v2313 = vpack.c.bf16 %v2128, %v2125
  %v2314 = vpack.c.bf16 %v2136, %v2133
  %v2315 = vpack.c.bf16 %v2144, %v2141
  %v2316 = vpack.c.bf16 %v2152, %v2149
  %v2317 = vpack.c.bf16 %v2160, %v2157
  %v2318 = vpack.c.bf16 %v2168, %v2165
  %v2319 = vpack.c.bf16 %v2176, %v2173
  %v2320 = vpack.c.bf16 %v2184, %v2181
  %v2321 = vpack.c.bf16 %v2192, %v2189
  %v2322 = vpack.c.bf16 %v2200, %v2197
  %v2323 = vpack.c.bf16 %v2208, %v2205
  %v2324 = vpack.c.bf16 %v2216, %v2213
  %v2325 = vpack.c.bf16 %v2224, %v2221
  %v2326 = vpack.c.bf16 %v2232, %v2229
  %v2327 = vpack.c.bf16 %v2240, %v2237
  %v2328 = vpack.c.bf16 %v2248, %v2245
  %v2329 = vpack.c.bf16 %v2256, %v2253
  %v2330 = vpack.c.bf16 %v2264, %v2261
  %v2395 = vunpack.c.l.b16 %v2267
  %v2396 = vunpack.c.h.b16 %v2267
  %v2397 = vunpack.c.l.b16 %v2268
  %v2398 = vunpack.c.h.b16 %v2268
  %v2399 = vunpack.c.l.b16 %v2269
  %v2400 = vunpack.c.h.b16 %v2269
  %v2401 = vunpack.c.l.b16 %v2270
  %v2402 = vunpack.c.h.b16 %v2270
  %v2403 = vunpack.c.l.b16 %v2271
  %v2404 = vunpack.c.h.b16 %v2271
  %v2405 = vunpack.c.l.b16 %v2272
  %v2406 = vunpack.c.h.b16 %v2272
  %v2407 = vunpack.c.l.b16 %v2273
  %v2408 = vunpack.c.h.b16 %v2273
  %v2409 = vunpack.c.l.b16 %v2274
  %v2410 = vunpack.c.h.b16 %v2274
  %v2411 = vunpack.c.l.b16 %v2275
  %v2412 = vunpack.c.h.b16 %v2275
  %v2413 = vunpack.c.l.b16 %v2276
  %v2414 = vunpack.c.h.b16 %v2276
  %v2415 = vunpack.c.l.b16 %v2277
  %v2416 = vunpack.c.h.b16 %v2277
  %v2417 = vunpack.c.l.b16 %v2278
  %v2418 = vunpack.c.h.b16 %v2278
  %v2419 = vunpack.c.l.b16 %v2279
  %v2420 = vunpack.c.h.b16 %v2279
  %v2421 = vunpack.c.l.b16 %v2280
  %v2422 = vunpack.c.h.b16 %v2280
  %v2423 = vunpack.c.l.b16 %v2281
  %v2424 = vunpack.c.h.b16 %v2281
  %v2425 = vunpack.c.l.b16 %v2282
  %v2426 = vunpack.c.h.b16 %v2282
  %v2427 = vunpack.c.l.b16 %v2283
  %v2428 = vunpack.c.h.b16 %v2283
  %v2429 = vunpack.c.l.b16 %v2284
  %v2430 = vunpack.c.h.b16 %v2284
  %v2431 = vunpack.c.l.b16 %v2285
  %v2432 = vunpack.c.h.b16 %v2285
  %v2433 = vunpack.c.l.b16 %v2286
  %v2434 = vunpack.c.h.b16 %v2286
  %v2435 = vunpack.c.l.b16 %v2287
  %v2436 = vunpack.c.h.b16 %v2287
  %v2437 = vunpack.c.l.b16 %v2288
  %v2438 = vunpack.c.h.b16 %v2288
  %v2439 = vunpack.c.l.b16 %v2289
  %v2440 = vunpack.c.h.b16 %v2289
  %v2441 = vunpack.c.l.b16 %v2290
  %v2442 = vunpack.c.h.b16 %v2290
  %v2443 = vunpack.c.l.b16 %v2291
  %v2444 = vunpack.c.h.b16 %v2291
  %v2445 = vunpack.c.l.b16 %v2292
  %v2446 = vunpack.c.h.b16 %v2292
  %v2447 = vunpack.c.l.b16 %v2293
  %v2448 = vunpack.c.h.b16 %v2293
  %v2449 = vunpack.c.l.b16 %v2294
  %v2450 = vunpack.c.h.b16 %v2294
  %v2451 = vunpack.c.l.b16 %v2295
  %v2452 = vunpack.c.h.b16 %v2295
  %v2453 = vunpack.c.l.b16 %v2296
  %v2454 = vunpack.c.h.b16 %v2296
  %v2455 = vunpack.c.l.b16 %v2297
  %v2456 = vunpack.c.h.b16 %v2297
  %v2457 = vunpack.c.l.b16 %v2298
  %v2458 = vunpack.c.h.b16 %v2298
  %v2459 = vunpack.c.l.b16 %v2299
  %v2460 = vunpack.c.h.b16 %v2299
  %v2461 = vunpack.c.l.b16 %v2300
  %v2462 = vunpack.c.h.b16 %v2300
  %v2463 = vunpack.c.l.b16 %v2301
  %v2464 = vunpack.c.h.b16 %v2301
  %v2465 = vunpack.c.l.b16 %v2302
  %v2466 = vunpack.c.h.b16 %v2302
  %v2467 = vunpack.c.l.b16 %v2303
  %v2468 = vunpack.c.h.b16 %v2303
  %v2469 = vunpack.c.l.b16 %v2304
  %v2470 = vunpack.c.h.b16 %v2304
  %v2471 = vunpack.c.l.b16 %v2305
  %v2472 = vunpack.c.h.b16 %v2305
  %v2473 = vunpack.c.l.b16 %v2306
  %v2474 = vunpack.c.h.b16 %v2306
  %v2475 = vunpack.c.l.b16 %v2307
  %v2476 = vunpack.c.h.b16 %v2307
  %v2477 = vunpack.c.l.b16 %v2308
  %v2478 = vunpack.c.h.b16 %v2308
  %v2479 = vunpack.c.l.b16 %v2309
  %v2480 = vunpack.c.h.b16 %v2309
  %v2481 = vunpack.c.l.b16 %v2310
  %v2482 = vunpack.c.h.b16 %v2310
  %v2483 = vunpack.c.l.b16 %v2311
  %v2484 = vunpack.c.h.b16 %v2311
  %v2485 = vunpack.c.l.b16 %v2312
  %v2486 = vunpack.c.h.b16 %v2312
  %v2487 = vunpack.c.l.b16 %v2313
  %v2488 = vunpack.c.h.b16 %v2313
  %v2489 = vunpack.c.l.b16 %v2314
  %v2490 = vunpack.c.h.b16 %v2314
  %v2491 = vunpack.c.l.b16 %v2315
  %v2492 = vunpack.c.h.b16 %v2315
  %v2493 = vunpack.c.l.b16 %v2316
  %v2494 = vunpack.c.h.b16 %v2316
  %v2495 = vunpack.c.l.b16 %v2317
  %v2496 = vunpack.c.h.b16 %v2317
  %v2497 = vunpack.c.l.b16 %v2318
  %v2498 = vunpack.c.h.b16 %v2318
  %v2499 = vunpack.c.l.b16 %v2319
  %v2500 = vunpack.c.h.b16 %v2319
  %v2501 = vunpack.c.l.b16 %v2320
  %v2502 = vunpack.c.h.b16 %v2320
  %v2503 = vunpack.c.l.b16 %v2321
  %v2504 = vunpack.c.h.b16 %v2321
  %v2505 = vunpack.c.l.b16 %v2322
  %v2506 = vunpack.c.h.b16 %v2322
  %v2507 = vunpack.c.l.b16 %v2323
  %v2508 = vunpack.c.h.b16 %v2323
  %v2509 = vunpack.c.l.b16 %v2324
  %v2510 = vunpack.c.h.b16 %v2324
  %v2511 = vunpack.c.l.b16 %v2325
  %v2512 = vunpack.c.h.b16 %v2325
  %v2513 = vunpack.c.l.b16 %v2326
  %v2514 = vunpack.c.h.b16 %v2326
  %v2515 = vunpack.c.l.b16 %v2327
  %v2516 = vunpack.c.h.b16 %v2327
  %v2517 = vunpack.c.l.b16 %v2328
  %v2518 = vunpack.c.h.b16 %v2328
  %v2519 = vunpack.c.l.b16 %v2329
  %v2520 = vunpack.c.h.b16 %v2329
  %v2521 = vunpack.c.l.b16 %v2330
  %v2522 = vunpack.c.h.b16 %v2330
  %v2523 = vpack.i.b16 %v2397, %v2395
  %v2524 = vpack.i.b16 %v2398, %v2396
  %v2525 = vpack.i.b16 %v2401, %v2399
  %v2526 = vpack.i.b16 %v2402, %v2400
  %v2527 = vpack.i.b16 %v2405, %v2403
  %v2528 = vpack.i.b16 %v2406, %v2404
  %v2529 = vpack.i.b16 %v2409, %v2407
  %v2530 = vpack.i.b16 %v2410, %v2408
  %v2531 = vpack.i.b16 %v2413, %v2411
  %v2532 = vpack.i.b16 %v2414, %v2412
  %v2533 = vpack.i.b16 %v2417, %v2415
  %v2534 = vpack.i.b16 %v2418, %v2416
  %v2535 = vpack.i.b16 %v2421, %v2419
  %v2536 = vpack.i.b16 %v2422, %v2420
  %v2537 = vpack.i.b16 %v2425, %v2423
  %v2538 = vpack.i.b16 %v2426, %v2424
  %v2539 = vpack.i.b16 %v2429, %v2427
  %v2540 = vpack.i.b16 %v2430, %v2428
  %v2541 = vpack.i.b16 %v2433, %v2431
  %v2542 = vpack.i.b16 %v2434, %v2432
  %v2543 = vpack.i.b16 %v2437, %v2435
  %v2544 = vpack.i.b16 %v2438, %v2436
  %v2545 = vpack.i.b16 %v2441, %v2439
  %v2546 = vpack.i.b16 %v2442, %v2440
  %v2547 = vpack.i.b16 %v2445, %v2443
  %v2548 = vpack.i.b16 %v2446, %v2444
  %v2549 = vpack.i.b16 %v2449, %v2447
  %v2550 = vpack.i.b16 %v2450, %v2448
  %v2551 = vpack.i.b16 %v2453, %v2451
  %v2552 = vpack.i.b16 %v2454, %v2452
  %v2553 = vpack.i.b16 %v2457, %v2455
  %v2554 = vpack.i.b16 %v2458, %v2456
  %v2555 = vpack.i.b16 %v2461, %v2459
  %v2556 = vpack.i.b16 %v2462, %v2460
  %v2557 = vpack.i.b16 %v2465, %v2463
  %v2558 = vpack.i.b16 %v2466, %v2464
  %v2559 = vpack.i.b16 %v2469, %v2467
  %v2560 = vpack.i.b16 %v2470, %v2468
  %v2561 = vpack.i.b16 %v2473, %v2471
  %v2562 = vpack.i.b16 %v2474, %v2472
  %v2563 = vpack.i.b16 %v2477, %v2475
  %v2564 = vpack.i.b16 %v2478, %v2476
  %v2565 = vpack.i.b16 %v2481, %v2479
  %v2566 = vpack.i.b16 %v2482, %v2480
  %v2567 = vpack.i.b16 %v2485, %v2483
  %v2568 = vpack.i.b16 %v2486, %v2484
  %v2569 = vpack.i.b16 %v2489, %v2487
  %v2570 = vpack.i.b16 %v2490, %v2488
  %v2571 = vpack.i.b16 %v2493, %v2491
  %v2572 = vpack.i.b16 %v2494, %v2492
  %v2573 = vpack.i.b16 %v2497, %v2495
  %v2574 = vpack.i.b16 %v2498, %v2496
  %v2575 = vpack.i.b16 %v2501, %v2499
  %v2576 = vpack.i.b16 %v2502, %v2500
  %v2577 = vpack.i.b16 %v2505, %v2503
  %v2578 = vpack.i.b16 %v2506, %v2504
  %v2579 = vpack.i.b16 %v2509, %v2507
  %v2580 = vpack.i.b16 %v2510, %v2508
  %v2581 = vpack.i.b16 %v2513, %v2511
  %v2582 = vpack.i.b16 %v2514, %v2512
  %v2583 = vpack.i.b16 %v2517, %v2515
  %v2584 = vpack.i.b16 %v2518, %v2516
  %v2585 = vpack.i.b16 %v2521, %v2519
  %v2586 = vpack.i.b16 %v2522, %v2520
  %v2587 = vcombine.low %v2523, %v2525
  %v2588 = vcombine.high %v2523, %v2525
  %v2589 = vcombine.low %v2527, %v2529
  %v2590 = vcombine.high %v2527, %v2529
  %v2591 = vcombine.low %v2531, %v2533
  %v2592 = vcombine.high %v2531, %v2533
  %v2593 = vcombine.low %v2535, %v2537
  %v2594 = vcombine.high %v2535, %v2537
  %v2596 = vunpack.c.l.s4 1966171168
  %v2597 = vunpack.c.0.s8 %v2596
  %v2598 = vlaneseq
  %v2599 = vshrl.u32 %v2598, 7
  %v2600 = vsub.s32 %v2597, %v2599
  %v2601 = vrot.slane %v2587, %v2600
  %v2603 = vunpack.c.l.s4 1966171168
  %v2604 = vunpack.c.0.s8 %v2603
  %v2605 = vlaneseq
  %v2606 = vshrl.u32 %v2605, 7
  %v2607 = vsub.s32 %v2604, %v2606
  %v2608 = vrot.slane %v2588, %v2607
  %v2610 = vunpack.c.l.s4 1966171168
  %v2611 = vunpack.c.0.s8 %v2610
  %v2612 = vlaneseq
  %v2613 = vshrl.u32 %v2612, 7
  %v2614 = vsub.s32 %v2611, %v2613
  %v2615 = vrot.slane %v2589, %v2614
  %v2617 = vunpack.c.l.s4 1966171168
  %v2618 = vunpack.c.0.s8 %v2617
  %v2619 = vlaneseq
  %v2620 = vshrl.u32 %v2619, 7
  %v2621 = vsub.s32 %v2618, %v2620
  %v2622 = vrot.slane %v2590, %v2621
  %v2624 = vunpack.c.l.s4 1966171168
  %v2625 = vunpack.c.0.s8 %v2624
  %v2626 = vlaneseq
  %v2627 = vshrl.u32 %v2626, 7
  %v2628 = vsub.s32 %v2625, %v2627
  %v2629 = vrot.slane %v2591, %v2628
  %v2631 = vunpack.c.l.s4 1966171168
  %v2632 = vunpack.c.0.s8 %v2631
  %v2633 = vlaneseq
  %v2634 = vshrl.u32 %v2633, 7
  %v2635 = vsub.s32 %v2632, %v2634
  %v2636 = vrot.slane %v2592, %v2635
  %v2638 = vunpack.c.l.s4 1966171168
  %v2639 = vunpack.c.0.s8 %v2638
  %v2640 = vlaneseq
  %v2641 = vshrl.u32 %v2640, 7
  %v2642 = vsub.s32 %v2639, %v2641
  %v2643 = vrot.slane %v2593, %v2642
  %v2645 = vunpack.c.l.s4 1966171168
  %v2646 = vunpack.c.0.s8 %v2645
  %v2647 = vlaneseq
  %v2648 = vshrl.u32 %v2647, 7
  %v2649 = vsub.s32 %v2646, %v2648
  %v2650 = vrot.slane %v2594, %v2649
  %v2651 = vcombine.low %v2601, %v2615
  %v2652 = vcombine.high %v2601, %v2615
  %v2653 = vcombine.low %v2608, %v2622
  %v2654 = vcombine.high %v2608, %v2622
  %v2655 = vcombine.low %v2629, %v2643
  %v2656 = vcombine.high %v2629, %v2643
  %v2657 = vcombine.low %v2636, %v2650
  %v2658 = vcombine.high %v2636, %v2650
  %v2660 = vunpack.c.l.s4 1966171168
  %v2661 = vunpack.c.0.s8 %v2660
  %v2662 = vlaneseq
  %v2663 = vshrl.u32 %v2662, 7
  %v2664 = vsub.s32 %v2661, %v2663
  %v2665 = vrot.slane %v2651, %v2664
  %v2667 = vunpack.c.l.s4 1966171168
  %v2668 = vunpack.c.0.s8 %v2667
  %v2669 = vlaneseq
  %v2670 = vshrl.u32 %v2669, 7
  %v2671 = vsub.s32 %v2668, %v2670
  %v2672 = vrot.slane %v2653, %v2671
  %v2674 = vunpack.c.l.s4 1966171168
  %v2675 = vunpack.c.0.s8 %v2674
  %v2676 = vlaneseq
  %v2677 = vshrl.u32 %v2676, 7
  %v2678 = vsub.s32 %v2675, %v2677
  %v2679 = vrot.slane %v2652, %v2678
  %v2681 = vunpack.c.l.s4 1966171168
  %v2682 = vunpack.c.0.s8 %v2681
  %v2683 = vlaneseq
  %v2684 = vshrl.u32 %v2683, 7
  %v2685 = vsub.s32 %v2682, %v2684
  %v2686 = vrot.slane %v2654, %v2685
  %v2688 = vunpack.c.l.s4 1966171168
  %v2689 = vunpack.c.0.s8 %v2688
  %v2690 = vlaneseq
  %v2691 = vshrl.u32 %v2690, 7
  %v2692 = vsub.s32 %v2689, %v2691
  %v2693 = vrot.slane %v2655, %v2692
  %v2695 = vunpack.c.l.s4 1966171168
  %v2696 = vunpack.c.0.s8 %v2695
  %v2697 = vlaneseq
  %v2698 = vshrl.u32 %v2697, 7
  %v2699 = vsub.s32 %v2696, %v2698
  %v2700 = vrot.slane %v2657, %v2699
  %v2702 = vunpack.c.l.s4 1966171168
  %v2703 = vunpack.c.0.s8 %v2702
  %v2704 = vlaneseq
  %v2705 = vshrl.u32 %v2704, 7
  %v2706 = vsub.s32 %v2703, %v2705
  %v2707 = vrot.slane %v2656, %v2706
  %v2709 = vunpack.c.l.s4 1966171168
  %v2710 = vunpack.c.0.s8 %v2709
  %v2711 = vlaneseq
  %v2712 = vshrl.u32 %v2711, 7
  %v2713 = vsub.s32 %v2710, %v2712
  %v2714 = vrot.slane %v2658, %v2713
  %v2715 = vcombine.low %v2665, %v2693
  %v2716 = vcombine.high %v2665, %v2693
  %v2717 = vcombine.low %v2672, %v2700
  %v2718 = vcombine.high %v2672, %v2700
  %v2719 = vcombine.low %v2679, %v2707
  %v2720 = vcombine.high %v2679, %v2707
  %v2721 = vcombine.low %v2686, %v2714
  %v2722 = vcombine.high %v2686, %v2714
  %v2723 = vcombine.low %v2524, %v2526
  %v2724 = vcombine.high %v2524, %v2526
  %v2725 = vcombine.low %v2528, %v2530
  %v2726 = vcombine.high %v2528, %v2530
  %v2727 = vcombine.low %v2532, %v2534
  %v2728 = vcombine.high %v2532, %v2534
  %v2729 = vcombine.low %v2536, %v2538
  %v2730 = vcombine.high %v2536, %v2538
  %v2732 = vunpack.c.l.s4 1966171168
  %v2733 = vunpack.c.0.s8 %v2732
  %v2734 = vlaneseq
  %v2735 = vshrl.u32 %v2734, 7
  %v2736 = vsub.s32 %v2733, %v2735
  %v2737 = vrot.slane %v2723, %v2736
  %v2739 = vunpack.c.l.s4 1966171168
  %v2740 = vunpack.c.0.s8 %v2739
  %v2741 = vlaneseq
  %v2742 = vshrl.u32 %v2741, 7
  %v2743 = vsub.s32 %v2740, %v2742
  %v2744 = vrot.slane %v2724, %v2743
  %v2746 = vunpack.c.l.s4 1966171168
  %v2747 = vunpack.c.0.s8 %v2746
  %v2748 = vlaneseq
  %v2749 = vshrl.u32 %v2748, 7
  %v2750 = vsub.s32 %v2747, %v2749
  %v2751 = vrot.slane %v2725, %v2750
  %v2753 = vunpack.c.l.s4 1966171168
  %v2754 = vunpack.c.0.s8 %v2753
  %v2755 = vlaneseq
  %v2756 = vshrl.u32 %v2755, 7
  %v2757 = vsub.s32 %v2754, %v2756
  %v2758 = vrot.slane %v2726, %v2757
  %v2760 = vunpack.c.l.s4 1966171168
  %v2761 = vunpack.c.0.s8 %v2760
  %v2762 = vlaneseq
  %v2763 = vshrl.u32 %v2762, 7
  %v2764 = vsub.s32 %v2761, %v2763
  %v2765 = vrot.slane %v2727, %v2764
  %v2767 = vunpack.c.l.s4 1966171168
  %v2768 = vunpack.c.0.s8 %v2767
  %v2769 = vlaneseq
  %v2770 = vshrl.u32 %v2769, 7
  %v2771 = vsub.s32 %v2768, %v2770
  %v2772 = vrot.slane %v2728, %v2771
  %v2774 = vunpack.c.l.s4 1966171168
  %v2775 = vunpack.c.0.s8 %v2774
  %v2776 = vlaneseq
  %v2777 = vshrl.u32 %v2776, 7
  %v2778 = vsub.s32 %v2775, %v2777
  %v2779 = vrot.slane %v2729, %v2778
  %v2781 = vunpack.c.l.s4 1966171168
  %v2782 = vunpack.c.0.s8 %v2781
  %v2783 = vlaneseq
  %v2784 = vshrl.u32 %v2783, 7
  %v2785 = vsub.s32 %v2782, %v2784
  %v2786 = vrot.slane %v2730, %v2785
  %v2787 = vcombine.low %v2737, %v2751
  %v2788 = vcombine.high %v2737, %v2751
  %v2789 = vcombine.low %v2744, %v2758
  %v2790 = vcombine.high %v2744, %v2758
  %v2791 = vcombine.low %v2765, %v2779
  %v2792 = vcombine.high %v2765, %v2779
  %v2793 = vcombine.low %v2772, %v2786
  %v2794 = vcombine.high %v2772, %v2786
  %v2796 = vunpack.c.l.s4 1966171168
  %v2797 = vunpack.c.0.s8 %v2796
  %v2798 = vlaneseq
  %v2799 = vshrl.u32 %v2798, 7
  %v2800 = vsub.s32 %v2797, %v2799
  %v2801 = vrot.slane %v2787, %v2800
  %v2803 = vunpack.c.l.s4 1966171168
  %v2804 = vunpack.c.0.s8 %v2803
  %v2805 = vlaneseq
  %v2806 = vshrl.u32 %v2805, 7
  %v2807 = vsub.s32 %v2804, %v2806
  %v2808 = vrot.slane %v2789, %v2807
  %v2810 = vunpack.c.l.s4 1966171168
  %v2811 = vunpack.c.0.s8 %v2810
  %v2812 = vlaneseq
  %v2813 = vshrl.u32 %v2812, 7
  %v2814 = vsub.s32 %v2811, %v2813
  %v2815 = vrot.slane %v2788, %v2814
  %v2817 = vunpack.c.l.s4 1966171168
  %v2818 = vunpack.c.0.s8 %v2817
  %v2819 = vlaneseq
  %v2820 = vshrl.u32 %v2819, 7
  %v2821 = vsub.s32 %v2818, %v2820
  %v2822 = vrot.slane %v2790, %v2821
  %v2824 = vunpack.c.l.s4 1966171168
  %v2825 = vunpack.c.0.s8 %v2824
  %v2826 = vlaneseq
  %v2827 = vshrl.u32 %v2826, 7
  %v2828 = vsub.s32 %v2825, %v2827
  %v2829 = vrot.slane %v2791, %v2828
  %v2831 = vunpack.c.l.s4 1966171168
  %v2832 = vunpack.c.0.s8 %v2831
  %v2833 = vlaneseq
  %v2834 = vshrl.u32 %v2833, 7
  %v2835 = vsub.s32 %v2832, %v2834
  %v2836 = vrot.slane %v2793, %v2835
  %v2838 = vunpack.c.l.s4 1966171168
  %v2839 = vunpack.c.0.s8 %v2838
  %v2840 = vlaneseq
  %v2841 = vshrl.u32 %v2840, 7
  %v2842 = vsub.s32 %v2839, %v2841
  %v2843 = vrot.slane %v2792, %v2842
  %v2845 = vunpack.c.l.s4 1966171168
  %v2846 = vunpack.c.0.s8 %v2845
  %v2847 = vlaneseq
  %v2848 = vshrl.u32 %v2847, 7
  %v2849 = vsub.s32 %v2846, %v2848
  %v2850 = vrot.slane %v2794, %v2849
  %v2851 = vcombine.low %v2801, %v2829
  %v2852 = vcombine.high %v2801, %v2829
  %v2853 = vcombine.low %v2808, %v2836
  %v2854 = vcombine.high %v2808, %v2836
  %v2855 = vcombine.low %v2815, %v2843
  %v2856 = vcombine.high %v2815, %v2843
  %v2857 = vcombine.low %v2822, %v2850
  %v2858 = vcombine.high %v2822, %v2850
  %v2859 = vcombine.low %v2539, %v2541
  %v2860 = vcombine.high %v2539, %v2541
  %v2861 = vcombine.low %v2543, %v2545
  %v2862 = vcombine.high %v2543, %v2545
  %v2863 = vcombine.low %v2547, %v2549
  %v2864 = vcombine.high %v2547, %v2549
  %v2865 = vcombine.low %v2551, %v2553
  %v2866 = vcombine.high %v2551, %v2553
  %v2868 = vunpack.c.l.s4 1966171168
  %v2869 = vunpack.c.0.s8 %v2868
  %v2870 = vlaneseq
  %v2871 = vshrl.u32 %v2870, 7
  %v2872 = vsub.s32 %v2869, %v2871
  %v2873 = vrot.slane %v2859, %v2872
  %v2875 = vunpack.c.l.s4 1966171168
  %v2876 = vunpack.c.0.s8 %v2875
  %v2877 = vlaneseq
  %v2878 = vshrl.u32 %v2877, 7
  %v2879 = vsub.s32 %v2876, %v2878
  %v2880 = vrot.slane %v2860, %v2879
  %v2882 = vunpack.c.l.s4 1966171168
  %v2883 = vunpack.c.0.s8 %v2882
  %v2884 = vlaneseq
  %v2885 = vshrl.u32 %v2884, 7
  %v2886 = vsub.s32 %v2883, %v2885
  %v2887 = vrot.slane %v2861, %v2886
  %v2889 = vunpack.c.l.s4 1966171168
  %v2890 = vunpack.c.0.s8 %v2889
  %v2891 = vlaneseq
  %v2892 = vshrl.u32 %v2891, 7
  %v2893 = vsub.s32 %v2890, %v2892
  %v2894 = vrot.slane %v2862, %v2893
  %v2896 = vunpack.c.l.s4 1966171168
  %v2897 = vunpack.c.0.s8 %v2896
  %v2898 = vlaneseq
  %v2899 = vshrl.u32 %v2898, 7
  %v2900 = vsub.s32 %v2897, %v2899
  %v2901 = vrot.slane %v2863, %v2900
  %v2903 = vunpack.c.l.s4 1966171168
  %v2904 = vunpack.c.0.s8 %v2903
  %v2905 = vlaneseq
  %v2906 = vshrl.u32 %v2905, 7
  %v2907 = vsub.s32 %v2904, %v2906
  %v2908 = vrot.slane %v2864, %v2907
  %v2910 = vunpack.c.l.s4 1966171168
  %v2911 = vunpack.c.0.s8 %v2910
  %v2912 = vlaneseq
  %v2913 = vshrl.u32 %v2912, 7
  %v2914 = vsub.s32 %v2911, %v2913
  %v2915 = vrot.slane %v2865, %v2914
  %v2917 = vunpack.c.l.s4 1966171168
  %v2918 = vunpack.c.0.s8 %v2917
  %v2919 = vlaneseq
  %v2920 = vshrl.u32 %v2919, 7
  %v2921 = vsub.s32 %v2918, %v2920
  %v2922 = vrot.slane %v2866, %v2921
  %v2923 = vcombine.low %v2873, %v2887
  %v2924 = vcombine.high %v2873, %v2887
  %v2925 = vcombine.low %v2880, %v2894
  %v2926 = vcombine.high %v2880, %v2894
  %v2927 = vcombine.low %v2901, %v2915
  %v2928 = vcombine.high %v2901, %v2915
  %v2929 = vcombine.low %v2908, %v2922
  %v2930 = vcombine.high %v2908, %v2922
  %v2932 = vunpack.c.l.s4 1966171168
  %v2933 = vunpack.c.0.s8 %v2932
  %v2934 = vlaneseq
  %v2935 = vshrl.u32 %v2934, 7
  %v2936 = vsub.s32 %v2933, %v2935
  %v2937 = vrot.slane %v2923, %v2936
  %v2939 = vunpack.c.l.s4 1966171168
  %v2940 = vunpack.c.0.s8 %v2939
  %v2941 = vlaneseq
  %v2942 = vshrl.u32 %v2941, 7
  %v2943 = vsub.s32 %v2940, %v2942
  %v2944 = vrot.slane %v2925, %v2943
  %v2946 = vunpack.c.l.s4 1966171168
  %v2947 = vunpack.c.0.s8 %v2946
  %v2948 = vlaneseq
  %v2949 = vshrl.u32 %v2948, 7
  %v2950 = vsub.s32 %v2947, %v2949
  %v2951 = vrot.slane %v2924, %v2950
  %v2953 = vunpack.c.l.s4 1966171168
  %v2954 = vunpack.c.0.s8 %v2953
  %v2955 = vlaneseq
  %v2956 = vshrl.u32 %v2955, 7
  %v2957 = vsub.s32 %v2954, %v2956
  %v2958 = vrot.slane %v2926, %v2957
  %v2960 = vunpack.c.l.s4 1966171168
  %v2961 = vunpack.c.0.s8 %v2960
  %v2962 = vlaneseq
  %v2963 = vshrl.u32 %v2962, 7
  %v2964 = vsub.s32 %v2961, %v2963
  %v2965 = vrot.slane %v2927, %v2964
  %v2967 = vunpack.c.l.s4 1966171168
  %v2968 = vunpack.c.0.s8 %v2967
  %v2969 = vlaneseq
  %v2970 = vshrl.u32 %v2969, 7
  %v2971 = vsub.s32 %v2968, %v2970
  %v2972 = vrot.slane %v2929, %v2971
  %v2974 = vunpack.c.l.s4 1966171168
  %v2975 = vunpack.c.0.s8 %v2974
  %v2976 = vlaneseq
  %v2977 = vshrl.u32 %v2976, 7
  %v2978 = vsub.s32 %v2975, %v2977
  %v2979 = vrot.slane %v2928, %v2978
  %v2981 = vunpack.c.l.s4 1966171168
  %v2982 = vunpack.c.0.s8 %v2981
  %v2983 = vlaneseq
  %v2984 = vshrl.u32 %v2983, 7
  %v2985 = vsub.s32 %v2982, %v2984
  %v2986 = vrot.slane %v2930, %v2985
  %v2987 = vcombine.low %v2937, %v2965
  %v2988 = vcombine.high %v2937, %v2965
  %v2989 = vcombine.low %v2944, %v2972
  %v2990 = vcombine.high %v2944, %v2972
  %v2991 = vcombine.low %v2951, %v2979
  %v2992 = vcombine.high %v2951, %v2979
  %v2993 = vcombine.low %v2958, %v2986
  %v2994 = vcombine.high %v2958, %v2986
  %v2995 = vcombine.low %v2540, %v2542
  %v2996 = vcombine.high %v2540, %v2542
  %v2997 = vcombine.low %v2544, %v2546
  %v2998 = vcombine.high %v2544, %v2546
  %v2999 = vcombine.low %v2548, %v2550
  %v3000 = vcombine.high %v2548, %v2550
  %v3001 = vcombine.low %v2552, %v2554
  %v3002 = vcombine.high %v2552, %v2554
  %v3004 = vunpack.c.l.s4 1966171168
  %v3005 = vunpack.c.0.s8 %v3004
  %v3006 = vlaneseq
  %v3007 = vshrl.u32 %v3006, 7
  %v3008 = vsub.s32 %v3005, %v3007
  %v3009 = vrot.slane %v2995, %v3008
  %v3011 = vunpack.c.l.s4 1966171168
  %v3012 = vunpack.c.0.s8 %v3011
  %v3013 = vlaneseq
  %v3014 = vshrl.u32 %v3013, 7
  %v3015 = vsub.s32 %v3012, %v3014
  %v3016 = vrot.slane %v2996, %v3015
  %v3018 = vunpack.c.l.s4 1966171168
  %v3019 = vunpack.c.0.s8 %v3018
  %v3020 = vlaneseq
  %v3021 = vshrl.u32 %v3020, 7
  %v3022 = vsub.s32 %v3019, %v3021
  %v3023 = vrot.slane %v2997, %v3022
  %v3025 = vunpack.c.l.s4 1966171168
  %v3026 = vunpack.c.0.s8 %v3025
  %v3027 = vlaneseq
  %v3028 = vshrl.u32 %v3027, 7
  %v3029 = vsub.s32 %v3026, %v3028
  %v3030 = vrot.slane %v2998, %v3029
  %v3032 = vunpack.c.l.s4 1966171168
  %v3033 = vunpack.c.0.s8 %v3032
  %v3034 = vlaneseq
  %v3035 = vshrl.u32 %v3034, 7
  %v3036 = vsub.s32 %v3033, %v3035
  %v3037 = vrot.slane %v2999, %v3036
  %v3039 = vunpack.c.l.s4 1966171168
  %v3040 = vunpack.c.0.s8 %v3039
  %v3041 = vlaneseq
  %v3042 = vshrl.u32 %v3041, 7
  %v3043 = vsub.s32 %v3040, %v3042
  %v3044 = vrot.slane %v3000, %v3043
  %v3046 = vunpack.c.l.s4 1966171168
  %v3047 = vunpack.c.0.s8 %v3046
  %v3048 = vlaneseq
  %v3049 = vshrl.u32 %v3048, 7
  %v3050 = vsub.s32 %v3047, %v3049
  %v3051 = vrot.slane %v3001, %v3050
  %v3053 = vunpack.c.l.s4 1966171168
  %v3054 = vunpack.c.0.s8 %v3053
  %v3055 = vlaneseq
  %v3056 = vshrl.u32 %v3055, 7
  %v3057 = vsub.s32 %v3054, %v3056
  %v3058 = vrot.slane %v3002, %v3057
  %v3059 = vcombine.low %v3009, %v3023
  %v3060 = vcombine.high %v3009, %v3023
  %v3061 = vcombine.low %v3016, %v3030
  %v3062 = vcombine.high %v3016, %v3030
  %v3063 = vcombine.low %v3037, %v3051
  %v3064 = vcombine.high %v3037, %v3051
  %v3065 = vcombine.low %v3044, %v3058
  %v3066 = vcombine.high %v3044, %v3058
  %v3068 = vunpack.c.l.s4 1966171168
  %v3069 = vunpack.c.0.s8 %v3068
  %v3070 = vlaneseq
  %v3071 = vshrl.u32 %v3070, 7
  %v3072 = vsub.s32 %v3069, %v3071
  %v3073 = vrot.slane %v3059, %v3072
  %v3075 = vunpack.c.l.s4 1966171168
  %v3076 = vunpack.c.0.s8 %v3075
  %v3077 = vlaneseq
  %v3078 = vshrl.u32 %v3077, 7
  %v3079 = vsub.s32 %v3076, %v3078
  %v3080 = vrot.slane %v3061, %v3079
  %v3082 = vunpack.c.l.s4 1966171168
  %v3083 = vunpack.c.0.s8 %v3082
  %v3084 = vlaneseq
  %v3085 = vshrl.u32 %v3084, 7
  %v3086 = vsub.s32 %v3083, %v3085
  %v3087 = vrot.slane %v3060, %v3086
  %v3089 = vunpack.c.l.s4 1966171168
  %v3090 = vunpack.c.0.s8 %v3089
  %v3091 = vlaneseq
  %v3092 = vshrl.u32 %v3091, 7
  %v3093 = vsub.s32 %v3090, %v3092
  %v3094 = vrot.slane %v3062, %v3093
  %v3096 = vunpack.c.l.s4 1966171168
  %v3097 = vunpack.c.0.s8 %v3096
  %v3098 = vlaneseq
  %v3099 = vshrl.u32 %v3098, 7
  %v3100 = vsub.s32 %v3097, %v3099
  %v3101 = vrot.slane %v3063, %v3100
  %v3103 = vunpack.c.l.s4 1966171168
  %v3104 = vunpack.c.0.s8 %v3103
  %v3105 = vlaneseq
  %v3106 = vshrl.u32 %v3105, 7
  %v3107 = vsub.s32 %v3104, %v3106
  %v3108 = vrot.slane %v3065, %v3107
  %v3110 = vunpack.c.l.s4 1966171168
  %v3111 = vunpack.c.0.s8 %v3110
  %v3112 = vlaneseq
  %v3113 = vshrl.u32 %v3112, 7
  %v3114 = vsub.s32 %v3111, %v3113
  %v3115 = vrot.slane %v3064, %v3114
  %v3117 = vunpack.c.l.s4 1966171168
  %v3118 = vunpack.c.0.s8 %v3117
  %v3119 = vlaneseq
  %v3120 = vshrl.u32 %v3119, 7
  %v3121 = vsub.s32 %v3118, %v3120
  %v3122 = vrot.slane %v3066, %v3121
  %v3123 = vcombine.low %v3073, %v3101
  %v3124 = vcombine.high %v3073, %v3101
  %v3125 = vcombine.low %v3080, %v3108
  %v3126 = vcombine.high %v3080, %v3108
  %v3127 = vcombine.low %v3087, %v3115
  %v3128 = vcombine.high %v3087, %v3115
  %v3129 = vcombine.low %v3094, %v3122
  %v3130 = vcombine.high %v3094, %v3122
  %v3131 = vcombine.low %v2555, %v2557
  %v3132 = vcombine.high %v2555, %v2557
  %v3133 = vcombine.low %v2559, %v2561
  %v3134 = vcombine.high %v2559, %v2561
  %v3135 = vcombine.low %v2563, %v2565
  %v3136 = vcombine.high %v2563, %v2565
  %v3137 = vcombine.low %v2567, %v2569
  %v3138 = vcombine.high %v2567, %v2569
  %v3140 = vunpack.c.l.s4 1966171168
  %v3141 = vunpack.c.0.s8 %v3140
  %v3142 = vlaneseq
  %v3143 = vshrl.u32 %v3142, 7
  %v3144 = vsub.s32 %v3141, %v3143
  %v3145 = vrot.slane %v3131, %v3144
  %v3147 = vunpack.c.l.s4 1966171168
  %v3148 = vunpack.c.0.s8 %v3147
  %v3149 = vlaneseq
  %v3150 = vshrl.u32 %v3149, 7
  %v3151 = vsub.s32 %v3148, %v3150
  %v3152 = vrot.slane %v3132, %v3151
  %v3154 = vunpack.c.l.s4 1966171168
  %v3155 = vunpack.c.0.s8 %v3154
  %v3156 = vlaneseq
  %v3157 = vshrl.u32 %v3156, 7
  %v3158 = vsub.s32 %v3155, %v3157
  %v3159 = vrot.slane %v3133, %v3158
  %v3161 = vunpack.c.l.s4 1966171168
  %v3162 = vunpack.c.0.s8 %v3161
  %v3163 = vlaneseq
  %v3164 = vshrl.u32 %v3163, 7
  %v3165 = vsub.s32 %v3162, %v3164
  %v3166 = vrot.slane %v3134, %v3165
  %v3168 = vunpack.c.l.s4 1966171168
  %v3169 = vunpack.c.0.s8 %v3168
  %v3170 = vlaneseq
  %v3171 = vshrl.u32 %v3170, 7
  %v3172 = vsub.s32 %v3169, %v3171
  %v3173 = vrot.slane %v3135, %v3172
  %v3175 = vunpack.c.l.s4 1966171168
  %v3176 = vunpack.c.0.s8 %v3175
  %v3177 = vlaneseq
  %v3178 = vshrl.u32 %v3177, 7
  %v3179 = vsub.s32 %v3176, %v3178
  %v3180 = vrot.slane %v3136, %v3179
  %v3182 = vunpack.c.l.s4 1966171168
  %v3183 = vunpack.c.0.s8 %v3182
  %v3184 = vlaneseq
  %v3185 = vshrl.u32 %v3184, 7
  %v3186 = vsub.s32 %v3183, %v3185
  %v3187 = vrot.slane %v3137, %v3186
  %v3189 = vunpack.c.l.s4 1966171168
  %v3190 = vunpack.c.0.s8 %v3189
  %v3191 = vlaneseq
  %v3192 = vshrl.u32 %v3191, 7
  %v3193 = vsub.s32 %v3190, %v3192
  %v3194 = vrot.slane %v3138, %v3193
  %v3195 = vcombine.low %v3145, %v3159
  %v3196 = vcombine.high %v3145, %v3159
  %v3197 = vcombine.low %v3152, %v3166
  %v3198 = vcombine.high %v3152, %v3166
  %v3199 = vcombine.low %v3173, %v3187
  %v3200 = vcombine.high %v3173, %v3187
  %v3201 = vcombine.low %v3180, %v3194
  %v3202 = vcombine.high %v3180, %v3194
  %v3204 = vunpack.c.l.s4 1966171168
  %v3205 = vunpack.c.0.s8 %v3204
  %v3206 = vlaneseq
  %v3207 = vshrl.u32 %v3206, 7
  %v3208 = vsub.s32 %v3205, %v3207
  %v3209 = vrot.slane %v3195, %v3208
  %v3211 = vunpack.c.l.s4 1966171168
  %v3212 = vunpack.c.0.s8 %v3211
  %v3213 = vlaneseq
  %v3214 = vshrl.u32 %v3213, 7
  %v3215 = vsub.s32 %v3212, %v3214
  %v3216 = vrot.slane %v3197, %v3215
  %v3218 = vunpack.c.l.s4 1966171168
  %v3219 = vunpack.c.0.s8 %v3218
  %v3220 = vlaneseq
  %v3221 = vshrl.u32 %v3220, 7
  %v3222 = vsub.s32 %v3219, %v3221
  %v3223 = vrot.slane %v3196, %v3222
  %v3225 = vunpack.c.l.s4 1966171168
  %v3226 = vunpack.c.0.s8 %v3225
  %v3227 = vlaneseq
  %v3228 = vshrl.u32 %v3227, 7
  %v3229 = vsub.s32 %v3226, %v3228
  %v3230 = vrot.slane %v3198, %v3229
  %v3232 = vunpack.c.l.s4 1966171168
  %v3233 = vunpack.c.0.s8 %v3232
  %v3234 = vlaneseq
  %v3235 = vshrl.u32 %v3234, 7
  %v3236 = vsub.s32 %v3233, %v3235
  %v3237 = vrot.slane %v3199, %v3236
  %v3239 = vunpack.c.l.s4 1966171168
  %v3240 = vunpack.c.0.s8 %v3239
  %v3241 = vlaneseq
  %v3242 = vshrl.u32 %v3241, 7
  %v3243 = vsub.s32 %v3240, %v3242
  %v3244 = vrot.slane %v3201, %v3243
  %v3246 = vunpack.c.l.s4 1966171168
  %v3247 = vunpack.c.0.s8 %v3246
  %v3248 = vlaneseq
  %v3249 = vshrl.u32 %v3248, 7
  %v3250 = vsub.s32 %v3247, %v3249
  %v3251 = vrot.slane %v3200, %v3250
  %v3253 = vunpack.c.l.s4 1966171168
  %v3254 = vunpack.c.0.s8 %v3253
  %v3255 = vlaneseq
  %v3256 = vshrl.u32 %v3255, 7
  %v3257 = vsub.s32 %v3254, %v3256
  %v3258 = vrot.slane %v3202, %v3257
  %v3259 = vcombine.low %v3209, %v3237
  %v3260 = vcombine.high %v3209, %v3237
  %v3261 = vcombine.low %v3216, %v3244
  %v3262 = vcombine.high %v3216, %v3244
  %v3263 = vcombine.low %v3223, %v3251
  %v3264 = vcombine.high %v3223, %v3251
  %v3265 = vcombine.low %v3230, %v3258
  %v3266 = vcombine.high %v3230, %v3258
  %v3267 = vcombine.low %v2556, %v2558
  %v3268 = vcombine.high %v2556, %v2558
  %v3269 = vcombine.low %v2560, %v2562
  %v3270 = vcombine.high %v2560, %v2562
  %v3271 = vcombine.low %v2564, %v2566
  %v3272 = vcombine.high %v2564, %v2566
  %v3273 = vcombine.low %v2568, %v2570
  %v3274 = vcombine.high %v2568, %v2570
  %v3276 = vunpack.c.l.s4 1966171168
  %v3277 = vunpack.c.0.s8 %v3276
  %v3278 = vlaneseq
  %v3279 = vshrl.u32 %v3278, 7
  %v3280 = vsub.s32 %v3277, %v3279
  %v3281 = vrot.slane %v3267, %v3280
  %v3283 = vunpack.c.l.s4 1966171168
  %v3284 = vunpack.c.0.s8 %v3283
  %v3285 = vlaneseq
  %v3286 = vshrl.u32 %v3285, 7
  %v3287 = vsub.s32 %v3284, %v3286
  %v3288 = vrot.slane %v3268, %v3287
  %v3290 = vunpack.c.l.s4 1966171168
  %v3291 = vunpack.c.0.s8 %v3290
  %v3292 = vlaneseq
  %v3293 = vshrl.u32 %v3292, 7
  %v3294 = vsub.s32 %v3291, %v3293
  %v3295 = vrot.slane %v3269, %v3294
  %v3297 = vunpack.c.l.s4 1966171168
  %v3298 = vunpack.c.0.s8 %v3297
  %v3299 = vlaneseq
  %v3300 = vshrl.u32 %v3299, 7
  %v3301 = vsub.s32 %v3298, %v3300
  %v3302 = vrot.slane %v3270, %v3301
  %v3304 = vunpack.c.l.s4 1966171168
  %v3305 = vunpack.c.0.s8 %v3304
  %v3306 = vlaneseq
  %v3307 = vshrl.u32 %v3306, 7
  %v3308 = vsub.s32 %v3305, %v3307
  %v3309 = vrot.slane %v3271, %v3308
  %v3311 = vunpack.c.l.s4 1966171168
  %v3312 = vunpack.c.0.s8 %v3311
  %v3313 = vlaneseq
  %v3314 = vshrl.u32 %v3313, 7
  %v3315 = vsub.s32 %v3312, %v3314
  %v3316 = vrot.slane %v3272, %v3315
  %v3318 = vunpack.c.l.s4 1966171168
  %v3319 = vunpack.c.0.s8 %v3318
  %v3320 = vlaneseq
  %v3321 = vshrl.u32 %v3320, 7
  %v3322 = vsub.s32 %v3319, %v3321
  %v3323 = vrot.slane %v3273, %v3322
  %v3325 = vunpack.c.l.s4 1966171168
  %v3326 = vunpack.c.0.s8 %v3325
  %v3327 = vlaneseq
  %v3328 = vshrl.u32 %v3327, 7
  %v3329 = vsub.s32 %v3326, %v3328
  %v3330 = vrot.slane %v3274, %v3329
  %v3331 = vcombine.low %v3281, %v3295
  %v3332 = vcombine.high %v3281, %v3295
  %v3333 = vcombine.low %v3288, %v3302
  %v3334 = vcombine.high %v3288, %v3302
  %v3335 = vcombine.low %v3309, %v3323
  %v3336 = vcombine.high %v3309, %v3323
  %v3337 = vcombine.low %v3316, %v3330
  %v3338 = vcombine.high %v3316, %v3330
  %v3340 = vunpack.c.l.s4 1966171168
  %v3341 = vunpack.c.0.s8 %v3340
  %v3342 = vlaneseq
  %v3343 = vshrl.u32 %v3342, 7
  %v3344 = vsub.s32 %v3341, %v3343
  %v3345 = vrot.slane %v3331, %v3344
  %v3347 = vunpack.c.l.s4 1966171168
  %v3348 = vunpack.c.0.s8 %v3347
  %v3349 = vlaneseq
  %v3350 = vshrl.u32 %v3349, 7
  %v3351 = vsub.s32 %v3348, %v3350
  %v3352 = vrot.slane %v3333, %v3351
  %v3354 = vunpack.c.l.s4 1966171168
  %v3355 = vunpack.c.0.s8 %v3354
  %v3356 = vlaneseq
  %v3357 = vshrl.u32 %v3356, 7
  %v3358 = vsub.s32 %v3355, %v3357
  %v3359 = vrot.slane %v3332, %v3358
  %v3361 = vunpack.c.l.s4 1966171168
  %v3362 = vunpack.c.0.s8 %v3361
  %v3363 = vlaneseq
  %v3364 = vshrl.u32 %v3363, 7
  %v3365 = vsub.s32 %v3362, %v3364
  %v3366 = vrot.slane %v3334, %v3365
  %v3368 = vunpack.c.l.s4 1966171168
  %v3369 = vunpack.c.0.s8 %v3368
  %v3370 = vlaneseq
  %v3371 = vshrl.u32 %v3370, 7
  %v3372 = vsub.s32 %v3369, %v3371
  %v3373 = vrot.slane %v3335, %v3372
  %v3375 = vunpack.c.l.s4 1966171168
  %v3376 = vunpack.c.0.s8 %v3375
  %v3377 = vlaneseq
  %v3378 = vshrl.u32 %v3377, 7
  %v3379 = vsub.s32 %v3376, %v3378
  %v3380 = vrot.slane %v3337, %v3379
  %v3382 = vunpack.c.l.s4 1966171168
  %v3383 = vunpack.c.0.s8 %v3382
  %v3384 = vlaneseq
  %v3385 = vshrl.u32 %v3384, 7
  %v3386 = vsub.s32 %v3383, %v3385
  %v3387 = vrot.slane %v3336, %v3386
  %v3389 = vunpack.c.l.s4 1966171168
  %v3390 = vunpack.c.0.s8 %v3389
  %v3391 = vlaneseq
  %v3392 = vshrl.u32 %v3391, 7
  %v3393 = vsub.s32 %v3390, %v3392
  %v3394 = vrot.slane %v3338, %v3393
  %v3395 = vcombine.low %v3345, %v3373
  %v3396 = vcombine.high %v3345, %v3373
  %v3397 = vcombine.low %v3352, %v3380
  %v3398 = vcombine.high %v3352, %v3380
  %v3399 = vcombine.low %v3359, %v3387
  %v3400 = vcombine.high %v3359, %v3387
  %v3401 = vcombine.low %v3366, %v3394
  %v3402 = vcombine.high %v3366, %v3394
  %v3403 = vcombine.low %v2571, %v2573
  %v3404 = vcombine.high %v2571, %v2573
  %v3405 = vcombine.low %v2575, %v2577
  %v3406 = vcombine.high %v2575, %v2577
  %v3407 = vcombine.low %v2579, %v2581
  %v3408 = vcombine.high %v2579, %v2581
  %v3409 = vcombine.low %v2583, %v2585
  %v3410 = vcombine.high %v2583, %v2585
  %v3412 = vunpack.c.l.s4 1966171168
  %v3413 = vunpack.c.0.s8 %v3412
  %v3414 = vlaneseq
  %v3415 = vshrl.u32 %v3414, 7
  %v3416 = vsub.s32 %v3413, %v3415
  %v3417 = vrot.slane %v3403, %v3416
  %v3419 = vunpack.c.l.s4 1966171168
  %v3420 = vunpack.c.0.s8 %v3419
  %v3421 = vlaneseq
  %v3422 = vshrl.u32 %v3421, 7
  %v3423 = vsub.s32 %v3420, %v3422
  %v3424 = vrot.slane %v3404, %v3423
  %v3426 = vunpack.c.l.s4 1966171168
  %v3427 = vunpack.c.0.s8 %v3426
  %v3428 = vlaneseq
  %v3429 = vshrl.u32 %v3428, 7
  %v3430 = vsub.s32 %v3427, %v3429
  %v3431 = vrot.slane %v3405, %v3430
  %v3433 = vunpack.c.l.s4 1966171168
  %v3434 = vunpack.c.0.s8 %v3433
  %v3435 = vlaneseq
  %v3436 = vshrl.u32 %v3435, 7
  %v3437 = vsub.s32 %v3434, %v3436
  %v3438 = vrot.slane %v3406, %v3437
  %v3440 = vunpack.c.l.s4 1966171168
  %v3441 = vunpack.c.0.s8 %v3440
  %v3442 = vlaneseq
  %v3443 = vshrl.u32 %v3442, 7
  %v3444 = vsub.s32 %v3441, %v3443
  %v3445 = vrot.slane %v3407, %v3444
  %v3447 = vunpack.c.l.s4 1966171168
  %v3448 = vunpack.c.0.s8 %v3447
  %v3449 = vlaneseq
  %v3450 = vshrl.u32 %v3449, 7
  %v3451 = vsub.s32 %v3448, %v3450
  %v3452 = vrot.slane %v3408, %v3451
  %v3454 = vunpack.c.l.s4 1966171168
  %v3455 = vunpack.c.0.s8 %v3454
  %v3456 = vlaneseq
  %v3457 = vshrl.u32 %v3456, 7
  %v3458 = vsub.s32 %v3455, %v3457
  %v3459 = vrot.slane %v3409, %v3458
  %v3461 = vunpack.c.l.s4 1966171168
  %v3462 = vunpack.c.0.s8 %v3461
  %v3463 = vlaneseq
  %v3464 = vshrl.u32 %v3463, 7
  %v3465 = vsub.s32 %v3462, %v3464
  %v3466 = vrot.slane %v3410, %v3465
  %v3467 = vcombine.low %v3417, %v3431
  %v3468 = vcombine.high %v3417, %v3431
  %v3469 = vcombine.low %v3424, %v3438
  %v3470 = vcombine.high %v3424, %v3438
  %v3471 = vcombine.low %v3445, %v3459
  %v3472 = vcombine.high %v3445, %v3459
  %v3473 = vcombine.low %v3452, %v3466
  %v3474 = vcombine.high %v3452, %v3466
  %v3476 = vunpack.c.l.s4 1966171168
  %v3477 = vunpack.c.0.s8 %v3476
  %v3478 = vlaneseq
  %v3479 = vshrl.u32 %v3478, 7
  %v3480 = vsub.s32 %v3477, %v3479
  %v3481 = vrot.slane %v3467, %v3480
  %v3483 = vunpack.c.l.s4 1966171168
  %v3484 = vunpack.c.0.s8 %v3483
  %v3485 = vlaneseq
  %v3486 = vshrl.u32 %v3485, 7
  %v3487 = vsub.s32 %v3484, %v3486
  %v3488 = vrot.slane %v3469, %v3487
  %v3490 = vunpack.c.l.s4 1966171168
  %v3491 = vunpack.c.0.s8 %v3490
  %v3492 = vlaneseq
  %v3493 = vshrl.u32 %v3492, 7
  %v3494 = vsub.s32 %v3491, %v3493
  %v3495 = vrot.slane %v3468, %v3494
  %v3497 = vunpack.c.l.s4 1966171168
  %v3498 = vunpack.c.0.s8 %v3497
  %v3499 = vlaneseq
  %v3500 = vshrl.u32 %v3499, 7
  %v3501 = vsub.s32 %v3498, %v3500
  %v3502 = vrot.slane %v3470, %v3501
  %v3504 = vunpack.c.l.s4 1966171168
  %v3505 = vunpack.c.0.s8 %v3504
  %v3506 = vlaneseq
  %v3507 = vshrl.u32 %v3506, 7
  %v3508 = vsub.s32 %v3505, %v3507
  %v3509 = vrot.slane %v3471, %v3508
  %v3511 = vunpack.c.l.s4 1966171168
  %v3512 = vunpack.c.0.s8 %v3511
  %v3513 = vlaneseq
  %v3514 = vshrl.u32 %v3513, 7
  %v3515 = vsub.s32 %v3512, %v3514
  %v3516 = vrot.slane %v3473, %v3515
  %v3518 = vunpack.c.l.s4 1966171168
  %v3519 = vunpack.c.0.s8 %v3518
  %v3520 = vlaneseq
  %v3521 = vshrl.u32 %v3520, 7
  %v3522 = vsub.s32 %v3519, %v3521
  %v3523 = vrot.slane %v3472, %v3522
  %v3525 = vunpack.c.l.s4 1966171168
  %v3526 = vunpack.c.0.s8 %v3525
  %v3527 = vlaneseq
  %v3528 = vshrl.u32 %v3527, 7
  %v3529 = vsub.s32 %v3526, %v3528
  %v3530 = vrot.slane %v3474, %v3529
  %v3531 = vcombine.low %v3481, %v3509
  %v3532 = vcombine.high %v3481, %v3509
  %v3533 = vcombine.low %v3488, %v3516
  %v3534 = vcombine.high %v3488, %v3516
  %v3535 = vcombine.low %v3495, %v3523
  %v3536 = vcombine.high %v3495, %v3523
  %v3537 = vcombine.low %v3502, %v3530
  %v3538 = vcombine.high %v3502, %v3530
  %v3539 = vcombine.low %v2572, %v2574
  %v3540 = vcombine.high %v2572, %v2574
  %v3541 = vcombine.low %v2576, %v2578
  %v3542 = vcombine.high %v2576, %v2578
  %v3543 = vcombine.low %v2580, %v2582
  %v3544 = vcombine.high %v2580, %v2582
  %v3545 = vcombine.low %v2584, %v2586
  %v3546 = vcombine.high %v2584, %v2586
  %v3548 = vunpack.c.l.s4 1966171168
  %v3549 = vunpack.c.0.s8 %v3548
  %v3550 = vlaneseq
  %v3551 = vshrl.u32 %v3550, 7
  %v3552 = vsub.s32 %v3549, %v3551
  %v3553 = vrot.slane %v3539, %v3552
  %v3555 = vunpack.c.l.s4 1966171168
  %v3556 = vunpack.c.0.s8 %v3555
  %v3557 = vlaneseq
  %v3558 = vshrl.u32 %v3557, 7
  %v3559 = vsub.s32 %v3556, %v3558
  %v3560 = vrot.slane %v3540, %v3559
  %v3562 = vunpack.c.l.s4 1966171168
  %v3563 = vunpack.c.0.s8 %v3562
  %v3564 = vlaneseq
  %v3565 = vshrl.u32 %v3564, 7
  %v3566 = vsub.s32 %v3563, %v3565
  %v3567 = vrot.slane %v3541, %v3566
  %v3569 = vunpack.c.l.s4 1966171168
  %v3570 = vunpack.c.0.s8 %v3569
  %v3571 = vlaneseq
  %v3572 = vshrl.u32 %v3571, 7
  %v3573 = vsub.s32 %v3570, %v3572
  %v3574 = vrot.slane %v3542, %v3573
  %v3576 = vunpack.c.l.s4 1966171168
  %v3577 = vunpack.c.0.s8 %v3576
  %v3578 = vlaneseq
  %v3579 = vshrl.u32 %v3578, 7
  %v3580 = vsub.s32 %v3577, %v3579
  %v3581 = vrot.slane %v3543, %v3580
  %v3583 = vunpack.c.l.s4 1966171168
  %v3584 = vunpack.c.0.s8 %v3583
  %v3585 = vlaneseq
  %v3586 = vshrl.u32 %v3585, 7
  %v3587 = vsub.s32 %v3584, %v3586
  %v3588 = vrot.slane %v3544, %v3587
  %v3590 = vunpack.c.l.s4 1966171168
  %v3591 = vunpack.c.0.s8 %v3590
  %v3592 = vlaneseq
  %v3593 = vshrl.u32 %v3592, 7
  %v3594 = vsub.s32 %v3591, %v3593
  %v3595 = vrot.slane %v3545, %v3594
  %v3597 = vunpack.c.l.s4 1966171168
  %v3598 = vunpack.c.0.s8 %v3597
  %v3599 = vlaneseq
  %v3600 = vshrl.u32 %v3599, 7
  %v3601 = vsub.s32 %v3598, %v3600
  %v3602 = vrot.slane %v3546, %v3601
  %v3603 = vcombine.low %v3553, %v3567
  %v3604 = vcombine.high %v3553, %v3567
  %v3605 = vcombine.low %v3560, %v3574
  %v3606 = vcombine.high %v3560, %v3574
  %v3607 = vcombine.low %v3581, %v3595
  %v3608 = vcombine.high %v3581, %v3595
  %v3609 = vcombine.low %v3588, %v3602
  %v3610 = vcombine.high %v3588, %v3602
  %v3612 = vunpack.c.l.s4 1966171168
  %v3613 = vunpack.c.0.s8 %v3612
  %v3614 = vlaneseq
  %v3615 = vshrl.u32 %v3614, 7
  %v3616 = vsub.s32 %v3613, %v3615
  %v3617 = vrot.slane %v3603, %v3616
  %v3619 = vunpack.c.l.s4 1966171168
  %v3620 = vunpack.c.0.s8 %v3619
  %v3621 = vlaneseq
  %v3622 = vshrl.u32 %v3621, 7
  %v3623 = vsub.s32 %v3620, %v3622
  %v3624 = vrot.slane %v3605, %v3623
  %v3626 = vunpack.c.l.s4 1966171168
  %v3627 = vunpack.c.0.s8 %v3626
  %v3628 = vlaneseq
  %v3629 = vshrl.u32 %v3628, 7
  %v3630 = vsub.s32 %v3627, %v3629
  %v3631 = vrot.slane %v3604, %v3630
  %v3633 = vunpack.c.l.s4 1966171168
  %v3634 = vunpack.c.0.s8 %v3633
  %v3635 = vlaneseq
  %v3636 = vshrl.u32 %v3635, 7
  %v3637 = vsub.s32 %v3634, %v3636
  %v3638 = vrot.slane %v3606, %v3637
  %v3640 = vunpack.c.l.s4 1966171168
  %v3641 = vunpack.c.0.s8 %v3640
  %v3642 = vlaneseq
  %v3643 = vshrl.u32 %v3642, 7
  %v3644 = vsub.s32 %v3641, %v3643
  %v3645 = vrot.slane %v3607, %v3644
  %v3647 = vunpack.c.l.s4 1966171168
  %v3648 = vunpack.c.0.s8 %v3647
  %v3649 = vlaneseq
  %v3650 = vshrl.u32 %v3649, 7
  %v3651 = vsub.s32 %v3648, %v3650
  %v3652 = vrot.slane %v3609, %v3651
  %v3654 = vunpack.c.l.s4 1966171168
  %v3655 = vunpack.c.0.s8 %v3654
  %v3656 = vlaneseq
  %v3657 = vshrl.u32 %v3656, 7
  %v3658 = vsub.s32 %v3655, %v3657
  %v3659 = vrot.slane %v3608, %v3658
  %v3661 = vunpack.c.l.s4 1966171168
  %v3662 = vunpack.c.0.s8 %v3661
  %v3663 = vlaneseq
  %v3664 = vshrl.u32 %v3663, 7
  %v3665 = vsub.s32 %v3662, %v3664
  %v3666 = vrot.slane %v3610, %v3665
  %v3667 = vcombine.low %v3617, %v3645
  %v3668 = vcombine.high %v3617, %v3645
  %v3669 = vcombine.low %v3624, %v3652
  %v3670 = vcombine.high %v3624, %v3652
  %v3671 = vcombine.low %v3631, %v3659
  %v3672 = vcombine.high %v3631, %v3659
  %v3673 = vcombine.low %v3638, %v3666
  %v3674 = vcombine.high %v3638, %v3666
  %s3739 = smul.u32 0, 16
  %s3740 = smul.addr %s3739, 8
  %s3741 = scalar_lea.vmem [#allocation3], %s3740
  %3742 = vst [vmem:[%s3741] sm:$0xff] %v2715
  %3743 = vst [vmem:[%s3741 + $0x8] sm:$0xff] %v2719
  %3744 = vst [vmem:[%s3741 + $0x10] sm:$0xff] %v2716
  %3745 = vst [vmem:[%s3741 + $0x18] sm:$0xff] %v2720
  %3746 = vst [vmem:[%s3741 + $0x20] sm:$0xff] %v2717
  %3747 = vst [vmem:[%s3741 + $0x28] sm:$0xff] %v2721
  %3748 = vst [vmem:[%s3741 + $0x30] sm:$0xff] %v2718
  %3749 = vst [vmem:[%s3741 + $0x38] sm:$0xff] %v2722
  %3750 = vst [vmem:[%s3741 + $0x40] sm:$0xff] %v2851
  %3751 = vst [vmem:[%s3741 + $0x48] sm:$0xff] %v2855
  %3752 = vst [vmem:[%s3741 + $0x50] sm:$0xff] %v2852
  %3753 = vst [vmem:[%s3741 + $0x58] sm:$0xff] %v2856
  %3754 = vst [vmem:[%s3741 + $0x60] sm:$0xff] %v2853
  %3755 = vst [vmem:[%s3741 + $0x68] sm:$0xff] %v2857
  %3756 = vst [vmem:[%s3741 + $0x70] sm:$0xff] %v2854
  %3757 = vst [vmem:[%s3741 + $0x78] sm:$0xff] %v2858
  %3758 = vst [vmem:[%s3741 + $0x80] sm:$0xff] %v2987
  %3759 = vst [vmem:[%s3741 + $0x88] sm:$0xff] %v2991
  %3760 = vst [vmem:[%s3741 + $0x90] sm:$0xff] %v2988
  %3761 = vst [vmem:[%s3741 + $0x98] sm:$0xff] %v2992
  %3762 = vst [vmem:[%s3741 + $0xa0] sm:$0xff] %v2989
  %3763 = vst [vmem:[%s3741 + $0xa8] sm:$0xff] %v2993
  %3764 = vst [vmem:[%s3741 + $0xb0] sm:$0xff] %v2990
  %3765 = vst [vmem:[%s3741 + $0xb8] sm:$0xff] %v2994
  %3766 = vst [vmem:[%s3741 + $0xc0] sm:$0xff] %v3123
  %3767 = vst [vmem:[%s3741 + $0xc8] sm:$0xff] %v3127
  %3768 = vst [vmem:[%s3741 + $0xd0] sm:$0xff] %v3124
  %3769 = vst [vmem:[%s3741 + $0xd8] sm:$0xff] %v3128
  %3770 = vst [vmem:[%s3741 + $0xe0] sm:$0xff] %v3125
  %3771 = vst [vmem:[%s3741 + $0xe8] sm:$0xff] %v3129
  %3772 = vst [vmem:[%s3741 + $0xf0] sm:$0xff] %v3126
  %3773 = vst [vmem:[%s3741 + $0xf8] sm:$0xff] %v3130
  %3774 = vst [vmem:[%s3741 + $0x100] sm:$0xff] %v3259
  %3775 = vst [vmem:[%s3741 + $0x108] sm:$0xff] %v3263
  %3776 = vst [vmem:[%s3741 + $0x110] sm:$0xff] %v3260
  %3777 = vst [vmem:[%s3741 + $0x118] sm:$0xff] %v3264
  %3778 = vst [vmem:[%s3741 + $0x120] sm:$0xff] %v3261
  %3779 = vst [vmem:[%s3741 + $0x128] sm:$0xff] %v3265
  %3780 = vst [vmem:[%s3741 + $0x130] sm:$0xff] %v3262
  %3781 = vst [vmem:[%s3741 + $0x138] sm:$0xff] %v3266
  %3782 = vst [vmem:[%s3741 + $0x140] sm:$0xff] %v3395
  %3783 = vst [vmem:[%s3741 + $0x148] sm:$0xff] %v3399
  %3784 = vst [vmem:[%s3741 + $0x150] sm:$0xff] %v3396
  %3785 = vst [vmem:[%s3741 + $0x158] sm:$0xff] %v3400
  %3786 = vst [vmem:[%s3741 + $0x160] sm:$0xff] %v3397
  %3787 = vst [vmem:[%s3741 + $0x168] sm:$0xff] %v3401
  %3788 = vst [vmem:[%s3741 + $0x170] sm:$0xff] %v3398
  %3789 = vst [vmem:[%s3741 + $0x178] sm:$0xff] %v3402
  %3790 = vst [vmem:[%s3741 + $0x180] sm:$0xff] %v3531
  %3791 = vst [vmem:[%s3741 + $0x188] sm:$0xff] %v3535
  %3792 = vst [vmem:[%s3741 + $0x190] sm:$0xff] %v3532
  %3793 = vst [vmem:[%s3741 + $0x198] sm:$0xff] %v3536
  %3794 = vst [vmem:[%s3741 + $0x1a0] sm:$0xff] %v3533
  %3795 = vst [vmem:[%s3741 + $0x1a8] sm:$0xff] %v3537
  %3796 = vst [vmem:[%s3741 + $0x1b0] sm:$0xff] %v3534
  %3797 = vst [vmem:[%s3741 + $0x1b8] sm:$0xff] %v3538
  %3798 = vst [vmem:[%s3741 + $0x1c0] sm:$0xff] %v3667
  %3799 = vst [vmem:[%s3741 + $0x1c8] sm:$0xff] %v3671
  %3800 = vst [vmem:[%s3741 + $0x1d0] sm:$0xff] %v3668
  %3801 = vst [vmem:[%s3741 + $0x1d8] sm:$0xff] %v3672
  %3802 = vst [vmem:[%s3741 + $0x1e0] sm:$0xff] %v3669
  %3803 = vst [vmem:[%s3741 + $0x1e8] sm:$0xff] %v3673
  %3804 = vst [vmem:[%s3741 + $0x1f0] sm:$0xff] %v3670
  %3805 = vst [vmem:[%s3741 + $0x1f8] sm:$0xff] %v3674
  %v3806 = vld [vmem:[%s3] sm:$0xff]
  %v3807 = vld [vmem:[%s3 + $0x8] sm:$0xff]
  %v3808 = vld [vmem:[%s3 + $0x10] sm:$0xff]
  %v3809 = vld [vmem:[%s3 + $0x18] sm:$0xff]
  %v3810 = vld [vmem:[%s3 + $0x20] sm:$0xff]
  %v3811 = vld [vmem:[%s3 + $0x28] sm:$0xff]
  %v3812 = vld [vmem:[%s3 + $0x30] sm:$0xff]
  %v3813 = vld [vmem:[%s3 + $0x38] sm:$0xff]
  %v3814 = vld [vmem:[%s3 + $0x40] sm:$0xff]
  %v3815 = vld [vmem:[%s3 + $0x48] sm:$0xff]
  %v3816 = vld [vmem:[%s3 + $0x50] sm:$0xff]
  %v3817 = vld [vmem:[%s3 + $0x58] sm:$0xff]
  %v3818 = vld [vmem:[%s3 + $0x60] sm:$0xff]
  %v3819 = vld [vmem:[%s3 + $0x68] sm:$0xff]
  %v3820 = vld [vmem:[%s3 + $0x70] sm:$0xff]
  %v3821 = vld [vmem:[%s3 + $0x78] sm:$0xff]
  %v3822 = vld [vmem:[%s3 + $0x80] sm:$0xff]
  %v3823 = vld [vmem:[%s3 + $0x88] sm:$0xff]
  %v3824 = vld [vmem:[%s3 + $0x90] sm:$0xff]
  %v3825 = vld [vmem:[%s3 + $0x98] sm:$0xff]
  %v3826 = vld [vmem:[%s3 + $0xa0] sm:$0xff]
  %v3827 = vld [vmem:[%s3 + $0xa8] sm:$0xff]
  %v3828 = vld [vmem:[%s3 + $0xb0] sm:$0xff]
  %v3829 = vld [vmem:[%s3 + $0xb8] sm:$0xff]
  %v3830 = vld [vmem:[%s3 + $0xc0] sm:$0xff]
  %v3831 = vld [vmem:[%s3 + $0xc8] sm:$0xff]
  %v3832 = vld [vmem:[%s3 + $0xd0] sm:$0xff]
  %v3833 = vld [vmem:[%s3 + $0xd8] sm:$0xff]
  %v3834 = vld [vmem:[%s3 + $0xe0] sm:$0xff]
  %v3835 = vld [vmem:[%s3 + $0xe8] sm:$0xff]
  %v3836 = vld [vmem:[%s3 + $0xf0] sm:$0xff]
  %v3837 = vld [vmem:[%s3 + $0xf8] sm:$0xff]
  %v3838 = vld [vmem:[%s3 + $0x100] sm:$0xff]
  %v3839 = vld [vmem:[%s3 + $0x108] sm:$0xff]
  %v3840 = vld [vmem:[%s3 + $0x110] sm:$0xff]
  %v3841 = vld [vmem:[%s3 + $0x118] sm:$0xff]
  %v3842 = vld [vmem:[%s3 + $0x120] sm:$0xff]
  %v3843 = vld [vmem:[%s3 + $0x128] sm:$0xff]
  %v3844 = vld [vmem:[%s3 + $0x130] sm:$0xff]
  %v3845 = vld [vmem:[%s3 + $0x138] sm:$0xff]
  %v3846 = vld [vmem:[%s3 + $0x140] sm:$0xff]
  %v3847 = vld [vmem:[%s3 + $0x148] sm:$0xff]
  %v3848 = vld [vmem:[%s3 + $0x150] sm:$0xff]
  %v3849 = vld [vmem:[%s3 + $0x158] sm:$0xff]
  %v3850 = vld [vmem:[%s3 + $0x160] sm:$0xff]
  %v3851 = vld [vmem:[%s3 + $0x168] sm:$0xff]
  %v3852 = vld [vmem:[%s3 + $0x170] sm:$0xff]
  %v3853 = vld [vmem:[%s3 + $0x178] sm:$0xff]
  %v3854 = vld [vmem:[%s3 + $0x180] sm:$0xff]
  %v3855 = vld [vmem:[%s3 + $0x188] sm:$0xff]
  %v3856 = vld [vmem:[%s3 + $0x190] sm:$0xff]
  %v3857 = vld [vmem:[%s3 + $0x198] sm:$0xff]
  %v3858 = vld [vmem:[%s3 + $0x1a0] sm:$0xff]
  %v3859 = vld [vmem:[%s3 + $0x1a8] sm:$0xff]
  %v3860 = vld [vmem:[%s3 + $0x1b0] sm:$0xff]
  %v3861 = vld [vmem:[%s3 + $0x1b8] sm:$0xff]
  %v3862 = vld [vmem:[%s3 + $0x1c0] sm:$0xff]
  %v3863 = vld [vmem:[%s3 + $0x1c8] sm:$0xff]
  %v3864 = vld [vmem:[%s3 + $0x1d0] sm:$0xff]
  %v3865 = vld [vmem:[%s3 + $0x1d8] sm:$0xff]
  %v3866 = vld [vmem:[%s3 + $0x1e0] sm:$0xff]
  %v3867 = vld [vmem:[%s3 + $0x1e8] sm:$0xff]
  %v3868 = vld [vmem:[%s3 + $0x1f0] sm:$0xff]
  %v3869 = vld [vmem:[%s3 + $0x1f8] sm:$0xff]
  %v3870 = vld [vmem:[%s3 + $0x200] sm:$0xff]
  %v3871 = vld [vmem:[%s3 + $0x208] sm:$0xff]
  %v3872 = vld [vmem:[%s3 + $0x210] sm:$0xff]
  %v3873 = vld [vmem:[%s3 + $0x218] sm:$0xff]
  %v3874 = vld [vmem:[%s3 + $0x220] sm:$0xff]
  %v3875 = vld [vmem:[%s3 + $0x228] sm:$0xff]
  %v3876 = vld [vmem:[%s3 + $0x230] sm:$0xff]
  %v3877 = vld [vmem:[%s3 + $0x238] sm:$0xff]
  %v3878 = vld [vmem:[%s3 + $0x240] sm:$0xff]
  %v3879 = vld [vmem:[%s3 + $0x248] sm:$0xff]
  %v3880 = vld [vmem:[%s3 + $0x250] sm:$0xff]
  %v3881 = vld [vmem:[%s3 + $0x258] sm:$0xff]
  %v3882 = vld [vmem:[%s3 + $0x260] sm:$0xff]
  %v3883 = vld [vmem:[%s3 + $0x268] sm:$0xff]
  %v3884 = vld [vmem:[%s3 + $0x270] sm:$0xff]
  %v3885 = vld [vmem:[%s3 + $0x278] sm:$0xff]
  %v3886 = vld [vmem:[%s3 + $0x280] sm:$0xff]
  %v3887 = vld [vmem:[%s3 + $0x288] sm:$0xff]
  %v3888 = vld [vmem:[%s3 + $0x290] sm:$0xff]
  %v3889 = vld [vmem:[%s3 + $0x298] sm:$0xff]
  %v3890 = vld [vmem:[%s3 + $0x2a0] sm:$0xff]
  %v3891 = vld [vmem:[%s3 + $0x2a8] sm:$0xff]
  %v3892 = vld [vmem:[%s3 + $0x2b0] sm:$0xff]
  %v3893 = vld [vmem:[%s3 + $0x2b8] sm:$0xff]
  %v3894 = vld [vmem:[%s3 + $0x2c0] sm:$0xff]
  %v3895 = vld [vmem:[%s3 + $0x2c8] sm:$0xff]
  %v3896 = vld [vmem:[%s3 + $0x2d0] sm:$0xff]
  %v3897 = vld [vmem:[%s3 + $0x2d8] sm:$0xff]
  %v3898 = vld [vmem:[%s3 + $0x2e0] sm:$0xff]
  %v3899 = vld [vmem:[%s3 + $0x2e8] sm:$0xff]
  %v3900 = vld [vmem:[%s3 + $0x2f0] sm:$0xff]
  %v3901 = vld [vmem:[%s3 + $0x2f8] sm:$0xff]
  %v3902 = vld [vmem:[%s3 + $0x300] sm:$0xff]
  %v3903 = vld [vmem:[%s3 + $0x308] sm:$0xff]
  %v3904 = vld [vmem:[%s3 + $0x310] sm:$0xff]
  %v3905 = vld [vmem:[%s3 + $0x318] sm:$0xff]
  %v3906 = vld [vmem:[%s3 + $0x320] sm:$0xff]
  %v3907 = vld [vmem:[%s3 + $0x328] sm:$0xff]
  %v3908 = vld [vmem:[%s3 + $0x330] sm:$0xff]
  %v3909 = vld [vmem:[%s3 + $0x338] sm:$0xff]
  %v3910 = vld [vmem:[%s3 + $0x340] sm:$0xff]
  %v3911 = vld [vmem:[%s3 + $0x348] sm:$0xff]
  %v3912 = vld [vmem:[%s3 + $0x350] sm:$0xff]
  %v3913 = vld [vmem:[%s3 + $0x358] sm:$0xff]
  %v3914 = vld [vmem:[%s3 + $0x360] sm:$0xff]
  %v3915 = vld [vmem:[%s3 + $0x368] sm:$0xff]
  %v3916 = vld [vmem:[%s3 + $0x370] sm:$0xff]
  %v3917 = vld [vmem:[%s3 + $0x378] sm:$0xff]
  %v3918 = vld [vmem:[%s3 + $0x380] sm:$0xff]
  %v3919 = vld [vmem:[%s3 + $0x388] sm:$0xff]
  %v3920 = vld [vmem:[%s3 + $0x390] sm:$0xff]
  %v3921 = vld [vmem:[%s3 + $0x398] sm:$0xff]
  %v3922 = vld [vmem:[%s3 + $0x3a0] sm:$0xff]
  %v3923 = vld [vmem:[%s3 + $0x3a8] sm:$0xff]
  %v3924 = vld [vmem:[%s3 + $0x3b0] sm:$0xff]
  %v3925 = vld [vmem:[%s3 + $0x3b8] sm:$0xff]
  %v3926 = vld [vmem:[%s3 + $0x3c0] sm:$0xff]
  %v3927 = vld [vmem:[%s3 + $0x3c8] sm:$0xff]
  %v3928 = vld [vmem:[%s3 + $0x3d0] sm:$0xff]
  %v3929 = vld [vmem:[%s3 + $0x3d8] sm:$0xff]
  %v3930 = vld [vmem:[%s3 + $0x3e0] sm:$0xff]
  %v3931 = vld [vmem:[%s3 + $0x3e8] sm:$0xff]
  %v3932 = vld [vmem:[%s3 + $0x3f0] sm:$0xff]
  %v3933 = vld [vmem:[%s3 + $0x3f8] sm:$0xff]
  %s3934 = scalar_lea.vmem [#allocation2], 128
  %v3935 = vld [vmem:[%s3934] sm:$0xff]
  %v3936 = vld [vmem:[%s3934 + $0x8] sm:$0xff]
  %v3937 = vld [vmem:[%s3934 + $0x10] sm:$0xff]
  %v3938 = vld [vmem:[%s3934 + $0x18] sm:$0xff]
  %v3939 = vld [vmem:[%s3934 + $0x20] sm:$0xff]
  %v3940 = vld [vmem:[%s3934 + $0x28] sm:$0xff]
  %v3941 = vld [vmem:[%s3934 + $0x30] sm:$0xff]
  %v3942 = vld [vmem:[%s3934 + $0x38] sm:$0xff]
  %v3943 = vld [vmem:[%s3934 + $0x40] sm:$0xff]
  %v3944 = vld [vmem:[%s3934 + $0x48] sm:$0xff]
  %v3945 = vld [vmem:[%s3934 + $0x50] sm:$0xff]
  %v3946 = vld [vmem:[%s3934 + $0x58] sm:$0xff]
  %v3947 = vld [vmem:[%s3934 + $0x60] sm:$0xff]
  %v3948 = vld [vmem:[%s3934 + $0x68] sm:$0xff]
  %v3949 = vld [vmem:[%s3934 + $0x70] sm:$0xff]
  %v3950 = vld [vmem:[%s3934 + $0x78] sm:$0xff]
  %v4079 = vunpack.c.l.b16 %v3806
  %v4080 = vunpack.c.h.b16 %v3806
  %v4081 = vunpack.c.l.b16 %v3807
  %v4082 = vunpack.c.h.b16 %v3807
  %v4083 = vunpack.c.l.b16 %v3808
  %v4084 = vunpack.c.h.b16 %v3808
  %v4085 = vunpack.c.l.b16 %v3809
  %v4086 = vunpack.c.h.b16 %v3809
  %v4087 = vunpack.c.l.b16 %v3810
  %v4088 = vunpack.c.h.b16 %v3810
  %v4089 = vunpack.c.l.b16 %v3811
  %v4090 = vunpack.c.h.b16 %v3811
  %v4091 = vunpack.c.l.b16 %v3812
  %v4092 = vunpack.c.h.b16 %v3812
  %v4093 = vunpack.c.l.b16 %v3813
  %v4094 = vunpack.c.h.b16 %v3813
  %v4095 = vunpack.c.l.b16 %v3814
  %v4096 = vunpack.c.h.b16 %v3814
  %v4097 = vunpack.c.l.b16 %v3815
  %v4098 = vunpack.c.h.b16 %v3815
  %v4099 = vunpack.c.l.b16 %v3816
  %v4100 = vunpack.c.h.b16 %v3816
  %v4101 = vunpack.c.l.b16 %v3817
  %v4102 = vunpack.c.h.b16 %v3817
  %v4103 = vunpack.c.l.b16 %v3818
  %v4104 = vunpack.c.h.b16 %v3818
  %v4105 = vunpack.c.l.b16 %v3819
  %v4106 = vunpack.c.h.b16 %v3819
  %v4107 = vunpack.c.l.b16 %v3820
  %v4108 = vunpack.c.h.b16 %v3820
  %v4109 = vunpack.c.l.b16 %v3821
  %v4110 = vunpack.c.h.b16 %v3821
  %v4111 = vunpack.c.l.b16 %v3822
  %v4112 = vunpack.c.h.b16 %v3822
  %v4113 = vunpack.c.l.b16 %v3823
  %v4114 = vunpack.c.h.b16 %v3823
  %v4115 = vunpack.c.l.b16 %v3824
  %v4116 = vunpack.c.h.b16 %v3824
  %v4117 = vunpack.c.l.b16 %v3825
  %v4118 = vunpack.c.h.b16 %v3825
  %v4119 = vunpack.c.l.b16 %v3826
  %v4120 = vunpack.c.h.b16 %v3826
  %v4121 = vunpack.c.l.b16 %v3827
  %v4122 = vunpack.c.h.b16 %v3827
  %v4123 = vunpack.c.l.b16 %v3828
  %v4124 = vunpack.c.h.b16 %v3828
  %v4125 = vunpack.c.l.b16 %v3829
  %v4126 = vunpack.c.h.b16 %v3829
  %v4127 = vunpack.c.l.b16 %v3830
  %v4128 = vunpack.c.h.b16 %v3830
  %v4129 = vunpack.c.l.b16 %v3831
  %v4130 = vunpack.c.h.b16 %v3831
  %v4131 = vunpack.c.l.b16 %v3832
  %v4132 = vunpack.c.h.b16 %v3832
  %v4133 = vunpack.c.l.b16 %v3833
  %v4134 = vunpack.c.h.b16 %v3833
  %v4135 = vunpack.c.l.b16 %v3834
  %v4136 = vunpack.c.h.b16 %v3834
  %v4137 = vunpack.c.l.b16 %v3835
  %v4138 = vunpack.c.h.b16 %v3835
  %v4139 = vunpack.c.l.b16 %v3836
  %v4140 = vunpack.c.h.b16 %v3836
  %v4141 = vunpack.c.l.b16 %v3837
  %v4142 = vunpack.c.h.b16 %v3837
  %v4143 = vunpack.c.l.b16 %v3838
  %v4144 = vunpack.c.h.b16 %v3838
  %v4145 = vunpack.c.l.b16 %v3839
  %v4146 = vunpack.c.h.b16 %v3839
  %v4147 = vunpack.c.l.b16 %v3840
  %v4148 = vunpack.c.h.b16 %v3840
  %v4149 = vunpack.c.l.b16 %v3841
  %v4150 = vunpack.c.h.b16 %v3841
  %v4151 = vunpack.c.l.b16 %v3842
  %v4152 = vunpack.c.h.b16 %v3842
  %v4153 = vunpack.c.l.b16 %v3843
  %v4154 = vunpack.c.h.b16 %v3843
  %v4155 = vunpack.c.l.b16 %v3844
  %v4156 = vunpack.c.h.b16 %v3844
  %v4157 = vunpack.c.l.b16 %v3845
  %v4158 = vunpack.c.h.b16 %v3845
  %v4159 = vunpack.c.l.b16 %v3846
  %v4160 = vunpack.c.h.b16 %v3846
  %v4161 = vunpack.c.l.b16 %v3847
  %v4162 = vunpack.c.h.b16 %v3847
  %v4163 = vunpack.c.l.b16 %v3848
  %v4164 = vunpack.c.h.b16 %v3848
  %v4165 = vunpack.c.l.b16 %v3849
  %v4166 = vunpack.c.h.b16 %v3849
  %v4167 = vunpack.c.l.b16 %v3850
  %v4168 = vunpack.c.h.b16 %v3850
  %v4169 = vunpack.c.l.b16 %v3851
  %v4170 = vunpack.c.h.b16 %v3851
  %v4171 = vunpack.c.l.b16 %v3852
  %v4172 = vunpack.c.h.b16 %v3852
  %v4173 = vunpack.c.l.b16 %v3853
  %v4174 = vunpack.c.h.b16 %v3853
  %v4175 = vunpack.c.l.b16 %v3854
  %v4176 = vunpack.c.h.b16 %v3854
  %v4177 = vunpack.c.l.b16 %v3855
  %v4178 = vunpack.c.h.b16 %v3855
  %v4179 = vunpack.c.l.b16 %v3856
  %v4180 = vunpack.c.h.b16 %v3856
  %v4181 = vunpack.c.l.b16 %v3857
  %v4182 = vunpack.c.h.b16 %v3857
  %v4183 = vunpack.c.l.b16 %v3858
  %v4184 = vunpack.c.h.b16 %v3858
  %v4185 = vunpack.c.l.b16 %v3859
  %v4186 = vunpack.c.h.b16 %v3859
  %v4187 = vunpack.c.l.b16 %v3860
  %v4188 = vunpack.c.h.b16 %v3860
  %v4189 = vunpack.c.l.b16 %v3861
  %v4190 = vunpack.c.h.b16 %v3861
  %v4191 = vunpack.c.l.b16 %v3862
  %v4192 = vunpack.c.h.b16 %v3862
  %v4193 = vunpack.c.l.b16 %v3863
  %v4194 = vunpack.c.h.b16 %v3863
  %v4195 = vunpack.c.l.b16 %v3864
  %v4196 = vunpack.c.h.b16 %v3864
  %v4197 = vunpack.c.l.b16 %v3865
  %v4198 = vunpack.c.h.b16 %v3865
  %v4199 = vunpack.c.l.b16 %v3866
  %v4200 = vunpack.c.h.b16 %v3866
  %v4201 = vunpack.c.l.b16 %v3867
  %v4202 = vunpack.c.h.b16 %v3867
  %v4203 = vunpack.c.l.b16 %v3868
  %v4204 = vunpack.c.h.b16 %v3868
  %v4205 = vunpack.c.l.b16 %v3869
  %v4206 = vunpack.c.h.b16 %v3869
  %v4207 = vunpack.c.l.b16 %v3870
  %v4208 = vunpack.c.h.b16 %v3870
  %v4209 = vunpack.c.l.b16 %v3871
  %v4210 = vunpack.c.h.b16 %v3871
  %v4211 = vunpack.c.l.b16 %v3872
  %v4212 = vunpack.c.h.b16 %v3872
  %v4213 = vunpack.c.l.b16 %v3873
  %v4214 = vunpack.c.h.b16 %v3873
  %v4215 = vunpack.c.l.b16 %v3874
  %v4216 = vunpack.c.h.b16 %v3874
  %v4217 = vunpack.c.l.b16 %v3875
  %v4218 = vunpack.c.h.b16 %v3875
  %v4219 = vunpack.c.l.b16 %v3876
  %v4220 = vunpack.c.h.b16 %v3876
  %v4221 = vunpack.c.l.b16 %v3877
  %v4222 = vunpack.c.h.b16 %v3877
  %v4223 = vunpack.c.l.b16 %v3878
  %v4224 = vunpack.c.h.b16 %v3878
  %v4225 = vunpack.c.l.b16 %v3879
  %v4226 = vunpack.c.h.b16 %v3879
  %v4227 = vunpack.c.l.b16 %v3880
  %v4228 = vunpack.c.h.b16 %v3880
  %v4229 = vunpack.c.l.b16 %v3881
  %v4230 = vunpack.c.h.b16 %v3881
  %v4231 = vunpack.c.l.b16 %v3882
  %v4232 = vunpack.c.h.b16 %v3882
  %v4233 = vunpack.c.l.b16 %v3883
  %v4234 = vunpack.c.h.b16 %v3883
  %v4235 = vunpack.c.l.b16 %v3884
  %v4236 = vunpack.c.h.b16 %v3884
  %v4237 = vunpack.c.l.b16 %v3885
  %v4238 = vunpack.c.h.b16 %v3885
  %v4239 = vunpack.c.l.b16 %v3886
  %v4240 = vunpack.c.h.b16 %v3886
  %v4241 = vunpack.c.l.b16 %v3887
  %v4242 = vunpack.c.h.b16 %v3887
  %v4243 = vunpack.c.l.b16 %v3888
  %v4244 = vunpack.c.h.b16 %v3888
  %v4245 = vunpack.c.l.b16 %v3889
  %v4246 = vunpack.c.h.b16 %v3889
  %v4247 = vunpack.c.l.b16 %v3890
  %v4248 = vunpack.c.h.b16 %v3890
  %v4249 = vunpack.c.l.b16 %v3891
  %v4250 = vunpack.c.h.b16 %v3891
  %v4251 = vunpack.c.l.b16 %v3892
  %v4252 = vunpack.c.h.b16 %v3892
  %v4253 = vunpack.c.l.b16 %v3893
  %v4254 = vunpack.c.h.b16 %v3893
  %v4255 = vunpack.c.l.b16 %v3894
  %v4256 = vunpack.c.h.b16 %v3894
  %v4257 = vunpack.c.l.b16 %v3895
  %v4258 = vunpack.c.h.b16 %v3895
  %v4259 = vunpack.c.l.b16 %v3896
  %v4260 = vunpack.c.h.b16 %v3896
  %v4261 = vunpack.c.l.b16 %v3897
  %v4262 = vunpack.c.h.b16 %v3897
  %v4263 = vunpack.c.l.b16 %v3898
  %v4264 = vunpack.c.h.b16 %v3898
  %v4265 = vunpack.c.l.b16 %v3899
  %v4266 = vunpack.c.h.b16 %v3899
  %v4267 = vunpack.c.l.b16 %v3900
  %v4268 = vunpack.c.h.b16 %v3900
  %v4269 = vunpack.c.l.b16 %v3901
  %v4270 = vunpack.c.h.b16 %v3901
  %v4271 = vunpack.c.l.b16 %v3902
  %v4272 = vunpack.c.h.b16 %v3902
  %v4273 = vunpack.c.l.b16 %v3903
  %v4274 = vunpack.c.h.b16 %v3903
  %v4275 = vunpack.c.l.b16 %v3904
  %v4276 = vunpack.c.h.b16 %v3904
  %v4277 = vunpack.c.l.b16 %v3905
  %v4278 = vunpack.c.h.b16 %v3905
  %v4279 = vunpack.c.l.b16 %v3906
  %v4280 = vunpack.c.h.b16 %v3906
  %v4281 = vunpack.c.l.b16 %v3907
  %v4282 = vunpack.c.h.b16 %v3907
  %v4283 = vunpack.c.l.b16 %v3908
  %v4284 = vunpack.c.h.b16 %v3908
  %v4285 = vunpack.c.l.b16 %v3909
  %v4286 = vunpack.c.h.b16 %v3909
  %v4287 = vunpack.c.l.b16 %v3910
  %v4288 = vunpack.c.h.b16 %v3910
  %v4289 = vunpack.c.l.b16 %v3911
  %v4290 = vunpack.c.h.b16 %v3911
  %v4291 = vunpack.c.l.b16 %v3912
  %v4292 = vunpack.c.h.b16 %v3912
  %v4293 = vunpack.c.l.b16 %v3913
  %v4294 = vunpack.c.h.b16 %v3913
  %v4295 = vunpack.c.l.b16 %v3914
  %v4296 = vunpack.c.h.b16 %v3914
  %v4297 = vunpack.c.l.b16 %v3915
  %v4298 = vunpack.c.h.b16 %v3915
  %v4299 = vunpack.c.l.b16 %v3916
  %v4300 = vunpack.c.h.b16 %v3916
  %v4301 = vunpack.c.l.b16 %v3917
  %v4302 = vunpack.c.h.b16 %v3917
  %v4303 = vunpack.c.l.b16 %v3918
  %v4304 = vunpack.c.h.b16 %v3918
  %v4305 = vunpack.c.l.b16 %v3919
  %v4306 = vunpack.c.h.b16 %v3919
  %v4307 = vunpack.c.l.b16 %v3920
  %v4308 = vunpack.c.h.b16 %v3920
  %v4309 = vunpack.c.l.b16 %v3921
  %v4310 = vunpack.c.h.b16 %v3921
  %v4311 = vunpack.c.l.b16 %v3922
  %v4312 = vunpack.c.h.b16 %v3922
  %v4313 = vunpack.c.l.b16 %v3923
  %v4314 = vunpack.c.h.b16 %v3923
  %v4315 = vunpack.c.l.b16 %v3924
  %v4316 = vunpack.c.h.b16 %v3924
  %v4317 = vunpack.c.l.b16 %v3925
  %v4318 = vunpack.c.h.b16 %v3925
  %v4319 = vunpack.c.l.b16 %v3926
  %v4320 = vunpack.c.h.b16 %v3926
  %v4321 = vunpack.c.l.b16 %v3927
  %v4322 = vunpack.c.h.b16 %v3927
  %v4323 = vunpack.c.l.b16 %v3928
  %v4324 = vunpack.c.h.b16 %v3928
  %v4325 = vunpack.c.l.b16 %v3929
  %v4326 = vunpack.c.h.b16 %v3929
  %v4327 = vunpack.c.l.b16 %v3930
  %v4328 = vunpack.c.h.b16 %v3930
  %v4329 = vunpack.c.l.b16 %v3931
  %v4330 = vunpack.c.h.b16 %v3931
  %v4331 = vunpack.c.l.b16 %v3932
  %v4332 = vunpack.c.h.b16 %v3932
  %v4333 = vunpack.c.l.b16 %v3933
  %v4334 = vunpack.c.h.b16 %v3933
  %v4335 = vpack.c.b16 %v4081, %v4079
  %v4336 = vpack.c.b16 %v4082, %v4080
  %v4337 = vpack.c.b16 %v4085, %v4083
  %v4338 = vpack.c.b16 %v4086, %v4084
  %v4339 = vpack.c.b16 %v4089, %v4087
  %v4340 = vpack.c.b16 %v4090, %v4088
  %v4341 = vpack.c.b16 %v4093, %v4091
  %v4342 = vpack.c.b16 %v4094, %v4092
  %v4343 = vpack.c.b16 %v4097, %v4095
  %v4344 = vpack.c.b16 %v4098, %v4096
  %v4345 = vpack.c.b16 %v4101, %v4099
  %v4346 = vpack.c.b16 %v4102, %v4100
  %v4347 = vpack.c.b16 %v4105, %v4103
  %v4348 = vpack.c.b16 %v4106, %v4104
  %v4349 = vpack.c.b16 %v4109, %v4107
  %v4350 = vpack.c.b16 %v4110, %v4108
  %v4351 = vpack.c.b16 %v4113, %v4111
  %v4352 = vpack.c.b16 %v4114, %v4112
  %v4353 = vpack.c.b16 %v4117, %v4115
  %v4354 = vpack.c.b16 %v4118, %v4116
  %v4355 = vpack.c.b16 %v4121, %v4119
  %v4356 = vpack.c.b16 %v4122, %v4120
  %v4357 = vpack.c.b16 %v4125, %v4123
  %v4358 = vpack.c.b16 %v4126, %v4124
  %v4359 = vpack.c.b16 %v4129, %v4127
  %v4360 = vpack.c.b16 %v4130, %v4128
  %v4361 = vpack.c.b16 %v4133, %v4131
  %v4362 = vpack.c.b16 %v4134, %v4132
  %v4363 = vpack.c.b16 %v4137, %v4135
  %v4364 = vpack.c.b16 %v4138, %v4136
  %v4365 = vpack.c.b16 %v4141, %v4139
  %v4366 = vpack.c.b16 %v4142, %v4140
  %v4367 = vpack.c.b16 %v4145, %v4143
  %v4368 = vpack.c.b16 %v4146, %v4144
  %v4369 = vpack.c.b16 %v4149, %v4147
  %v4370 = vpack.c.b16 %v4150, %v4148
  %v4371 = vpack.c.b16 %v4153, %v4151
  %v4372 = vpack.c.b16 %v4154, %v4152
  %v4373 = vpack.c.b16 %v4157, %v4155
  %v4374 = vpack.c.b16 %v4158, %v4156
  %v4375 = vpack.c.b16 %v4161, %v4159
  %v4376 = vpack.c.b16 %v4162, %v4160
  %v4377 = vpack.c.b16 %v4165, %v4163
  %v4378 = vpack.c.b16 %v4166, %v4164
  %v4379 = vpack.c.b16 %v4169, %v4167
  %v4380 = vpack.c.b16 %v4170, %v4168
  %v4381 = vpack.c.b16 %v4173, %v4171
  %v4382 = vpack.c.b16 %v4174, %v4172
  %v4383 = vpack.c.b16 %v4177, %v4175
  %v4384 = vpack.c.b16 %v4178, %v4176
  %v4385 = vpack.c.b16 %v4181, %v4179
  %v4386 = vpack.c.b16 %v4182, %v4180
  %v4387 = vpack.c.b16 %v4185, %v4183
  %v4388 = vpack.c.b16 %v4186, %v4184
  %v4389 = vpack.c.b16 %v4189, %v4187
  %v4390 = vpack.c.b16 %v4190, %v4188
  %v4391 = vpack.c.b16 %v4193, %v4191
  %v4392 = vpack.c.b16 %v4194, %v4192
  %v4393 = vpack.c.b16 %v4197, %v4195
  %v4394 = vpack.c.b16 %v4198, %v4196
  %v4395 = vpack.c.b16 %v4201, %v4199
  %v4396 = vpack.c.b16 %v4202, %v4200
  %v4397 = vpack.c.b16 %v4205, %v4203
  %v4398 = vpack.c.b16 %v4206, %v4204
  %v4399 = vpack.c.b16 %v4209, %v4207
  %v4400 = vpack.c.b16 %v4210, %v4208
  %v4401 = vpack.c.b16 %v4213, %v4211
  %v4402 = vpack.c.b16 %v4214, %v4212
  %v4403 = vpack.c.b16 %v4217, %v4215
  %v4404 = vpack.c.b16 %v4218, %v4216
  %v4405 = vpack.c.b16 %v4221, %v4219
  %v4406 = vpack.c.b16 %v4222, %v4220
  %v4407 = vpack.c.b16 %v4225, %v4223
  %v4408 = vpack.c.b16 %v4226, %v4224
  %v4409 = vpack.c.b16 %v4229, %v4227
  %v4410 = vpack.c.b16 %v4230, %v4228
  %v4411 = vpack.c.b16 %v4233, %v4231
  %v4412 = vpack.c.b16 %v4234, %v4232
  %v4413 = vpack.c.b16 %v4237, %v4235
  %v4414 = vpack.c.b16 %v4238, %v4236
  %v4415 = vpack.c.b16 %v4241, %v4239
  %v4416 = vpack.c.b16 %v4242, %v4240
  %v4417 = vpack.c.b16 %v4245, %v4243
  %v4418 = vpack.c.b16 %v4246, %v4244
  %v4419 = vpack.c.b16 %v4249, %v4247
  %v4420 = vpack.c.b16 %v4250, %v4248
  %v4421 = vpack.c.b16 %v4253, %v4251
  %v4422 = vpack.c.b16 %v4254, %v4252
  %v4423 = vpack.c.b16 %v4257, %v4255
  %v4424 = vpack.c.b16 %v4258, %v4256
  %v4425 = vpack.c.b16 %v4261, %v4259
  %v4426 = vpack.c.b16 %v4262, %v4260
  %v4427 = vpack.c.b16 %v4265, %v4263
  %v4428 = vpack.c.b16 %v4266, %v4264
  %v4429 = vpack.c.b16 %v4269, %v4267
  %v4430 = vpack.c.b16 %v4270, %v4268
  %v4431 = vpack.c.b16 %v4273, %v4271
  %v4432 = vpack.c.b16 %v4274, %v4272
  %v4433 = vpack.c.b16 %v4277, %v4275
  %v4434 = vpack.c.b16 %v4278, %v4276
  %v4435 = vpack.c.b16 %v4281, %v4279
  %v4436 = vpack.c.b16 %v4282, %v4280
  %v4437 = vpack.c.b16 %v4285, %v4283
  %v4438 = vpack.c.b16 %v4286, %v4284
  %v4439 = vpack.c.b16 %v4289, %v4287
  %v4440 = vpack.c.b16 %v4290, %v4288
  %v4441 = vpack.c.b16 %v4293, %v4291
  %v4442 = vpack.c.b16 %v4294, %v4292
  %v4443 = vpack.c.b16 %v4297, %v4295
  %v4444 = vpack.c.b16 %v4298, %v4296
  %v4445 = vpack.c.b16 %v4301, %v4299
  %v4446 = vpack.c.b16 %v4302, %v4300
  %v4447 = vpack.c.b16 %v4305, %v4303
  %v4448 = vpack.c.b16 %v4306, %v4304
  %v4449 = vpack.c.b16 %v4309, %v4307
  %v4450 = vpack.c.b16 %v4310, %v4308
  %v4451 = vpack.c.b16 %v4313, %v4311
  %v4452 = vpack.c.b16 %v4314, %v4312
  %v4453 = vpack.c.b16 %v4317, %v4315
  %v4454 = vpack.c.b16 %v4318, %v4316
  %v4455 = vpack.c.b16 %v4321, %v4319
  %v4456 = vpack.c.b16 %v4322, %v4320
  %v4457 = vpack.c.b16 %v4325, %v4323
  %v4458 = vpack.c.b16 %v4326, %v4324
  %v4459 = vpack.c.b16 %v4329, %v4327
  %v4460 = vpack.c.b16 %v4330, %v4328
  %v4461 = vpack.c.b16 %v4333, %v4331
  %v4462 = vpack.c.b16 %v4334, %v4332
  %4591 = vmatprep.subr.bf16.mxu0 0
  %4592 = vmatpush1.bf16.msra.mxu0 %v3935
  %4593 = vmatprep.subr.bf16.mxu0 0
  %4594 = vmatpush1.bf16.msra.mxu0 %v3936
  %4595 = vmatprep.subr.bf16.mxu0 0
  %4596 = vmatpush1.bf16.msra.mxu0 %v3937
  %4597 = vmatprep.subr.bf16.mxu0 0
  %4598 = vmatpush1.bf16.msra.mxu0 %v3938
  %4599 = vmatprep.subr.bf16.mxu0 0
  %4600 = vmatpush1.bf16.msra.mxu0 %v3939
  %4601 = vmatprep.subr.bf16.mxu0 0
  %4602 = vmatpush1.bf16.msra.mxu0 %v3940
  %4603 = vmatprep.subr.bf16.mxu0 0
  %4604 = vmatpush1.bf16.msra.mxu0 %v3941
  %4605 = vmatprep.subr.bf16.mxu0 0
  %4606 = vmatpush1.bf16.msra.mxu0 %v3942
  %4607 = vmatprep.subr.bf16.mxu0 0
  %4608 = vmatpush1.bf16.msra.mxu0 %v3943
  %4609 = vmatprep.subr.bf16.mxu0 0
  %4610 = vmatpush1.bf16.msra.mxu0 %v3944
  %4611 = vmatprep.subr.bf16.mxu0 0
  %4612 = vmatpush1.bf16.msra.mxu0 %v3945
  %4613 = vmatprep.subr.bf16.mxu0 0
  %4614 = vmatpush1.bf16.msra.mxu0 %v3946
  %4615 = vmatprep.subr.bf16.mxu0 0
  %4616 = vmatpush1.bf16.msra.mxu0 %v3947
  %4617 = vmatprep.subr.bf16.mxu0 0
  %4618 = vmatpush1.bf16.msra.mxu0 %v3948
  %4619 = vmatprep.subr.bf16.mxu0 0
  %4620 = vmatpush1.bf16.msra.mxu0 %v3949
  %4621 = vmatprep.subr.bf16.mxu0 0
  %4622 = vmatpush1.bf16.msra.mxu0 %v3950
  %4623 = vmatprep.mubr.bf16.mxu0 %v4336
  %4624 = vmatmul.mubr.bf16.gmra.mrb[0].mxu0 %v4335
  %v4625 = vpop.f32.mrb[0].mxu0
  %v4626 = vadd.f32 0.0, %v4625
  %v4627 = vpop.f32.mrb[0].mxu0
  %v4628 = vpop.f32.mrb[0].mxu0
  %v4629 = vadd.f32 0.0, %v4628
  %v4630 = vpop.f32.mrb[0].mxu0
  %4631 = vmatprep.mubr.bf16.mxu0 %v4338
  %4632 = vmatmul.mubr.bf16.gmra.mrb[0].mxu0 %v4337
  %v4633 = vpop.f32.mrb[0].mxu0
  %v4634 = vadd.f32 0.0, %v4633
  %v4635 = vpop.f32.mrb[0].mxu0
  %v4636 = vpop.f32.mrb[0].mxu0
  %v4637 = vadd.f32 0.0, %v4636
  %v4638 = vpop.f32.mrb[0].mxu0
  %4639 = vmatprep.mubr.bf16.mxu0 %v4340
  %4640 = vmatmul.mubr.bf16.gmra.mrb[0].mxu0 %v4339
  %v4641 = vpop.f32.mrb[0].mxu0
  %v4642 = vadd.f32 0.0, %v4641
  %v4643 = vpop.f32.mrb[0].mxu0
  %v4644 = vpop.f32.mrb[0].mxu0
  %v4645 = vadd.f32 0.0, %v4644
  %v4646 = vpop.f32.mrb[0].mxu0
  %4647 = vmatprep.mubr.bf16.mxu0 %v4342
  %4648 = vmatmul.mubr.bf16.gmra.mrb[0].mxu0 %v4341
  %v4649 = vpop.f32.mrb[0].mxu0
  %v4650 = vadd.f32 0.0, %v4649
  %v4651 = vpop.f32.mrb[0].mxu0
  %v4652 = vpop.f32.mrb[0].mxu0
  %v4653 = vadd.f32 0.0, %v4652
  %v4654 = vpop.f32.mrb[0].mxu0
  %4655 = vmatprep.mubr.bf16.mxu0 %v4344
  %4656 = vmatmul.mubr.bf16.gmra.mrb[0].mxu0 %v4343
  %v4657 = vpop.f32.mrb[0].mxu0
  %v4658 = vadd.f32 0.0, %v4657
  %v4659 = vpop.f32.mrb[0].mxu0
  %v4660 = vpop.f32.mrb[0].mxu0
  %v4661 = vadd.f32 0.0, %v4660
  %v4662 = vpop.f32.mrb[0].mxu0
  %4663 = vmatprep.mubr.bf16.mxu0 %v4346
  %4664 = vmatmul.mubr.bf16.gmra.mrb[0].mxu0 %v4345
  %v4665 = vpop.f32.mrb[0].mxu0
  %v4666 = vadd.f32 0.0, %v4665
  %v4667 = vpop.f32.mrb[0].mxu0
  %v4668 = vpop.f32.mrb[0].mxu0
  %v4669 = vadd.f32 0.0, %v4668
  %v4670 = vpop.f32.mrb[0].mxu0
  %4671 = vmatprep.mubr.bf16.mxu0 %v4348
  %4672 = vmatmul.mubr.bf16.gmra.mrb[0].mxu0 %v4347
  %v4673 = vpop.f32.mrb[0].mxu0
  %v4674 = vadd.f32 0.0, %v4673
  %v4675 = vpop.f32.mrb[0].mxu0
  %v4676 = vpop.f32.mrb[0].mxu0
  %v4677 = vadd.f32 0.0, %v4676
  %v4678 = vpop.f32.mrb[0].mxu0
  %4679 = vmatprep.mubr.bf16.mxu0 %v4350
  %4680 = vmatmul.mubr.bf16.gmra.mrb[0].mxu0 %v4349
  %v4681 = vpop.f32.mrb[0].mxu0
  %v4682 = vadd.f32 0.0, %v4681
  %v4683 = vpop.f32.mrb[0].mxu0
  %v4684 = vpop.f32.mrb[0].mxu0
  %v4685 = vadd.f32 0.0, %v4684
  %v4686 = vpop.f32.mrb[0].mxu0
  %4687 = vmatprep.mubr.bf16.mxu0 %v4352
  %4688 = vmatmul.mubr.bf16.gmra.mrb[0].mxu0 %v4351
  %v4689 = vpop.f32.mrb[0].mxu0
  %v4690 = vadd.f32 0.0, %v4689
  %v4691 = vpop.f32.mrb[0].mxu0
  %v4692 = vpop.f32.mrb[0].mxu0
  %v4693 = vadd.f32 0.0, %v4692
  %v4694 = vpop.f32.mrb[0].mxu0
  %4695 = vmatprep.mubr.bf16.mxu0 %v4354
  %4696 = vmatmul.mubr.bf16.gmra.mrb[0].mxu0 %v4353
  %v4697 = vpop.f32.mrb[0].mxu0
  %v4698 = vadd.f32 0.0, %v4697
  %v4699 = vpop.f32.mrb[0].mxu0
  %v4700 = vpop.f32.mrb[0].mxu0
  %v4701 = vadd.f32 0.0, %v4700
  %v4702 = vpop.f32.mrb[0].mxu0
  %4703 = vmatprep.mubr.bf16.mxu0 %v4356
  %4704 = vmatmul.mubr.bf16.gmra.mrb[0].mxu0 %v4355
  %v4705 = vpop.f32.mrb[0].mxu0
  %v4706 = vadd.f32 0.0, %v4705
  %v4707 = vpop.f32.mrb[0].mxu0
  %v4708 = vpop.f32.mrb[0].mxu0
  %v4709 = vadd.f32 0.0, %v4708
  %v4710 = vpop.f32.mrb[0].mxu0
  %4711 = vmatprep.mubr.bf16.mxu0 %v4358
  %4712 = vmatmul.mubr.bf16.gmra.mrb[0].mxu0 %v4357
  %v4713 = vpop.f32.mrb[0].mxu0
  %v4714 = vadd.f32 0.0, %v4713
  %v4715 = vpop.f32.mrb[0].mxu0
  %v4716 = vpop.f32.mrb[0].mxu0
  %v4717 = vadd.f32 0.0, %v4716
  %v4718 = vpop.f32.mrb[0].mxu0
  %4719 = vmatprep.mubr.bf16.mxu0 %v4360
  %4720 = vmatmul.mubr.bf16.gmra.mrb[0].mxu0 %v4359
  %v4721 = vpop.f32.mrb[0].mxu0
  %v4722 = vadd.f32 0.0, %v4721
  %v4723 = vpop.f32.mrb[0].mxu0
  %v4724 = vpop.f32.mrb[0].mxu0
  %v4725 = vadd.f32 0.0, %v4724
  %v4726 = vpop.f32.mrb[0].mxu0
  %4727 = vmatprep.mubr.bf16.mxu0 %v4362
  %4728 = vmatmul.mubr.bf16.gmra.mrb[0].mxu0 %v4361
  %v4729 = vpop.f32.mrb[0].mxu0
  %v4730 = vadd.f32 0.0, %v4729
  %v4731 = vpop.f32.mrb[0].mxu0
  %v4732 = vpop.f32.mrb[0].mxu0
  %v4733 = vadd.f32 0.0, %v4732
  %v4734 = vpop.f32.mrb[0].mxu0
  %4735 = vmatprep.mubr.bf16.mxu0 %v4364
  %4736 = vmatmul.mubr.bf16.gmra.mrb[0].mxu0 %v4363
  %v4737 = vpop.f32.mrb[0].mxu0
  %v4738 = vadd.f32 0.0, %v4737
  %v4739 = vpop.f32.mrb[0].mxu0
  %v4740 = vpop.f32.mrb[0].mxu0
  %v4741 = vadd.f32 0.0, %v4740
  %v4742 = vpop.f32.mrb[0].mxu0
  %4743 = vmatprep.mubr.bf16.mxu0 %v4366
  %4744 = vmatmul.mubr.bf16.gmra.mrb[0].mxu0 %v4365
  %v4745 = vpop.f32.mrb[0].mxu0
  %v4746 = vadd.f32 0.0, %v4745
  %v4747 = vpop.f32.mrb[0].mxu0
  %v4748 = vpop.f32.mrb[0].mxu0
  %v4749 = vadd.f32 0.0, %v4748
  %v4750 = vpop.f32.mrb[0].mxu0
  %4751 = vmatprep.mubr.bf16.mxu0 %v4368
  %4752 = vmatmul.mubr.bf16.gmra.mrb[0].mxu0 %v4367
  %v4753 = vpop.f32.mrb[0].mxu0
  %v4754 = vadd.f32 0.0, %v4753
  %v4755 = vpop.f32.mrb[0].mxu0
  %v4756 = vpop.f32.mrb[0].mxu0
  %v4757 = vadd.f32 0.0, %v4756
  %v4758 = vpop.f32.mrb[0].mxu0
  %4759 = vmatprep.mubr.bf16.mxu0 %v4370
  %4760 = vmatmul.mubr.bf16.gmra.mrb[0].mxu0 %v4369
  %v4761 = vpop.f32.mrb[0].mxu0
  %v4762 = vadd.f32 0.0, %v4761
  %v4763 = vpop.f32.mrb[0].mxu0
  %v4764 = vpop.f32.mrb[0].mxu0
  %v4765 = vadd.f32 0.0, %v4764
  %v4766 = vpop.f32.mrb[0].mxu0
  %4767 = vmatprep.mubr.bf16.mxu0 %v4372
  %4768 = vmatmul.mubr.bf16.gmra.mrb[0].mxu0 %v4371
  %v4769 = vpop.f32.mrb[0].mxu0
  %v4770 = vadd.f32 0.0, %v4769
  %v4771 = vpop.f32.mrb[0].mxu0
  %v4772 = vpop.f32.mrb[0].mxu0
  %v4773 = vadd.f32 0.0, %v4772
  %v4774 = vpop.f32.mrb[0].mxu0
  %4775 = vmatprep.mubr.bf16.mxu0 %v4374
  %4776 = vmatmul.mubr.bf16.gmra.mrb[0].mxu0 %v4373
  %v4777 = vpop.f32.mrb[0].mxu0
  %v4778 = vadd.f32 0.0, %v4777
  %v4779 = vpop.f32.mrb[0].mxu0
  %v4780 = vpop.f32.mrb[0].mxu0
  %v4781 = vadd.f32 0.0, %v4780
  %v4782 = vpop.f32.mrb[0].mxu0
  %4783 = vmatprep.mubr.bf16.mxu0 %v4376
  %4784 = vmatmul.mubr.bf16.gmra.mrb[0].mxu0 %v4375
  %v4785 = vpop.f32.mrb[0].mxu0
  %v4786 = vadd.f32 0.0, %v4785
  %v4787 = vpop.f32.mrb[0].mxu0
  %v4788 = vpop.f32.mrb[0].mxu0
  %v4789 = vadd.f32 0.0, %v4788
  %v4790 = vpop.f32.mrb[0].mxu0
  %4791 = vmatprep.mubr.bf16.mxu0 %v4378
  %4792 = vmatmul.mubr.bf16.gmra.mrb[0].mxu0 %v4377
  %v4793 = vpop.f32.mrb[0].mxu0
  %v4794 = vadd.f32 0.0, %v4793
  %v4795 = vpop.f32.mrb[0].mxu0
  %v4796 = vpop.f32.mrb[0].mxu0
  %v4797 = vadd.f32 0.0, %v4796
  %v4798 = vpop.f32.mrb[0].mxu0
  %4799 = vmatprep.mubr.bf16.mxu0 %v4380
  %4800 = vmatmul.mubr.bf16.gmra.mrb[0].mxu0 %v4379
  %v4801 = vpop.f32.mrb[0].mxu0
  %v4802 = vadd.f32 0.0, %v4801
  %v4803 = vpop.f32.mrb[0].mxu0
  %v4804 = vpop.f32.mrb[0].mxu0
  %v4805 = vadd.f32 0.0, %v4804
  %v4806 = vpop.f32.mrb[0].mxu0
  %4807 = vmatprep.mubr.bf16.mxu0 %v4382
  %4808 = vmatmul.mubr.bf16.gmra.mrb[0].mxu0 %v4381
  %v4809 = vpop.f32.mrb[0].mxu0
  %v4810 = vadd.f32 0.0, %v4809
  %v4811 = vpop.f32.mrb[0].mxu0
  %v4812 = vpop.f32.mrb[0].mxu0
  %v4813 = vadd.f32 0.0, %v4812
  %v4814 = vpop.f32.mrb[0].mxu0
  %4815 = vmatprep.mubr.bf16.mxu0 %v4384
  %4816 = vmatmul.mubr.bf16.gmra.mrb[0].mxu0 %v4383
  %v4817 = vpop.f32.mrb[0].mxu0
  %v4818 = vadd.f32 0.0, %v4817
  %v4819 = vpop.f32.mrb[0].mxu0
  %v4820 = vpop.f32.mrb[0].mxu0
  %v4821 = vadd.f32 0.0, %v4820
  %v4822 = vpop.f32.mrb[0].mxu0
  %4823 = vmatprep.mubr.bf16.mxu0 %v4386
  %4824 = vmatmul.mubr.bf16.gmra.mrb[0].mxu0 %v4385
  %v4825 = vpop.f32.mrb[0].mxu0
  %v4826 = vadd.f32 0.0, %v4825
  %v4827 = vpop.f32.mrb[0].mxu0
  %v4828 = vpop.f32.mrb[0].mxu0
  %v4829 = vadd.f32 0.0, %v4828
  %v4830 = vpop.f32.mrb[0].mxu0
  %4831 = vmatprep.mubr.bf16.mxu0 %v4388
  %4832 = vmatmul.mubr.bf16.gmra.mrb[0].mxu0 %v4387
  %v4833 = vpop.f32.mrb[0].mxu0
  %v4834 = vadd.f32 0.0, %v4833
  %v4835 = vpop.f32.mrb[0].mxu0
  %v4836 = vpop.f32.mrb[0].mxu0
  %v4837 = vadd.f32 0.0, %v4836
  %v4838 = vpop.f32.mrb[0].mxu0
  %4839 = vmatprep.mubr.bf16.mxu0 %v4390
  %4840 = vmatmul.mubr.bf16.gmra.mrb[0].mxu0 %v4389
  %v4841 = vpop.f32.mrb[0].mxu0
  %v4842 = vadd.f32 0.0, %v4841
  %v4843 = vpop.f32.mrb[0].mxu0
  %v4844 = vpop.f32.mrb[0].mxu0
  %v4845 = vadd.f32 0.0, %v4844
  %v4846 = vpop.f32.mrb[0].mxu0
  %4847 = vmatprep.mubr.bf16.mxu0 %v4392
  %4848 = vmatmul.mubr.bf16.gmra.mrb[0].mxu0 %v4391
  %v4849 = vpop.f32.mrb[0].mxu0
  %v4850 = vadd.f32 0.0, %v4849
  %v4851 = vpop.f32.mrb[0].mxu0
  %v4852 = vpop.f32.mrb[0].mxu0
  %v4853 = vadd.f32 0.0, %v4852
  %v4854 = vpop.f32.mrb[0].mxu0
  %4855 = vmatprep.mubr.bf16.mxu0 %v4394
  %4856 = vmatmul.mubr.bf16.gmra.mrb[0].mxu0 %v4393
  %v4857 = vpop.f32.mrb[0].mxu0
  %v4858 = vadd.f32 0.0, %v4857
  %v4859 = vpop.f32.mrb[0].mxu0
  %v4860 = vpop.f32.mrb[0].mxu0
  %v4861 = vadd.f32 0.0, %v4860
  %v4862 = vpop.f32.mrb[0].mxu0
  %4863 = vmatprep.mubr.bf16.mxu0 %v4396
  %4864 = vmatmul.mubr.bf16.gmra.mrb[0].mxu0 %v4395
  %v4865 = vpop.f32.mrb[0].mxu0
  %v4866 = vadd.f32 0.0, %v4865
  %v4867 = vpop.f32.mrb[0].mxu0
  %v4868 = vpop.f32.mrb[0].mxu0
  %v4869 = vadd.f32 0.0, %v4868
  %v4870 = vpop.f32.mrb[0].mxu0
  %4871 = vmatprep.mubr.bf16.mxu0 %v4398
  %4872 = vmatmul.mubr.bf16.gmra.mrb[0].mxu0 %v4397
  %v4873 = vpop.f32.mrb[0].mxu0
  %v4874 = vadd.f32 0.0, %v4873
  %v4875 = vpop.f32.mrb[0].mxu0
  %v4876 = vpop.f32.mrb[0].mxu0
  %v4877 = vadd.f32 0.0, %v4876
  %v4878 = vpop.f32.mrb[0].mxu0
  %4879 = vmatprep.mubr.bf16.mxu0 %v4400
  %4880 = vmatmul.mubr.bf16.gmra.mrb[0].mxu0 %v4399
  %v4881 = vpop.f32.mrb[0].mxu0
  %v4882 = vadd.f32 0.0, %v4881
  %v4883 = vpop.f32.mrb[0].mxu0
  %v4884 = vpop.f32.mrb[0].mxu0
  %v4885 = vadd.f32 0.0, %v4884
  %v4886 = vpop.f32.mrb[0].mxu0
  %4887 = vmatprep.mubr.bf16.mxu0 %v4402
  %4888 = vmatmul.mubr.bf16.gmra.mrb[0].mxu0 %v4401
  %v4889 = vpop.f32.mrb[0].mxu0
  %v4890 = vadd.f32 0.0, %v4889
  %v4891 = vpop.f32.mrb[0].mxu0
  %v4892 = vpop.f32.mrb[0].mxu0
  %v4893 = vadd.f32 0.0, %v4892
  %v4894 = vpop.f32.mrb[0].mxu0
  %4895 = vmatprep.mubr.bf16.mxu0 %v4404
  %4896 = vmatmul.mubr.bf16.gmra.mrb[0].mxu0 %v4403
  %v4897 = vpop.f32.mrb[0].mxu0
  %v4898 = vadd.f32 0.0, %v4897
  %v4899 = vpop.f32.mrb[0].mxu0
  %v4900 = vpop.f32.mrb[0].mxu0
  %v4901 = vadd.f32 0.0, %v4900
  %v4902 = vpop.f32.mrb[0].mxu0
  %4903 = vmatprep.mubr.bf16.mxu0 %v4406
  %4904 = vmatmul.mubr.bf16.gmra.mrb[0].mxu0 %v4405
  %v4905 = vpop.f32.mrb[0].mxu0
  %v4906 = vadd.f32 0.0, %v4905
  %v4907 = vpop.f32.mrb[0].mxu0
  %v4908 = vpop.f32.mrb[0].mxu0
  %v4909 = vadd.f32 0.0, %v4908
  %v4910 = vpop.f32.mrb[0].mxu0
  %4911 = vmatprep.mubr.bf16.mxu0 %v4408
  %4912 = vmatmul.mubr.bf16.gmra.mrb[0].mxu0 %v4407
  %v4913 = vpop.f32.mrb[0].mxu0
  %v4914 = vadd.f32 0.0, %v4913
  %v4915 = vpop.f32.mrb[0].mxu0
  %v4916 = vpop.f32.mrb[0].mxu0
  %v4917 = vadd.f32 0.0, %v4916
  %v4918 = vpop.f32.mrb[0].mxu0
  %4919 = vmatprep.mubr.bf16.mxu0 %v4410
  %4920 = vmatmul.mubr.bf16.gmra.mrb[0].mxu0 %v4409
  %v4921 = vpop.f32.mrb[0].mxu0
  %v4922 = vadd.f32 0.0, %v4921
  %v4923 = vpop.f32.mrb[0].mxu0
  %v4924 = vpop.f32.mrb[0].mxu0
  %v4925 = vadd.f32 0.0, %v4924
  %v4926 = vpop.f32.mrb[0].mxu0
  %4927 = vmatprep.mubr.bf16.mxu0 %v4412
  %4928 = vmatmul.mubr.bf16.gmra.mrb[0].mxu0 %v4411
  %v4929 = vpop.f32.mrb[0].mxu0
  %v4930 = vadd.f32 0.0, %v4929
  %v4931 = vpop.f32.mrb[0].mxu0
  %v4932 = vpop.f32.mrb[0].mxu0
  %v4933 = vadd.f32 0.0, %v4932
  %v4934 = vpop.f32.mrb[0].mxu0
  %4935 = vmatprep.mubr.bf16.mxu0 %v4414
  %4936 = vmatmul.mubr.bf16.gmra.mrb[0].mxu0 %v4413
  %v4937 = vpop.f32.mrb[0].mxu0
  %v4938 = vadd.f32 0.0, %v4937
  %v4939 = vpop.f32.mrb[0].mxu0
  %v4940 = vpop.f32.mrb[0].mxu0
  %v4941 = vadd.f32 0.0, %v4940
  %v4942 = vpop.f32.mrb[0].mxu0
  %4943 = vmatprep.mubr.bf16.mxu0 %v4416
  %4944 = vmatmul.mubr.bf16.gmra.mrb[0].mxu0 %v4415
  %v4945 = vpop.f32.mrb[0].mxu0
  %v4946 = vadd.f32 0.0, %v4945
  %v4947 = vpop.f32.mrb[0].mxu0
  %v4948 = vpop.f32.mrb[0].mxu0
  %v4949 = vadd.f32 0.0, %v4948
  %v4950 = vpop.f32.mrb[0].mxu0
  %4951 = vmatprep.mubr.bf16.mxu0 %v4418
  %4952 = vmatmul.mubr.bf16.gmra.mrb[0].mxu0 %v4417
  %v4953 = vpop.f32.mrb[0].mxu0
  %v4954 = vadd.f32 0.0, %v4953
  %v4955 = vpop.f32.mrb[0].mxu0
  %v4956 = vpop.f32.mrb[0].mxu0
  %v4957 = vadd.f32 0.0, %v4956
  %v4958 = vpop.f32.mrb[0].mxu0
  %4959 = vmatprep.mubr.bf16.mxu0 %v4420
  %4960 = vmatmul.mubr.bf16.gmra.mrb[0].mxu0 %v4419
  %v4961 = vpop.f32.mrb[0].mxu0
  %v4962 = vadd.f32 0.0, %v4961
  %v4963 = vpop.f32.mrb[0].mxu0
  %v4964 = vpop.f32.mrb[0].mxu0
  %v4965 = vadd.f32 0.0, %v4964
  %v4966 = vpop.f32.mrb[0].mxu0
  %4967 = vmatprep.mubr.bf16.mxu0 %v4422
  %4968 = vmatmul.mubr.bf16.gmra.mrb[0].mxu0 %v4421
  %v4969 = vpop.f32.mrb[0].mxu0
  %v4970 = vadd.f32 0.0, %v4969
  %v4971 = vpop.f32.mrb[0].mxu0
  %v4972 = vpop.f32.mrb[0].mxu0
  %v4973 = vadd.f32 0.0, %v4972
  %v4974 = vpop.f32.mrb[0].mxu0
  %4975 = vmatprep.mubr.bf16.mxu0 %v4424
  %4976 = vmatmul.mubr.bf16.gmra.mrb[0].mxu0 %v4423
  %v4977 = vpop.f32.mrb[0].mxu0
  %v4978 = vadd.f32 0.0, %v4977
  %v4979 = vpop.f32.mrb[0].mxu0
  %v4980 = vpop.f32.mrb[0].mxu0
  %v4981 = vadd.f32 0.0, %v4980
  %v4982 = vpop.f32.mrb[0].mxu0
  %4983 = vmatprep.mubr.bf16.mxu0 %v4426
  %4984 = vmatmul.mubr.bf16.gmra.mrb[0].mxu0 %v4425
  %v4985 = vpop.f32.mrb[0].mxu0
  %v4986 = vadd.f32 0.0, %v4985
  %v4987 = vpop.f32.mrb[0].mxu0
  %v4988 = vpop.f32.mrb[0].mxu0
  %v4989 = vadd.f32 0.0, %v4988
  %v4990 = vpop.f32.mrb[0].mxu0
  %4991 = vmatprep.mubr.bf16.mxu0 %v4428
  %4992 = vmatmul.mubr.bf16.gmra.mrb[0].mxu0 %v4427
  %v4993 = vpop.f32.mrb[0].mxu0
  %v4994 = vadd.f32 0.0, %v4993
  %v4995 = vpop.f32.mrb[0].mxu0
  %v4996 = vpop.f32.mrb[0].mxu0
  %v4997 = vadd.f32 0.0, %v4996
  %v4998 = vpop.f32.mrb[0].mxu0
  %4999 = vmatprep.mubr.bf16.mxu0 %v4430
  %5000 = vmatmul.mubr.bf16.gmra.mrb[0].mxu0 %v4429
  %v5001 = vpop.f32.mrb[0].mxu0
  %v5002 = vadd.f32 0.0, %v5001
  %v5003 = vpop.f32.mrb[0].mxu0
  %v5004 = vpop.f32.mrb[0].mxu0
  %v5005 = vadd.f32 0.0, %v5004
  %v5006 = vpop.f32.mrb[0].mxu0
  %5007 = vmatprep.mubr.bf16.mxu0 %v4432
  %5008 = vmatmul.mubr.bf16.gmra.mrb[0].mxu0 %v4431
  %v5009 = vpop.f32.mrb[0].mxu0
  %v5010 = vadd.f32 0.0, %v5009
  %v5011 = vpop.f32.mrb[0].mxu0
  %v5012 = vpop.f32.mrb[0].mxu0
  %v5013 = vadd.f32 0.0, %v5012
  %v5014 = vpop.f32.mrb[0].mxu0
  %5015 = vmatprep.mubr.bf16.mxu0 %v4434
  %5016 = vmatmul.mubr.bf16.gmra.mrb[0].mxu0 %v4433
  %v5017 = vpop.f32.mrb[0].mxu0
  %v5018 = vadd.f32 0.0, %v5017
  %v5019 = vpop.f32.mrb[0].mxu0
  %v5020 = vpop.f32.mrb[0].mxu0
  %v5021 = vadd.f32 0.0, %v5020
  %v5022 = vpop.f32.mrb[0].mxu0
  %5023 = vmatprep.mubr.bf16.mxu0 %v4436
  %5024 = vmatmul.mubr.bf16.gmra.mrb[0].mxu0 %v4435
  %v5025 = vpop.f32.mrb[0].mxu0
  %v5026 = vadd.f32 0.0, %v5025
  %v5027 = vpop.f32.mrb[0].mxu0
  %v5028 = vpop.f32.mrb[0].mxu0
  %v5029 = vadd.f32 0.0, %v5028
  %v5030 = vpop.f32.mrb[0].mxu0
  %5031 = vmatprep.mubr.bf16.mxu0 %v4438
  %5032 = vmatmul.mubr.bf16.gmra.mrb[0].mxu0 %v4437
  %v5033 = vpop.f32.mrb[0].mxu0
  %v5034 = vadd.f32 0.0, %v5033
  %v5035 = vpop.f32.mrb[0].mxu0
  %v5036 = vpop.f32.mrb[0].mxu0
  %v5037 = vadd.f32 0.0, %v5036
  %v5038 = vpop.f32.mrb[0].mxu0
  %5039 = vmatprep.mubr.bf16.mxu0 %v4440
  %5040 = vmatmul.mubr.bf16.gmra.mrb[0].mxu0 %v4439
  %v5041 = vpop.f32.mrb[0].mxu0
  %v5042 = vadd.f32 0.0, %v5041
  %v5043 = vpop.f32.mrb[0].mxu0
  %v5044 = vpop.f32.mrb[0].mxu0
  %v5045 = vadd.f32 0.0, %v5044
  %v5046 = vpop.f32.mrb[0].mxu0
  %5047 = vmatprep.mubr.bf16.mxu0 %v4442
  %5048 = vmatmul.mubr.bf16.gmra.mrb[0].mxu0 %v4441
  %v5049 = vpop.f32.mrb[0].mxu0
  %v5050 = vadd.f32 0.0, %v5049
  %v5051 = vpop.f32.mrb[0].mxu0
  %v5052 = vpop.f32.mrb[0].mxu0
  %v5053 = vadd.f32 0.0, %v5052
  %v5054 = vpop.f32.mrb[0].mxu0
  %5055 = vmatprep.mubr.bf16.mxu0 %v4444
  %5056 = vmatmul.mubr.bf16.gmra.mrb[0].mxu0 %v4443
  %v5057 = vpop.f32.mrb[0].mxu0
  %v5058 = vadd.f32 0.0, %v5057
  %v5059 = vpop.f32.mrb[0].mxu0
  %v5060 = vpop.f32.mrb[0].mxu0
  %v5061 = vadd.f32 0.0, %v5060
  %v5062 = vpop.f32.mrb[0].mxu0
  %5063 = vmatprep.mubr.bf16.mxu0 %v4446
  %5064 = vmatmul.mubr.bf16.gmra.mrb[0].mxu0 %v4445
  %v5065 = vpop.f32.mrb[0].mxu0
  %v5066 = vadd.f32 0.0, %v5065
  %v5067 = vpop.f32.mrb[0].mxu0
  %v5068 = vpop.f32.mrb[0].mxu0
  %v5069 = vadd.f32 0.0, %v5068
  %v5070 = vpop.f32.mrb[0].mxu0
  %5071 = vmatprep.mubr.bf16.mxu0 %v4448
  %5072 = vmatmul.mubr.bf16.gmra.mrb[0].mxu0 %v4447
  %v5073 = vpop.f32.mrb[0].mxu0
  %v5074 = vadd.f32 0.0, %v5073
  %v5075 = vpop.f32.mrb[0].mxu0
  %v5076 = vpop.f32.mrb[0].mxu0
  %v5077 = vadd.f32 0.0, %v5076
  %v5078 = vpop.f32.mrb[0].mxu0
  %5079 = vmatprep.mubr.bf16.mxu0 %v4450
  %5080 = vmatmul.mubr.bf16.gmra.mrb[0].mxu0 %v4449
  %v5081 = vpop.f32.mrb[0].mxu0
  %v5082 = vadd.f32 0.0, %v5081
  %v5083 = vpop.f32.mrb[0].mxu0
  %v5084 = vpop.f32.mrb[0].mxu0
  %v5085 = vadd.f32 0.0, %v5084
  %v5086 = vpop.f32.mrb[0].mxu0
  %5087 = vmatprep.mubr.bf16.mxu0 %v4452
  %5088 = vmatmul.mubr.bf16.gmra.mrb[0].mxu0 %v4451
  %v5089 = vpop.f32.mrb[0].mxu0
  %v5090 = vadd.f32 0.0, %v5089
  %v5091 = vpop.f32.mrb[0].mxu0
  %v5092 = vpop.f32.mrb[0].mxu0
  %v5093 = vadd.f32 0.0, %v5092
  %v5094 = vpop.f32.mrb[0].mxu0
  %5095 = vmatprep.mubr.bf16.mxu0 %v4454
  %5096 = vmatmul.mubr.bf16.gmra.mrb[0].mxu0 %v4453
  %v5097 = vpop.f32.mrb[0].mxu0
  %v5098 = vadd.f32 0.0, %v5097
  %v5099 = vpop.f32.mrb[0].mxu0
  %v5100 = vpop.f32.mrb[0].mxu0
  %v5101 = vadd.f32 0.0, %v5100
  %v5102 = vpop.f32.mrb[0].mxu0
  %5103 = vmatprep.mubr.bf16.mxu0 %v4456
  %5104 = vmatmul.mubr.bf16.gmra.mrb[0].mxu0 %v4455
  %v5105 = vpop.f32.mrb[0].mxu0
  %v5106 = vadd.f32 0.0, %v5105
  %v5107 = vpop.f32.mrb[0].mxu0
  %v5108 = vpop.f32.mrb[0].mxu0
  %v5109 = vadd.f32 0.0, %v5108
  %v5110 = vpop.f32.mrb[0].mxu0
  %5111 = vmatprep.mubr.bf16.mxu0 %v4458
  %5112 = vmatmul.mubr.bf16.gmra.mrb[0].mxu0 %v4457
  %v5113 = vpop.f32.mrb[0].mxu0
  %v5114 = vadd.f32 0.0, %v5113
  %v5115 = vpop.f32.mrb[0].mxu0
  %v5116 = vpop.f32.mrb[0].mxu0
  %v5117 = vadd.f32 0.0, %v5116
  %v5118 = vpop.f32.mrb[0].mxu0
  %5119 = vmatprep.mubr.bf16.mxu0 %v4460
  %5120 = vmatmul.mubr.bf16.gmra.mrb[0].mxu0 %v4459
  %v5121 = vpop.f32.mrb[0].mxu0
  %v5122 = vadd.f32 0.0, %v5121
  %v5123 = vpop.f32.mrb[0].mxu0
  %v5124 = vpop.f32.mrb[0].mxu0
  %v5125 = vadd.f32 0.0, %v5124
  %v5126 = vpop.f32.mrb[0].mxu0
  %5127 = vmatprep.mubr.bf16.mxu0 %v4462
  %5128 = vmatmul.mubr.bf16.gmra.mrb[0].mxu0 %v4461
  %v5129 = vpop.f32.mrb[0].mxu0
  %v5130 = vadd.f32 0.0, %v5129
  %v5131 = vpop.f32.mrb[0].mxu0
  %v5132 = vpop.f32.mrb[0].mxu0
  %v5133 = vadd.f32 0.0, %v5132
  %v5134 = vpop.f32.mrb[0].mxu0
  %5135 = vdwg.mxu0
  %v5136 = vpack.c.bf16 %v4629, %v4626
  %v5137 = vpack.c.bf16 %v4637, %v4634
  %v5138 = vpack.c.bf16 %v4645, %v4642
  %v5139 = vpack.c.bf16 %v4653, %v4650
  %v5140 = vpack.c.bf16 %v4661, %v4658
  %v5141 = vpack.c.bf16 %v4669, %v4666
  %v5142 = vpack.c.bf16 %v4677, %v4674
  %v5143 = vpack.c.bf16 %v4685, %v4682
  %v5144 = vpack.c.bf16 %v4693, %v4690
  %v5145 = vpack.c.bf16 %v4701, %v4698
  %v5146 = vpack.c.bf16 %v4709, %v4706
  %v5147 = vpack.c.bf16 %v4717, %v4714
  %v5148 = vpack.c.bf16 %v4725, %v4722
  %v5149 = vpack.c.bf16 %v4733, %v4730
  %v5150 = vpack.c.bf16 %v4741, %v4738
  %v5151 = vpack.c.bf16 %v4749, %v4746
  %v5152 = vpack.c.bf16 %v4757, %v4754
  %v5153 = vpack.c.bf16 %v4765, %v4762
  %v5154 = vpack.c.bf16 %v4773, %v4770
  %v5155 = vpack.c.bf16 %v4781, %v4778
  %v5156 = vpack.c.bf16 %v4789, %v4786
  %v5157 = vpack.c.bf16 %v4797, %v4794
  %v5158 = vpack.c.bf16 %v4805, %v4802
  %v5159 = vpack.c.bf16 %v4813, %v4810
  %v5160 = vpack.c.bf16 %v4821, %v4818
  %v5161 = vpack.c.bf16 %v4829, %v4826
  %v5162 = vpack.c.bf16 %v4837, %v4834
  %v5163 = vpack.c.bf16 %v4845, %v4842
  %v5164 = vpack.c.bf16 %v4853, %v4850
  %v5165 = vpack.c.bf16 %v4861, %v4858
  %v5166 = vpack.c.bf16 %v4869, %v4866
  %v5167 = vpack.c.bf16 %v4877, %v4874
  %v5168 = vpack.c.bf16 %v4885, %v4882
  %v5169 = vpack.c.bf16 %v4893, %v4890
  %v5170 = vpack.c.bf16 %v4901, %v4898
  %v5171 = vpack.c.bf16 %v4909, %v4906
  %v5172 = vpack.c.bf16 %v4917, %v4914
  %v5173 = vpack.c.bf16 %v4925, %v4922
  %v5174 = vpack.c.bf16 %v4933, %v4930
  %v5175 = vpack.c.bf16 %v4941, %v4938
  %v5176 = vpack.c.bf16 %v4949, %v4946
  %v5177 = vpack.c.bf16 %v4957, %v4954
  %v5178 = vpack.c.bf16 %v4965, %v4962
  %v5179 = vpack.c.bf16 %v4973, %v4970
  %v5180 = vpack.c.bf16 %v4981, %v4978
  %v5181 = vpack.c.bf16 %v4989, %v4986
  %v5182 = vpack.c.bf16 %v4997, %v4994
  %v5183 = vpack.c.bf16 %v5005, %v5002
  %v5184 = vpack.c.bf16 %v5013, %v5010
  %v5185 = vpack.c.bf16 %v5021, %v5018
  %v5186 = vpack.c.bf16 %v5029, %v5026
  %v5187 = vpack.c.bf16 %v5037, %v5034
  %v5188 = vpack.c.bf16 %v5045, %v5042
  %v5189 = vpack.c.bf16 %v5053, %v5050
  %v5190 = vpack.c.bf16 %v5061, %v5058
  %v5191 = vpack.c.bf16 %v5069, %v5066
  %v5192 = vpack.c.bf16 %v5077, %v5074
  %v5193 = vpack.c.bf16 %v5085, %v5082
  %v5194 = vpack.c.bf16 %v5093, %v5090
  %v5195 = vpack.c.bf16 %v5101, %v5098
  %v5196 = vpack.c.bf16 %v5109, %v5106
  %v5197 = vpack.c.bf16 %v5117, %v5114
  %v5198 = vpack.c.bf16 %v5125, %v5122
  %v5199 = vpack.c.bf16 %v5133, %v5130
  %v5264 = vunpack.c.l.b16 %v5136
  %v5265 = vunpack.c.h.b16 %v5136
  %v5266 = vunpack.c.l.b16 %v5137
  %v5267 = vunpack.c.h.b16 %v5137
  %v5268 = vunpack.c.l.b16 %v5138
  %v5269 = vunpack.c.h.b16 %v5138
  %v5270 = vunpack.c.l.b16 %v5139
  %v5271 = vunpack.c.h.b16 %v5139
  %v5272 = vunpack.c.l.b16 %v5140
  %v5273 = vunpack.c.h.b16 %v5140
  %v5274 = vunpack.c.l.b16 %v5141
  %v5275 = vunpack.c.h.b16 %v5141
  %v5276 = vunpack.c.l.b16 %v5142
  %v5277 = vunpack.c.h.b16 %v5142
  %v5278 = vunpack.c.l.b16 %v5143
  %v5279 = vunpack.c.h.b16 %v5143
  %v5280 = vunpack.c.l.b16 %v5144
  %v5281 = vunpack.c.h.b16 %v5144
  %v5282 = vunpack.c.l.b16 %v5145
  %v5283 = vunpack.c.h.b16 %v5145
  %v5284 = vunpack.c.l.b16 %v5146
  %v5285 = vunpack.c.h.b16 %v5146
  %v5286 = vunpack.c.l.b16 %v5147
  %v5287 = vunpack.c.h.b16 %v5147
  %v5288 = vunpack.c.l.b16 %v5148
  %v5289 = vunpack.c.h.b16 %v5148
  %v5290 = vunpack.c.l.b16 %v5149
  %v5291 = vunpack.c.h.b16 %v5149
  %v5292 = vunpack.c.l.b16 %v5150
  %v5293 = vunpack.c.h.b16 %v5150
  %v5294 = vunpack.c.l.b16 %v5151
  %v5295 = vunpack.c.h.b16 %v5151
  %v5296 = vunpack.c.l.b16 %v5152
  %v5297 = vunpack.c.h.b16 %v5152
  %v5298 = vunpack.c.l.b16 %v5153
  %v5299 = vunpack.c.h.b16 %v5153
  %v5300 = vunpack.c.l.b16 %v5154
  %v5301 = vunpack.c.h.b16 %v5154
  %v5302 = vunpack.c.l.b16 %v5155
  %v5303 = vunpack.c.h.b16 %v5155
  %v5304 = vunpack.c.l.b16 %v5156
  %v5305 = vunpack.c.h.b16 %v5156
  %v5306 = vunpack.c.l.b16 %v5157
  %v5307 = vunpack.c.h.b16 %v5157
  %v5308 = vunpack.c.l.b16 %v5158
  %v5309 = vunpack.c.h.b16 %v5158
  %v5310 = vunpack.c.l.b16 %v5159
  %v5311 = vunpack.c.h.b16 %v5159
  %v5312 = vunpack.c.l.b16 %v5160
  %v5313 = vunpack.c.h.b16 %v5160
  %v5314 = vunpack.c.l.b16 %v5161
  %v5315 = vunpack.c.h.b16 %v5161
  %v5316 = vunpack.c.l.b16 %v5162
  %v5317 = vunpack.c.h.b16 %v5162
  %v5318 = vunpack.c.l.b16 %v5163
  %v5319 = vunpack.c.h.b16 %v5163
  %v5320 = vunpack.c.l.b16 %v5164
  %v5321 = vunpack.c.h.b16 %v5164
  %v5322 = vunpack.c.l.b16 %v5165
  %v5323 = vunpack.c.h.b16 %v5165
  %v5324 = vunpack.c.l.b16 %v5166
  %v5325 = vunpack.c.h.b16 %v5166
  %v5326 = vunpack.c.l.b16 %v5167
  %v5327 = vunpack.c.h.b16 %v5167
  %v5328 = vunpack.c.l.b16 %v5168
  %v5329 = vunpack.c.h.b16 %v5168
  %v5330 = vunpack.c.l.b16 %v5169
  %v5331 = vunpack.c.h.b16 %v5169
  %v5332 = vunpack.c.l.b16 %v5170
  %v5333 = vunpack.c.h.b16 %v5170
  %v5334 = vunpack.c.l.b16 %v5171
  %v5335 = vunpack.c.h.b16 %v5171
  %v5336 = vunpack.c.l.b16 %v5172
  %v5337 = vunpack.c.h.b16 %v5172
  %v5338 = vunpack.c.l.b16 %v5173
  %v5339 = vunpack.c.h.b16 %v5173
  %v5340 = vunpack.c.l.b16 %v5174
  %v5341 = vunpack.c.h.b16 %v5174
  %v5342 = vunpack.c.l.b16 %v5175
  %v5343 = vunpack.c.h.b16 %v5175
  %v5344 = vunpack.c.l.b16 %v5176
  %v5345 = vunpack.c.h.b16 %v5176
  %v5346 = vunpack.c.l.b16 %v5177
  %v5347 = vunpack.c.h.b16 %v5177
  %v5348 = vunpack.c.l.b16 %v5178
  %v5349 = vunpack.c.h.b16 %v5178
  %v5350 = vunpack.c.l.b16 %v5179
  %v5351 = vunpack.c.h.b16 %v5179
  %v5352 = vunpack.c.l.b16 %v5180
  %v5353 = vunpack.c.h.b16 %v5180
  %v5354 = vunpack.c.l.b16 %v5181
  %v5355 = vunpack.c.h.b16 %v5181
  %v5356 = vunpack.c.l.b16 %v5182
  %v5357 = vunpack.c.h.b16 %v5182
  %v5358 = vunpack.c.l.b16 %v5183
  %v5359 = vunpack.c.h.b16 %v5183
  %v5360 = vunpack.c.l.b16 %v5184
  %v5361 = vunpack.c.h.b16 %v5184
  %v5362 = vunpack.c.l.b16 %v5185
  %v5363 = vunpack.c.h.b16 %v5185
  %v5364 = vunpack.c.l.b16 %v5186
  %v5365 = vunpack.c.h.b16 %v5186
  %v5366 = vunpack.c.l.b16 %v5187
  %v5367 = vunpack.c.h.b16 %v5187
  %v5368 = vunpack.c.l.b16 %v5188
  %v5369 = vunpack.c.h.b16 %v5188
  %v5370 = vunpack.c.l.b16 %v5189
  %v5371 = vunpack.c.h.b16 %v5189
  %v5372 = vunpack.c.l.b16 %v5190
  %v5373 = vunpack.c.h.b16 %v5190
  %v5374 = vunpack.c.l.b16 %v5191
  %v5375 = vunpack.c.h.b16 %v5191
  %v5376 = vunpack.c.l.b16 %v5192
  %v5377 = vunpack.c.h.b16 %v5192
  %v5378 = vunpack.c.l.b16 %v5193
  %v5379 = vunpack.c.h.b16 %v5193
  %v5380 = vunpack.c.l.b16 %v5194
  %v5381 = vunpack.c.h.b16 %v5194
  %v5382 = vunpack.c.l.b16 %v5195
  %v5383 = vunpack.c.h.b16 %v5195
  %v5384 = vunpack.c.l.b16 %v5196
  %v5385 = vunpack.c.h.b16 %v5196
  %v5386 = vunpack.c.l.b16 %v5197
  %v5387 = vunpack.c.h.b16 %v5197
  %v5388 = vunpack.c.l.b16 %v5198
  %v5389 = vunpack.c.h.b16 %v5198
  %v5390 = vunpack.c.l.b16 %v5199
  %v5391 = vunpack.c.h.b16 %v5199
  %v5392 = vpack.i.b16 %v5266, %v5264
  %v5393 = vpack.i.b16 %v5267, %v5265
  %v5394 = vpack.i.b16 %v5270, %v5268
  %v5395 = vpack.i.b16 %v5271, %v5269
  %v5396 = vpack.i.b16 %v5274, %v5272
  %v5397 = vpack.i.b16 %v5275, %v5273
  %v5398 = vpack.i.b16 %v5278, %v5276
  %v5399 = vpack.i.b16 %v5279, %v5277
  %v5400 = vpack.i.b16 %v5282, %v5280
  %v5401 = vpack.i.b16 %v5283, %v5281
  %v5402 = vpack.i.b16 %v5286, %v5284
  %v5403 = vpack.i.b16 %v5287, %v5285
  %v5404 = vpack.i.b16 %v5290, %v5288
  %v5405 = vpack.i.b16 %v5291, %v5289
  %v5406 = vpack.i.b16 %v5294, %v5292
  %v5407 = vpack.i.b16 %v5295, %v5293
  %v5408 = vpack.i.b16 %v5298, %v5296
  %v5409 = vpack.i.b16 %v5299, %v5297
  %v5410 = vpack.i.b16 %v5302, %v5300
  %v5411 = vpack.i.b16 %v5303, %v5301
  %v5412 = vpack.i.b16 %v5306, %v5304
  %v5413 = vpack.i.b16 %v5307, %v5305
  %v5414 = vpack.i.b16 %v5310, %v5308
  %v5415 = vpack.i.b16 %v5311, %v5309
  %v5416 = vpack.i.b16 %v5314, %v5312
  %v5417 = vpack.i.b16 %v5315, %v5313
  %v5418 = vpack.i.b16 %v5318, %v5316
  %v5419 = vpack.i.b16 %v5319, %v5317
  %v5420 = vpack.i.b16 %v5322, %v5320
  %v5421 = vpack.i.b16 %v5323, %v5321
  %v5422 = vpack.i.b16 %v5326, %v5324
  %v5423 = vpack.i.b16 %v5327, %v5325
  %v5424 = vpack.i.b16 %v5330, %v5328
  %v5425 = vpack.i.b16 %v5331, %v5329
  %v5426 = vpack.i.b16 %v5334, %v5332
  %v5427 = vpack.i.b16 %v5335, %v5333
  %v5428 = vpack.i.b16 %v5338, %v5336
  %v5429 = vpack.i.b16 %v5339, %v5337
  %v5430 = vpack.i.b16 %v5342, %v5340
  %v5431 = vpack.i.b16 %v5343, %v5341
  %v5432 = vpack.i.b16 %v5346, %v5344
  %v5433 = vpack.i.b16 %v5347, %v5345
  %v5434 = vpack.i.b16 %v5350, %v5348
  %v5435 = vpack.i.b16 %v5351, %v5349
  %v5436 = vpack.i.b16 %v5354, %v5352
  %v5437 = vpack.i.b16 %v5355, %v5353
  %v5438 = vpack.i.b16 %v5358, %v5356
  %v5439 = vpack.i.b16 %v5359, %v5357
  %v5440 = vpack.i.b16 %v5362, %v5360
  %v5441 = vpack.i.b16 %v5363, %v5361
  %v5442 = vpack.i.b16 %v5366, %v5364
  %v5443 = vpack.i.b16 %v5367, %v5365
  %v5444 = vpack.i.b16 %v5370, %v5368
  %v5445 = vpack.i.b16 %v5371, %v5369
  %v5446 = vpack.i.b16 %v5374, %v5372
  %v5447 = vpack.i.b16 %v5375, %v5373
  %v5448 = vpack.i.b16 %v5378, %v5376
  %v5449 = vpack.i.b16 %v5379, %v5377
  %v5450 = vpack.i.b16 %v5382, %v5380
  %v5451 = vpack.i.b16 %v5383, %v5381
  %v5452 = vpack.i.b16 %v5386, %v5384
  %v5453 = vpack.i.b16 %v5387, %v5385
  %v5454 = vpack.i.b16 %v5390, %v5388
  %v5455 = vpack.i.b16 %v5391, %v5389
  %v5456 = vcombine.low %v5392, %v5394
  %v5457 = vcombine.high %v5392, %v5394
  %v5458 = vcombine.low %v5396, %v5398
  %v5459 = vcombine.high %v5396, %v5398
  %v5460 = vcombine.low %v5400, %v5402
  %v5461 = vcombine.high %v5400, %v5402
  %v5462 = vcombine.low %v5404, %v5406
  %v5463 = vcombine.high %v5404, %v5406
  %v5465 = vunpack.c.l.s4 1966171168
  %v5466 = vunpack.c.0.s8 %v5465
  %v5467 = vlaneseq
  %v5468 = vshrl.u32 %v5467, 7
  %v5469 = vsub.s32 %v5466, %v5468
  %v5470 = vrot.slane %v5456, %v5469
  %v5472 = vunpack.c.l.s4 1966171168
  %v5473 = vunpack.c.0.s8 %v5472
  %v5474 = vlaneseq
  %v5475 = vshrl.u32 %v5474, 7
  %v5476 = vsub.s32 %v5473, %v5475
  %v5477 = vrot.slane %v5457, %v5476
  %v5479 = vunpack.c.l.s4 1966171168
  %v5480 = vunpack.c.0.s8 %v5479
  %v5481 = vlaneseq
  %v5482 = vshrl.u32 %v5481, 7
  %v5483 = vsub.s32 %v5480, %v5482
  %v5484 = vrot.slane %v5458, %v5483
  %v5486 = vunpack.c.l.s4 1966171168
  %v5487 = vunpack.c.0.s8 %v5486
  %v5488 = vlaneseq
  %v5489 = vshrl.u32 %v5488, 7
  %v5490 = vsub.s32 %v5487, %v5489
  %v5491 = vrot.slane %v5459, %v5490
  %v5493 = vunpack.c.l.s4 1966171168
  %v5494 = vunpack.c.0.s8 %v5493
  %v5495 = vlaneseq
  %v5496 = vshrl.u32 %v5495, 7
  %v5497 = vsub.s32 %v5494, %v5496
  %v5498 = vrot.slane %v5460, %v5497
  %v5500 = vunpack.c.l.s4 1966171168
  %v5501 = vunpack.c.0.s8 %v5500
  %v5502 = vlaneseq
  %v5503 = vshrl.u32 %v5502, 7
  %v5504 = vsub.s32 %v5501, %v5503
  %v5505 = vrot.slane %v5461, %v5504
  %v5507 = vunpack.c.l.s4 1966171168
  %v5508 = vunpack.c.0.s8 %v5507
  %v5509 = vlaneseq
  %v5510 = vshrl.u32 %v5509, 7
  %v5511 = vsub.s32 %v5508, %v5510
  %v5512 = vrot.slane %v5462, %v5511
  %v5514 = vunpack.c.l.s4 1966171168
  %v5515 = vunpack.c.0.s8 %v5514
  %v5516 = vlaneseq
  %v5517 = vshrl.u32 %v5516, 7
  %v5518 = vsub.s32 %v5515, %v5517
  %v5519 = vrot.slane %v5463, %v5518
  %v5520 = vcombine.low %v5470, %v5484
  %v5521 = vcombine.high %v5470, %v5484
  %v5522 = vcombine.low %v5477, %v5491
  %v5523 = vcombine.high %v5477, %v5491
  %v5524 = vcombine.low %v5498, %v5512
  %v5525 = vcombine.high %v5498, %v5512
  %v5526 = vcombine.low %v5505, %v5519
  %v5527 = vcombine.high %v5505, %v5519
  %v5529 = vunpack.c.l.s4 1966171168
  %v5530 = vunpack.c.0.s8 %v5529
  %v5531 = vlaneseq
  %v5532 = vshrl.u32 %v5531, 7
  %v5533 = vsub.s32 %v5530, %v5532
  %v5534 = vrot.slane %v5520, %v5533
  %v5536 = vunpack.c.l.s4 1966171168
  %v5537 = vunpack.c.0.s8 %v5536
  %v5538 = vlaneseq
  %v5539 = vshrl.u32 %v5538, 7
  %v5540 = vsub.s32 %v5537, %v5539
  %v5541 = vrot.slane %v5522, %v5540
  %v5543 = vunpack.c.l.s4 1966171168
  %v5544 = vunpack.c.0.s8 %v5543
  %v5545 = vlaneseq
  %v5546 = vshrl.u32 %v5545, 7
  %v5547 = vsub.s32 %v5544, %v5546
  %v5548 = vrot.slane %v5521, %v5547
  %v5550 = vunpack.c.l.s4 1966171168
  %v5551 = vunpack.c.0.s8 %v5550
  %v5552 = vlaneseq
  %v5553 = vshrl.u32 %v5552, 7
  %v5554 = vsub.s32 %v5551, %v5553
  %v5555 = vrot.slane %v5523, %v5554
  %v5557 = vunpack.c.l.s4 1966171168
  %v5558 = vunpack.c.0.s8 %v5557
  %v5559 = vlaneseq
  %v5560 = vshrl.u32 %v5559, 7
  %v5561 = vsub.s32 %v5558, %v5560
  %v5562 = vrot.slane %v5524, %v5561
  %v5564 = vunpack.c.l.s4 1966171168
  %v5565 = vunpack.c.0.s8 %v5564
  %v5566 = vlaneseq
  %v5567 = vshrl.u32 %v5566, 7
  %v5568 = vsub.s32 %v5565, %v5567
  %v5569 = vrot.slane %v5526, %v5568
  %v5571 = vunpack.c.l.s4 1966171168
  %v5572 = vunpack.c.0.s8 %v5571
  %v5573 = vlaneseq
  %v5574 = vshrl.u32 %v5573, 7
  %v5575 = vsub.s32 %v5572, %v5574
  %v5576 = vrot.slane %v5525, %v5575
  %v5578 = vunpack.c.l.s4 1966171168
  %v5579 = vunpack.c.0.s8 %v5578
  %v5580 = vlaneseq
  %v5581 = vshrl.u32 %v5580, 7
  %v5582 = vsub.s32 %v5579, %v5581
  %v5583 = vrot.slane %v5527, %v5582
  %v5584 = vcombine.low %v5534, %v5562
  %v5585 = vcombine.high %v5534, %v5562
  %v5586 = vcombine.low %v5541, %v5569
  %v5587 = vcombine.high %v5541, %v5569
  %v5588 = vcombine.low %v5548, %v5576
  %v5589 = vcombine.high %v5548, %v5576
  %v5590 = vcombine.low %v5555, %v5583
  %v5591 = vcombine.high %v5555, %v5583
  %v5592 = vcombine.low %v5393, %v5395
  %v5593 = vcombine.high %v5393, %v5395
  %v5594 = vcombine.low %v5397, %v5399
  %v5595 = vcombine.high %v5397, %v5399
  %v5596 = vcombine.low %v5401, %v5403
  %v5597 = vcombine.high %v5401, %v5403
  %v5598 = vcombine.low %v5405, %v5407
  %v5599 = vcombine.high %v5405, %v5407
  %v5601 = vunpack.c.l.s4 1966171168
  %v5602 = vunpack.c.0.s8 %v5601
  %v5603 = vlaneseq
  %v5604 = vshrl.u32 %v5603, 7
  %v5605 = vsub.s32 %v5602, %v5604
  %v5606 = vrot.slane %v5592, %v5605
  %v5608 = vunpack.c.l.s4 1966171168
  %v5609 = vunpack.c.0.s8 %v5608
  %v5610 = vlaneseq
  %v5611 = vshrl.u32 %v5610, 7
  %v5612 = vsub.s32 %v5609, %v5611
  %v5613 = vrot.slane %v5593, %v5612
  %v5615 = vunpack.c.l.s4 1966171168
  %v5616 = vunpack.c.0.s8 %v5615
  %v5617 = vlaneseq
  %v5618 = vshrl.u32 %v5617, 7
  %v5619 = vsub.s32 %v5616, %v5618
  %v5620 = vrot.slane %v5594, %v5619
  %v5622 = vunpack.c.l.s4 1966171168
  %v5623 = vunpack.c.0.s8 %v5622
  %v5624 = vlaneseq
  %v5625 = vshrl.u32 %v5624, 7
  %v5626 = vsub.s32 %v5623, %v5625
  %v5627 = vrot.slane %v5595, %v5626
  %v5629 = vunpack.c.l.s4 1966171168
  %v5630 = vunpack.c.0.s8 %v5629
  %v5631 = vlaneseq
  %v5632 = vshrl.u32 %v5631, 7
  %v5633 = vsub.s32 %v5630, %v5632
  %v5634 = vrot.slane %v5596, %v5633
  %v5636 = vunpack.c.l.s4 1966171168
  %v5637 = vunpack.c.0.s8 %v5636
  %v5638 = vlaneseq
  %v5639 = vshrl.u32 %v5638, 7
  %v5640 = vsub.s32 %v5637, %v5639
  %v5641 = vrot.slane %v5597, %v5640
  %v5643 = vunpack.c.l.s4 1966171168
  %v5644 = vunpack.c.0.s8 %v5643
  %v5645 = vlaneseq
  %v5646 = vshrl.u32 %v5645, 7
  %v5647 = vsub.s32 %v5644, %v5646
  %v5648 = vrot.slane %v5598, %v5647
  %v5650 = vunpack.c.l.s4 1966171168
  %v5651 = vunpack.c.0.s8 %v5650
  %v5652 = vlaneseq
  %v5653 = vshrl.u32 %v5652, 7
  %v5654 = vsub.s32 %v5651, %v5653
  %v5655 = vrot.slane %v5599, %v5654
  %v5656 = vcombine.low %v5606, %v5620
  %v5657 = vcombine.high %v5606, %v5620
  %v5658 = vcombine.low %v5613, %v5627
  %v5659 = vcombine.high %v5613, %v5627
  %v5660 = vcombine.low %v5634, %v5648
  %v5661 = vcombine.high %v5634, %v5648
  %v5662 = vcombine.low %v5641, %v5655
  %v5663 = vcombine.high %v5641, %v5655
  %v5665 = vunpack.c.l.s4 1966171168
  %v5666 = vunpack.c.0.s8 %v5665
  %v5667 = vlaneseq
  %v5668 = vshrl.u32 %v5667, 7
  %v5669 = vsub.s32 %v5666, %v5668
  %v5670 = vrot.slane %v5656, %v5669
  %v5672 = vunpack.c.l.s4 1966171168
  %v5673 = vunpack.c.0.s8 %v5672
  %v5674 = vlaneseq
  %v5675 = vshrl.u32 %v5674, 7
  %v5676 = vsub.s32 %v5673, %v5675
  %v5677 = vrot.slane %v5658, %v5676
  %v5679 = vunpack.c.l.s4 1966171168
  %v5680 = vunpack.c.0.s8 %v5679
  %v5681 = vlaneseq
  %v5682 = vshrl.u32 %v5681, 7
  %v5683 = vsub.s32 %v5680, %v5682
  %v5684 = vrot.slane %v5657, %v5683
  %v5686 = vunpack.c.l.s4 1966171168
  %v5687 = vunpack.c.0.s8 %v5686
  %v5688 = vlaneseq
  %v5689 = vshrl.u32 %v5688, 7
  %v5690 = vsub.s32 %v5687, %v5689
  %v5691 = vrot.slane %v5659, %v5690
  %v5693 = vunpack.c.l.s4 1966171168
  %v5694 = vunpack.c.0.s8 %v5693
  %v5695 = vlaneseq
  %v5696 = vshrl.u32 %v5695, 7
  %v5697 = vsub.s32 %v5694, %v5696
  %v5698 = vrot.slane %v5660, %v5697
  %v5700 = vunpack.c.l.s4 1966171168
  %v5701 = vunpack.c.0.s8 %v5700
  %v5702 = vlaneseq
  %v5703 = vshrl.u32 %v5702, 7
  %v5704 = vsub.s32 %v5701, %v5703
  %v5705 = vrot.slane %v5662, %v5704
  %v5707 = vunpack.c.l.s4 1966171168
  %v5708 = vunpack.c.0.s8 %v5707
  %v5709 = vlaneseq
  %v5710 = vshrl.u32 %v5709, 7
  %v5711 = vsub.s32 %v5708, %v5710
  %v5712 = vrot.slane %v5661, %v5711
  %v5714 = vunpack.c.l.s4 1966171168
  %v5715 = vunpack.c.0.s8 %v5714
  %v5716 = vlaneseq
  %v5717 = vshrl.u32 %v5716, 7
  %v5718 = vsub.s32 %v5715, %v5717
  %v5719 = vrot.slane %v5663, %v5718
  %v5720 = vcombine.low %v5670, %v5698
  %v5721 = vcombine.high %v5670, %v5698
  %v5722 = vcombine.low %v5677, %v5705
  %v5723 = vcombine.high %v5677, %v5705
  %v5724 = vcombine.low %v5684, %v5712
  %v5725 = vcombine.high %v5684, %v5712
  %v5726 = vcombine.low %v5691, %v5719
  %v5727 = vcombine.high %v5691, %v5719
  %v5728 = vcombine.low %v5408, %v5410
  %v5729 = vcombine.high %v5408, %v5410
  %v5730 = vcombine.low %v5412, %v5414
  %v5731 = vcombine.high %v5412, %v5414
  %v5732 = vcombine.low %v5416, %v5418
  %v5733 = vcombine.high %v5416, %v5418
  %v5734 = vcombine.low %v5420, %v5422
  %v5735 = vcombine.high %v5420, %v5422
  %v5737 = vunpack.c.l.s4 1966171168
  %v5738 = vunpack.c.0.s8 %v5737
  %v5739 = vlaneseq
  %v5740 = vshrl.u32 %v5739, 7
  %v5741 = vsub.s32 %v5738, %v5740
  %v5742 = vrot.slane %v5728, %v5741
  %v5744 = vunpack.c.l.s4 1966171168
  %v5745 = vunpack.c.0.s8 %v5744
  %v5746 = vlaneseq
  %v5747 = vshrl.u32 %v5746, 7
  %v5748 = vsub.s32 %v5745, %v5747
  %v5749 = vrot.slane %v5729, %v5748
  %v5751 = vunpack.c.l.s4 1966171168
  %v5752 = vunpack.c.0.s8 %v5751
  %v5753 = vlaneseq
  %v5754 = vshrl.u32 %v5753, 7
  %v5755 = vsub.s32 %v5752, %v5754
  %v5756 = vrot.slane %v5730, %v5755
  %v5758 = vunpack.c.l.s4 1966171168
  %v5759 = vunpack.c.0.s8 %v5758
  %v5760 = vlaneseq
  %v5761 = vshrl.u32 %v5760, 7
  %v5762 = vsub.s32 %v5759, %v5761
  %v5763 = vrot.slane %v5731, %v5762
  %v5765 = vunpack.c.l.s4 1966171168
  %v5766 = vunpack.c.0.s8 %v5765
  %v5767 = vlaneseq
  %v5768 = vshrl.u32 %v5767, 7
  %v5769 = vsub.s32 %v5766, %v5768
  %v5770 = vrot.slane %v5732, %v5769
  %v5772 = vunpack.c.l.s4 1966171168
  %v5773 = vunpack.c.0.s8 %v5772
  %v5774 = vlaneseq
  %v5775 = vshrl.u32 %v5774, 7
  %v5776 = vsub.s32 %v5773, %v5775
  %v5777 = vrot.slane %v5733, %v5776
  %v5779 = vunpack.c.l.s4 1966171168
  %v5780 = vunpack.c.0.s8 %v5779
  %v5781 = vlaneseq
  %v5782 = vshrl.u32 %v5781, 7
  %v5783 = vsub.s32 %v5780, %v5782
  %v5784 = vrot.slane %v5734, %v5783
  %v5786 = vunpack.c.l.s4 1966171168
  %v5787 = vunpack.c.0.s8 %v5786
  %v5788 = vlaneseq
  %v5789 = vshrl.u32 %v5788, 7
  %v5790 = vsub.s32 %v5787, %v5789
  %v5791 = vrot.slane %v5735, %v5790
  %v5792 = vcombine.low %v5742, %v5756
  %v5793 = vcombine.high %v5742, %v5756
  %v5794 = vcombine.low %v5749, %v5763
  %v5795 = vcombine.high %v5749, %v5763
  %v5796 = vcombine.low %v5770, %v5784
  %v5797 = vcombine.high %v5770, %v5784
  %v5798 = vcombine.low %v5777, %v5791
  %v5799 = vcombine.high %v5777, %v5791
  %v5801 = vunpack.c.l.s4 1966171168
  %v5802 = vunpack.c.0.s8 %v5801
  %v5803 = vlaneseq
  %v5804 = vshrl.u32 %v5803, 7
  %v5805 = vsub.s32 %v5802, %v5804
  %v5806 = vrot.slane %v5792, %v5805
  %v5808 = vunpack.c.l.s4 1966171168
  %v5809 = vunpack.c.0.s8 %v5808
  %v5810 = vlaneseq
  %v5811 = vshrl.u32 %v5810, 7
  %v5812 = vsub.s32 %v5809, %v5811
  %v5813 = vrot.slane %v5794, %v5812
  %v5815 = vunpack.c.l.s4 1966171168
  %v5816 = vunpack.c.0.s8 %v5815
  %v5817 = vlaneseq
  %v5818 = vshrl.u32 %v5817, 7
  %v5819 = vsub.s32 %v5816, %v5818
  %v5820 = vrot.slane %v5793, %v5819
  %v5822 = vunpack.c.l.s4 1966171168
  %v5823 = vunpack.c.0.s8 %v5822
  %v5824 = vlaneseq
  %v5825 = vshrl.u32 %v5824, 7
  %v5826 = vsub.s32 %v5823, %v5825
  %v5827 = vrot.slane %v5795, %v5826
  %v5829 = vunpack.c.l.s4 1966171168
  %v5830 = vunpack.c.0.s8 %v5829
  %v5831 = vlaneseq
  %v5832 = vshrl.u32 %v5831, 7
  %v5833 = vsub.s32 %v5830, %v5832
  %v5834 = vrot.slane %v5796, %v5833
  %v5836 = vunpack.c.l.s4 1966171168
  %v5837 = vunpack.c.0.s8 %v5836
  %v5838 = vlaneseq
  %v5839 = vshrl.u32 %v5838, 7
  %v5840 = vsub.s32 %v5837, %v5839
  %v5841 = vrot.slane %v5798, %v5840
  %v5843 = vunpack.c.l.s4 1966171168
  %v5844 = vunpack.c.0.s8 %v5843
  %v5845 = vlaneseq
  %v5846 = vshrl.u32 %v5845, 7
  %v5847 = vsub.s32 %v5844, %v5846
  %v5848 = vrot.slane %v5797, %v5847
  %v5850 = vunpack.c.l.s4 1966171168
  %v5851 = vunpack.c.0.s8 %v5850
  %v5852 = vlaneseq
  %v5853 = vshrl.u32 %v5852, 7
  %v5854 = vsub.s32 %v5851, %v5853
  %v5855 = vrot.slane %v5799, %v5854
  %v5856 = vcombine.low %v5806, %v5834
  %v5857 = vcombine.high %v5806, %v5834
  %v5858 = vcombine.low %v5813, %v5841
  %v5859 = vcombine.high %v5813, %v5841
  %v5860 = vcombine.low %v5820, %v5848
  %v5861 = vcombine.high %v5820, %v5848
  %v5862 = vcombine.low %v5827, %v5855
  %v5863 = vcombine.high %v5827, %v5855
  %v5864 = vcombine.low %v5409, %v5411
  %v5865 = vcombine.high %v5409, %v5411
  %v5866 = vcombine.low %v5413, %v5415
  %v5867 = vcombine.high %v5413, %v5415
  %v5868 = vcombine.low %v5417, %v5419
  %v5869 = vcombine.high %v5417, %v5419
  %v5870 = vcombine.low %v5421, %v5423
  %v5871 = vcombine.high %v5421, %v5423
  %v5873 = vunpack.c.l.s4 1966171168
  %v5874 = vunpack.c.0.s8 %v5873
  %v5875 = vlaneseq
  %v5876 = vshrl.u32 %v5875, 7
  %v5877 = vsub.s32 %v5874, %v5876
  %v5878 = vrot.slane %v5864, %v5877
  %v5880 = vunpack.c.l.s4 1966171168
  %v5881 = vunpack.c.0.s8 %v5880
  %v5882 = vlaneseq
  %v5883 = vshrl.u32 %v5882, 7
  %v5884 = vsub.s32 %v5881, %v5883
  %v5885 = vrot.slane %v5865, %v5884
  %v5887 = vunpack.c.l.s4 1966171168
  %v5888 = vunpack.c.0.s8 %v5887
  %v5889 = vlaneseq
  %v5890 = vshrl.u32 %v5889, 7
  %v5891 = vsub.s32 %v5888, %v5890
  %v5892 = vrot.slane %v5866, %v5891
  %v5894 = vunpack.c.l.s4 1966171168
  %v5895 = vunpack.c.0.s8 %v5894
  %v5896 = vlaneseq
  %v5897 = vshrl.u32 %v5896, 7
  %v5898 = vsub.s32 %v5895, %v5897
  %v5899 = vrot.slane %v5867, %v5898
  %v5901 = vunpack.c.l.s4 1966171168
  %v5902 = vunpack.c.0.s8 %v5901
  %v5903 = vlaneseq
  %v5904 = vshrl.u32 %v5903, 7
  %v5905 = vsub.s32 %v5902, %v5904
  %v5906 = vrot.slane %v5868, %v5905
  %v5908 = vunpack.c.l.s4 1966171168
  %v5909 = vunpack.c.0.s8 %v5908
  %v5910 = vlaneseq
  %v5911 = vshrl.u32 %v5910, 7
  %v5912 = vsub.s32 %v5909, %v5911
  %v5913 = vrot.slane %v5869, %v5912
  %v5915 = vunpack.c.l.s4 1966171168
  %v5916 = vunpack.c.0.s8 %v5915
  %v5917 = vlaneseq
  %v5918 = vshrl.u32 %v5917, 7
  %v5919 = vsub.s32 %v5916, %v5918
  %v5920 = vrot.slane %v5870, %v5919
  %v5922 = vunpack.c.l.s4 1966171168
  %v5923 = vunpack.c.0.s8 %v5922
  %v5924 = vlaneseq
  %v5925 = vshrl.u32 %v5924, 7
  %v5926 = vsub.s32 %v5923, %v5925
  %v5927 = vrot.slane %v5871, %v5926
  %v5928 = vcombine.low %v5878, %v5892
  %v5929 = vcombine.high %v5878, %v5892
  %v5930 = vcombine.low %v5885, %v5899
  %v5931 = vcombine.high %v5885, %v5899
  %v5932 = vcombine.low %v5906, %v5920
  %v5933 = vcombine.high %v5906, %v5920
  %v5934 = vcombine.low %v5913, %v5927
  %v5935 = vcombine.high %v5913, %v5927
  %v5937 = vunpack.c.l.s4 1966171168
  %v5938 = vunpack.c.0.s8 %v5937
  %v5939 = vlaneseq
  %v5940 = vshrl.u32 %v5939, 7
  %v5941 = vsub.s32 %v5938, %v5940
  %v5942 = vrot.slane %v5928, %v5941
  %v5944 = vunpack.c.l.s4 1966171168
  %v5945 = vunpack.c.0.s8 %v5944
  %v5946 = vlaneseq
  %v5947 = vshrl.u32 %v5946, 7
  %v5948 = vsub.s32 %v5945, %v5947
  %v5949 = vrot.slane %v5930, %v5948
  %v5951 = vunpack.c.l.s4 1966171168
  %v5952 = vunpack.c.0.s8 %v5951
  %v5953 = vlaneseq
  %v5954 = vshrl.u32 %v5953, 7
  %v5955 = vsub.s32 %v5952, %v5954
  %v5956 = vrot.slane %v5929, %v5955
  %v5958 = vunpack.c.l.s4 1966171168
  %v5959 = vunpack.c.0.s8 %v5958
  %v5960 = vlaneseq
  %v5961 = vshrl.u32 %v5960, 7
  %v5962 = vsub.s32 %v5959, %v5961
  %v5963 = vrot.slane %v5931, %v5962
  %v5965 = vunpack.c.l.s4 1966171168
  %v5966 = vunpack.c.0.s8 %v5965
  %v5967 = vlaneseq
  %v5968 = vshrl.u32 %v5967, 7
  %v5969 = vsub.s32 %v5966, %v5968
  %v5970 = vrot.slane %v5932, %v5969
  %v5972 = vunpack.c.l.s4 1966171168
  %v5973 = vunpack.c.0.s8 %v5972
  %v5974 = vlaneseq
  %v5975 = vshrl.u32 %v5974, 7
  %v5976 = vsub.s32 %v5973, %v5975
  %v5977 = vrot.slane %v5934, %v5976
  %v5979 = vunpack.c.l.s4 1966171168
  %v5980 = vunpack.c.0.s8 %v5979
  %v5981 = vlaneseq
  %v5982 = vshrl.u32 %v5981, 7
  %v5983 = vsub.s32 %v5980, %v5982
  %v5984 = vrot.slane %v5933, %v5983
  %v5986 = vunpack.c.l.s4 1966171168
  %v5987 = vunpack.c.0.s8 %v5986
  %v5988 = vlaneseq
  %v5989 = vshrl.u32 %v5988, 7
  %v5990 = vsub.s32 %v5987, %v5989
  %v5991 = vrot.slane %v5935, %v5990
  %v5992 = vcombine.low %v5942, %v5970
  %v5993 = vcombine.high %v5942, %v5970
  %v5994 = vcombine.low %v5949, %v5977
  %v5995 = vcombine.high %v5949, %v5977
  %v5996 = vcombine.low %v5956, %v5984
  %v5997 = vcombine.high %v5956, %v5984
  %v5998 = vcombine.low %v5963, %v5991
  %v5999 = vcombine.high %v5963, %v5991
  %v6000 = vcombine.low %v5424, %v5426
  %v6001 = vcombine.high %v5424, %v5426
  %v6002 = vcombine.low %v5428, %v5430
  %v6003 = vcombine.high %v5428, %v5430
  %v6004 = vcombine.low %v5432, %v5434
  %v6005 = vcombine.high %v5432, %v5434
  %v6006 = vcombine.low %v5436, %v5438
  %v6007 = vcombine.high %v5436, %v5438
  %v6009 = vunpack.c.l.s4 1966171168
  %v6010 = vunpack.c.0.s8 %v6009
  %v6011 = vlaneseq
  %v6012 = vshrl.u32 %v6011, 7
  %v6013 = vsub.s32 %v6010, %v6012
  %v6014 = vrot.slane %v6000, %v6013
  %v6016 = vunpack.c.l.s4 1966171168
  %v6017 = vunpack.c.0.s8 %v6016
  %v6018 = vlaneseq
  %v6019 = vshrl.u32 %v6018, 7
  %v6020 = vsub.s32 %v6017, %v6019
  %v6021 = vrot.slane %v6001, %v6020
  %v6023 = vunpack.c.l.s4 1966171168
  %v6024 = vunpack.c.0.s8 %v6023
  %v6025 = vlaneseq
  %v6026 = vshrl.u32 %v6025, 7
  %v6027 = vsub.s32 %v6024, %v6026
  %v6028 = vrot.slane %v6002, %v6027
  %v6030 = vunpack.c.l.s4 1966171168
  %v6031 = vunpack.c.0.s8 %v6030
  %v6032 = vlaneseq
  %v6033 = vshrl.u32 %v6032, 7
  %v6034 = vsub.s32 %v6031, %v6033
  %v6035 = vrot.slane %v6003, %v6034
  %v6037 = vunpack.c.l.s4 1966171168
  %v6038 = vunpack.c.0.s8 %v6037
  %v6039 = vlaneseq
  %v6040 = vshrl.u32 %v6039, 7
  %v6041 = vsub.s32 %v6038, %v6040
  %v6042 = vrot.slane %v6004, %v6041
  %v6044 = vunpack.c.l.s4 1966171168
  %v6045 = vunpack.c.0.s8 %v6044
  %v6046 = vlaneseq
  %v6047 = vshrl.u32 %v6046, 7
  %v6048 = vsub.s32 %v6045, %v6047
  %v6049 = vrot.slane %v6005, %v6048
  %v6051 = vunpack.c.l.s4 1966171168
  %v6052 = vunpack.c.0.s8 %v6051
  %v6053 = vlaneseq
  %v6054 = vshrl.u32 %v6053, 7
  %v6055 = vsub.s32 %v6052, %v6054
  %v6056 = vrot.slane %v6006, %v6055
  %v6058 = vunpack.c.l.s4 1966171168
  %v6059 = vunpack.c.0.s8 %v6058
  %v6060 = vlaneseq
  %v6061 = vshrl.u32 %v6060, 7
  %v6062 = vsub.s32 %v6059, %v6061
  %v6063 = vrot.slane %v6007, %v6062
  %v6064 = vcombine.low %v6014, %v6028
  %v6065 = vcombine.high %v6014, %v6028
  %v6066 = vcombine.low %v6021, %v6035
  %v6067 = vcombine.high %v6021, %v6035
  %v6068 = vcombine.low %v6042, %v6056
  %v6069 = vcombine.high %v6042, %v6056
  %v6070 = vcombine.low %v6049, %v6063
  %v6071 = vcombine.high %v6049, %v6063
  %v6073 = vunpack.c.l.s4 1966171168
  %v6074 = vunpack.c.0.s8 %v6073
  %v6075 = vlaneseq
  %v6076 = vshrl.u32 %v6075, 7
  %v6077 = vsub.s32 %v6074, %v6076
  %v6078 = vrot.slane %v6064, %v6077
  %v6080 = vunpack.c.l.s4 1966171168
  %v6081 = vunpack.c.0.s8 %v6080
  %v6082 = vlaneseq
  %v6083 = vshrl.u32 %v6082, 7
  %v6084 = vsub.s32 %v6081, %v6083
  %v6085 = vrot.slane %v6066, %v6084
  %v6087 = vunpack.c.l.s4 1966171168
  %v6088 = vunpack.c.0.s8 %v6087
  %v6089 = vlaneseq
  %v6090 = vshrl.u32 %v6089, 7
  %v6091 = vsub.s32 %v6088, %v6090
  %v6092 = vrot.slane %v6065, %v6091
  %v6094 = vunpack.c.l.s4 1966171168
  %v6095 = vunpack.c.0.s8 %v6094
  %v6096 = vlaneseq
  %v6097 = vshrl.u32 %v6096, 7
  %v6098 = vsub.s32 %v6095, %v6097
  %v6099 = vrot.slane %v6067, %v6098
  %v6101 = vunpack.c.l.s4 1966171168
  %v6102 = vunpack.c.0.s8 %v6101
  %v6103 = vlaneseq
  %v6104 = vshrl.u32 %v6103, 7
  %v6105 = vsub.s32 %v6102, %v6104
  %v6106 = vrot.slane %v6068, %v6105
  %v6108 = vunpack.c.l.s4 1966171168
  %v6109 = vunpack.c.0.s8 %v6108
  %v6110 = vlaneseq
  %v6111 = vshrl.u32 %v6110, 7
  %v6112 = vsub.s32 %v6109, %v6111
  %v6113 = vrot.slane %v6070, %v6112
  %v6115 = vunpack.c.l.s4 1966171168
  %v6116 = vunpack.c.0.s8 %v6115
  %v6117 = vlaneseq
  %v6118 = vshrl.u32 %v6117, 7
  %v6119 = vsub.s32 %v6116, %v6118
  %v6120 = vrot.slane %v6069, %v6119
  %v6122 = vunpack.c.l.s4 1966171168
  %v6123 = vunpack.c.0.s8 %v6122
  %v6124 = vlaneseq
  %v6125 = vshrl.u32 %v6124, 7
  %v6126 = vsub.s32 %v6123, %v6125
  %v6127 = vrot.slane %v6071, %v6126
  %v6128 = vcombine.low %v6078, %v6106
  %v6129 = vcombine.high %v6078, %v6106
  %v6130 = vcombine.low %v6085, %v6113
  %v6131 = vcombine.high %v6085, %v6113
  %v6132 = vcombine.low %v6092, %v6120
  %v6133 = vcombine.high %v6092, %v6120
  %v6134 = vcombine.low %v6099, %v6127
  %v6135 = vcombine.high %v6099, %v6127
  %v6136 = vcombine.low %v5425, %v5427
  %v6137 = vcombine.high %v5425, %v5427
  %v6138 = vcombine.low %v5429, %v5431
  %v6139 = vcombine.high %v5429, %v5431
  %v6140 = vcombine.low %v5433, %v5435
  %v6141 = vcombine.high %v5433, %v5435
  %v6142 = vcombine.low %v5437, %v5439
  %v6143 = vcombine.high %v5437, %v5439
  %v6145 = vunpack.c.l.s4 1966171168
  %v6146 = vunpack.c.0.s8 %v6145
  %v6147 = vlaneseq
  %v6148 = vshrl.u32 %v6147, 7
  %v6149 = vsub.s32 %v6146, %v6148
  %v6150 = vrot.slane %v6136, %v6149
  %v6152 = vunpack.c.l.s4 1966171168
  %v6153 = vunpack.c.0.s8 %v6152
  %v6154 = vlaneseq
  %v6155 = vshrl.u32 %v6154, 7
  %v6156 = vsub.s32 %v6153, %v6155
  %v6157 = vrot.slane %v6137, %v6156
  %v6159 = vunpack.c.l.s4 1966171168
  %v6160 = vunpack.c.0.s8 %v6159
  %v6161 = vlaneseq
  %v6162 = vshrl.u32 %v6161, 7
  %v6163 = vsub.s32 %v6160, %v6162
  %v6164 = vrot.slane %v6138, %v6163
  %v6166 = vunpack.c.l.s4 1966171168
  %v6167 = vunpack.c.0.s8 %v6166
  %v6168 = vlaneseq
  %v6169 = vshrl.u32 %v6168, 7
  %v6170 = vsub.s32 %v6167, %v6169
  %v6171 = vrot.slane %v6139, %v6170
  %v6173 = vunpack.c.l.s4 1966171168
  %v6174 = vunpack.c.0.s8 %v6173
  %v6175 = vlaneseq
  %v6176 = vshrl.u32 %v6175, 7
  %v6177 = vsub.s32 %v6174, %v6176
  %v6178 = vrot.slane %v6140, %v6177
  %v6180 = vunpack.c.l.s4 1966171168
  %v6181 = vunpack.c.0.s8 %v6180
  %v6182 = vlaneseq
  %v6183 = vshrl.u32 %v6182, 7
  %v6184 = vsub.s32 %v6181, %v6183
  %v6185 = vrot.slane %v6141, %v6184
  %v6187 = vunpack.c.l.s4 1966171168
  %v6188 = vunpack.c.0.s8 %v6187
  %v6189 = vlaneseq
  %v6190 = vshrl.u32 %v6189, 7
  %v6191 = vsub.s32 %v6188, %v6190
  %v6192 = vrot.slane %v6142, %v6191
  %v6194 = vunpack.c.l.s4 1966171168
  %v6195 = vunpack.c.0.s8 %v6194
  %v6196 = vlaneseq
  %v6197 = vshrl.u32 %v6196, 7
  %v6198 = vsub.s32 %v6195, %v6197
  %v6199 = vrot.slane %v6143, %v6198
  %v6200 = vcombine.low %v6150, %v6164
  %v6201 = vcombine.high %v6150, %v6164
  %v6202 = vcombine.low %v6157, %v6171
  %v6203 = vcombine.high %v6157, %v6171
  %v6204 = vcombine.low %v6178, %v6192
  %v6205 = vcombine.high %v6178, %v6192
  %v6206 = vcombine.low %v6185, %v6199
  %v6207 = vcombine.high %v6185, %v6199
  %v6209 = vunpack.c.l.s4 1966171168
  %v6210 = vunpack.c.0.s8 %v6209
  %v6211 = vlaneseq
  %v6212 = vshrl.u32 %v6211, 7
  %v6213 = vsub.s32 %v6210, %v6212
  %v6214 = vrot.slane %v6200, %v6213
  %v6216 = vunpack.c.l.s4 1966171168
  %v6217 = vunpack.c.0.s8 %v6216
  %v6218 = vlaneseq
  %v6219 = vshrl.u32 %v6218, 7
  %v6220 = vsub.s32 %v6217, %v6219
  %v6221 = vrot.slane %v6202, %v6220
  %v6223 = vunpack.c.l.s4 1966171168
  %v6224 = vunpack.c.0.s8 %v6223
  %v6225 = vlaneseq
  %v6226 = vshrl.u32 %v6225, 7
  %v6227 = vsub.s32 %v6224, %v6226
  %v6228 = vrot.slane %v6201, %v6227
  %v6230 = vunpack.c.l.s4 1966171168
  %v6231 = vunpack.c.0.s8 %v6230
  %v6232 = vlaneseq
  %v6233 = vshrl.u32 %v6232, 7
  %v6234 = vsub.s32 %v6231, %v6233
  %v6235 = vrot.slane %v6203, %v6234
  %v6237 = vunpack.c.l.s4 1966171168
  %v6238 = vunpack.c.0.s8 %v6237
  %v6239 = vlaneseq
  %v6240 = vshrl.u32 %v6239, 7
  %v6241 = vsub.s32 %v6238, %v6240
  %v6242 = vrot.slane %v6204, %v6241
  %v6244 = vunpack.c.l.s4 1966171168
  %v6245 = vunpack.c.0.s8 %v6244
  %v6246 = vlaneseq
  %v6247 = vshrl.u32 %v6246, 7
  %v6248 = vsub.s32 %v6245, %v6247
  %v6249 = vrot.slane %v6206, %v6248
  %v6251 = vunpack.c.l.s4 1966171168
  %v6252 = vunpack.c.0.s8 %v6251
  %v6253 = vlaneseq
  %v6254 = vshrl.u32 %v6253, 7
  %v6255 = vsub.s32 %v6252, %v6254
  %v6256 = vrot.slane %v6205, %v6255
  %v6258 = vunpack.c.l.s4 1966171168
  %v6259 = vunpack.c.0.s8 %v6258
  %v6260 = vlaneseq
  %v6261 = vshrl.u32 %v6260, 7
  %v6262 = vsub.s32 %v6259, %v6261
  %v6263 = vrot.slane %v6207, %v6262
  %v6264 = vcombine.low %v6214, %v6242
  %v6265 = vcombine.high %v6214, %v6242
  %v6266 = vcombine.low %v6221, %v6249
  %v6267 = vcombine.high %v6221, %v6249
  %v6268 = vcombine.low %v6228, %v6256
  %v6269 = vcombine.high %v6228, %v6256
  %v6270 = vcombine.low %v6235, %v6263
  %v6271 = vcombine.high %v6235, %v6263
  %v6272 = vcombine.low %v5440, %v5442
  %v6273 = vcombine.high %v5440, %v5442
  %v6274 = vcombine.low %v5444, %v5446
  %v6275 = vcombine.high %v5444, %v5446
  %v6276 = vcombine.low %v5448, %v5450
  %v6277 = vcombine.high %v5448, %v5450
  %v6278 = vcombine.low %v5452, %v5454
  %v6279 = vcombine.high %v5452, %v5454
  %v6281 = vunpack.c.l.s4 1966171168
  %v6282 = vunpack.c.0.s8 %v6281
  %v6283 = vlaneseq
  %v6284 = vshrl.u32 %v6283, 7
  %v6285 = vsub.s32 %v6282, %v6284
  %v6286 = vrot.slane %v6272, %v6285
  %v6288 = vunpack.c.l.s4 1966171168
  %v6289 = vunpack.c.0.s8 %v6288
  %v6290 = vlaneseq
  %v6291 = vshrl.u32 %v6290, 7
  %v6292 = vsub.s32 %v6289, %v6291
  %v6293 = vrot.slane %v6273, %v6292
  %v6295 = vunpack.c.l.s4 1966171168
  %v6296 = vunpack.c.0.s8 %v6295
  %v6297 = vlaneseq
  %v6298 = vshrl.u32 %v6297, 7
  %v6299 = vsub.s32 %v6296, %v6298
  %v6300 = vrot.slane %v6274, %v6299
  %v6302 = vunpack.c.l.s4 1966171168
  %v6303 = vunpack.c.0.s8 %v6302
  %v6304 = vlaneseq
  %v6305 = vshrl.u32 %v6304, 7
  %v6306 = vsub.s32 %v6303, %v6305
  %v6307 = vrot.slane %v6275, %v6306
  %v6309 = vunpack.c.l.s4 1966171168
  %v6310 = vunpack.c.0.s8 %v6309
  %v6311 = vlaneseq
  %v6312 = vshrl.u32 %v6311, 7
  %v6313 = vsub.s32 %v6310, %v6312
  %v6314 = vrot.slane %v6276, %v6313
  %v6316 = vunpack.c.l.s4 1966171168
  %v6317 = vunpack.c.0.s8 %v6316
  %v6318 = vlaneseq
  %v6319 = vshrl.u32 %v6318, 7
  %v6320 = vsub.s32 %v6317, %v6319
  %v6321 = vrot.slane %v6277, %v6320
  %v6323 = vunpack.c.l.s4 1966171168
  %v6324 = vunpack.c.0.s8 %v6323
  %v6325 = vlaneseq
  %v6326 = vshrl.u32 %v6325, 7
  %v6327 = vsub.s32 %v6324, %v6326
  %v6328 = vrot.slane %v6278, %v6327
  %v6330 = vunpack.c.l.s4 1966171168
  %v6331 = vunpack.c.0.s8 %v6330
  %v6332 = vlaneseq
  %v6333 = vshrl.u32 %v6332, 7
  %v6334 = vsub.s32 %v6331, %v6333
  %v6335 = vrot.slane %v6279, %v6334
  %v6336 = vcombine.low %v6286, %v6300
  %v6337 = vcombine.high %v6286, %v6300
  %v6338 = vcombine.low %v6293, %v6307
  %v6339 = vcombine.high %v6293, %v6307
  %v6340 = vcombine.low %v6314, %v6328
  %v6341 = vcombine.high %v6314, %v6328
  %v6342 = vcombine.low %v6321, %v6335
  %v6343 = vcombine.high %v6321, %v6335
  %v6345 = vunpack.c.l.s4 1966171168
  %v6346 = vunpack.c.0.s8 %v6345
  %v6347 = vlaneseq
  %v6348 = vshrl.u32 %v6347, 7
  %v6349 = vsub.s32 %v6346, %v6348
  %v6350 = vrot.slane %v6336, %v6349
  %v6352 = vunpack.c.l.s4 1966171168
  %v6353 = vunpack.c.0.s8 %v6352
  %v6354 = vlaneseq
  %v6355 = vshrl.u32 %v6354, 7
  %v6356 = vsub.s32 %v6353, %v6355
  %v6357 = vrot.slane %v6338, %v6356
  %v6359 = vunpack.c.l.s4 1966171168
  %v6360 = vunpack.c.0.s8 %v6359
  %v6361 = vlaneseq
  %v6362 = vshrl.u32 %v6361, 7
  %v6363 = vsub.s32 %v6360, %v6362
  %v6364 = vrot.slane %v6337, %v6363
  %v6366 = vunpack.c.l.s4 1966171168
  %v6367 = vunpack.c.0.s8 %v6366
  %v6368 = vlaneseq
  %v6369 = vshrl.u32 %v6368, 7
  %v6370 = vsub.s32 %v6367, %v6369
  %v6371 = vrot.slane %v6339, %v6370
  %v6373 = vunpack.c.l.s4 1966171168
  %v6374 = vunpack.c.0.s8 %v6373
  %v6375 = vlaneseq
  %v6376 = vshrl.u32 %v6375, 7
  %v6377 = vsub.s32 %v6374, %v6376
  %v6378 = vrot.slane %v6340, %v6377
  %v6380 = vunpack.c.l.s4 1966171168
  %v6381 = vunpack.c.0.s8 %v6380
  %v6382 = vlaneseq
  %v6383 = vshrl.u32 %v6382, 7
  %v6384 = vsub.s32 %v6381, %v6383
  %v6385 = vrot.slane %v6342, %v6384
  %v6387 = vunpack.c.l.s4 1966171168
  %v6388 = vunpack.c.0.s8 %v6387
  %v6389 = vlaneseq
  %v6390 = vshrl.u32 %v6389, 7
  %v6391 = vsub.s32 %v6388, %v6390
  %v6392 = vrot.slane %v6341, %v6391
  %v6394 = vunpack.c.l.s4 1966171168
  %v6395 = vunpack.c.0.s8 %v6394
  %v6396 = vlaneseq
  %v6397 = vshrl.u32 %v6396, 7
  %v6398 = vsub.s32 %v6395, %v6397
  %v6399 = vrot.slane %v6343, %v6398
  %v6400 = vcombine.low %v6350, %v6378
  %v6401 = vcombine.high %v6350, %v6378
  %v6402 = vcombine.low %v6357, %v6385
  %v6403 = vcombine.high %v6357, %v6385
  %v6404 = vcombine.low %v6364, %v6392
  %v6405 = vcombine.high %v6364, %v6392
  %v6406 = vcombine.low %v6371, %v6399
  %v6407 = vcombine.high %v6371, %v6399
  %v6408 = vcombine.low %v5441, %v5443
  %v6409 = vcombine.high %v5441, %v5443
  %v6410 = vcombine.low %v5445, %v5447
  %v6411 = vcombine.high %v5445, %v5447
  %v6412 = vcombine.low %v5449, %v5451
  %v6413 = vcombine.high %v5449, %v5451
  %v6414 = vcombine.low %v5453, %v5455
  %v6415 = vcombine.high %v5453, %v5455
  %v6417 = vunpack.c.l.s4 1966171168
  %v6418 = vunpack.c.0.s8 %v6417
  %v6419 = vlaneseq
  %v6420 = vshrl.u32 %v6419, 7
  %v6421 = vsub.s32 %v6418, %v6420
  %v6422 = vrot.slane %v6408, %v6421
  %v6424 = vunpack.c.l.s4 1966171168
  %v6425 = vunpack.c.0.s8 %v6424
  %v6426 = vlaneseq
  %v6427 = vshrl.u32 %v6426, 7
  %v6428 = vsub.s32 %v6425, %v6427
  %v6429 = vrot.slane %v6409, %v6428
  %v6431 = vunpack.c.l.s4 1966171168
  %v6432 = vunpack.c.0.s8 %v6431
  %v6433 = vlaneseq
  %v6434 = vshrl.u32 %v6433, 7
  %v6435 = vsub.s32 %v6432, %v6434
  %v6436 = vrot.slane %v6410, %v6435
  %v6438 = vunpack.c.l.s4 1966171168
  %v6439 = vunpack.c.0.s8 %v6438
  %v6440 = vlaneseq
  %v6441 = vshrl.u32 %v6440, 7
  %v6442 = vsub.s32 %v6439, %v6441
  %v6443 = vrot.slane %v6411, %v6442
  %v6445 = vunpack.c.l.s4 1966171168
  %v6446 = vunpack.c.0.s8 %v6445
  %v6447 = vlaneseq
  %v6448 = vshrl.u32 %v6447, 7
  %v6449 = vsub.s32 %v6446, %v6448
  %v6450 = vrot.slane %v6412, %v6449
  %v6452 = vunpack.c.l.s4 1966171168
  %v6453 = vunpack.c.0.s8 %v6452
  %v6454 = vlaneseq
  %v6455 = vshrl.u32 %v6454, 7
  %v6456 = vsub.s32 %v6453, %v6455
  %v6457 = vrot.slane %v6413, %v6456
  %v6459 = vunpack.c.l.s4 1966171168
  %v6460 = vunpack.c.0.s8 %v6459
  %v6461 = vlaneseq
  %v6462 = vshrl.u32 %v6461, 7
  %v6463 = vsub.s32 %v6460, %v6462
  %v6464 = vrot.slane %v6414, %v6463
  %v6466 = vunpack.c.l.s4 1966171168
  %v6467 = vunpack.c.0.s8 %v6466
  %v6468 = vlaneseq
  %v6469 = vshrl.u32 %v6468, 7
  %v6470 = vsub.s32 %v6467, %v6469
  %v6471 = vrot.slane %v6415, %v6470
  %v6472 = vcombine.low %v6422, %v6436
  %v6473 = vcombine.high %v6422, %v6436
  %v6474 = vcombine.low %v6429, %v6443
  %v6475 = vcombine.high %v6429, %v6443
  %v6476 = vcombine.low %v6450, %v6464
  %v6477 = vcombine.high %v6450, %v6464
  %v6478 = vcombine.low %v6457, %v6471
  %v6479 = vcombine.high %v6457, %v6471
  %v6481 = vunpack.c.l.s4 1966171168
  %v6482 = vunpack.c.0.s8 %v6481
  %v6483 = vlaneseq
  %v6484 = vshrl.u32 %v6483, 7
  %v6485 = vsub.s32 %v6482, %v6484
  %v6486 = vrot.slane %v6472, %v6485
  %v6488 = vunpack.c.l.s4 1966171168
  %v6489 = vunpack.c.0.s8 %v6488
  %v6490 = vlaneseq
  %v6491 = vshrl.u32 %v6490, 7
  %v6492 = vsub.s32 %v6489, %v6491
  %v6493 = vrot.slane %v6474, %v6492
  %v6495 = vunpack.c.l.s4 1966171168
  %v6496 = vunpack.c.0.s8 %v6495
  %v6497 = vlaneseq
  %v6498 = vshrl.u32 %v6497, 7
  %v6499 = vsub.s32 %v6496, %v6498
  %v6500 = vrot.slane %v6473, %v6499
  %v6502 = vunpack.c.l.s4 1966171168
  %v6503 = vunpack.c.0.s8 %v6502
  %v6504 = vlaneseq
  %v6505 = vshrl.u32 %v6504, 7
  %v6506 = vsub.s32 %v6503, %v6505
  %v6507 = vrot.slane %v6475, %v6506
  %v6509 = vunpack.c.l.s4 1966171168
  %v6510 = vunpack.c.0.s8 %v6509
  %v6511 = vlaneseq
  %v6512 = vshrl.u32 %v6511, 7
  %v6513 = vsub.s32 %v6510, %v6512
  %v6514 = vrot.slane %v6476, %v6513
  %v6516 = vunpack.c.l.s4 1966171168
  %v6517 = vunpack.c.0.s8 %v6516
  %v6518 = vlaneseq
  %v6519 = vshrl.u32 %v6518, 7
  %v6520 = vsub.s32 %v6517, %v6519
  %v6521 = vrot.slane %v6478, %v6520
  %v6523 = vunpack.c.l.s4 1966171168
  %v6524 = vunpack.c.0.s8 %v6523
  %v6525 = vlaneseq
  %v6526 = vshrl.u32 %v6525, 7
  %v6527 = vsub.s32 %v6524, %v6526
  %v6528 = vrot.slane %v6477, %v6527
  %v6530 = vunpack.c.l.s4 1966171168
  %v6531 = vunpack.c.0.s8 %v6530
  %v6532 = vlaneseq
  %v6533 = vshrl.u32 %v6532, 7
  %v6534 = vsub.s32 %v6531, %v6533
  %v6535 = vrot.slane %v6479, %v6534
  %v6536 = vcombine.low %v6486, %v6514
  %v6537 = vcombine.high %v6486, %v6514
  %v6538 = vcombine.low %v6493, %v6521
  %v6539 = vcombine.high %v6493, %v6521
  %v6540 = vcombine.low %v6500, %v6528
  %v6541 = vcombine.high %v6500, %v6528
  %v6542 = vcombine.low %v6507, %v6535
  %v6543 = vcombine.high %v6507, %v6535
  %s6608 = smul.u32 4, 16
  %s6609 = smul.addr %s6608, 8
  %s6610 = scalar_lea.vmem [#allocation3], %s6609
  %6611 = vst [vmem:[%s6610] sm:$0xff] %v5584
  %6612 = vst [vmem:[%s6610 + $0x8] sm:$0xff] %v5588
  %6613 = vst [vmem:[%s6610 + $0x10] sm:$0xff] %v5585
  %6614 = vst [vmem:[%s6610 + $0x18] sm:$0xff] %v5589
  %6615 = vst [vmem:[%s6610 + $0x20] sm:$0xff] %v5586
  %6616 = vst [vmem:[%s6610 + $0x28] sm:$0xff] %v5590
  %6617 = vst [vmem:[%s6610 + $0x30] sm:$0xff] %v5587
  %6618 = vst [vmem:[%s6610 + $0x38] sm:$0xff] %v5591
  %6619 = vst [vmem:[%s6610 + $0x40] sm:$0xff] %v5720
  %6620 = vst [vmem:[%s6610 + $0x48] sm:$0xff] %v5724
  %6621 = vst [vmem:[%s6610 + $0x50] sm:$0xff] %v5721
  %6622 = vst [vmem:[%s6610 + $0x58] sm:$0xff] %v5725
  %6623 = vst [vmem:[%s6610 + $0x60] sm:$0xff] %v5722
  %6624 = vst [vmem:[%s6610 + $0x68] sm:$0xff] %v5726
  %6625 = vst [vmem:[%s6610 + $0x70] sm:$0xff] %v5723
  %6626 = vst [vmem:[%s6610 + $0x78] sm:$0xff] %v5727
  %6627 = vst [vmem:[%s6610 + $0x80] sm:$0xff] %v5856
  %6628 = vst [vmem:[%s6610 + $0x88] sm:$0xff] %v5860
  %6629 = vst [vmem:[%s6610 + $0x90] sm:$0xff] %v5857
  %6630 = vst [vmem:[%s6610 + $0x98] sm:$0xff] %v5861
  %6631 = vst [vmem:[%s6610 + $0xa0] sm:$0xff] %v5858
  %6632 = vst [vmem:[%s6610 + $0xa8] sm:$0xff] %v5862
  %6633 = vst [vmem:[%s6610 + $0xb0] sm:$0xff] %v5859
  %6634 = vst [vmem:[%s6610 + $0xb8] sm:$0xff] %v5863
  %6635 = vst [vmem:[%s6610 + $0xc0] sm:$0xff] %v5992
  %6636 = vst [vmem:[%s6610 + $0xc8] sm:$0xff] %v5996
  %6637 = vst [vmem:[%s6610 + $0xd0] sm:$0xff] %v5993
  %6638 = vst [vmem:[%s6610 + $0xd8] sm:$0xff] %v5997
  %6639 = vst [vmem:[%s6610 + $0xe0] sm:$0xff] %v5994
  %6640 = vst [vmem:[%s6610 + $0xe8] sm:$0xff] %v5998
  %6641 = vst [vmem:[%s6610 + $0xf0] sm:$0xff] %v5995
  %6642 = vst [vmem:[%s6610 + $0xf8] sm:$0xff] %v5999
  %6643 = vst [vmem:[%s6610 + $0x100] sm:$0xff] %v6128
  %6644 = vst [vmem:[%s6610 + $0x108] sm:$0xff] %v6132
  %6645 = vst [vmem:[%s6610 + $0x110] sm:$0xff] %v6129
  %6646 = vst [vmem:[%s6610 + $0x118] sm:$0xff] %v6133
  %6647 = vst [vmem:[%s6610 + $0x120] sm:$0xff] %v6130
  %6648 = vst [vmem:[%s6610 + $0x128] sm:$0xff] %v6134
  %6649 = vst [vmem:[%s6610 + $0x130] sm:$0xff] %v6131
  %6650 = vst [vmem:[%s6610 + $0x138] sm:$0xff] %v6135
  %6651 = vst [vmem:[%s6610 + $0x140] sm:$0xff] %v6264
  %6652 = vst [vmem:[%s6610 + $0x148] sm:$0xff] %v6268
  %6653 = vst [vmem:[%s6610 + $0x150] sm:$0xff] %v6265
  %6654 = vst [vmem:[%s6610 + $0x158] sm:$0xff] %v6269
  %6655 = vst [vmem:[%s6610 + $0x160] sm:$0xff] %v6266
  %6656 = vst [vmem:[%s6610 + $0x168] sm:$0xff] %v6270
  %6657 = vst [vmem:[%s6610 + $0x170] sm:$0xff] %v6267
  %6658 = vst [vmem:[%s6610 + $0x178] sm:$0xff] %v6271
  %6659 = vst [vmem:[%s6610 + $0x180] sm:$0xff] %v6400
  %6660 = vst [vmem:[%s6610 + $0x188] sm:$0xff] %v6404
  %6661 = vst [vmem:[%s6610 + $0x190] sm:$0xff] %v6401
  %6662 = vst [vmem:[%s6610 + $0x198] sm:$0xff] %v6405
  %6663 = vst [vmem:[%s6610 + $0x1a0] sm:$0xff] %v6402
  %6664 = vst [vmem:[%s6610 + $0x1a8] sm:$0xff] %v6406
  %6665 = vst [vmem:[%s6610 + $0x1b0] sm:$0xff] %v6403
  %6666 = vst [vmem:[%s6610 + $0x1b8] sm:$0xff] %v6407
  %6667 = vst [vmem:[%s6610 + $0x1c0] sm:$0xff] %v6536
  %6668 = vst [vmem:[%s6610 + $0x1c8] sm:$0xff] %v6540
  %6669 = vst [vmem:[%s6610 + $0x1d0] sm:$0xff] %v6537
  %6670 = vst [vmem:[%s6610 + $0x1d8] sm:$0xff] %v6541
  %6671 = vst [vmem:[%s6610 + $0x1e0] sm:$0xff] %v6538
  %6672 = vst [vmem:[%s6610 + $0x1e8] sm:$0xff] %v6542
  %6673 = vst [vmem:[%s6610 + $0x1f0] sm:$0xff] %v6539
  %6674 = vst [vmem:[%s6610 + $0x1f8] sm:$0xff] %v6543
  %v6675 = vld [vmem:[#allocation3] sm:$0xff]
  %v6676 = vld [vmem:[#allocation3 + $0x8] sm:$0xff]
  %v6677 = vld [vmem:[#allocation3 + $0x10] sm:$0xff]
  %v6678 = vld [vmem:[#allocation3 + $0x18] sm:$0xff]
  %v6679 = vld [vmem:[#allocation3 + $0x20] sm:$0xff]
  %v6680 = vld [vmem:[#allocation3 + $0x28] sm:$0xff]
  %v6681 = vld [vmem:[#allocation3 + $0x30] sm:$0xff]
  %v6682 = vld [vmem:[#allocation3 + $0x38] sm:$0xff]
  %v6683 = vld [vmem:[#allocation3 + $0x40] sm:$0xff]
  %v6684 = vld [vmem:[#allocation3 + $0x48] sm:$0xff]
  %v6685 = vld [vmem:[#allocation3 + $0x50] sm:$0xff]
  %v6686 = vld [vmem:[#allocation3 + $0x58] sm:$0xff]
  %v6687 = vld [vmem:[#allocation3 + $0x60] sm:$0xff]
  %v6688 = vld [vmem:[#allocation3 + $0x68] sm:$0xff]
  %v6689 = vld [vmem:[#allocation3 + $0x70] sm:$0xff]
  %v6690 = vld [vmem:[#allocation3 + $0x78] sm:$0xff]
  %v6691 = vld [vmem:[#allocation3 + $0x80] sm:$0xff]
  %v6692 = vld [vmem:[#allocation3 + $0x88] sm:$0xff]
  %v6693 = vld [vmem:[#allocation3 + $0x90] sm:$0xff]
  %v6694 = vld [vmem:[#allocation3 + $0x98] sm:$0xff]
  %v6695 = vld [vmem:[#allocation3 + $0xa0] sm:$0xff]
  %v6696 = vld [vmem:[#allocation3 + $0xa8] sm:$0xff]
  %v6697 = vld [vmem:[#allocation3 + $0xb0] sm:$0xff]
  %v6698 = vld [vmem:[#allocation3 + $0xb8] sm:$0xff]
  %v6699 = vld [vmem:[#allocation3 + $0xc0] sm:$0xff]
  %v6700 = vld [vmem:[#allocation3 + $0xc8] sm:$0xff]
  %v6701 = vld [vmem:[#allocation3 + $0xd0] sm:$0xff]
  %v6702 = vld [vmem:[#allocation3 + $0xd8] sm:$0xff]
  %v6703 = vld [vmem:[#allocation3 + $0xe0] sm:$0xff]
  %v6704 = vld [vmem:[#allocation3 + $0xe8] sm:$0xff]
  %v6705 = vld [vmem:[#allocation3 + $0xf0] sm:$0xff]
  %v6706 = vld [vmem:[#allocation3 + $0xf8] sm:$0xff]
  %v6707 = vld [vmem:[#allocation3 + $0x100] sm:$0xff]
  %v6708 = vld [vmem:[#allocation3 + $0x108] sm:$0xff]
  %v6709 = vld [vmem:[#allocation3 + $0x110] sm:$0xff]
  %v6710 = vld [vmem:[#allocation3 + $0x118] sm:$0xff]
  %v6711 = vld [vmem:[#allocation3 + $0x120] sm:$0xff]
  %v6712 = vld [vmem:[#allocation3 + $0x128] sm:$0xff]
  %v6713 = vld [vmem:[#allocation3 + $0x130] sm:$0xff]
  %v6714 = vld [vmem:[#allocation3 + $0x138] sm:$0xff]
  %v6715 = vld [vmem:[#allocation3 + $0x140] sm:$0xff]
  %v6716 = vld [vmem:[#allocation3 + $0x148] sm:$0xff]
  %v6717 = vld [vmem:[#allocation3 + $0x150] sm:$0xff]
  %v6718 = vld [vmem:[#allocation3 + $0x158] sm:$0xff]
  %v6719 = vld [vmem:[#allocation3 + $0x160] sm:$0xff]
  %v6720 = vld [vmem:[#allocation3 + $0x168] sm:$0xff]
  %v6721 = vld [vmem:[#allocation3 + $0x170] sm:$0xff]
  %v6722 = vld [vmem:[#allocation3 + $0x178] sm:$0xff]
  %v6723 = vld [vmem:[#allocation3 + $0x180] sm:$0xff]
  %v6724 = vld [vmem:[#allocation3 + $0x188] sm:$0xff]
  %v6725 = vld [vmem:[#allocation3 + $0x190] sm:$0xff]
  %v6726 = vld [vmem:[#allocation3 + $0x198] sm:$0xff]
  %v6727 = vld [vmem:[#allocation3 + $0x1a0] sm:$0xff]
  %v6728 = vld [vmem:[#allocation3 + $0x1a8] sm:$0xff]
  %v6729 = vld [vmem:[#allocation3 + $0x1b0] sm:$0xff]
  %v6730 = vld [vmem:[#allocation3 + $0x1b8] sm:$0xff]
  %v6731 = vld [vmem:[#allocation3 + $0x1c0] sm:$0xff]
  %v6732 = vld [vmem:[#allocation3 + $0x1c8] sm:$0xff]
  %v6733 = vld [vmem:[#allocation3 + $0x1d0] sm:$0xff]
  %v6734 = vld [vmem:[#allocation3 + $0x1d8] sm:$0xff]
  %v6735 = vld [vmem:[#allocation3 + $0x1e0] sm:$0xff]
  %v6736 = vld [vmem:[#allocation3 + $0x1e8] sm:$0xff]
  %v6737 = vld [vmem:[#allocation3 + $0x1f0] sm:$0xff]
  %v6738 = vld [vmem:[#allocation3 + $0x1f8] sm:$0xff]
  %v6739 = vld [vmem:[#allocation3 + $0x200] sm:$0xff]
  %v6740 = vld [vmem:[#allocation3 + $0x208] sm:$0xff]
  %v6741 = vld [vmem:[#allocation3 + $0x210] sm:$0xff]
  %v6742 = vld [vmem:[#allocation3 + $0x218] sm:$0xff]
  %v6743 = vld [vmem:[#allocation3 + $0x220] sm:$0xff]
  %v6744 = vld [vmem:[#allocation3 + $0x228] sm:$0xff]
  %v6745 = vld [vmem:[#allocation3 + $0x230] sm:$0xff]
  %v6746 = vld [vmem:[#allocation3 + $0x238] sm:$0xff]
  %v6747 = vld [vmem:[#allocation3 + $0x240] sm:$0xff]
  %v6748 = vld [vmem:[#allocation3 + $0x248] sm:$0xff]
  %v6749 = vld [vmem:[#allocation3 + $0x250] sm:$0xff]
  %v6750 = vld [vmem:[#allocation3 + $0x258] sm:$0xff]
  %v6751 = vld [vmem:[#allocation3 + $0x260] sm:$0xff]
  %v6752 = vld [vmem:[#allocation3 + $0x268] sm:$0xff]
  %v6753 = vld [vmem:[#allocation3 + $0x270] sm:$0xff]
  %v6754 = vld [vmem:[#allocation3 + $0x278] sm:$0xff]
  %v6755 = vld [vmem:[#allocation3 + $0x280] sm:$0xff]
  %v6756 = vld [vmem:[#allocation3 + $0x288] sm:$0xff]
  %v6757 = vld [vmem:[#allocation3 + $0x290] sm:$0xff]
  %v6758 = vld [vmem:[#allocation3 + $0x298] sm:$0xff]
  %v6759 = vld [vmem:[#allocation3 + $0x2a0] sm:$0xff]
  %v6760 = vld [vmem:[#allocation3 + $0x2a8] sm:$0xff]
  %v6761 = vld [vmem:[#allocation3 + $0x2b0] sm:$0xff]
  %v6762 = vld [vmem:[#allocation3 + $0x2b8] sm:$0xff]
  %v6763 = vld [vmem:[#allocation3 + $0x2c0] sm:$0xff]
  %v6764 = vld [vmem:[#allocation3 + $0x2c8] sm:$0xff]
  %v6765 = vld [vmem:[#allocation3 + $0x2d0] sm:$0xff]
  %v6766 = vld [vmem:[#allocation3 + $0x2d8] sm:$0xff]
  %v6767 = vld [vmem:[#allocation3 + $0x2e0] sm:$0xff]
  %v6768 = vld [vmem:[#allocation3 + $0x2e8] sm:$0xff]
  %v6769 = vld [vmem:[#allocation3 + $0x2f0] sm:$0xff]
  %v6770 = vld [vmem:[#allocation3 + $0x2f8] sm:$0xff]
  %v6771 = vld [vmem:[#allocation3 + $0x300] sm:$0xff]
  %v6772 = vld [vmem:[#allocation3 + $0x308] sm:$0xff]
  %v6773 = vld [vmem:[#allocation3 + $0x310] sm:$0xff]
  %v6774 = vld [vmem:[#allocation3 + $0x318] sm:$0xff]
  %v6775 = vld [vmem:[#allocation3 + $0x320] sm:$0xff]
  %v6776 = vld [vmem:[#allocation3 + $0x328] sm:$0xff]
  %v6777 = vld [vmem:[#allocation3 + $0x330] sm:$0xff]
  %v6778 = vld [vmem:[#allocation3 + $0x338] sm:$0xff]
  %v6779 = vld [vmem:[#allocation3 + $0x340] sm:$0xff]
  %v6780 = vld [vmem:[#allocation3 + $0x348] sm:$0xff]
  %v6781 = vld [vmem:[#allocation3 + $0x350] sm:$0xff]
  %v6782 = vld [vmem:[#allocation3 + $0x358] sm:$0xff]
  %v6783 = vld [vmem:[#allocation3 + $0x360] sm:$0xff]
  %v6784 = vld [vmem:[#allocation3 + $0x368] sm:$0xff]
  %v6785 = vld [vmem:[#allocation3 + $0x370] sm:$0xff]
  %v6786 = vld [vmem:[#allocation3 + $0x378] sm:$0xff]
  %v6787 = vld [vmem:[#allocation3 + $0x380] sm:$0xff]
  %v6788 = vld [vmem:[#allocation3 + $0x388] sm:$0xff]
  %v6789 = vld [vmem:[#allocation3 + $0x390] sm:$0xff]
  %v6790 = vld [vmem:[#allocation3 + $0x398] sm:$0xff]
  %v6791 = vld [vmem:[#allocation3 + $0x3a0] sm:$0xff]
  %v6792 = vld [vmem:[#allocation3 + $0x3a8] sm:$0xff]
  %v6793 = vld [vmem:[#allocation3 + $0x3b0] sm:$0xff]
  %v6794 = vld [vmem:[#allocation3 + $0x3b8] sm:$0xff]
  %v6795 = vld [vmem:[#allocation3 + $0x3c0] sm:$0xff]
  %v6796 = vld [vmem:[#allocation3 + $0x3c8] sm:$0xff]
  %v6797 = vld [vmem:[#allocation3 + $0x3d0] sm:$0xff]
  %v6798 = vld [vmem:[#allocation3 + $0x3d8] sm:$0xff]
  %v6799 = vld [vmem:[#allocation3 + $0x3e0] sm:$0xff]
  %v6800 = vld [vmem:[#allocation3 + $0x3e8] sm:$0xff]
  %v6801 = vld [vmem:[#allocation3 + $0x3f0] sm:$0xff]
  %v6802 = vld [vmem:[#allocation3 + $0x3f8] sm:$0xff]
  %v6803 = vld [vmem:[%s4] sm:$0xf]
  %v6804 = vld [vmem:[%s4 + $0x4] sm:$0xf]
  %v6805 = vld [vmem:[%s4 + $0x8] sm:$0xf]
  %v6806 = vld [vmem:[%s4 + $0xc] sm:$0xf]
  %v6807 = vld [vmem:[%s4 + $0x10] sm:$0xf]
  %v6808 = vld [vmem:[%s4 + $0x14] sm:$0xf]
  %v6809 = vld [vmem:[%s4 + $0x18] sm:$0xf]
  %v6810 = vld [vmem:[%s4 + $0x1c] sm:$0xf]
  %v6811 = vld [vmem:[%s4 + $0x20] sm:$0xf]
  %v6812 = vld [vmem:[%s4 + $0x24] sm:$0xf]
  %v6813 = vld [vmem:[%s4 + $0x28] sm:$0xf]
  %v6814 = vld [vmem:[%s4 + $0x2c] sm:$0xf]
  %v6815 = vld [vmem:[%s4 + $0x30] sm:$0xf]
  %v6816 = vld [vmem:[%s4 + $0x34] sm:$0xf]
  %v6817 = vld [vmem:[%s4 + $0x38] sm:$0xf]
  %v6818 = vld [vmem:[%s4 + $0x3c] sm:$0xf]
  %v6819 = vld [vmem:[%s4 + $0x40] sm:$0xf]
  %v6820 = vld [vmem:[%s4 + $0x44] sm:$0xf]
  %v6821 = vld [vmem:[%s4 + $0x48] sm:$0xf]
  %v6822 = vld [vmem:[%s4 + $0x4c] sm:$0xf]
  %v6823 = vld [vmem:[%s4 + $0x50] sm:$0xf]
  %v6824 = vld [vmem:[%s4 + $0x54] sm:$0xf]
  %v6825 = vld [vmem:[%s4 + $0x58] sm:$0xf]
  %v6826 = vld [vmem:[%s4 + $0x5c] sm:$0xf]
  %v6827 = vld [vmem:[%s4 + $0x60] sm:$0xf]
  %v6828 = vld [vmem:[%s4 + $0x64] sm:$0xf]
  %v6829 = vld [vmem:[%s4 + $0x68] sm:$0xf]
  %v6830 = vld [vmem:[%s4 + $0x6c] sm:$0xf]
  %v6831 = vld [vmem:[%s4 + $0x70] sm:$0xf]
  %v6832 = vld [vmem:[%s4 + $0x74] sm:$0xf]
  %v6833 = vld [vmem:[%s4 + $0x78] sm:$0xf]
  %v6834 = vld [vmem:[%s4 + $0x7c] sm:$0xf]
  %v6835 = vld [vmem:[%s4 + $0x80] sm:$0xf]
  %v6836 = vld [vmem:[%s4 + $0x84] sm:$0xf]
  %v6837 = vld [vmem:[%s4 + $0x88] sm:$0xf]
  %v6838 = vld [vmem:[%s4 + $0x8c] sm:$0xf]
  %v6839 = vld [vmem:[%s4 + $0x90] sm:$0xf]
  %v6840 = vld [vmem:[%s4 + $0x94] sm:$0xf]
  %v6841 = vld [vmem:[%s4 + $0x98] sm:$0xf]
  %v6842 = vld [vmem:[%s4 + $0x9c] sm:$0xf]
  %v6843 = vld [vmem:[%s4 + $0xa0] sm:$0xf]
  %v6844 = vld [vmem:[%s4 + $0xa4] sm:$0xf]
  %v6845 = vld [vmem:[%s4 + $0xa8] sm:$0xf]
  %v6846 = vld [vmem:[%s4 + $0xac] sm:$0xf]
  %v6847 = vld [vmem:[%s4 + $0xb0] sm:$0xf]
  %v6848 = vld [vmem:[%s4 + $0xb4] sm:$0xf]
  %v6849 = vld [vmem:[%s4 + $0xb8] sm:$0xf]
  %v6850 = vld [vmem:[%s4 + $0xbc] sm:$0xf]
  %v6851 = vld [vmem:[%s4 + $0xc0] sm:$0xf]
  %v6852 = vld [vmem:[%s4 + $0xc4] sm:$0xf]
  %v6853 = vld [vmem:[%s4 + $0xc8] sm:$0xf]
  %v6854 = vld [vmem:[%s4 + $0xcc] sm:$0xf]
  %v6855 = vld [vmem:[%s4 + $0xd0] sm:$0xf]
  %v6856 = vld [vmem:[%s4 + $0xd4] sm:$0xf]
  %v6857 = vld [vmem:[%s4 + $0xd8] sm:$0xf]
  %v6858 = vld [vmem:[%s4 + $0xdc] sm:$0xf]
  %v6859 = vld [vmem:[%s4 + $0xe0] sm:$0xf]
  %v6860 = vld [vmem:[%s4 + $0xe4] sm:$0xf]
  %v6861 = vld [vmem:[%s4 + $0xe8] sm:$0xf]
  %v6862 = vld [vmem:[%s4 + $0xec] sm:$0xf]
  %v6863 = vld [vmem:[%s4 + $0xf0] sm:$0xf]
  %v6864 = vld [vmem:[%s4 + $0xf4] sm:$0xf]
  %v6865 = vld [vmem:[%s4 + $0xf8] sm:$0xf]
  %v6866 = vld [vmem:[%s4 + $0xfc] sm:$0xf]
  %v6867 = vld [vmem:[%s4 + $0x100] sm:$0xf]
  %v6868 = vld [vmem:[%s4 + $0x104] sm:$0xf]
  %v6869 = vld [vmem:[%s4 + $0x108] sm:$0xf]
  %v6870 = vld [vmem:[%s4 + $0x10c] sm:$0xf]
  %v6871 = vld [vmem:[%s4 + $0x110] sm:$0xf]
  %v6872 = vld [vmem:[%s4 + $0x114] sm:$0xf]
  %v6873 = vld [vmem:[%s4 + $0x118] sm:$0xf]
  %v6874 = vld [vmem:[%s4 + $0x11c] sm:$0xf]
  %v6875 = vld [vmem:[%s4 + $0x120] sm:$0xf]
  %v6876 = vld [vmem:[%s4 + $0x124] sm:$0xf]
  %v6877 = vld [vmem:[%s4 + $0x128] sm:$0xf]
  %v6878 = vld [vmem:[%s4 + $0x12c] sm:$0xf]
  %v6879 = vld [vmem:[%s4 + $0x130] sm:$0xf]
  %v6880 = vld [vmem:[%s4 + $0x134] sm:$0xf]
  %v6881 = vld [vmem:[%s4 + $0x138] sm:$0xf]
  %v6882 = vld [vmem:[%s4 + $0x13c] sm:$0xf]
  %v6883 = vld [vmem:[%s4 + $0x140] sm:$0xf]
  %v6884 = vld [vmem:[%s4 + $0x144] sm:$0xf]
  %v6885 = vld [vmem:[%s4 + $0x148] sm:$0xf]
  %v6886 = vld [vmem:[%s4 + $0x14c] sm:$0xf]
  %v6887 = vld [vmem:[%s4 + $0x150] sm:$0xf]
  %v6888 = vld [vmem:[%s4 + $0x154] sm:$0xf]
  %v6889 = vld [vmem:[%s4 + $0x158] sm:$0xf]
  %v6890 = vld [vmem:[%s4 + $0x15c] sm:$0xf]
  %v6891 = vld [vmem:[%s4 + $0x160] sm:$0xf]
  %v6892 = vld [vmem:[%s4 + $0x164] sm:$0xf]
  %v6893 = vld [vmem:[%s4 + $0x168] sm:$0xf]
  %v6894 = vld [vmem:[%s4 + $0x16c] sm:$0xf]
  %v6895 = vld [vmem:[%s4 + $0x170] sm:$0xf]
  %v6896 = vld [vmem:[%s4 + $0x174] sm:$0xf]
  %v6897 = vld [vmem:[%s4 + $0x178] sm:$0xf]
  %v6898 = vld [vmem:[%s4 + $0x17c] sm:$0xf]
  %v6899 = vld [vmem:[%s4 + $0x180] sm:$0xf]
  %v6900 = vld [vmem:[%s4 + $0x184] sm:$0xf]
  %v6901 = vld [vmem:[%s4 + $0x188] sm:$0xf]
  %v6902 = vld [vmem:[%s4 + $0x18c] sm:$0xf]
  %v6903 = vld [vmem:[%s4 + $0x190] sm:$0xf]
  %v6904 = vld [vmem:[%s4 + $0x194] sm:$0xf]
  %v6905 = vld [vmem:[%s4 + $0x198] sm:$0xf]
  %v6906 = vld [vmem:[%s4 + $0x19c] sm:$0xf]
  %v6907 = vld [vmem:[%s4 + $0x1a0] sm:$0xf]
  %v6908 = vld [vmem:[%s4 + $0x1a4] sm:$0xf]
  %v6909 = vld [vmem:[%s4 + $0x1a8] sm:$0xf]
  %v6910 = vld [vmem:[%s4 + $0x1ac] sm:$0xf]
  %v6911 = vld [vmem:[%s4 + $0x1b0] sm:$0xf]
  %v6912 = vld [vmem:[%s4 + $0x1b4] sm:$0xf]
  %v6913 = vld [vmem:[%s4 + $0x1b8] sm:$0xf]
  %v6914 = vld [vmem:[%s4 + $0x1bc] sm:$0xf]
  %v6915 = vld [vmem:[%s4 + $0x1c0] sm:$0xf]
  %v6916 = vld [vmem:[%s4 + $0x1c4] sm:$0xf]
  %v6917 = vld [vmem:[%s4 + $0x1c8] sm:$0xf]
  %v6918 = vld [vmem:[%s4 + $0x1cc] sm:$0xf]
  %v6919 = vld [vmem:[%s4 + $0x1d0] sm:$0xf]
  %v6920 = vld [vmem:[%s4 + $0x1d4] sm:$0xf]
  %v6921 = vld [vmem:[%s4 + $0x1d8] sm:$0xf]
  %v6922 = vld [vmem:[%s4 + $0x1dc] sm:$0xf]
  %v6923 = vld [vmem:[%s4 + $0x1e0] sm:$0xf]
  %v6924 = vld [vmem:[%s4 + $0x1e4] sm:$0xf]
  %v6925 = vld [vmem:[%s4 + $0x1e8] sm:$0xf]
  %v6926 = vld [vmem:[%s4 + $0x1ec] sm:$0xf]
  %v6927 = vld [vmem:[%s4 + $0x1f0] sm:$0xf]
  %v6928 = vld [vmem:[%s4 + $0x1f4] sm:$0xf]
  %v6929 = vld [vmem:[%s4 + $0x1f8] sm:$0xf]
  %v6930 = vld [vmem:[%s4 + $0x1fc] sm:$0xf]
  %v6931 = vld [vmem:[%s4 + $0x200] sm:$0xf]
  %v6932 = vld [vmem:[%s4 + $0x204] sm:$0xf]
  %v6933 = vld [vmem:[%s4 + $0x208] sm:$0xf]
  %v6934 = vld [vmem:[%s4 + $0x20c] sm:$0xf]
  %v6935 = vld [vmem:[%s4 + $0x210] sm:$0xf]
  %v6936 = vld [vmem:[%s4 + $0x214] sm:$0xf]
  %v6937 = vld [vmem:[%s4 + $0x218] sm:$0xf]
  %v6938 = vld [vmem:[%s4 + $0x21c] sm:$0xf]
  %v6939 = vld [vmem:[%s4 + $0x220] sm:$0xf]
  %v6940 = vld [vmem:[%s4 + $0x224] sm:$0xf]
  %v6941 = vld [vmem:[%s4 + $0x228] sm:$0xf]
  %v6942 = vld [vmem:[%s4 + $0x22c] sm:$0xf]
  %v6943 = vld [vmem:[%s4 + $0x230] sm:$0xf]
  %v6944 = vld [vmem:[%s4 + $0x234] sm:$0xf]
  %v6945 = vld [vmem:[%s4 + $0x238] sm:$0xf]
  %v6946 = vld [vmem:[%s4 + $0x23c] sm:$0xf]
  %v6947 = vld [vmem:[%s4 + $0x240] sm:$0xf]
  %v6948 = vld [vmem:[%s4 + $0x244] sm:$0xf]
  %v6949 = vld [vmem:[%s4 + $0x248] sm:$0xf]
  %v6950 = vld [vmem:[%s4 + $0x24c] sm:$0xf]
  %v6951 = vld [vmem:[%s4 + $0x250] sm:$0xf]
  %v6952 = vld [vmem:[%s4 + $0x254] sm:$0xf]
  %v6953 = vld [vmem:[%s4 + $0x258] sm:$0xf]
  %v6954 = vld [vmem:[%s4 + $0x25c] sm:$0xf]
  %v6955 = vld [vmem:[%s4 + $0x260] sm:$0xf]
  %v6956 = vld [vmem:[%s4 + $0x264] sm:$0xf]
  %v6957 = vld [vmem:[%s4 + $0x268] sm:$0xf]
  %v6958 = vld [vmem:[%s4 + $0x26c] sm:$0xf]
  %v6959 = vld [vmem:[%s4 + $0x270] sm:$0xf]
  %v6960 = vld [vmem:[%s4 + $0x274] sm:$0xf]
  %v6961 = vld [vmem:[%s4 + $0x278] sm:$0xf]
  %v6962 = vld [vmem:[%s4 + $0x27c] sm:$0xf]
  %v6963 = vld [vmem:[%s4 + $0x280] sm:$0xf]
  %v6964 = vld [vmem:[%s4 + $0x284] sm:$0xf]
  %v6965 = vld [vmem:[%s4 + $0x288] sm:$0xf]
  %v6966 = vld [vmem:[%s4 + $0x28c] sm:$0xf]
  %v6967 = vld [vmem:[%s4 + $0x290] sm:$0xf]
  %v6968 = vld [vmem:[%s4 + $0x294] sm:$0xf]
  %v6969 = vld [vmem:[%s4 + $0x298] sm:$0xf]
  %v6970 = vld [vmem:[%s4 + $0x29c] sm:$0xf]
  %v6971 = vld [vmem:[%s4 + $0x2a0] sm:$0xf]
  %v6972 = vld [vmem:[%s4 + $0x2a4] sm:$0xf]
  %v6973 = vld [vmem:[%s4 + $0x2a8] sm:$0xf]
  %v6974 = vld [vmem:[%s4 + $0x2ac] sm:$0xf]
  %v6975 = vld [vmem:[%s4 + $0x2b0] sm:$0xf]
  %v6976 = vld [vmem:[%s4 + $0x2b4] sm:$0xf]
  %v6977 = vld [vmem:[%s4 + $0x2b8] sm:$0xf]
  %v6978 = vld [vmem:[%s4 + $0x2bc] sm:$0xf]
  %v6979 = vld [vmem:[%s4 + $0x2c0] sm:$0xf]
  %v6980 = vld [vmem:[%s4 + $0x2c4] sm:$0xf]
  %v6981 = vld [vmem:[%s4 + $0x2c8] sm:$0xf]
  %v6982 = vld [vmem:[%s4 + $0x2cc] sm:$0xf]
  %v6983 = vld [vmem:[%s4 + $0x2d0] sm:$0xf]
  %v6984 = vld [vmem:[%s4 + $0x2d4] sm:$0xf]
  %v6985 = vld [vmem:[%s4 + $0x2d8] sm:$0xf]
  %v6986 = vld [vmem:[%s4 + $0x2dc] sm:$0xf]
  %v6987 = vld [vmem:[%s4 + $0x2e0] sm:$0xf]
  %v6988 = vld [vmem:[%s4 + $0x2e4] sm:$0xf]
  %v6989 = vld [vmem:[%s4 + $0x2e8] sm:$0xf]
  %v6990 = vld [vmem:[%s4 + $0x2ec] sm:$0xf]
  %v6991 = vld [vmem:[%s4 + $0x2f0] sm:$0xf]
  %v6992 = vld [vmem:[%s4 + $0x2f4] sm:$0xf]
  %v6993 = vld [vmem:[%s4 + $0x2f8] sm:$0xf]
  %v6994 = vld [vmem:[%s4 + $0x2fc] sm:$0xf]
  %v6995 = vld [vmem:[%s4 + $0x300] sm:$0xf]
  %v6996 = vld [vmem:[%s4 + $0x304] sm:$0xf]
  %v6997 = vld [vmem:[%s4 + $0x308] sm:$0xf]
  %v6998 = vld [vmem:[%s4 + $0x30c] sm:$0xf]
  %v6999 = vld [vmem:[%s4 + $0x310] sm:$0xf]
  %v7000 = vld [vmem:[%s4 + $0x314] sm:$0xf]
  %v7001 = vld [vmem:[%s4 + $0x318] sm:$0xf]
  %v7002 = vld [vmem:[%s4 + $0x31c] sm:$0xf]
  %v7003 = vld [vmem:[%s4 + $0x320] sm:$0xf]
  %v7004 = vld [vmem:[%s4 + $0x324] sm:$0xf]
  %v7005 = vld [vmem:[%s4 + $0x328] sm:$0xf]
  %v7006 = vld [vmem:[%s4 + $0x32c] sm:$0xf]
  %v7007 = vld [vmem:[%s4 + $0x330] sm:$0xf]
  %v7008 = vld [vmem:[%s4 + $0x334] sm:$0xf]
  %v7009 = vld [vmem:[%s4 + $0x338] sm:$0xf]
  %v7010 = vld [vmem:[%s4 + $0x33c] sm:$0xf]
  %v7011 = vld [vmem:[%s4 + $0x340] sm:$0xf]
  %v7012 = vld [vmem:[%s4 + $0x344] sm:$0xf]
  %v7013 = vld [vmem:[%s4 + $0x348] sm:$0xf]
  %v7014 = vld [vmem:[%s4 + $0x34c] sm:$0xf]
  %v7015 = vld [vmem:[%s4 + $0x350] sm:$0xf]
  %v7016 = vld [vmem:[%s4 + $0x354] sm:$0xf]
  %v7017 = vld [vmem:[%s4 + $0x358] sm:$0xf]
  %v7018 = vld [vmem:[%s4 + $0x35c] sm:$0xf]
  %v7019 = vld [vmem:[%s4 + $0x360] sm:$0xf]
  %v7020 = vld [vmem:[%s4 + $0x364] sm:$0xf]
  %v7021 = vld [vmem:[%s4 + $0x368] sm:$0xf]
  %v7022 = vld [vmem:[%s4 + $0x36c] sm:$0xf]
  %v7023 = vld [vmem:[%s4 + $0x370] sm:$0xf]
  %v7024 = vld [vmem:[%s4 + $0x374] sm:$0xf]
  %v7025 = vld [vmem:[%s4 + $0x378] sm:$0xf]
  %v7026 = vld [vmem:[%s4 + $0x37c] sm:$0xf]
  %v7027 = vld [vmem:[%s4 + $0x380] sm:$0xf]
  %v7028 = vld [vmem:[%s4 + $0x384] sm:$0xf]
  %v7029 = vld [vmem:[%s4 + $0x388] sm:$0xf]
  %v7030 = vld [vmem:[%s4 + $0x38c] sm:$0xf]
  %v7031 = vld [vmem:[%s4 + $0x390] sm:$0xf]
  %v7032 = vld [vmem:[%s4 + $0x394] sm:$0xf]
  %v7033 = vld [vmem:[%s4 + $0x398] sm:$0xf]
  %v7034 = vld [vmem:[%s4 + $0x39c] sm:$0xf]
  %v7035 = vld [vmem:[%s4 + $0x3a0] sm:$0xf]
  %v7036 = vld [vmem:[%s4 + $0x3a4] sm:$0xf]
  %v7037 = vld [vmem:[%s4 + $0x3a8] sm:$0xf]
  %v7038 = vld [vmem:[%s4 + $0x3ac] sm:$0xf]
  %v7039 = vld [vmem:[%s4 + $0x3b0] sm:$0xf]
  %v7040 = vld [vmem:[%s4 + $0x3b4] sm:$0xf]
  %v7041 = vld [vmem:[%s4 + $0x3b8] sm:$0xf]
  %v7042 = vld [vmem:[%s4 + $0x3bc] sm:$0xf]
  %v7043 = vld [vmem:[%s4 + $0x3c0] sm:$0xf]
  %v7044 = vld [vmem:[%s4 + $0x3c4] sm:$0xf]
  %v7045 = vld [vmem:[%s4 + $0x3c8] sm:$0xf]
  %v7046 = vld [vmem:[%s4 + $0x3cc] sm:$0xf]
  %v7047 = vld [vmem:[%s4 + $0x3d0] sm:$0xf]
  %v7048 = vld [vmem:[%s4 + $0x3d4] sm:$0xf]
  %v7049 = vld [vmem:[%s4 + $0x3d8] sm:$0xf]
  %v7050 = vld [vmem:[%s4 + $0x3dc] sm:$0xf]
  %v7051 = vld [vmem:[%s4 + $0x3e0] sm:$0xf]
  %v7052 = vld [vmem:[%s4 + $0x3e4] sm:$0xf]
  %v7053 = vld [vmem:[%s4 + $0x3e8] sm:$0xf]
  %v7054 = vld [vmem:[%s4 + $0x3ec] sm:$0xf]
  %v7055 = vld [vmem:[%s4 + $0x3f0] sm:$0xf]
  %v7056 = vld [vmem:[%s4 + $0x3f4] sm:$0xf]
  %v7057 = vld [vmem:[%s4 + $0x3f8] sm:$0xf]
  %v7058 = vld [vmem:[%s4 + $0x3fc] sm:$0xf]
  %v7059 = vld [vmem:[%s5] sm:$0x1]
  %v7061 = vlaneseq
  %v7062 = vshrl.u32 %v7061, 7
  %v7063 = vsub.s32 0, %v7062
  %v7064 = vrot.slane %v7059, %v7063
  %v7322 = vunpack.c.l.b16 %v6803
  %v7323 = vunpack.c.l.b16 %v6804
  %v7324 = vunpack.c.l.b16 %v6805
  %v7325 = vunpack.c.l.b16 %v6806
  %v7326 = vunpack.c.l.b16 %v6807
  %v7327 = vunpack.c.l.b16 %v6808
  %v7328 = vunpack.c.l.b16 %v6809
  %v7329 = vunpack.c.l.b16 %v6810
  %v7330 = vunpack.c.l.b16 %v6811
  %v7331 = vunpack.c.l.b16 %v6812
  %v7332 = vunpack.c.l.b16 %v6813
  %v7333 = vunpack.c.l.b16 %v6814
  %v7334 = vunpack.c.l.b16 %v6815
  %v7335 = vunpack.c.l.b16 %v6816
  %v7336 = vunpack.c.l.b16 %v6817
  %v7337 = vunpack.c.l.b16 %v6818
  %v7338 = vunpack.c.l.b16 %v6819
  %v7339 = vunpack.c.l.b16 %v6820
  %v7340 = vunpack.c.l.b16 %v6821
  %v7341 = vunpack.c.l.b16 %v6822
  %v7342 = vunpack.c.l.b16 %v6823
  %v7343 = vunpack.c.l.b16 %v6824
  %v7344 = vunpack.c.l.b16 %v6825
  %v7345 = vunpack.c.l.b16 %v6826
  %v7346 = vunpack.c.l.b16 %v6827
  %v7347 = vunpack.c.l.b16 %v6828
  %v7348 = vunpack.c.l.b16 %v6829
  %v7349 = vunpack.c.l.b16 %v6830
  %v7350 = vunpack.c.l.b16 %v6831
  %v7351 = vunpack.c.l.b16 %v6832
  %v7352 = vunpack.c.l.b16 %v6833
  %v7353 = vunpack.c.l.b16 %v6834
  %v7354 = vunpack.c.l.b16 %v6835
  %v7355 = vunpack.c.l.b16 %v6836
  %v7356 = vunpack.c.l.b16 %v6837
  %v7357 = vunpack.c.l.b16 %v6838
  %v7358 = vunpack.c.l.b16 %v6839
  %v7359 = vunpack.c.l.b16 %v6840
  %v7360 = vunpack.c.l.b16 %v6841
  %v7361 = vunpack.c.l.b16 %v6842
  %v7362 = vunpack.c.l.b16 %v6843
  %v7363 = vunpack.c.l.b16 %v6844
  %v7364 = vunpack.c.l.b16 %v6845
  %v7365 = vunpack.c.l.b16 %v6846
  %v7366 = vunpack.c.l.b16 %v6847
  %v7367 = vunpack.c.l.b16 %v6848
  %v7368 = vunpack.c.l.b16 %v6849
  %v7369 = vunpack.c.l.b16 %v6850
  %v7370 = vunpack.c.l.b16 %v6851
  %v7371 = vunpack.c.l.b16 %v6852
  %v7372 = vunpack.c.l.b16 %v6853
  %v7373 = vunpack.c.l.b16 %v6854
  %v7374 = vunpack.c.l.b16 %v6855
  %v7375 = vunpack.c.l.b16 %v6856
  %v7376 = vunpack.c.l.b16 %v6857
  %v7377 = vunpack.c.l.b16 %v6858
  %v7378 = vunpack.c.l.b16 %v6859
  %v7379 = vunpack.c.l.b16 %v6860
  %v7380 = vunpack.c.l.b16 %v6861
  %v7381 = vunpack.c.l.b16 %v6862
  %v7382 = vunpack.c.l.b16 %v6863
  %v7383 = vunpack.c.l.b16 %v6864
  %v7384 = vunpack.c.l.b16 %v6865
  %v7385 = vunpack.c.l.b16 %v6866
  %v7386 = vunpack.c.l.b16 %v6867
  %v7387 = vunpack.c.l.b16 %v6868
  %v7388 = vunpack.c.l.b16 %v6869
  %v7389 = vunpack.c.l.b16 %v6870
  %v7390 = vunpack.c.l.b16 %v6871
  %v7391 = vunpack.c.l.b16 %v6872
  %v7392 = vunpack.c.l.b16 %v6873
  %v7393 = vunpack.c.l.b16 %v6874
  %v7394 = vunpack.c.l.b16 %v6875
  %v7395 = vunpack.c.l.b16 %v6876
  %v7396 = vunpack.c.l.b16 %v6877
  %v7397 = vunpack.c.l.b16 %v6878
  %v7398 = vunpack.c.l.b16 %v6879
  %v7399 = vunpack.c.l.b16 %v6880
  %v7400 = vunpack.c.l.b16 %v6881
  %v7401 = vunpack.c.l.b16 %v6882
  %v7402 = vunpack.c.l.b16 %v6883
  %v7403 = vunpack.c.l.b16 %v6884
  %v7404 = vunpack.c.l.b16 %v6885
  %v7405 = vunpack.c.l.b16 %v6886
  %v7406 = vunpack.c.l.b16 %v6887
  %v7407 = vunpack.c.l.b16 %v6888
  %v7408 = vunpack.c.l.b16 %v6889
  %v7409 = vunpack.c.l.b16 %v6890
  %v7410 = vunpack.c.l.b16 %v6891
  %v7411 = vunpack.c.l.b16 %v6892
  %v7412 = vunpack.c.l.b16 %v6893
  %v7413 = vunpack.c.l.b16 %v6894
  %v7414 = vunpack.c.l.b16 %v6895
  %v7415 = vunpack.c.l.b16 %v6896
  %v7416 = vunpack.c.l.b16 %v6897
  %v7417 = vunpack.c.l.b16 %v6898
  %v7418 = vunpack.c.l.b16 %v6899
  %v7419 = vunpack.c.l.b16 %v6900
  %v7420 = vunpack.c.l.b16 %v6901
  %v7421 = vunpack.c.l.b16 %v6902
  %v7422 = vunpack.c.l.b16 %v6903
  %v7423 = vunpack.c.l.b16 %v6904
  %v7424 = vunpack.c.l.b16 %v6905
  %v7425 = vunpack.c.l.b16 %v6906
  %v7426 = vunpack.c.l.b16 %v6907
  %v7427 = vunpack.c.l.b16 %v6908
  %v7428 = vunpack.c.l.b16 %v6909
  %v7429 = vunpack.c.l.b16 %v6910
  %v7430 = vunpack.c.l.b16 %v6911
  %v7431 = vunpack.c.l.b16 %v6912
  %v7432 = vunpack.c.l.b16 %v6913
  %v7433 = vunpack.c.l.b16 %v6914
  %v7434 = vunpack.c.l.b16 %v6915
  %v7435 = vunpack.c.l.b16 %v6916
  %v7436 = vunpack.c.l.b16 %v6917
  %v7437 = vunpack.c.l.b16 %v6918
  %v7438 = vunpack.c.l.b16 %v6919
  %v7439 = vunpack.c.l.b16 %v6920
  %v7440 = vunpack.c.l.b16 %v6921
  %v7441 = vunpack.c.l.b16 %v6922
  %v7442 = vunpack.c.l.b16 %v6923
  %v7443 = vunpack.c.l.b16 %v6924
  %v7444 = vunpack.c.l.b16 %v6925
  %v7445 = vunpack.c.l.b16 %v6926
  %v7446 = vunpack.c.l.b16 %v6927
  %v7447 = vunpack.c.l.b16 %v6928
  %v7448 = vunpack.c.l.b16 %v6929
  %v7449 = vunpack.c.l.b16 %v6930
  %v7450 = vunpack.c.l.b16 %v6931
  %v7451 = vunpack.c.l.b16 %v6932
  %v7452 = vunpack.c.l.b16 %v6933
  %v7453 = vunpack.c.l.b16 %v6934
  %v7454 = vunpack.c.l.b16 %v6935
  %v7455 = vunpack.c.l.b16 %v6936
  %v7456 = vunpack.c.l.b16 %v6937
  %v7457 = vunpack.c.l.b16 %v6938
  %v7458 = vunpack.c.l.b16 %v6939
  %v7459 = vunpack.c.l.b16 %v6940
  %v7460 = vunpack.c.l.b16 %v6941
  %v7461 = vunpack.c.l.b16 %v6942
  %v7462 = vunpack.c.l.b16 %v6943
  %v7463 = vunpack.c.l.b16 %v6944
  %v7464 = vunpack.c.l.b16 %v6945
  %v7465 = vunpack.c.l.b16 %v6946
  %v7466 = vunpack.c.l.b16 %v6947
  %v7467 = vunpack.c.l.b16 %v6948
  %v7468 = vunpack.c.l.b16 %v6949
  %v7469 = vunpack.c.l.b16 %v6950
  %v7470 = vunpack.c.l.b16 %v6951
  %v7471 = vunpack.c.l.b16 %v6952
  %v7472 = vunpack.c.l.b16 %v6953
  %v7473 = vunpack.c.l.b16 %v6954
  %v7474 = vunpack.c.l.b16 %v6955
  %v7475 = vunpack.c.l.b16 %v6956
  %v7476 = vunpack.c.l.b16 %v6957
  %v7477 = vunpack.c.l.b16 %v6958
  %v7478 = vunpack.c.l.b16 %v6959
  %v7479 = vunpack.c.l.b16 %v6960
  %v7480 = vunpack.c.l.b16 %v6961
  %v7481 = vunpack.c.l.b16 %v6962
  %v7482 = vunpack.c.l.b16 %v6963
  %v7483 = vunpack.c.l.b16 %v6964
  %v7484 = vunpack.c.l.b16 %v6965
  %v7485 = vunpack.c.l.b16 %v6966
  %v7486 = vunpack.c.l.b16 %v6967
  %v7487 = vunpack.c.l.b16 %v6968
  %v7488 = vunpack.c.l.b16 %v6969
  %v7489 = vunpack.c.l.b16 %v6970
  %v7490 = vunpack.c.l.b16 %v6971
  %v7491 = vunpack.c.l.b16 %v6972
  %v7492 = vunpack.c.l.b16 %v6973
  %v7493 = vunpack.c.l.b16 %v6974
  %v7494 = vunpack.c.l.b16 %v6975
  %v7495 = vunpack.c.l.b16 %v6976
  %v7496 = vunpack.c.l.b16 %v6977
  %v7497 = vunpack.c.l.b16 %v6978
  %v7498 = vunpack.c.l.b16 %v6979
  %v7499 = vunpack.c.l.b16 %v6980
  %v7500 = vunpack.c.l.b16 %v6981
  %v7501 = vunpack.c.l.b16 %v6982
  %v7502 = vunpack.c.l.b16 %v6983
  %v7503 = vunpack.c.l.b16 %v6984
  %v7504 = vunpack.c.l.b16 %v6985
  %v7505 = vunpack.c.l.b16 %v6986
  %v7506 = vunpack.c.l.b16 %v6987
  %v7507 = vunpack.c.l.b16 %v6988
  %v7508 = vunpack.c.l.b16 %v6989
  %v7509 = vunpack.c.l.b16 %v6990
  %v7510 = vunpack.c.l.b16 %v6991
  %v7511 = vunpack.c.l.b16 %v6992
  %v7512 = vunpack.c.l.b16 %v6993
  %v7513 = vunpack.c.l.b16 %v6994
  %v7514 = vunpack.c.l.b16 %v6995
  %v7515 = vunpack.c.l.b16 %v6996
  %v7516 = vunpack.c.l.b16 %v6997
  %v7517 = vunpack.c.l.b16 %v6998
  %v7518 = vunpack.c.l.b16 %v6999
  %v7519 = vunpack.c.l.b16 %v7000
  %v7520 = vunpack.c.l.b16 %v7001
  %v7521 = vunpack.c.l.b16 %v7002
  %v7522 = vunpack.c.l.b16 %v7003
  %v7523 = vunpack.c.l.b16 %v7004
  %v7524 = vunpack.c.l.b16 %v7005
  %v7525 = vunpack.c.l.b16 %v7006
  %v7526 = vunpack.c.l.b16 %v7007
  %v7527 = vunpack.c.l.b16 %v7008
  %v7528 = vunpack.c.l.b16 %v7009
  %v7529 = vunpack.c.l.b16 %v7010
  %v7530 = vunpack.c.l.b16 %v7011
  %v7531 = vunpack.c.l.b16 %v7012
  %v7532 = vunpack.c.l.b16 %v7013
  %v7533 = vunpack.c.l.b16 %v7014
  %v7534 = vunpack.c.l.b16 %v7015
  %v7535 = vunpack.c.l.b16 %v7016
  %v7536 = vunpack.c.l.b16 %v7017
  %v7537 = vunpack.c.l.b16 %v7018
  %v7538 = vunpack.c.l.b16 %v7019
  %v7539 = vunpack.c.l.b16 %v7020
  %v7540 = vunpack.c.l.b16 %v7021
  %v7541 = vunpack.c.l.b16 %v7022
  %v7542 = vunpack.c.l.b16 %v7023
  %v7543 = vunpack.c.l.b16 %v7024
  %v7544 = vunpack.c.l.b16 %v7025
  %v7545 = vunpack.c.l.b16 %v7026
  %v7546 = vunpack.c.l.b16 %v7027
  %v7547 = vunpack.c.l.b16 %v7028
  %v7548 = vunpack.c.l.b16 %v7029
  %v7549 = vunpack.c.l.b16 %v7030
  %v7550 = vunpack.c.l.b16 %v7031
  %v7551 = vunpack.c.l.b16 %v7032
  %v7552 = vunpack.c.l.b16 %v7033
  %v7553 = vunpack.c.l.b16 %v7034
  %v7554 = vunpack.c.l.b16 %v7035
  %v7555 = vunpack.c.l.b16 %v7036
  %v7556 = vunpack.c.l.b16 %v7037
  %v7557 = vunpack.c.l.b16 %v7038
  %v7558 = vunpack.c.l.b16 %v7039
  %v7559 = vunpack.c.l.b16 %v7040
  %v7560 = vunpack.c.l.b16 %v7041
  %v7561 = vunpack.c.l.b16 %v7042
  %v7562 = vunpack.c.l.b16 %v7043
  %v7563 = vunpack.c.l.b16 %v7044
  %v7564 = vunpack.c.l.b16 %v7045
  %v7565 = vunpack.c.l.b16 %v7046
  %v7566 = vunpack.c.l.b16 %v7047
  %v7567 = vunpack.c.l.b16 %v7048
  %v7568 = vunpack.c.l.b16 %v7049
  %v7569 = vunpack.c.l.b16 %v7050
  %v7570 = vunpack.c.l.b16 %v7051
  %v7571 = vunpack.c.l.b16 %v7052
  %v7572 = vunpack.c.l.b16 %v7053
  %v7573 = vunpack.c.l.b16 %v7054
  %v7574 = vunpack.c.l.b16 %v7055
  %v7575 = vunpack.c.l.b16 %v7056
  %v7576 = vunpack.c.l.b16 %v7057
  %v7577 = vunpack.c.l.b16 %v7058
  %v7578 = vpack.c.b16 %v7323, %v7322
  %v7579 = vpack.c.b16 %v7325, %v7324
  %v7580 = vpack.c.b16 %v7327, %v7326
  %v7581 = vpack.c.b16 %v7329, %v7328
  %v7582 = vpack.c.b16 %v7331, %v7330
  %v7583 = vpack.c.b16 %v7333, %v7332
  %v7584 = vpack.c.b16 %v7335, %v7334
  %v7585 = vpack.c.b16 %v7337, %v7336
  %v7586 = vpack.c.b16 %v7339, %v7338
  %v7587 = vpack.c.b16 %v7341, %v7340
  %v7588 = vpack.c.b16 %v7343, %v7342
  %v7589 = vpack.c.b16 %v7345, %v7344
  %v7590 = vpack.c.b16 %v7347, %v7346
  %v7591 = vpack.c.b16 %v7349, %v7348
  %v7592 = vpack.c.b16 %v7351, %v7350
  %v7593 = vpack.c.b16 %v7353, %v7352
  %v7594 = vpack.c.b16 %v7355, %v7354
  %v7595 = vpack.c.b16 %v7357, %v7356
  %v7596 = vpack.c.b16 %v7359, %v7358
  %v7597 = vpack.c.b16 %v7361, %v7360
  %v7598 = vpack.c.b16 %v7363, %v7362
  %v7599 = vpack.c.b16 %v7365, %v7364
  %v7600 = vpack.c.b16 %v7367, %v7366
  %v7601 = vpack.c.b16 %v7369, %v7368
  %v7602 = vpack.c.b16 %v7371, %v7370
  %v7603 = vpack.c.b16 %v7373, %v7372
  %v7604 = vpack.c.b16 %v7375, %v7374
  %v7605 = vpack.c.b16 %v7377, %v7376
  %v7606 = vpack.c.b16 %v7379, %v7378
  %v7607 = vpack.c.b16 %v7381, %v7380
  %v7608 = vpack.c.b16 %v7383, %v7382
  %v7609 = vpack.c.b16 %v7385, %v7384
  %v7610 = vpack.c.b16 %v7387, %v7386
  %v7611 = vpack.c.b16 %v7389, %v7388
  %v7612 = vpack.c.b16 %v7391, %v7390
  %v7613 = vpack.c.b16 %v7393, %v7392
  %v7614 = vpack.c.b16 %v7395, %v7394
  %v7615 = vpack.c.b16 %v7397, %v7396
  %v7616 = vpack.c.b16 %v7399, %v7398
  %v7617 = vpack.c.b16 %v7401, %v7400
  %v7618 = vpack.c.b16 %v7403, %v7402
  %v7619 = vpack.c.b16 %v7405, %v7404
  %v7620 = vpack.c.b16 %v7407, %v7406
  %v7621 = vpack.c.b16 %v7409, %v7408
  %v7622 = vpack.c.b16 %v7411, %v7410
  %v7623 = vpack.c.b16 %v7413, %v7412
  %v7624 = vpack.c.b16 %v7415, %v7414
  %v7625 = vpack.c.b16 %v7417, %v7416
  %v7626 = vpack.c.b16 %v7419, %v7418
  %v7627 = vpack.c.b16 %v7421, %v7420
  %v7628 = vpack.c.b16 %v7423, %v7422
  %v7629 = vpack.c.b16 %v7425, %v7424
  %v7630 = vpack.c.b16 %v7427, %v7426
  %v7631 = vpack.c.b16 %v7429, %v7428
  %v7632 = vpack.c.b16 %v7431, %v7430
  %v7633 = vpack.c.b16 %v7433, %v7432
  %v7634 = vpack.c.b16 %v7435, %v7434
  %v7635 = vpack.c.b16 %v7437, %v7436
  %v7636 = vpack.c.b16 %v7439, %v7438
  %v7637 = vpack.c.b16 %v7441, %v7440
  %v7638 = vpack.c.b16 %v7443, %v7442
  %v7639 = vpack.c.b16 %v7445, %v7444
  %v7640 = vpack.c.b16 %v7447, %v7446
  %v7641 = vpack.c.b16 %v7449, %v7448
  %v7642 = vpack.c.b16 %v7451, %v7450
  %v7643 = vpack.c.b16 %v7453, %v7452
  %v7644 = vpack.c.b16 %v7455, %v7454
  %v7645 = vpack.c.b16 %v7457, %v7456
  %v7646 = vpack.c.b16 %v7459, %v7458
  %v7647 = vpack.c.b16 %v7461, %v7460
  %v7648 = vpack.c.b16 %v7463, %v7462
  %v7649 = vpack.c.b16 %v7465, %v7464
  %v7650 = vpack.c.b16 %v7467, %v7466
  %v7651 = vpack.c.b16 %v7469, %v7468
  %v7652 = vpack.c.b16 %v7471, %v7470
  %v7653 = vpack.c.b16 %v7473, %v7472
  %v7654 = vpack.c.b16 %v7475, %v7474
  %v7655 = vpack.c.b16 %v7477, %v7476
  %v7656 = vpack.c.b16 %v7479, %v7478
  %v7657 = vpack.c.b16 %v7481, %v7480
  %v7658 = vpack.c.b16 %v7483, %v7482
  %v7659 = vpack.c.b16 %v7485, %v7484
  %v7660 = vpack.c.b16 %v7487, %v7486
  %v7661 = vpack.c.b16 %v7489, %v7488
  %v7662 = vpack.c.b16 %v7491, %v7490
  %v7663 = vpack.c.b16 %v7493, %v7492
  %v7664 = vpack.c.b16 %v7495, %v7494
  %v7665 = vpack.c.b16 %v7497, %v7496
  %v7666 = vpack.c.b16 %v7499, %v7498
  %v7667 = vpack.c.b16 %v7501, %v7500
  %v7668 = vpack.c.b16 %v7503, %v7502
  %v7669 = vpack.c.b16 %v7505, %v7504
  %v7670 = vpack.c.b16 %v7507, %v7506
  %v7671 = vpack.c.b16 %v7509, %v7508
  %v7672 = vpack.c.b16 %v7511, %v7510
  %v7673 = vpack.c.b16 %v7513, %v7512
  %v7674 = vpack.c.b16 %v7515, %v7514
  %v7675 = vpack.c.b16 %v7517, %v7516
  %v7676 = vpack.c.b16 %v7519, %v7518
  %v7677 = vpack.c.b16 %v7521, %v7520
  %v7678 = vpack.c.b16 %v7523, %v7522
  %v7679 = vpack.c.b16 %v7525, %v7524
  %v7680 = vpack.c.b16 %v7527, %v7526
  %v7681 = vpack.c.b16 %v7529, %v7528
  %v7682 = vpack.c.b16 %v7531, %v7530
  %v7683 = vpack.c.b16 %v7533, %v7532
  %v7684 = vpack.c.b16 %v7535, %v7534
  %v7685 = vpack.c.b16 %v7537, %v7536
  %v7686 = vpack.c.b16 %v7539, %v7538
  %v7687 = vpack.c.b16 %v7541, %v7540
  %v7688 = vpack.c.b16 %v7543, %v7542
  %v7689 = vpack.c.b16 %v7545, %v7544
  %v7690 = vpack.c.b16 %v7547, %v7546
  %v7691 = vpack.c.b16 %v7549, %v7548
  %v7692 = vpack.c.b16 %v7551, %v7550
  %v7693 = vpack.c.b16 %v7553, %v7552
  %v7694 = vpack.c.b16 %v7555, %v7554
  %v7695 = vpack.c.b16 %v7557, %v7556
  %v7696 = vpack.c.b16 %v7559, %v7558
  %v7697 = vpack.c.b16 %v7561, %v7560
  %v7698 = vpack.c.b16 %v7563, %v7562
  %v7699 = vpack.c.b16 %v7565, %v7564
  %v7700 = vpack.c.b16 %v7567, %v7566
  %v7701 = vpack.c.b16 %v7569, %v7568
  %v7702 = vpack.c.b16 %v7571, %v7570
  %v7703 = vpack.c.b16 %v7573, %v7572
  %v7704 = vpack.c.b16 %v7575, %v7574
  %v7705 = vpack.c.b16 %v7577, %v7576
  %7834 = vmatprep.subr.bf16.mxu0 0
  %7835 = vmatpush1.bf16.msra.mxu0 %v7578
  %7836 = vmatprep.subr.bf16.mxu0 0
  %7837 = vmatpush1.bf16.msra.mxu0 %v7579
  %7838 = vmatprep.subr.bf16.mxu0 0
  %7839 = vmatpush1.bf16.msra.mxu0 %v7580
  %7840 = vmatprep.subr.bf16.mxu0 0
  %7841 = vmatpush1.bf16.msra.mxu0 %v7581
  %7842 = vmatprep.subr.bf16.mxu0 0
  %7843 = vmatpush1.bf16.msra.mxu0 %v7582
  %7844 = vmatprep.subr.bf16.mxu0 0
  %7845 = vmatpush1.bf16.msra.mxu0 %v7583
  %7846 = vmatprep.subr.bf16.mxu0 0
  %7847 = vmatpush1.bf16.msra.mxu0 %v7584
  %7848 = vmatprep.subr.bf16.mxu0 0
  %7849 = vmatpush1.bf16.msra.mxu0 %v7585
  %7850 = vmatprep.subr.bf16.mxu0 0
  %7851 = vmatpush1.bf16.msra.mxu0 %v7586
  %7852 = vmatprep.subr.bf16.mxu0 0
  %7853 = vmatpush1.bf16.msra.mxu0 %v7587
  %7854 = vmatprep.subr.bf16.mxu0 0
  %7855 = vmatpush1.bf16.msra.mxu0 %v7588
  %7856 = vmatprep.subr.bf16.mxu0 0
  %7857 = vmatpush1.bf16.msra.mxu0 %v7589
  %7858 = vmatprep.subr.bf16.mxu0 0
  %7859 = vmatpush1.bf16.msra.mxu0 %v7590
  %7860 = vmatprep.subr.bf16.mxu0 0
  %7861 = vmatpush1.bf16.msra.mxu0 %v7591
  %7862 = vmatprep.subr.bf16.mxu0 0
  %7863 = vmatpush1.bf16.msra.mxu0 %v7592
  %7864 = vmatprep.subr.bf16.mxu0 0
  %7865 = vmatpush1.bf16.msra.mxu0 %v7593
  %7866 = vmatprep.mubr.bf16.mxu0 %v6676
  %7867 = vmatmul.mubr.bf16.gmra.mrb[0].mxu0 %v6675
  %v7868 = vpop.f32.mrb[0].mxu0
  %v7869 = vadd.f32 %v7064, %v7868
  %v7870 = vpop.f32.mrb[0].mxu0
  %v7871 = vpop.f32.mrb[0].mxu0
  %v7872 = vadd.f32 %v7064, %v7871
  %v7873 = vpop.f32.mrb[0].mxu0
  %7874 = vmatprep.mubr.bf16.mxu0 %v6692
  %7875 = vmatmul.mubr.bf16.gmra.mrb[0].mxu0 %v6691
  %v7876 = vpop.f32.mrb[0].mxu0
  %v7877 = vadd.f32 %v7064, %v7876
  %v7878 = vpop.f32.mrb[0].mxu0
  %v7879 = vpop.f32.mrb[0].mxu0
  %v7880 = vadd.f32 %v7064, %v7879
  %v7881 = vpop.f32.mrb[0].mxu0
  %7882 = vmatprep.mubr.bf16.mxu0 %v6708
  %7883 = vmatmul.mubr.bf16.gmra.mrb[0].mxu0 %v6707
  %v7884 = vpop.f32.mrb[0].mxu0
  %v7885 = vadd.f32 %v7064, %v7884
  %v7886 = vpop.f32.mrb[0].mxu0
  %v7887 = vpop.f32.mrb[0].mxu0
  %v7888 = vadd.f32 %v7064, %v7887
  %v7889 = vpop.f32.mrb[0].mxu0
  %7890 = vmatprep.mubr.bf16.mxu0 %v6724
  %7891 = vmatmul.mubr.bf16.gmra.mrb[0].mxu0 %v6723
  %v7892 = vpop.f32.mrb[0].mxu0
  %v7893 = vadd.f32 %v7064, %v7892
  %v7894 = vpop.f32.mrb[0].mxu0
  %v7895 = vpop.f32.mrb[0].mxu0
  %v7896 = vadd.f32 %v7064, %v7895
  %v7897 = vpop.f32.mrb[0].mxu0
  %7898 = vmatprep.mubr.bf16.mxu0 %v6740
  %7899 = vmatmul.mubr.bf16.gmra.mrb[0].mxu0 %v6739
  %v7900 = vpop.f32.mrb[0].mxu0
  %v7901 = vadd.f32 %v7064, %v7900
  %v7902 = vpop.f32.mrb[0].mxu0
  %v7903 = vpop.f32.mrb[0].mxu0
  %v7904 = vadd.f32 %v7064, %v7903
  %v7905 = vpop.f32.mrb[0].mxu0
  %7906 = vmatprep.mubr.bf16.mxu0 %v6756
  %7907 = vmatmul.mubr.bf16.gmra.mrb[0].mxu0 %v6755
  %v7908 = vpop.f32.mrb[0].mxu0
  %v7909 = vadd.f32 %v7064, %v7908
  %v7910 = vpop.f32.mrb[0].mxu0
  %v7911 = vpop.f32.mrb[0].mxu0
  %v7912 = vadd.f32 %v7064, %v7911
  %v7913 = vpop.f32.mrb[0].mxu0
  %7914 = vmatprep.mubr.bf16.mxu0 %v6772
  %7915 = vmatmul.mubr.bf16.gmra.mrb[0].mxu0 %v6771
  %v7916 = vpop.f32.mrb[0].mxu0
  %v7917 = vadd.f32 %v7064, %v7916
  %v7918 = vpop.f32.mrb[0].mxu0
  %v7919 = vpop.f32.mrb[0].mxu0
  %v7920 = vadd.f32 %v7064, %v7919
  %v7921 = vpop.f32.mrb[0].mxu0
  %7922 = vmatprep.mubr.bf16.mxu0 %v6788
  %7923 = vmatmul.mubr.bf16.gmra.mrb[0].mxu0 %v6787
  %v7924 = vpop.f32.mrb[0].mxu0
  %v7925 = vadd.f32 %v7064, %v7924
  %v7926 = vpop.f32.mrb[0].mxu0
  %v7927 = vpop.f32.mrb[0].mxu0
  %v7928 = vadd.f32 %v7064, %v7927
  %v7929 = vpop.f32.mrb[0].mxu0
  %7930 = vdwg.mxu0
  %7931 = vmatprep.subr.bf16.mxu0 0
  %7932 = vmatpush1.bf16.msra.mxu0 %v7594
  %7933 = vmatprep.subr.bf16.mxu0 0
  %7934 = vmatpush1.bf16.msra.mxu0 %v7595
  %7935 = vmatprep.subr.bf16.mxu0 0
  %7936 = vmatpush1.bf16.msra.mxu0 %v7596
  %7937 = vmatprep.subr.bf16.mxu0 0
  %7938 = vmatpush1.bf16.msra.mxu0 %v7597
  %7939 = vmatprep.subr.bf16.mxu0 0
  %7940 = vmatpush1.bf16.msra.mxu0 %v7598
  %7941 = vmatprep.subr.bf16.mxu0 0
  %7942 = vmatpush1.bf16.msra.mxu0 %v7599
  %7943 = vmatprep.subr.bf16.mxu0 0
  %7944 = vmatpush1.bf16.msra.mxu0 %v7600
  %7945 = vmatprep.subr.bf16.mxu0 0
  %7946 = vmatpush1.bf16.msra.mxu0 %v7601
  %7947 = vmatprep.subr.bf16.mxu0 0
  %7948 = vmatpush1.bf16.msra.mxu0 %v7602
  %7949 = vmatprep.subr.bf16.mxu0 0
  %7950 = vmatpush1.bf16.msra.mxu0 %v7603
  %7951 = vmatprep.subr.bf16.mxu0 0
  %7952 = vmatpush1.bf16.msra.mxu0 %v7604
  %7953 = vmatprep.subr.bf16.mxu0 0
  %7954 = vmatpush1.bf16.msra.mxu0 %v7605
  %7955 = vmatprep.subr.bf16.mxu0 0
  %7956 = vmatpush1.bf16.msra.mxu0 %v7606
  %7957 = vmatprep.subr.bf16.mxu0 0
  %7958 = vmatpush1.bf16.msra.mxu0 %v7607
  %7959 = vmatprep.subr.bf16.mxu0 0
  %7960 = vmatpush1.bf16.msra.mxu0 %v7608
  %7961 = vmatprep.subr.bf16.mxu0 0
  %7962 = vmatpush1.bf16.msra.mxu0 %v7609
  %7963 = vmatprep.mubr.bf16.mxu0 %v6678
  %7964 = vmatmul.mubr.bf16.gmra.mrb[0].mxu0 %v6677
  %v7965 = vpop.f32.mrb[0].mxu0
  %v7966 = vadd.f32 %v7869, %v7965
  %v7967 = vpop.f32.mrb[0].mxu0
  %v7968 = vpop.f32.mrb[0].mxu0
  %v7969 = vadd.f32 %v7872, %v7968
  %v7970 = vpop.f32.mrb[0].mxu0
  %7971 = vmatprep.mubr.bf16.mxu0 %v6694
  %7972 = vmatmul.mubr.bf16.gmra.mrb[0].mxu0 %v6693
  %v7973 = vpop.f32.mrb[0].mxu0
  %v7974 = vadd.f32 %v7877, %v7973
  %v7975 = vpop.f32.mrb[0].mxu0
  %v7976 = vpop.f32.mrb[0].mxu0
  %v7977 = vadd.f32 %v7880, %v7976
  %v7978 = vpop.f32.mrb[0].mxu0
  %7979 = vmatprep.mubr.bf16.mxu0 %v6710
  %7980 = vmatmul.mubr.bf16.gmra.mrb[0].mxu0 %v6709
  %v7981 = vpop.f32.mrb[0].mxu0
  %v7982 = vadd.f32 %v7885, %v7981
  %v7983 = vpop.f32.mrb[0].mxu0
  %v7984 = vpop.f32.mrb[0].mxu0
  %v7985 = vadd.f32 %v7888, %v7984
  %v7986 = vpop.f32.mrb[0].mxu0
  %7987 = vmatprep.mubr.bf16.mxu0 %v6726
  %7988 = vmatmul.mubr.bf16.gmra.mrb[0].mxu0 %v6725
  %v7989 = vpop.f32.mrb[0].mxu0
  %v7990 = vadd.f32 %v7893, %v7989
  %v7991 = vpop.f32.mrb[0].mxu0
  %v7992 = vpop.f32.mrb[0].mxu0
  %v7993 = vadd.f32 %v7896, %v7992
  %v7994 = vpop.f32.mrb[0].mxu0
  %7995 = vmatprep.mubr.bf16.mxu0 %v6742
  %7996 = vmatmul.mubr.bf16.gmra.mrb[0].mxu0 %v6741
  %v7997 = vpop.f32.mrb[0].mxu0
  %v7998 = vadd.f32 %v7901, %v7997
  %v7999 = vpop.f32.mrb[0].mxu0
  %v8000 = vpop.f32.mrb[0].mxu0
  %v8001 = vadd.f32 %v7904, %v8000
  %v8002 = vpop.f32.mrb[0].mxu0
  %8003 = vmatprep.mubr.bf16.mxu0 %v6758
  %8004 = vmatmul.mubr.bf16.gmra.mrb[0].mxu0 %v6757
  %v8005 = vpop.f32.mrb[0].mxu0
  %v8006 = vadd.f32 %v7909, %v8005
  %v8007 = vpop.f32.mrb[0].mxu0
  %v8008 = vpop.f32.mrb[0].mxu0
  %v8009 = vadd.f32 %v7912, %v8008
  %v8010 = vpop.f32.mrb[0].mxu0
  %8011 = vmatprep.mubr.bf16.mxu0 %v6774
  %8012 = vmatmul.mubr.bf16.gmra.mrb[0].mxu0 %v6773
  %v8013 = vpop.f32.mrb[0].mxu0
  %v8014 = vadd.f32 %v7917, %v8013
  %v8015 = vpop.f32.mrb[0].mxu0
  %v8016 = vpop.f32.mrb[0].mxu0
  %v8017 = vadd.f32 %v7920, %v8016
  %v8018 = vpop.f32.mrb[0].mxu0
  %8019 = vmatprep.mubr.bf16.mxu0 %v6790
  %8020 = vmatmul.mubr.bf16.gmra.mrb[0].mxu0 %v6789
  %v8021 = vpop.f32.mrb[0].mxu0
  %v8022 = vadd.f32 %v7925, %v8021
  %v8023 = vpop.f32.mrb[0].mxu0
  %v8024 = vpop.f32.mrb[0].mxu0
  %v8025 = vadd.f32 %v7928, %v8024
  %v8026 = vpop.f32.mrb[0].mxu0
  %8027 = vdwg.mxu0
  %8028 = vmatprep.subr.bf16.mxu0 0
  %8029 = vmatpush1.bf16.msra.mxu0 %v7610
  %8030 = vmatprep.subr.bf16.mxu0 0
  %8031 = vmatpush1.bf16.msra.mxu0 %v7611
  %8032 = vmatprep.subr.bf16.mxu0 0
  %8033 = vmatpush1.bf16.msra.mxu0 %v7612
  %8034 = vmatprep.subr.bf16.mxu0 0
  %8035 = vmatpush1.bf16.msra.mxu0 %v7613
  %8036 = vmatprep.subr.bf16.mxu0 0
  %8037 = vmatpush1.bf16.msra.mxu0 %v7614
  %8038 = vmatprep.subr.bf16.mxu0 0
  %8039 = vmatpush1.bf16.msra.mxu0 %v7615
  %8040 = vmatprep.subr.bf16.mxu0 0
  %8041 = vmatpush1.bf16.msra.mxu0 %v7616
  %8042 = vmatprep.subr.bf16.mxu0 0
  %8043 = vmatpush1.bf16.msra.mxu0 %v7617
  %8044 = vmatprep.subr.bf16.mxu0 0
  %8045 = vmatpush1.bf16.msra.mxu0 %v7618
  %8046 = vmatprep.subr.bf16.mxu0 0
  %8047 = vmatpush1.bf16.msra.mxu0 %v7619
  %8048 = vmatprep.subr.bf16.mxu0 0
  %8049 = vmatpush1.bf16.msra.mxu0 %v7620
  %8050 = vmatprep.subr.bf16.mxu0 0
  %8051 = vmatpush1.bf16.msra.mxu0 %v7621
  %8052 = vmatprep.subr.bf16.mxu0 0
  %8053 = vmatpush1.bf16.msra.mxu0 %v7622
  %8054 = vmatprep.subr.bf16.mxu0 0
  %8055 = vmatpush1.bf16.msra.mxu0 %v7623
  %8056 = vmatprep.subr.bf16.mxu0 0
  %8057 = vmatpush1.bf16.msra.mxu0 %v7624
  %8058 = vmatprep.subr.bf16.mxu0 0
  %8059 = vmatpush1.bf16.msra.mxu0 %v7625
  %8060 = vmatprep.mubr.bf16.mxu0 %v6680
  %8061 = vmatmul.mubr.bf16.gmra.mrb[0].mxu0 %v6679
  %v8062 = vpop.f32.mrb[0].mxu0
  %v8063 = vadd.f32 %v7966, %v8062
  %v8064 = vpop.f32.mrb[0].mxu0
  %v8065 = vpop.f32.mrb[0].mxu0
  %v8066 = vadd.f32 %v7969, %v8065
  %v8067 = vpop.f32.mrb[0].mxu0
  %8068 = vmatprep.mubr.bf16.mxu0 %v6696
  %8069 = vmatmul.mubr.bf16.gmra.mrb[0].mxu0 %v6695
  %v8070 = vpop.f32.mrb[0].mxu0
  %v8071 = vadd.f32 %v7974, %v8070
  %v8072 = vpop.f32.mrb[0].mxu0
  %v8073 = vpop.f32.mrb[0].mxu0
  %v8074 = vadd.f32 %v7977, %v8073
  %v8075 = vpop.f32.mrb[0].mxu0
  %8076 = vmatprep.mubr.bf16.mxu0 %v6712
  %8077 = vmatmul.mubr.bf16.gmra.mrb[0].mxu0 %v6711
  %v8078 = vpop.f32.mrb[0].mxu0
  %v8079 = vadd.f32 %v7982, %v8078
  %v8080 = vpop.f32.mrb[0].mxu0
  %v8081 = vpop.f32.mrb[0].mxu0
  %v8082 = vadd.f32 %v7985, %v8081
  %v8083 = vpop.f32.mrb[0].mxu0
  %8084 = vmatprep.mubr.bf16.mxu0 %v6728
  %8085 = vmatmul.mubr.bf16.gmra.mrb[0].mxu0 %v6727
  %v8086 = vpop.f32.mrb[0].mxu0
  %v8087 = vadd.f32 %v7990, %v8086
  %v8088 = vpop.f32.mrb[0].mxu0
  %v8089 = vpop.f32.mrb[0].mxu0
  %v8090 = vadd.f32 %v7993, %v8089
  %v8091 = vpop.f32.mrb[0].mxu0
  %8092 = vmatprep.mubr.bf16.mxu0 %v6744
  %8093 = vmatmul.mubr.bf16.gmra.mrb[0].mxu0 %v6743
  %v8094 = vpop.f32.mrb[0].mxu0
  %v8095 = vadd.f32 %v7998, %v8094
  %v8096 = vpop.f32.mrb[0].mxu0
  %v8097 = vpop.f32.mrb[0].mxu0
  %v8098 = vadd.f32 %v8001, %v8097
  %v8099 = vpop.f32.mrb[0].mxu0
  %8100 = vmatprep.mubr.bf16.mxu0 %v6760
  %8101 = vmatmul.mubr.bf16.gmra.mrb[0].mxu0 %v6759
  %v8102 = vpop.f32.mrb[0].mxu0
  %v8103 = vadd.f32 %v8006, %v8102
  %v8104 = vpop.f32.mrb[0].mxu0
  %v8105 = vpop.f32.mrb[0].mxu0
  %v8106 = vadd.f32 %v8009, %v8105
  %v8107 = vpop.f32.mrb[0].mxu0
  %8108 = vmatprep.mubr.bf16.mxu0 %v6776
  %8109 = vmatmul.mubr.bf16.gmra.mrb[0].mxu0 %v6775
  %v8110 = vpop.f32.mrb[0].mxu0
  %v8111 = vadd.f32 %v8014, %v8110
  %v8112 = vpop.f32.mrb[0].mxu0
  %v8113 = vpop.f32.mrb[0].mxu0
  %v8114 = vadd.f32 %v8017, %v8113
  %v8115 = vpop.f32.mrb[0].mxu0
  %8116 = vmatprep.mubr.bf16.mxu0 %v6792
  %8117 = vmatmul.mubr.bf16.gmra.mrb[0].mxu0 %v6791
  %v8118 = vpop.f32.mrb[0].mxu0
  %v8119 = vadd.f32 %v8022, %v8118
  %v8120 = vpop.f32.mrb[0].mxu0
  %v8121 = vpop.f32.mrb[0].mxu0
  %v8122 = vadd.f32 %v8025, %v8121
  %v8123 = vpop.f32.mrb[0].mxu0
  %8124 = vdwg.mxu0
  %8125 = vmatprep.subr.bf16.mxu0 0
  %8126 = vmatpush1.bf16.msra.mxu0 %v7626
  %8127 = vmatprep.subr.bf16.mxu0 0
  %8128 = vmatpush1.bf16.msra.mxu0 %v7627
  %8129 = vmatprep.subr.bf16.mxu0 0
  %8130 = vmatpush1.bf16.msra.mxu0 %v7628
  %8131 = vmatprep.subr.bf16.mxu0 0
  %8132 = vmatpush1.bf16.msra.mxu0 %v7629
  %8133 = vmatprep.subr.bf16.mxu0 0
  %8134 = vmatpush1.bf16.msra.mxu0 %v7630
  %8135 = vmatprep.subr.bf16.mxu0 0
  %8136 = vmatpush1.bf16.msra.mxu0 %v7631
  %8137 = vmatprep.subr.bf16.mxu0 0
  %8138 = vmatpush1.bf16.msra.mxu0 %v7632
  %8139 = vmatprep.subr.bf16.mxu0 0
  %8140 = vmatpush1.bf16.msra.mxu0 %v7633
  %8141 = vmatprep.subr.bf16.mxu0 0
  %8142 = vmatpush1.bf16.msra.mxu0 %v7634
  %8143 = vmatprep.subr.bf16.mxu0 0
  %8144 = vmatpush1.bf16.msra.mxu0 %v7635
  %8145 = vmatprep.subr.bf16.mxu0 0
  %8146 = vmatpush1.bf16.msra.mxu0 %v7636
  %8147 = vmatprep.subr.bf16.mxu0 0
  %8148 = vmatpush1.bf16.msra.mxu0 %v7637
  %8149 = vmatprep.subr.bf16.mxu0 0
  %8150 = vmatpush1.bf16.msra.mxu0 %v7638
  %8151 = vmatprep.subr.bf16.mxu0 0
  %8152 = vmatpush1.bf16.msra.mxu0 %v7639
  %8153 = vmatprep.subr.bf16.mxu0 0
  %8154 = vmatpush1.bf16.msra.mxu0 %v7640
  %8155 = vmatprep.subr.bf16.mxu0 0
  %8156 = vmatpush1.bf16.msra.mxu0 %v7641
  %8157 = vmatprep.mubr.bf16.mxu0 %v6682
  %8158 = vmatmul.mubr.bf16.gmra.mrb[0].mxu0 %v6681
  %v8159 = vpop.f32.mrb[0].mxu0
  %v8160 = vadd.f32 %v8063, %v8159
  %v8161 = vpop.f32.mrb[0].mxu0
  %v8162 = vpop.f32.mrb[0].mxu0
  %v8163 = vadd.f32 %v8066, %v8162
  %v8164 = vpop.f32.mrb[0].mxu0
  %8165 = vmatprep.mubr.bf16.mxu0 %v6698
  %8166 = vmatmul.mubr.bf16.gmra.mrb[0].mxu0 %v6697
  %v8167 = vpop.f32.mrb[0].mxu0
  %v8168 = vadd.f32 %v8071, %v8167
  %v8169 = vpop.f32.mrb[0].mxu0
  %v8170 = vpop.f32.mrb[0].mxu0
  %v8171 = vadd.f32 %v8074, %v8170
  %v8172 = vpop.f32.mrb[0].mxu0
  %8173 = vmatprep.mubr.bf16.mxu0 %v6714
  %8174 = vmatmul.mubr.bf16.gmra.mrb[0].mxu0 %v6713
  %v8175 = vpop.f32.mrb[0].mxu0
  %v8176 = vadd.f32 %v8079, %v8175
  %v8177 = vpop.f32.mrb[0].mxu0
  %v8178 = vpop.f32.mrb[0].mxu0
  %v8179 = vadd.f32 %v8082, %v8178
  %v8180 = vpop.f32.mrb[0].mxu0
  %8181 = vmatprep.mubr.bf16.mxu0 %v6730
  %8182 = vmatmul.mubr.bf16.gmra.mrb[0].mxu0 %v6729
  %v8183 = vpop.f32.mrb[0].mxu0
  %v8184 = vadd.f32 %v8087, %v8183
  %v8185 = vpop.f32.mrb[0].mxu0
  %v8186 = vpop.f32.mrb[0].mxu0
  %v8187 = vadd.f32 %v8090, %v8186
  %v8188 = vpop.f32.mrb[0].mxu0
  %8189 = vmatprep.mubr.bf16.mxu0 %v6746
  %8190 = vmatmul.mubr.bf16.gmra.mrb[0].mxu0 %v6745
  %v8191 = vpop.f32.mrb[0].mxu0
  %v8192 = vadd.f32 %v8095, %v8191
  %v8193 = vpop.f32.mrb[0].mxu0
  %v8194 = vpop.f32.mrb[0].mxu0
  %v8195 = vadd.f32 %v8098, %v8194
  %v8196 = vpop.f32.mrb[0].mxu0
  %8197 = vmatprep.mubr.bf16.mxu0 %v6762
  %8198 = vmatmul.mubr.bf16.gmra.mrb[0].mxu0 %v6761
  %v8199 = vpop.f32.mrb[0].mxu0
  %v8200 = vadd.f32 %v8103, %v8199
  %v8201 = vpop.f32.mrb[0].mxu0
  %v8202 = vpop.f32.mrb[0].mxu0
  %v8203 = vadd.f32 %v8106, %v8202
  %v8204 = vpop.f32.mrb[0].mxu0
  %8205 = vmatprep.mubr.bf16.mxu0 %v6778
  %8206 = vmatmul.mubr.bf16.gmra.mrb[0].mxu0 %v6777
  %v8207 = vpop.f32.mrb[0].mxu0
  %v8208 = vadd.f32 %v8111, %v8207
  %v8209 = vpop.f32.mrb[0].mxu0
  %v8210 = vpop.f32.mrb[0].mxu0
  %v8211 = vadd.f32 %v8114, %v8210
  %v8212 = vpop.f32.mrb[0].mxu0
  %8213 = vmatprep.mubr.bf16.mxu0 %v6794
  %8214 = vmatmul.mubr.bf16.gmra.mrb[0].mxu0 %v6793
  %v8215 = vpop.f32.mrb[0].mxu0
  %v8216 = vadd.f32 %v8119, %v8215
  %v8217 = vpop.f32.mrb[0].mxu0
  %v8218 = vpop.f32.mrb[0].mxu0
  %v8219 = vadd.f32 %v8122, %v8218
  %v8220 = vpop.f32.mrb[0].mxu0
  %8221 = vdwg.mxu0
  %8222 = vmatprep.subr.bf16.mxu0 0
  %8223 = vmatpush1.bf16.msra.mxu0 %v7642
  %8224 = vmatprep.subr.bf16.mxu0 0
  %8225 = vmatpush1.bf16.msra.mxu0 %v7643
  %8226 = vmatprep.subr.bf16.mxu0 0
  %8227 = vmatpush1.bf16.msra.mxu0 %v7644
  %8228 = vmatprep.subr.bf16.mxu0 0
  %8229 = vmatpush1.bf16.msra.mxu0 %v7645
  %8230 = vmatprep.subr.bf16.mxu0 0
  %8231 = vmatpush1.bf16.msra.mxu0 %v7646
  %8232 = vmatprep.subr.bf16.mxu0 0
  %8233 = vmatpush1.bf16.msra.mxu0 %v7647
  %8234 = vmatprep.subr.bf16.mxu0 0
  %8235 = vmatpush1.bf16.msra.mxu0 %v7648
  %8236 = vmatprep.subr.bf16.mxu0 0
  %8237 = vmatpush1.bf16.msra.mxu0 %v7649
  %8238 = vmatprep.subr.bf16.mxu0 0
  %8239 = vmatpush1.bf16.msra.mxu0 %v7650
  %8240 = vmatprep.subr.bf16.mxu0 0
  %8241 = vmatpush1.bf16.msra.mxu0 %v7651
  %8242 = vmatprep.subr.bf16.mxu0 0
  %8243 = vmatpush1.bf16.msra.mxu0 %v7652
  %8244 = vmatprep.subr.bf16.mxu0 0
  %8245 = vmatpush1.bf16.msra.mxu0 %v7653
  %8246 = vmatprep.subr.bf16.mxu0 0
  %8247 = vmatpush1.bf16.msra.mxu0 %v7654
  %8248 = vmatprep.subr.bf16.mxu0 0
  %8249 = vmatpush1.bf16.msra.mxu0 %v7655
  %8250 = vmatprep.subr.bf16.mxu0 0
  %8251 = vmatpush1.bf16.msra.mxu0 %v7656
  %8252 = vmatprep.subr.bf16.mxu0 0
  %8253 = vmatpush1.bf16.msra.mxu0 %v7657
  %8254 = vmatprep.mubr.bf16.mxu0 %v6684
  %8255 = vmatmul.mubr.bf16.gmra.mrb[0].mxu0 %v6683
  %v8256 = vpop.f32.mrb[0].mxu0
  %v8257 = vadd.f32 %v8160, %v8256
  %v8258 = vpop.f32.mrb[0].mxu0
  %v8259 = vpop.f32.mrb[0].mxu0
  %v8260 = vadd.f32 %v8163, %v8259
  %v8261 = vpop.f32.mrb[0].mxu0
  %8262 = vmatprep.mubr.bf16.mxu0 %v6700
  %8263 = vmatmul.mubr.bf16.gmra.mrb[0].mxu0 %v6699
  %v8264 = vpop.f32.mrb[0].mxu0
  %v8265 = vadd.f32 %v8168, %v8264
  %v8266 = vpop.f32.mrb[0].mxu0
  %v8267 = vpop.f32.mrb[0].mxu0
  %v8268 = vadd.f32 %v8171, %v8267
  %v8269 = vpop.f32.mrb[0].mxu0
  %8270 = vmatprep.mubr.bf16.mxu0 %v6716
  %8271 = vmatmul.mubr.bf16.gmra.mrb[0].mxu0 %v6715
  %v8272 = vpop.f32.mrb[0].mxu0
  %v8273 = vadd.f32 %v8176, %v8272
  %v8274 = vpop.f32.mrb[0].mxu0
  %v8275 = vpop.f32.mrb[0].mxu0
  %v8276 = vadd.f32 %v8179, %v8275
  %v8277 = vpop.f32.mrb[0].mxu0
  %8278 = vmatprep.mubr.bf16.mxu0 %v6732
  %8279 = vmatmul.mubr.bf16.gmra.mrb[0].mxu0 %v6731
  %v8280 = vpop.f32.mrb[0].mxu0
  %v8281 = vadd.f32 %v8184, %v8280
  %v8282 = vpop.f32.mrb[0].mxu0
  %v8283 = vpop.f32.mrb[0].mxu0
  %v8284 = vadd.f32 %v8187, %v8283
  %v8285 = vpop.f32.mrb[0].mxu0
  %8286 = vmatprep.mubr.bf16.mxu0 %v6748
  %8287 = vmatmul.mubr.bf16.gmra.mrb[0].mxu0 %v6747
  %v8288 = vpop.f32.mrb[0].mxu0
  %v8289 = vadd.f32 %v8192, %v8288
  %v8290 = vpop.f32.mrb[0].mxu0
  %v8291 = vpop.f32.mrb[0].mxu0
  %v8292 = vadd.f32 %v8195, %v8291
  %v8293 = vpop.f32.mrb[0].mxu0
  %8294 = vmatprep.mubr.bf16.mxu0 %v6764
  %8295 = vmatmul.mubr.bf16.gmra.mrb[0].mxu0 %v6763
  %v8296 = vpop.f32.mrb[0].mxu0
  %v8297 = vadd.f32 %v8200, %v8296
  %v8298 = vpop.f32.mrb[0].mxu0
  %v8299 = vpop.f32.mrb[0].mxu0
  %v8300 = vadd.f32 %v8203, %v8299
  %v8301 = vpop.f32.mrb[0].mxu0
  %8302 = vmatprep.mubr.bf16.mxu0 %v6780
  %8303 = vmatmul.mubr.bf16.gmra.mrb[0].mxu0 %v6779
  %v8304 = vpop.f32.mrb[0].mxu0
  %v8305 = vadd.f32 %v8208, %v8304
  %v8306 = vpop.f32.mrb[0].mxu0
  %v8307 = vpop.f32.mrb[0].mxu0
  %v8308 = vadd.f32 %v8211, %v8307
  %v8309 = vpop.f32.mrb[0].mxu0
  %8310 = vmatprep.mubr.bf16.mxu0 %v6796
  %8311 = vmatmul.mubr.bf16.gmra.mrb[0].mxu0 %v6795
  %v8312 = vpop.f32.mrb[0].mxu0
  %v8313 = vadd.f32 %v8216, %v8312
  %v8314 = vpop.f32.mrb[0].mxu0
  %v8315 = vpop.f32.mrb[0].mxu0
  %v8316 = vadd.f32 %v8219, %v8315
  %v8317 = vpop.f32.mrb[0].mxu0
  %8318 = vdwg.mxu0
  %8319 = vmatprep.subr.bf16.mxu0 0
  %8320 = vmatpush1.bf16.msra.mxu0 %v7658
  %8321 = vmatprep.subr.bf16.mxu0 0
  %8322 = vmatpush1.bf16.msra.mxu0 %v7659
  %8323 = vmatprep.subr.bf16.mxu0 0
  %8324 = vmatpush1.bf16.msra.mxu0 %v7660
  %8325 = vmatprep.subr.bf16.mxu0 0
  %8326 = vmatpush1.bf16.msra.mxu0 %v7661
  %8327 = vmatprep.subr.bf16.mxu0 0
  %8328 = vmatpush1.bf16.msra.mxu0 %v7662
  %8329 = vmatprep.subr.bf16.mxu0 0
  %8330 = vmatpush1.bf16.msra.mxu0 %v7663
  %8331 = vmatprep.subr.bf16.mxu0 0
  %8332 = vmatpush1.bf16.msra.mxu0 %v7664
  %8333 = vmatprep.subr.bf16.mxu0 0
  %8334 = vmatpush1.bf16.msra.mxu0 %v7665
  %8335 = vmatprep.subr.bf16.mxu0 0
  %8336 = vmatpush1.bf16.msra.mxu0 %v7666
  %8337 = vmatprep.subr.bf16.mxu0 0
  %8338 = vmatpush1.bf16.msra.mxu0 %v7667
  %8339 = vmatprep.subr.bf16.mxu0 0
  %8340 = vmatpush1.bf16.msra.mxu0 %v7668
  %8341 = vmatprep.subr.bf16.mxu0 0
  %8342 = vmatpush1.bf16.msra.mxu0 %v7669
  %8343 = vmatprep.subr.bf16.mxu0 0
  %8344 = vmatpush1.bf16.msra.mxu0 %v7670
  %8345 = vmatprep.subr.bf16.mxu0 0
  %8346 = vmatpush1.bf16.msra.mxu0 %v7671
  %8347 = vmatprep.subr.bf16.mxu0 0
  %8348 = vmatpush1.bf16.msra.mxu0 %v7672
  %8349 = vmatprep.subr.bf16.mxu0 0
  %8350 = vmatpush1.bf16.msra.mxu0 %v7673
  %8351 = vmatprep.mubr.bf16.mxu0 %v6686
  %8352 = vmatmul.mubr.bf16.gmra.mrb[0].mxu0 %v6685
  %v8353 = vpop.f32.mrb[0].mxu0
  %v8354 = vadd.f32 %v8257, %v8353
  %v8355 = vpop.f32.mrb[0].mxu0
  %v8356 = vpop.f32.mrb[0].mxu0
  %v8357 = vadd.f32 %v8260, %v8356
  %v8358 = vpop.f32.mrb[0].mxu0
  %8359 = vmatprep.mubr.bf16.mxu0 %v6702
  %8360 = vmatmul.mubr.bf16.gmra.mrb[0].mxu0 %v6701
  %v8361 = vpop.f32.mrb[0].mxu0
  %v8362 = vadd.f32 %v8265, %v8361
  %v8363 = vpop.f32.mrb[0].mxu0
  %v8364 = vpop.f32.mrb[0].mxu0
  %v8365 = vadd.f32 %v8268, %v8364
  %v8366 = vpop.f32.mrb[0].mxu0
  %8367 = vmatprep.mubr.bf16.mxu0 %v6718
  %8368 = vmatmul.mubr.bf16.gmra.mrb[0].mxu0 %v6717
  %v8369 = vpop.f32.mrb[0].mxu0
  %v8370 = vadd.f32 %v8273, %v8369
  %v8371 = vpop.f32.mrb[0].mxu0
  %v8372 = vpop.f32.mrb[0].mxu0
  %v8373 = vadd.f32 %v8276, %v8372
  %v8374 = vpop.f32.mrb[0].mxu0
  %8375 = vmatprep.mubr.bf16.mxu0 %v6734
  %8376 = vmatmul.mubr.bf16.gmra.mrb[0].mxu0 %v6733
  %v8377 = vpop.f32.mrb[0].mxu0
  %v8378 = vadd.f32 %v8281, %v8377
  %v8379 = vpop.f32.mrb[0].mxu0
  %v8380 = vpop.f32.mrb[0].mxu0
  %v8381 = vadd.f32 %v8284, %v8380
  %v8382 = vpop.f32.mrb[0].mxu0
  %8383 = vmatprep.mubr.bf16.mxu0 %v6750
  %8384 = vmatmul.mubr.bf16.gmra.mrb[0].mxu0 %v6749
  %v8385 = vpop.f32.mrb[0].mxu0
  %v8386 = vadd.f32 %v8289, %v8385
  %v8387 = vpop.f32.mrb[0].mxu0
  %v8388 = vpop.f32.mrb[0].mxu0
  %v8389 = vadd.f32 %v8292, %v8388
  %v8390 = vpop.f32.mrb[0].mxu0
  %8391 = vmatprep.mubr.bf16.mxu0 %v6766
  %8392 = vmatmul.mubr.bf16.gmra.mrb[0].mxu0 %v6765
  %v8393 = vpop.f32.mrb[0].mxu0
  %v8394 = vadd.f32 %v8297, %v8393
  %v8395 = vpop.f32.mrb[0].mxu0
  %v8396 = vpop.f32.mrb[0].mxu0
  %v8397 = vadd.f32 %v8300, %v8396
  %v8398 = vpop.f32.mrb[0].mxu0
  %8399 = vmatprep.mubr.bf16.mxu0 %v6782
  %8400 = vmatmul.mubr.bf16.gmra.mrb[0].mxu0 %v6781
  %v8401 = vpop.f32.mrb[0].mxu0
  %v8402 = vadd.f32 %v8305, %v8401
  %v8403 = vpop.f32.mrb[0].mxu0
  %v8404 = vpop.f32.mrb[0].mxu0
  %v8405 = vadd.f32 %v8308, %v8404
  %v8406 = vpop.f32.mrb[0].mxu0
  %8407 = vmatprep.mubr.bf16.mxu0 %v6798
  %8408 = vmatmul.mubr.bf16.gmra.mrb[0].mxu0 %v6797
  %v8409 = vpop.f32.mrb[0].mxu0
  %v8410 = vadd.f32 %v8313, %v8409
  %v8411 = vpop.f32.mrb[0].mxu0
  %v8412 = vpop.f32.mrb[0].mxu0
  %v8413 = vadd.f32 %v8316, %v8412
  %v8414 = vpop.f32.mrb[0].mxu0
  %8415 = vdwg.mxu0
  %8416 = vmatprep.subr.bf16.mxu0 0
  %8417 = vmatpush1.bf16.msra.mxu0 %v7674
  %8418 = vmatprep.subr.bf16.mxu0 0
  %8419 = vmatpush1.bf16.msra.mxu0 %v7675
  %8420 = vmatprep.subr.bf16.mxu0 0
  %8421 = vmatpush1.bf16.msra.mxu0 %v7676
  %8422 = vmatprep.subr.bf16.mxu0 0
  %8423 = vmatpush1.bf16.msra.mxu0 %v7677
  %8424 = vmatprep.subr.bf16.mxu0 0
  %8425 = vmatpush1.bf16.msra.mxu0 %v7678
  %8426 = vmatprep.subr.bf16.mxu0 0
  %8427 = vmatpush1.bf16.msra.mxu0 %v7679
  %8428 = vmatprep.subr.bf16.mxu0 0
  %8429 = vmatpush1.bf16.msra.mxu0 %v7680
  %8430 = vmatprep.subr.bf16.mxu0 0
  %8431 = vmatpush1.bf16.msra.mxu0 %v7681
  %8432 = vmatprep.subr.bf16.mxu0 0
  %8433 = vmatpush1.bf16.msra.mxu0 %v7682
  %8434 = vmatprep.subr.bf16.mxu0 0
  %8435 = vmatpush1.bf16.msra.mxu0 %v7683
  %8436 = vmatprep.subr.bf16.mxu0 0
  %8437 = vmatpush1.bf16.msra.mxu0 %v7684
  %8438 = vmatprep.subr.bf16.mxu0 0
  %8439 = vmatpush1.bf16.msra.mxu0 %v7685
  %8440 = vmatprep.subr.bf16.mxu0 0
  %8441 = vmatpush1.bf16.msra.mxu0 %v7686
  %8442 = vmatprep.subr.bf16.mxu0 0
  %8443 = vmatpush1.bf16.msra.mxu0 %v7687
  %8444 = vmatprep.subr.bf16.mxu0 0
  %8445 = vmatpush1.bf16.msra.mxu0 %v7688
  %8446 = vmatprep.subr.bf16.mxu0 0
  %8447 = vmatpush1.bf16.msra.mxu0 %v7689
  %8448 = vmatprep.mubr.bf16.mxu0 %v6688
  %8449 = vmatmul.mubr.bf16.gmra.mrb[0].mxu0 %v6687
  %v8450 = vpop.f32.mrb[0].mxu0
  %v8451 = vadd.f32 %v8354, %v8450
  %v8452 = vpop.f32.mrb[0].mxu0
  %v8453 = vpop.f32.mrb[0].mxu0
  %v8454 = vadd.f32 %v8357, %v8453
  %v8455 = vpop.f32.mrb[0].mxu0
  %8456 = vmatprep.mubr.bf16.mxu0 %v6704
  %8457 = vmatmul.mubr.bf16.gmra.mrb[0].mxu0 %v6703
  %v8458 = vpop.f32.mrb[0].mxu0
  %v8459 = vadd.f32 %v8362, %v8458
  %v8460 = vpop.f32.mrb[0].mxu0
  %v8461 = vpop.f32.mrb[0].mxu0
  %v8462 = vadd.f32 %v8365, %v8461
  %v8463 = vpop.f32.mrb[0].mxu0
  %8464 = vmatprep.mubr.bf16.mxu0 %v6720
  %8465 = vmatmul.mubr.bf16.gmra.mrb[0].mxu0 %v6719
  %v8466 = vpop.f32.mrb[0].mxu0
  %v8467 = vadd.f32 %v8370, %v8466
  %v8468 = vpop.f32.mrb[0].mxu0
  %v8469 = vpop.f32.mrb[0].mxu0
  %v8470 = vadd.f32 %v8373, %v8469
  %v8471 = vpop.f32.mrb[0].mxu0
  %8472 = vmatprep.mubr.bf16.mxu0 %v6736
  %8473 = vmatmul.mubr.bf16.gmra.mrb[0].mxu0 %v6735
  %v8474 = vpop.f32.mrb[0].mxu0
  %v8475 = vadd.f32 %v8378, %v8474
  %v8476 = vpop.f32.mrb[0].mxu0
  %v8477 = vpop.f32.mrb[0].mxu0
  %v8478 = vadd.f32 %v8381, %v8477
  %v8479 = vpop.f32.mrb[0].mxu0
  %8480 = vmatprep.mubr.bf16.mxu0 %v6752
  %8481 = vmatmul.mubr.bf16.gmra.mrb[0].mxu0 %v6751
  %v8482 = vpop.f32.mrb[0].mxu0
  %v8483 = vadd.f32 %v8386, %v8482
  %v8484 = vpop.f32.mrb[0].mxu0
  %v8485 = vpop.f32.mrb[0].mxu0
  %v8486 = vadd.f32 %v8389, %v8485
  %v8487 = vpop.f32.mrb[0].mxu0
  %8488 = vmatprep.mubr.bf16.mxu0 %v6768
  %8489 = vmatmul.mubr.bf16.gmra.mrb[0].mxu0 %v6767
  %v8490 = vpop.f32.mrb[0].mxu0
  %v8491 = vadd.f32 %v8394, %v8490
  %v8492 = vpop.f32.mrb[0].mxu0
  %v8493 = vpop.f32.mrb[0].mxu0
  %v8494 = vadd.f32 %v8397, %v8493
  %v8495 = vpop.f32.mrb[0].mxu0
  %8496 = vmatprep.mubr.bf16.mxu0 %v6784
  %8497 = vmatmul.mubr.bf16.gmra.mrb[0].mxu0 %v6783
  %v8498 = vpop.f32.mrb[0].mxu0
  %v8499 = vadd.f32 %v8402, %v8498
  %v8500 = vpop.f32.mrb[0].mxu0
  %v8501 = vpop.f32.mrb[0].mxu0
  %v8502 = vadd.f32 %v8405, %v8501
  %v8503 = vpop.f32.mrb[0].mxu0
  %8504 = vmatprep.mubr.bf16.mxu0 %v6800
  %8505 = vmatmul.mubr.bf16.gmra.mrb[0].mxu0 %v6799
  %v8506 = vpop.f32.mrb[0].mxu0
  %v8507 = vadd.f32 %v8410, %v8506
  %v8508 = vpop.f32.mrb[0].mxu0
  %v8509 = vpop.f32.mrb[0].mxu0
  %v8510 = vadd.f32 %v8413, %v8509
  %v8511 = vpop.f32.mrb[0].mxu0
  %8512 = vdwg.mxu0
  %8513 = vmatprep.subr.bf16.mxu0 0
  %8514 = vmatpush1.bf16.msra.mxu0 %v7690
  %8515 = vmatprep.subr.bf16.mxu0 0
  %8516 = vmatpush1.bf16.msra.mxu0 %v7691
  %8517 = vmatprep.subr.bf16.mxu0 0
  %8518 = vmatpush1.bf16.msra.mxu0 %v7692
  %8519 = vmatprep.subr.bf16.mxu0 0
  %8520 = vmatpush1.bf16.msra.mxu0 %v7693
  %8521 = vmatprep.subr.bf16.mxu0 0
  %8522 = vmatpush1.bf16.msra.mxu0 %v7694
  %8523 = vmatprep.subr.bf16.mxu0 0
  %8524 = vmatpush1.bf16.msra.mxu0 %v7695
  %8525 = vmatprep.subr.bf16.mxu0 0
  %8526 = vmatpush1.bf16.msra.mxu0 %v7696
  %8527 = vmatprep.subr.bf16.mxu0 0
  %8528 = vmatpush1.bf16.msra.mxu0 %v7697
  %8529 = vmatprep.subr.bf16.mxu0 0
  %8530 = vmatpush1.bf16.msra.mxu0 %v7698
  %8531 = vmatprep.subr.bf16.mxu0 0
  %8532 = vmatpush1.bf16.msra.mxu0 %v7699
  %8533 = vmatprep.subr.bf16.mxu0 0
  %8534 = vmatpush1.bf16.msra.mxu0 %v7700
  %8535 = vmatprep.subr.bf16.mxu0 0
  %8536 = vmatpush1.bf16.msra.mxu0 %v7701
  %8537 = vmatprep.subr.bf16.mxu0 0
  %8538 = vmatpush1.bf16.msra.mxu0 %v7702
  %8539 = vmatprep.subr.bf16.mxu0 0
  %8540 = vmatpush1.bf16.msra.mxu0 %v7703
  %8541 = vmatprep.subr.bf16.mxu0 0
  %8542 = vmatpush1.bf16.msra.mxu0 %v7704
  %8543 = vmatprep.subr.bf16.mxu0 0
  %8544 = vmatpush1.bf16.msra.mxu0 %v7705
  %8545 = vmatprep.mubr.bf16.mxu0 %v6690
  %8546 = vmatmul.mubr.bf16.gmra.mrb[0].mxu0 %v6689
  %v8547 = vpop.f32.mrb[0].mxu0
  %v8548 = vadd.f32 %v8451, %v8547
  %v8549 = vpop.f32.mrb[0].mxu0
  %v8550 = vpop.f32.mrb[0].mxu0
  %v8551 = vadd.f32 %v8454, %v8550
  %v8552 = vpop.f32.mrb[0].mxu0
  %8553 = vmatprep.mubr.bf16.mxu0 %v6706
  %8554 = vmatmul.mubr.bf16.gmra.mrb[0].mxu0 %v6705
  %v8555 = vpop.f32.mrb[0].mxu0
  %v8556 = vadd.f32 %v8459, %v8555
  %v8557 = vpop.f32.mrb[0].mxu0
  %v8558 = vpop.f32.mrb[0].mxu0
  %v8559 = vadd.f32 %v8462, %v8558
  %v8560 = vpop.f32.mrb[0].mxu0
  %8561 = vmatprep.mubr.bf16.mxu0 %v6722
  %8562 = vmatmul.mubr.bf16.gmra.mrb[0].mxu0 %v6721
  %v8563 = vpop.f32.mrb[0].mxu0
  %v8564 = vadd.f32 %v8467, %v8563
  %v8565 = vpop.f32.mrb[0].mxu0
  %v8566 = vpop.f32.mrb[0].mxu0
  %v8567 = vadd.f32 %v8470, %v8566
  %v8568 = vpop.f32.mrb[0].mxu0
  %8569 = vmatprep.mubr.bf16.mxu0 %v6738
  %8570 = vmatmul.mubr.bf16.gmra.mrb[0].mxu0 %v6737
  %v8571 = vpop.f32.mrb[0].mxu0
  %v8572 = vadd.f32 %v8475, %v8571
  %v8573 = vpop.f32.mrb[0].mxu0
  %v8574 = vpop.f32.mrb[0].mxu0
  %v8575 = vadd.f32 %v8478, %v8574
  %v8576 = vpop.f32.mrb[0].mxu0
  %8577 = vmatprep.mubr.bf16.mxu0 %v6754
  %8578 = vmatmul.mubr.bf16.gmra.mrb[0].mxu0 %v6753
  %v8579 = vpop.f32.mrb[0].mxu0
  %v8580 = vadd.f32 %v8483, %v8579
  %v8581 = vpop.f32.mrb[0].mxu0
  %v8582 = vpop.f32.mrb[0].mxu0
  %v8583 = vadd.f32 %v8486, %v8582
  %v8584 = vpop.f32.mrb[0].mxu0
  %8585 = vmatprep.mubr.bf16.mxu0 %v6770
  %8586 = vmatmul.mubr.bf16.gmra.mrb[0].mxu0 %v6769
  %v8587 = vpop.f32.mrb[0].mxu0
  %v8588 = vadd.f32 %v8491, %v8587
  %v8589 = vpop.f32.mrb[0].mxu0
  %v8590 = vpop.f32.mrb[0].mxu0
  %v8591 = vadd.f32 %v8494, %v8590
  %v8592 = vpop.f32.mrb[0].mxu0
  %8593 = vmatprep.mubr.bf16.mxu0 %v6786
  %8594 = vmatmul.mubr.bf16.gmra.mrb[0].mxu0 %v6785
  %v8595 = vpop.f32.mrb[0].mxu0
  %v8596 = vadd.f32 %v8499, %v8595
  %v8597 = vpop.f32.mrb[0].mxu0
  %v8598 = vpop.f32.mrb[0].mxu0
  %v8599 = vadd.f32 %v8502, %v8598
  %v8600 = vpop.f32.mrb[0].mxu0
  %8601 = vmatprep.mubr.bf16.mxu0 %v6802
  %8602 = vmatmul.mubr.bf16.gmra.mrb[0].mxu0 %v6801
  %v8603 = vpop.f32.mrb[0].mxu0
  %v8604 = vadd.f32 %v8507, %v8603
  %v8605 = vpop.f32.mrb[0].mxu0
  %v8606 = vpop.f32.mrb[0].mxu0
  %v8607 = vadd.f32 %v8510, %v8606
  %v8608 = vpop.f32.mrb[0].mxu0
  %8609 = vdwg.mxu0
  %vm8610 = vcmp.ge.f32.partialorder %v8548, 0.0
  %vm8611 = vcmp.ge.f32.partialorder %v8551, 0.0
  %vm8612 = vcmp.ge.f32.partialorder %v8556, 0.0
  %vm8613 = vcmp.ge.f32.partialorder %v8559, 0.0
  %vm8614 = vcmp.ge.f32.partialorder %v8564, 0.0
  %vm8615 = vcmp.ge.f32.partialorder %v8567, 0.0
  %vm8616 = vcmp.ge.f32.partialorder %v8572, 0.0
  %vm8617 = vcmp.ge.f32.partialorder %v8575, 0.0
  %vm8618 = vcmp.ge.f32.partialorder %v8580, 0.0
  %vm8619 = vcmp.ge.f32.partialorder %v8583, 0.0
  %vm8620 = vcmp.ge.f32.partialorder %v8588, 0.0
  %vm8621 = vcmp.ge.f32.partialorder %v8591, 0.0
  %vm8622 = vcmp.ge.f32.partialorder %v8596, 0.0
  %vm8623 = vcmp.ge.f32.partialorder %v8599, 0.0
  %vm8624 = vcmp.ge.f32.partialorder %v8604, 0.0
  %vm8625 = vcmp.ge.f32.partialorder %v8607, 0.0
  %v8626 = vmul.f32 %v8548, 0.2
  %v8627 = vmul.f32 %v8551, 0.2
  %v8628 = vmul.f32 %v8556, 0.2
  %v8629 = vmul.f32 %v8559, 0.2
  %v8630 = vmul.f32 %v8564, 0.2
  %v8631 = vmul.f32 %v8567, 0.2
  %v8632 = vmul.f32 %v8572, 0.2
  %v8633 = vmul.f32 %v8575, 0.2
  %v8634 = vmul.f32 %v8580, 0.2
  %v8635 = vmul.f32 %v8583, 0.2
  %v8636 = vmul.f32 %v8588, 0.2
  %v8637 = vmul.f32 %v8591, 0.2
  %v8638 = vmul.f32 %v8596, 0.2
  %v8639 = vmul.f32 %v8599, 0.2
  %v8640 = vmul.f32 %v8604, 0.2
  %v8641 = vmul.f32 %v8607, 0.2
  %v8642 = vsel %vm8610, %v8548, %v8626
  %v8643 = vsel %vm8611, %v8551, %v8627
  %v8644 = vsel %vm8612, %v8556, %v8628
  %v8645 = vsel %vm8613, %v8559, %v8629
  %v8646 = vsel %vm8614, %v8564, %v8630
  %v8647 = vsel %vm8615, %v8567, %v8631
  %v8648 = vsel %vm8616, %v8572, %v8632
  %v8649 = vsel %vm8617, %v8575, %v8633
  %v8650 = vsel %vm8618, %v8580, %v8634
  %v8651 = vsel %vm8619, %v8583, %v8635
  %v8652 = vsel %vm8620, %v8588, %v8636
  %v8653 = vsel %vm8621, %v8591, %v8637
  %v8654 = vsel %vm8622, %v8596, %v8638
  %v8655 = vsel %vm8623, %v8599, %v8639
  %v8656 = vsel %vm8624, %v8604, %v8640
  %v8657 = vsel %vm8625, %v8607, %v8641
  %v8658 = vpack.c.bf16 %v8643, %v8642
  %v8659 = vpack.c.bf16 %v8645, %v8644
  %v8660 = vpack.c.bf16 %v8647, %v8646
  %v8661 = vpack.c.bf16 %v8649, %v8648
  %v8662 = vpack.c.bf16 %v8651, %v8650
  %v8663 = vpack.c.bf16 %v8653, %v8652
  %v8664 = vpack.c.bf16 %v8655, %v8654
  %v8665 = vpack.c.bf16 %v8657, %v8656
  %8666 = vst [vmem:[#allocation4] sm:$0xff] %v8658
  %8667 = vst [vmem:[#allocation4 + $0x8] sm:$0xff] %v8659
  %8668 = vst [vmem:[#allocation4 + $0x10] sm:$0xff] %v8660
  %8669 = vst [vmem:[#allocation4 + $0x18] sm:$0xff] %v8661
  %8670 = vst [vmem:[#allocation4 + $0x20] sm:$0xff] %v8662
  %8671 = vst [vmem:[#allocation4 + $0x28] sm:$0xff] %v8663
  %8672 = vst [vmem:[#allocation4 + $0x30] sm:$0xff] %v8664
  %8673 = vst [vmem:[#allocation4 + $0x38] sm:$0xff] %v8665
  %v8674 = vld [vmem:[%s6] sm:$0xf]
  %v8675 = vld [vmem:[%s6 + $0x4] sm:$0xf]
  %v8676 = vld [vmem:[%s6 + $0x8] sm:$0xf]
  %v8677 = vld [vmem:[%s6 + $0xc] sm:$0xf]
  %v8678 = vld [vmem:[%s6 + $0x10] sm:$0xf]
  %v8679 = vld [vmem:[%s6 + $0x14] sm:$0xf]
  %v8680 = vld [vmem:[%s6 + $0x18] sm:$0xf]
  %v8681 = vld [vmem:[%s6 + $0x1c] sm:$0xf]
  %v8682 = vld [vmem:[%s6 + $0x20] sm:$0xf]
  %v8683 = vld [vmem:[%s6 + $0x24] sm:$0xf]
  %v8684 = vld [vmem:[%s6 + $0x28] sm:$0xf]
  %v8685 = vld [vmem:[%s6 + $0x2c] sm:$0xf]
  %v8686 = vld [vmem:[%s6 + $0x30] sm:$0xf]
  %v8687 = vld [vmem:[%s6 + $0x34] sm:$0xf]
  %v8688 = vld [vmem:[%s6 + $0x38] sm:$0xf]
  %v8689 = vld [vmem:[%s6 + $0x3c] sm:$0xf]
  %v8690 = vld [vmem:[%s6 + $0x40] sm:$0xf]
  %v8691 = vld [vmem:[%s6 + $0x44] sm:$0xf]
  %v8692 = vld [vmem:[%s6 + $0x48] sm:$0xf]
  %v8693 = vld [vmem:[%s6 + $0x4c] sm:$0xf]
  %v8694 = vld [vmem:[%s6 + $0x50] sm:$0xf]
  %v8695 = vld [vmem:[%s6 + $0x54] sm:$0xf]
  %v8696 = vld [vmem:[%s6 + $0x58] sm:$0xf]
  %v8697 = vld [vmem:[%s6 + $0x5c] sm:$0xf]
  %v8698 = vld [vmem:[%s6 + $0x60] sm:$0xf]
  %v8699 = vld [vmem:[%s6 + $0x64] sm:$0xf]
  %v8700 = vld [vmem:[%s6 + $0x68] sm:$0xf]
  %v8701 = vld [vmem:[%s6 + $0x6c] sm:$0xf]
  %v8702 = vld [vmem:[%s6 + $0x70] sm:$0xf]
  %v8703 = vld [vmem:[%s6 + $0x74] sm:$0xf]
  %v8704 = vld [vmem:[%s6 + $0x78] sm:$0xf]
  %v8705 = vld [vmem:[%s6 + $0x7c] sm:$0xf]
  %v8706 = vld [vmem:[#allocation4] sm:$0xff]
  %v8707 = vld [vmem:[#allocation4 + $0x8] sm:$0xff]
  %v8708 = vld [vmem:[#allocation4 + $0x10] sm:$0xff]
  %v8709 = vld [vmem:[#allocation4 + $0x18] sm:$0xff]
  %v8742 = vunpack.c.l.b16 %v8674
  %v8743 = vunpack.c.l.b16 %v8675
  %v8744 = vunpack.c.l.b16 %v8676
  %v8745 = vunpack.c.l.b16 %v8677
  %v8746 = vunpack.c.l.b16 %v8678
  %v8747 = vunpack.c.l.b16 %v8679
  %v8748 = vunpack.c.l.b16 %v8680
  %v8749 = vunpack.c.l.b16 %v8681
  %v8750 = vunpack.c.l.b16 %v8682
  %v8751 = vunpack.c.l.b16 %v8683
  %v8752 = vunpack.c.l.b16 %v8684
  %v8753 = vunpack.c.l.b16 %v8685
  %v8754 = vunpack.c.l.b16 %v8686
  %v8755 = vunpack.c.l.b16 %v8687
  %v8756 = vunpack.c.l.b16 %v8688
  %v8757 = vunpack.c.l.b16 %v8689
  %v8758 = vunpack.c.l.b16 %v8690
  %v8759 = vunpack.c.l.b16 %v8691
  %v8760 = vunpack.c.l.b16 %v8692
  %v8761 = vunpack.c.l.b16 %v8693
  %v8762 = vunpack.c.l.b16 %v8694
  %v8763 = vunpack.c.l.b16 %v8695
  %v8764 = vunpack.c.l.b16 %v8696
  %v8765 = vunpack.c.l.b16 %v8697
  %v8766 = vunpack.c.l.b16 %v8698
  %v8767 = vunpack.c.l.b16 %v8699
  %v8768 = vunpack.c.l.b16 %v8700
  %v8769 = vunpack.c.l.b16 %v8701
  %v8770 = vunpack.c.l.b16 %v8702
  %v8771 = vunpack.c.l.b16 %v8703
  %v8772 = vunpack.c.l.b16 %v8704
  %v8773 = vunpack.c.l.b16 %v8705
  %v8774 = vpack.c.b16 %v8743, %v8742
  %v8775 = vpack.c.b16 %v8745, %v8744
  %v8776 = vpack.c.b16 %v8747, %v8746
  %v8777 = vpack.c.b16 %v8749, %v8748
  %v8778 = vpack.c.b16 %v8751, %v8750
  %v8779 = vpack.c.b16 %v8753, %v8752
  %v8780 = vpack.c.b16 %v8755, %v8754
  %v8781 = vpack.c.b16 %v8757, %v8756
  %v8782 = vpack.c.b16 %v8759, %v8758
  %v8783 = vpack.c.b16 %v8761, %v8760
  %v8784 = vpack.c.b16 %v8763, %v8762
  %v8785 = vpack.c.b16 %v8765, %v8764
  %v8786 = vpack.c.b16 %v8767, %v8766
  %v8787 = vpack.c.b16 %v8769, %v8768
  %v8788 = vpack.c.b16 %v8771, %v8770
  %v8789 = vpack.c.b16 %v8773, %v8772
  %vm8790 = vcmask 523264
  %v8792 = vsel %vm8790, %v8774, 0
  %v8795 = vsel %vm8790, %v8775, 0
  %v8798 = vsel %vm8790, %v8776, 0
  %v8801 = vsel %vm8790, %v8777, 0
  %v8804 = vsel %vm8790, %v8778, 0
  %v8807 = vsel %vm8790, %v8779, 0
  %v8810 = vsel %vm8790, %v8780, 0
  %v8813 = vsel %vm8790, %v8781, 0
  %v8816 = vsel %vm8790, %v8782, 0
  %v8819 = vsel %vm8790, %v8783, 0
  %v8822 = vsel %vm8790, %v8784, 0
  %v8825 = vsel %vm8790, %v8785, 0
  %v8828 = vsel %vm8790, %v8786, 0
  %v8831 = vsel %vm8790, %v8787, 0
  %v8834 = vsel %vm8790, %v8788, 0
  %v8837 = vsel %vm8790, %v8789, 0
  %8839 = vmatprep.subr.bf16.mxu0 0
  %8840 = vmatpush1.bf16.msra.mxu0 %v8706
  %8841 = vmatprep.subr.bf16.mxu0 0
  %8842 = vmatpush1.bf16.msra.mxu0 %v8707
  %8843 = vmatprep.subr.bf16.mxu0 0
  %8844 = vmatpush1.bf16.msra.mxu0 %v8708
  %8845 = vmatprep.subr.bf16.mxu0 0
  %8846 = vmatpush1.bf16.msra.mxu0 %v8709
  %8847 = vmatprep.subr.bf16.mxu0 0
  %8848 = vmatpush1.bf16.msra.mxu0 0
  %8849 = vmatprep.subr.bf16.mxu0 0
  %8850 = vmatpush1.bf16.msra.mxu0 0
  %8851 = vmatprep.subr.bf16.mxu0 0
  %8852 = vmatpush1.bf16.msra.mxu0 0
  %8853 = vmatprep.subr.bf16.mxu0 0
  %8854 = vmatpush1.bf16.msra.mxu0 0
  %8855 = vmatprep.subr.bf16.mxu0 0
  %8856 = vmatpush1.bf16.msra.mxu0 0
  %8857 = vmatprep.subr.bf16.mxu0 0
  %8858 = vmatpush1.bf16.msra.mxu0 0
  %8859 = vmatprep.subr.bf16.mxu0 0
  %8860 = vmatpush1.bf16.msra.mxu0 0
  %8861 = vmatprep.subr.bf16.mxu0 0
  %8862 = vmatpush1.bf16.msra.mxu0 0
  %8863 = vmatprep.subr.bf16.mxu0 0
  %8864 = vmatpush1.bf16.msra.mxu0 0
  %8865 = vmatprep.subr.bf16.mxu0 0
  %8866 = vmatpush1.bf16.msra.mxu0 0
  %8867 = vmatprep.subr.bf16.mxu0 0
  %8868 = vmatpush1.bf16.msra.mxu0 0
  %8869 = vmatprep.subr.bf16.mxu0 0
  %8870 = vmatpush1.bf16.msra.mxu0 0
  %8871 = vmatprep.mubr.bf16.mxu0 0
  %8872 = vmatmul.mubr.bf16.gmra.mrb[0].mxu0 %v8792
  %v8873 = vpop.f32.mrb[0].mxu0
  %v8874 = vadd.f32 0.0, %v8873
  %v8875 = vpop.f32.mrb[0].mxu0
  %v8876 = vpop.f32.mrb[0].mxu0
  %v8877 = vadd.f32 0.0, %v8876
  %v8878 = vpop.f32.mrb[0].mxu0
  %8879 = vmatprep.mubr.bf16.mxu0 0
  %8880 = vmatmul.mubr.bf16.gmra.mrb[0].mxu0 %v8795
  %v8881 = vpop.f32.mrb[0].mxu0
  %v8882 = vadd.f32 0.0, %v8881
  %v8883 = vpop.f32.mrb[0].mxu0
  %v8884 = vpop.f32.mrb[0].mxu0
  %v8885 = vadd.f32 0.0, %v8884
  %v8886 = vpop.f32.mrb[0].mxu0
  %8887 = vmatprep.mubr.bf16.mxu0 0
  %8888 = vmatmul.mubr.bf16.gmra.mrb[0].mxu0 %v8798
  %v8889 = vpop.f32.mrb[0].mxu0
  %v8890 = vadd.f32 0.0, %v8889
  %v8891 = vpop.f32.mrb[0].mxu0
  %v8892 = vpop.f32.mrb[0].mxu0
  %v8893 = vadd.f32 0.0, %v8892
  %v8894 = vpop.f32.mrb[0].mxu0
  %8895 = vmatprep.mubr.bf16.mxu0 0
  %8896 = vmatmul.mubr.bf16.gmra.mrb[0].mxu0 %v8801
  %v8897 = vpop.f32.mrb[0].mxu0
  %v8898 = vadd.f32 0.0, %v8897
  %v8899 = vpop.f32.mrb[0].mxu0
  %v8900 = vpop.f32.mrb[0].mxu0
  %v8901 = vadd.f32 0.0, %v8900
  %v8902 = vpop.f32.mrb[0].mxu0
  %8903 = vmatprep.mubr.bf16.mxu0 0
  %8904 = vmatmul.mubr.bf16.gmra.mrb[0].mxu0 %v8804
  %v8905 = vpop.f32.mrb[0].mxu0
  %v8906 = vadd.f32 0.0, %v8905
  %v8907 = vpop.f32.mrb[0].mxu0
  %v8908 = vpop.f32.mrb[0].mxu0
  %v8909 = vadd.f32 0.0, %v8908
  %v8910 = vpop.f32.mrb[0].mxu0
  %8911 = vmatprep.mubr.bf16.mxu0 0
  %8912 = vmatmul.mubr.bf16.gmra.mrb[0].mxu0 %v8807
  %v8913 = vpop.f32.mrb[0].mxu0
  %v8914 = vadd.f32 0.0, %v8913
  %v8915 = vpop.f32.mrb[0].mxu0
  %v8916 = vpop.f32.mrb[0].mxu0
  %v8917 = vadd.f32 0.0, %v8916
  %v8918 = vpop.f32.mrb[0].mxu0
  %8919 = vmatprep.mubr.bf16.mxu0 0
  %8920 = vmatmul.mubr.bf16.gmra.mrb[0].mxu0 %v8810
  %v8921 = vpop.f32.mrb[0].mxu0
  %v8922 = vadd.f32 0.0, %v8921
  %v8923 = vpop.f32.mrb[0].mxu0
  %v8924 = vpop.f32.mrb[0].mxu0
  %v8925 = vadd.f32 0.0, %v8924
  %v8926 = vpop.f32.mrb[0].mxu0
  %8927 = vmatprep.mubr.bf16.mxu0 0
  %8928 = vmatmul.mubr.bf16.gmra.mrb[0].mxu0 %v8813
  %v8929 = vpop.f32.mrb[0].mxu0
  %v8930 = vadd.f32 0.0, %v8929
  %v8931 = vpop.f32.mrb[0].mxu0
  %v8932 = vpop.f32.mrb[0].mxu0
  %v8933 = vadd.f32 0.0, %v8932
  %v8934 = vpop.f32.mrb[0].mxu0
  %8935 = vmatprep.mubr.bf16.mxu0 0
  %8936 = vmatmul.mubr.bf16.gmra.mrb[0].mxu0 %v8816
  %v8937 = vpop.f32.mrb[0].mxu0
  %v8938 = vadd.f32 0.0, %v8937
  %v8939 = vpop.f32.mrb[0].mxu0
  %v8940 = vpop.f32.mrb[0].mxu0
  %v8941 = vadd.f32 0.0, %v8940
  %v8942 = vpop.f32.mrb[0].mxu0
  %8943 = vmatprep.mubr.bf16.mxu0 0
  %8944 = vmatmul.mubr.bf16.gmra.mrb[0].mxu0 %v8819
  %v8945 = vpop.f32.mrb[0].mxu0
  %v8946 = vadd.f32 0.0, %v8945
  %v8947 = vpop.f32.mrb[0].mxu0
  %v8948 = vpop.f32.mrb[0].mxu0
  %v8949 = vadd.f32 0.0, %v8948
  %v8950 = vpop.f32.mrb[0].mxu0
  %8951 = vmatprep.mubr.bf16.mxu0 0
  %8952 = vmatmul.mubr.bf16.gmra.mrb[0].mxu0 %v8822
  %v8953 = vpop.f32.mrb[0].mxu0
  %v8954 = vadd.f32 0.0, %v8953
  %v8955 = vpop.f32.mrb[0].mxu0
  %v8956 = vpop.f32.mrb[0].mxu0
  %v8957 = vadd.f32 0.0, %v8956
  %v8958 = vpop.f32.mrb[0].mxu0
  %8959 = vmatprep.mubr.bf16.mxu0 0
  %8960 = vmatmul.mubr.bf16.gmra.mrb[0].mxu0 %v8825
  %v8961 = vpop.f32.mrb[0].mxu0
  %v8962 = vadd.f32 0.0, %v8961
  %v8963 = vpop.f32.mrb[0].mxu0
  %v8964 = vpop.f32.mrb[0].mxu0
  %v8965 = vadd.f32 0.0, %v8964
  %v8966 = vpop.f32.mrb[0].mxu0
  %8967 = vmatprep.mubr.bf16.mxu0 0
  %8968 = vmatmul.mubr.bf16.gmra.mrb[0].mxu0 %v8828
  %v8969 = vpop.f32.mrb[0].mxu0
  %v8970 = vadd.f32 0.0, %v8969
  %v8971 = vpop.f32.mrb[0].mxu0
  %v8972 = vpop.f32.mrb[0].mxu0
  %v8973 = vadd.f32 0.0, %v8972
  %v8974 = vpop.f32.mrb[0].mxu0
  %8975 = vmatprep.mubr.bf16.mxu0 0
  %8976 = vmatmul.mubr.bf16.gmra.mrb[0].mxu0 %v8831
  %v8977 = vpop.f32.mrb[0].mxu0
  %v8978 = vadd.f32 0.0, %v8977
  %v8979 = vpop.f32.mrb[0].mxu0
  %v8980 = vpop.f32.mrb[0].mxu0
  %v8981 = vadd.f32 0.0, %v8980
  %v8982 = vpop.f32.mrb[0].mxu0
  %8983 = vmatprep.mubr.bf16.mxu0 0
  %8984 = vmatmul.mubr.bf16.gmra.mrb[0].mxu0 %v8834
  %v8985 = vpop.f32.mrb[0].mxu0
  %v8986 = vadd.f32 0.0, %v8985
  %v8987 = vpop.f32.mrb[0].mxu0
  %v8988 = vpop.f32.mrb[0].mxu0
  %v8989 = vadd.f32 0.0, %v8988
  %v8990 = vpop.f32.mrb[0].mxu0
  %8991 = vmatprep.mubr.bf16.mxu0 0
  %8992 = vmatmul.mubr.bf16.gmra.mrb[0].mxu0 %v8837
  %v8993 = vpop.f32.mrb[0].mxu0
  %v8994 = vadd.f32 0.0, %v8993
  %v8995 = vpop.f32.mrb[0].mxu0
  %v8996 = vpop.f32.mrb[0].mxu0
  %v8997 = vadd.f32 0.0, %v8996
  %v8998 = vpop.f32.mrb[0].mxu0
  %8999 = vdwg.mxu0
  %v9000 = vpack.c.bf16 %v8877, %v8874
  %v9001 = vpack.c.bf16 %v8885, %v8882
  %v9002 = vpack.c.bf16 %v8893, %v8890
  %v9003 = vpack.c.bf16 %v8901, %v8898
  %v9004 = vpack.c.bf16 %v8909, %v8906
  %v9005 = vpack.c.bf16 %v8917, %v8914
  %v9006 = vpack.c.bf16 %v8925, %v8922
  %v9007 = vpack.c.bf16 %v8933, %v8930
  %v9008 = vpack.c.bf16 %v8941, %v8938
  %v9009 = vpack.c.bf16 %v8949, %v8946
  %v9010 = vpack.c.bf16 %v8957, %v8954
  %v9011 = vpack.c.bf16 %v8965, %v8962
  %v9012 = vpack.c.bf16 %v8973, %v8970
  %v9013 = vpack.c.bf16 %v8981, %v8978
  %v9014 = vpack.c.bf16 %v8989, %v8986
  %v9015 = vpack.c.bf16 %v8997, %v8994
  %v9032 = vunpack.c.l.b16 %v9000
  %v9033 = vunpack.c.h.b16 %v9000
  %v9034 = vunpack.c.l.b16 %v9001
  %v9035 = vunpack.c.h.b16 %v9001
  %v9036 = vunpack.c.l.b16 %v9002
  %v9037 = vunpack.c.h.b16 %v9002
  %v9038 = vunpack.c.l.b16 %v9003
  %v9039 = vunpack.c.h.b16 %v9003
  %v9040 = vunpack.c.l.b16 %v9004
  %v9041 = vunpack.c.h.b16 %v9004
  %v9042 = vunpack.c.l.b16 %v9005
  %v9043 = vunpack.c.h.b16 %v9005
  %v9044 = vunpack.c.l.b16 %v9006
  %v9045 = vunpack.c.h.b16 %v9006
  %v9046 = vunpack.c.l.b16 %v9007
  %v9047 = vunpack.c.h.b16 %v9007
  %v9048 = vunpack.c.l.b16 %v9008
  %v9049 = vunpack.c.h.b16 %v9008
  %v9050 = vunpack.c.l.b16 %v9009
  %v9051 = vunpack.c.h.b16 %v9009
  %v9052 = vunpack.c.l.b16 %v9010
  %v9053 = vunpack.c.h.b16 %v9010
  %v9054 = vunpack.c.l.b16 %v9011
  %v9055 = vunpack.c.h.b16 %v9011
  %v9056 = vunpack.c.l.b16 %v9012
  %v9057 = vunpack.c.h.b16 %v9012
  %v9058 = vunpack.c.l.b16 %v9013
  %v9059 = vunpack.c.h.b16 %v9013
  %v9060 = vunpack.c.l.b16 %v9014
  %v9061 = vunpack.c.h.b16 %v9014
  %v9062 = vunpack.c.l.b16 %v9015
  %v9063 = vunpack.c.h.b16 %v9015
  %v9064 = vpack.i.b16 %v9034, %v9032
  %v9065 = vpack.i.b16 %v9035, %v9033
  %v9066 = vpack.i.b16 %v9038, %v9036
  %v9067 = vpack.i.b16 %v9039, %v9037
  %v9068 = vpack.i.b16 %v9042, %v9040
  %v9069 = vpack.i.b16 %v9043, %v9041
  %v9070 = vpack.i.b16 %v9046, %v9044
  %v9071 = vpack.i.b16 %v9047, %v9045
  %v9072 = vpack.i.b16 %v9050, %v9048
  %v9073 = vpack.i.b16 %v9051, %v9049
  %v9074 = vpack.i.b16 %v9054, %v9052
  %v9075 = vpack.i.b16 %v9055, %v9053
  %v9076 = vpack.i.b16 %v9058, %v9056
  %v9077 = vpack.i.b16 %v9059, %v9057
  %v9078 = vpack.i.b16 %v9062, %v9060
  %v9079 = vpack.i.b16 %v9063, %v9061
  %v9080 = vcombine.low %v9064, %v9066
  %v9081 = vcombine.high %v9064, %v9066
  %v9082 = vcombine.low %v9068, %v9070
  %v9083 = vcombine.high %v9068, %v9070
  %v9084 = vcombine.low %v9072, %v9074
  %v9085 = vcombine.high %v9072, %v9074
  %v9086 = vcombine.low %v9076, %v9078
  %v9087 = vcombine.high %v9076, %v9078
  %v9089 = vunpack.c.l.s4 1966171168
  %v9090 = vunpack.c.0.s8 %v9089
  %v9091 = vlaneseq
  %v9092 = vshrl.u32 %v9091, 7
  %v9093 = vsub.s32 %v9090, %v9092
  %v9094 = vrot.slane %v9080, %v9093
  %v9096 = vunpack.c.l.s4 1966171168
  %v9097 = vunpack.c.0.s8 %v9096
  %v9098 = vlaneseq
  %v9099 = vshrl.u32 %v9098, 7
  %v9100 = vsub.s32 %v9097, %v9099
  %v9101 = vrot.slane %v9081, %v9100
  %v9103 = vunpack.c.l.s4 1966171168
  %v9104 = vunpack.c.0.s8 %v9103
  %v9105 = vlaneseq
  %v9106 = vshrl.u32 %v9105, 7
  %v9107 = vsub.s32 %v9104, %v9106
  %v9108 = vrot.slane %v9082, %v9107
  %v9110 = vunpack.c.l.s4 1966171168
  %v9111 = vunpack.c.0.s8 %v9110
  %v9112 = vlaneseq
  %v9113 = vshrl.u32 %v9112, 7
  %v9114 = vsub.s32 %v9111, %v9113
  %v9115 = vrot.slane %v9083, %v9114
  %v9117 = vunpack.c.l.s4 1966171168
  %v9118 = vunpack.c.0.s8 %v9117
  %v9119 = vlaneseq
  %v9120 = vshrl.u32 %v9119, 7
  %v9121 = vsub.s32 %v9118, %v9120
  %v9122 = vrot.slane %v9084, %v9121
  %v9124 = vunpack.c.l.s4 1966171168
  %v9125 = vunpack.c.0.s8 %v9124
  %v9126 = vlaneseq
  %v9127 = vshrl.u32 %v9126, 7
  %v9128 = vsub.s32 %v9125, %v9127
  %v9129 = vrot.slane %v9085, %v9128
  %v9131 = vunpack.c.l.s4 1966171168
  %v9132 = vunpack.c.0.s8 %v9131
  %v9133 = vlaneseq
  %v9134 = vshrl.u32 %v9133, 7
  %v9135 = vsub.s32 %v9132, %v9134
  %v9136 = vrot.slane %v9086, %v9135
  %v9138 = vunpack.c.l.s4 1966171168
  %v9139 = vunpack.c.0.s8 %v9138
  %v9140 = vlaneseq
  %v9141 = vshrl.u32 %v9140, 7
  %v9142 = vsub.s32 %v9139, %v9141
  %v9143 = vrot.slane %v9087, %v9142
  %v9144 = vcombine.low %v9094, %v9108
  %v9145 = vcombine.high %v9094, %v9108
  %v9146 = vcombine.low %v9101, %v9115
  %v9147 = vcombine.high %v9101, %v9115
  %v9148 = vcombine.low %v9122, %v9136
  %v9149 = vcombine.high %v9122, %v9136
  %v9150 = vcombine.low %v9129, %v9143
  %v9151 = vcombine.high %v9129, %v9143
  %v9153 = vunpack.c.l.s4 1966171168
  %v9154 = vunpack.c.0.s8 %v9153
  %v9155 = vlaneseq
  %v9156 = vshrl.u32 %v9155, 7
  %v9157 = vsub.s32 %v9154, %v9156
  %v9158 = vrot.slane %v9144, %v9157
  %v9160 = vunpack.c.l.s4 1966171168
  %v9161 = vunpack.c.0.s8 %v9160
  %v9162 = vlaneseq
  %v9163 = vshrl.u32 %v9162, 7
  %v9164 = vsub.s32 %v9161, %v9163
  %v9165 = vrot.slane %v9146, %v9164
  %v9167 = vunpack.c.l.s4 1966171168
  %v9168 = vunpack.c.0.s8 %v9167
  %v9169 = vlaneseq
  %v9170 = vshrl.u32 %v9169, 7
  %v9171 = vsub.s32 %v9168, %v9170
  %v9172 = vrot.slane %v9145, %v9171
  %v9174 = vunpack.c.l.s4 1966171168
  %v9175 = vunpack.c.0.s8 %v9174
  %v9176 = vlaneseq
  %v9177 = vshrl.u32 %v9176, 7
  %v9178 = vsub.s32 %v9175, %v9177
  %v9179 = vrot.slane %v9147, %v9178
  %v9181 = vunpack.c.l.s4 1966171168
  %v9182 = vunpack.c.0.s8 %v9181
  %v9183 = vlaneseq
  %v9184 = vshrl.u32 %v9183, 7
  %v9185 = vsub.s32 %v9182, %v9184
  %v9186 = vrot.slane %v9148, %v9185
  %v9188 = vunpack.c.l.s4 1966171168
  %v9189 = vunpack.c.0.s8 %v9188
  %v9190 = vlaneseq
  %v9191 = vshrl.u32 %v9190, 7
  %v9192 = vsub.s32 %v9189, %v9191
  %v9193 = vrot.slane %v9150, %v9192
  %v9195 = vunpack.c.l.s4 1966171168
  %v9196 = vunpack.c.0.s8 %v9195
  %v9197 = vlaneseq
  %v9198 = vshrl.u32 %v9197, 7
  %v9199 = vsub.s32 %v9196, %v9198
  %v9200 = vrot.slane %v9149, %v9199
  %v9202 = vunpack.c.l.s4 1966171168
  %v9203 = vunpack.c.0.s8 %v9202
  %v9204 = vlaneseq
  %v9205 = vshrl.u32 %v9204, 7
  %v9206 = vsub.s32 %v9203, %v9205
  %v9207 = vrot.slane %v9151, %v9206
  %v9208 = vcombine.low %v9158, %v9186
  %v9209 = vcombine.high %v9158, %v9186
  %v9210 = vcombine.low %v9165, %v9193
  %v9211 = vcombine.high %v9165, %v9193
  %v9212 = vcombine.low %v9172, %v9200
  %v9213 = vcombine.high %v9172, %v9200
  %v9214 = vcombine.low %v9179, %v9207
  %v9215 = vcombine.high %v9179, %v9207
  %v9216 = vcombine.low %v9065, %v9067
  %v9217 = vcombine.high %v9065, %v9067
  %v9218 = vcombine.low %v9069, %v9071
  %v9219 = vcombine.high %v9069, %v9071
  %v9220 = vcombine.low %v9073, %v9075
  %v9221 = vcombine.high %v9073, %v9075
  %v9222 = vcombine.low %v9077, %v9079
  %v9223 = vcombine.high %v9077, %v9079
  %v9225 = vunpack.c.l.s4 1966171168
  %v9226 = vunpack.c.0.s8 %v9225
  %v9227 = vlaneseq
  %v9228 = vshrl.u32 %v9227, 7
  %v9229 = vsub.s32 %v9226, %v9228
  %v9230 = vrot.slane %v9216, %v9229
  %v9232 = vunpack.c.l.s4 1966171168
  %v9233 = vunpack.c.0.s8 %v9232
  %v9234 = vlaneseq
  %v9235 = vshrl.u32 %v9234, 7
  %v9236 = vsub.s32 %v9233, %v9235
  %v9237 = vrot.slane %v9217, %v9236
  %v9239 = vunpack.c.l.s4 1966171168
  %v9240 = vunpack.c.0.s8 %v9239
  %v9241 = vlaneseq
  %v9242 = vshrl.u32 %v9241, 7
  %v9243 = vsub.s32 %v9240, %v9242
  %v9244 = vrot.slane %v9218, %v9243
  %v9246 = vunpack.c.l.s4 1966171168
  %v9247 = vunpack.c.0.s8 %v9246
  %v9248 = vlaneseq
  %v9249 = vshrl.u32 %v9248, 7
  %v9250 = vsub.s32 %v9247, %v9249
  %v9251 = vrot.slane %v9219, %v9250
  %v9253 = vunpack.c.l.s4 1966171168
  %v9254 = vunpack.c.0.s8 %v9253
  %v9255 = vlaneseq
  %v9256 = vshrl.u32 %v9255, 7
  %v9257 = vsub.s32 %v9254, %v9256
  %v9258 = vrot.slane %v9220, %v9257
  %v9260 = vunpack.c.l.s4 1966171168
  %v9261 = vunpack.c.0.s8 %v9260
  %v9262 = vlaneseq
  %v9263 = vshrl.u32 %v9262, 7
  %v9264 = vsub.s32 %v9261, %v9263
  %v9265 = vrot.slane %v9221, %v9264
  %v9267 = vunpack.c.l.s4 1966171168
  %v9268 = vunpack.c.0.s8 %v9267
  %v9269 = vlaneseq
  %v9270 = vshrl.u32 %v9269, 7
  %v9271 = vsub.s32 %v9268, %v9270
  %v9272 = vrot.slane %v9222, %v9271
  %v9274 = vunpack.c.l.s4 1966171168
  %v9275 = vunpack.c.0.s8 %v9274
  %v9276 = vlaneseq
  %v9277 = vshrl.u32 %v9276, 7
  %v9278 = vsub.s32 %v9275, %v9277
  %v9279 = vrot.slane %v9223, %v9278
  %v9280 = vcombine.low %v9230, %v9244
  %v9281 = vcombine.high %v9230, %v9244
  %v9282 = vcombine.low %v9237, %v9251
  %v9283 = vcombine.high %v9237, %v9251
  %v9284 = vcombine.low %v9258, %v9272
  %v9285 = vcombine.high %v9258, %v9272
  %v9286 = vcombine.low %v9265, %v9279
  %v9287 = vcombine.high %v9265, %v9279
  %v9289 = vunpack.c.l.s4 1966171168
  %v9290 = vunpack.c.0.s8 %v9289
  %v9291 = vlaneseq
  %v9292 = vshrl.u32 %v9291, 7
  %v9293 = vsub.s32 %v9290, %v9292
  %v9294 = vrot.slane %v9280, %v9293
  %v9296 = vunpack.c.l.s4 1966171168
  %v9297 = vunpack.c.0.s8 %v9296
  %v9298 = vlaneseq
  %v9299 = vshrl.u32 %v9298, 7
  %v9300 = vsub.s32 %v9297, %v9299
  %v9301 = vrot.slane %v9282, %v9300
  %v9303 = vunpack.c.l.s4 1966171168
  %v9304 = vunpack.c.0.s8 %v9303
  %v9305 = vlaneseq
  %v9306 = vshrl.u32 %v9305, 7
  %v9307 = vsub.s32 %v9304, %v9306
  %v9308 = vrot.slane %v9281, %v9307
  %v9310 = vunpack.c.l.s4 1966171168
  %v9311 = vunpack.c.0.s8 %v9310
  %v9312 = vlaneseq
  %v9313 = vshrl.u32 %v9312, 7
  %v9314 = vsub.s32 %v9311, %v9313
  %v9315 = vrot.slane %v9283, %v9314
  %v9317 = vunpack.c.l.s4 1966171168
  %v9318 = vunpack.c.0.s8 %v9317
  %v9319 = vlaneseq
  %v9320 = vshrl.u32 %v9319, 7
  %v9321 = vsub.s32 %v9318, %v9320
  %v9322 = vrot.slane %v9284, %v9321
  %v9324 = vunpack.c.l.s4 1966171168
  %v9325 = vunpack.c.0.s8 %v9324
  %v9326 = vlaneseq
  %v9327 = vshrl.u32 %v9326, 7
  %v9328 = vsub.s32 %v9325, %v9327
  %v9329 = vrot.slane %v9286, %v9328
  %v9331 = vunpack.c.l.s4 1966171168
  %v9332 = vunpack.c.0.s8 %v9331
  %v9333 = vlaneseq
  %v9334 = vshrl.u32 %v9333, 7
  %v9335 = vsub.s32 %v9332, %v9334
  %v9336 = vrot.slane %v9285, %v9335
  %v9338 = vunpack.c.l.s4 1966171168
  %v9339 = vunpack.c.0.s8 %v9338
  %v9340 = vlaneseq
  %v9341 = vshrl.u32 %v9340, 7
  %v9342 = vsub.s32 %v9339, %v9341
  %v9343 = vrot.slane %v9287, %v9342
  %v9344 = vcombine.low %v9294, %v9322
  %v9345 = vcombine.high %v9294, %v9322
  %v9346 = vcombine.low %v9301, %v9329
  %v9347 = vcombine.high %v9301, %v9329
  %v9348 = vcombine.low %v9308, %v9336
  %v9349 = vcombine.high %v9308, %v9336
  %v9350 = vcombine.low %v9315, %v9343
  %v9351 = vcombine.high %v9315, %v9343
  %s9368 = smul.u32 0, 16
  %s9369 = smul.addr %s9368, 8
  %s9370 = scalar_lea.vmem [#allocation5], %s9369
  %9371 = vst [vmem:[%s9370] sm:$0xff] %v9208
  %9372 = vst [vmem:[%s9370 + $0x8] sm:$0xff] %v9212
  %9373 = vst [vmem:[%s9370 + $0x10] sm:$0xff] %v9209
  %9374 = vst [vmem:[%s9370 + $0x18] sm:$0xff] %v9213
  %9375 = vst [vmem:[%s9370 + $0x20] sm:$0xff] %v9210
  %9376 = vst [vmem:[%s9370 + $0x28] sm:$0xff] %v9214
  %9377 = vst [vmem:[%s9370 + $0x30] sm:$0xff] %v9211
  %9378 = vst [vmem:[%s9370 + $0x38] sm:$0xff] %v9215
  %9379 = vst [vmem:[%s9370 + $0x40] sm:$0xff] %v9344
  %9380 = vst [vmem:[%s9370 + $0x48] sm:$0xff] %v9348
  %9381 = vst [vmem:[%s9370 + $0x50] sm:$0xff] %v9345
  %9382 = vst [vmem:[%s9370 + $0x58] sm:$0xff] %v9349
  %9383 = vst [vmem:[%s9370 + $0x60] sm:$0xff] %v9346
  %9384 = vst [vmem:[%s9370 + $0x68] sm:$0xff] %v9350
  %9385 = vst [vmem:[%s9370 + $0x70] sm:$0xff] %v9347
  %9386 = vst [vmem:[%s9370 + $0x78] sm:$0xff] %v9351
  %v9387 = vld [vmem:[%s6] sm:$0xf]
  %v9388 = vld [vmem:[%s6 + $0x4] sm:$0xf]
  %v9389 = vld [vmem:[%s6 + $0x8] sm:$0xf]
  %v9390 = vld [vmem:[%s6 + $0xc] sm:$0xf]
  %v9391 = vld [vmem:[%s6 + $0x10] sm:$0xf]
  %v9392 = vld [vmem:[%s6 + $0x14] sm:$0xf]
  %v9393 = vld [vmem:[%s6 + $0x18] sm:$0xf]
  %v9394 = vld [vmem:[%s6 + $0x1c] sm:$0xf]
  %v9395 = vld [vmem:[%s6 + $0x20] sm:$0xf]
  %v9396 = vld [vmem:[%s6 + $0x24] sm:$0xf]
  %v9397 = vld [vmem:[%s6 + $0x28] sm:$0xf]
  %v9398 = vld [vmem:[%s6 + $0x2c] sm:$0xf]
  %v9399 = vld [vmem:[%s6 + $0x30] sm:$0xf]
  %v9400 = vld [vmem:[%s6 + $0x34] sm:$0xf]
  %v9401 = vld [vmem:[%s6 + $0x38] sm:$0xf]
  %v9402 = vld [vmem:[%s6 + $0x3c] sm:$0xf]
  %v9403 = vld [vmem:[%s6 + $0x40] sm:$0xf]
  %v9404 = vld [vmem:[%s6 + $0x44] sm:$0xf]
  %v9405 = vld [vmem:[%s6 + $0x48] sm:$0xf]
  %v9406 = vld [vmem:[%s6 + $0x4c] sm:$0xf]
  %v9407 = vld [vmem:[%s6 + $0x50] sm:$0xf]
  %v9408 = vld [vmem:[%s6 + $0x54] sm:$0xf]
  %v9409 = vld [vmem:[%s6 + $0x58] sm:$0xf]
  %v9410 = vld [vmem:[%s6 + $0x5c] sm:$0xf]
  %v9411 = vld [vmem:[%s6 + $0x60] sm:$0xf]
  %v9412 = vld [vmem:[%s6 + $0x64] sm:$0xf]
  %v9413 = vld [vmem:[%s6 + $0x68] sm:$0xf]
  %v9414 = vld [vmem:[%s6 + $0x6c] sm:$0xf]
  %v9415 = vld [vmem:[%s6 + $0x70] sm:$0xf]
  %v9416 = vld [vmem:[%s6 + $0x74] sm:$0xf]
  %v9417 = vld [vmem:[%s6 + $0x78] sm:$0xf]
  %v9418 = vld [vmem:[%s6 + $0x7c] sm:$0xf]
  %s9419 = scalar_lea.vmem [#allocation4], 32
  %v9420 = vld [vmem:[%s9419] sm:$0xff]
  %v9421 = vld [vmem:[%s9419 + $0x8] sm:$0xff]
  %v9422 = vld [vmem:[%s9419 + $0x10] sm:$0xff]
  %v9423 = vld [vmem:[%s9419 + $0x18] sm:$0xff]
  %v9456 = vunpack.c.l.b16 %v9387
  %v9457 = vunpack.c.l.b16 %v9388
  %v9458 = vunpack.c.l.b16 %v9389
  %v9459 = vunpack.c.l.b16 %v9390
  %v9460 = vunpack.c.l.b16 %v9391
  %v9461 = vunpack.c.l.b16 %v9392
  %v9462 = vunpack.c.l.b16 %v9393
  %v9463 = vunpack.c.l.b16 %v9394
  %v9464 = vunpack.c.l.b16 %v9395
  %v9465 = vunpack.c.l.b16 %v9396
  %v9466 = vunpack.c.l.b16 %v9397
  %v9467 = vunpack.c.l.b16 %v9398
  %v9468 = vunpack.c.l.b16 %v9399
  %v9469 = vunpack.c.l.b16 %v9400
  %v9470 = vunpack.c.l.b16 %v9401
  %v9471 = vunpack.c.l.b16 %v9402
  %v9472 = vunpack.c.l.b16 %v9403
  %v9473 = vunpack.c.l.b16 %v9404
  %v9474 = vunpack.c.l.b16 %v9405
  %v9475 = vunpack.c.l.b16 %v9406
  %v9476 = vunpack.c.l.b16 %v9407
  %v9477 = vunpack.c.l.b16 %v9408
  %v9478 = vunpack.c.l.b16 %v9409
  %v9479 = vunpack.c.l.b16 %v9410
  %v9480 = vunpack.c.l.b16 %v9411
  %v9481 = vunpack.c.l.b16 %v9412
  %v9482 = vunpack.c.l.b16 %v9413
  %v9483 = vunpack.c.l.b16 %v9414
  %v9484 = vunpack.c.l.b16 %v9415
  %v9485 = vunpack.c.l.b16 %v9416
  %v9486 = vunpack.c.l.b16 %v9417
  %v9487 = vunpack.c.l.b16 %v9418
  %v9488 = vpack.c.b16 %v9457, %v9456
  %v9489 = vpack.c.b16 %v9459, %v9458
  %v9490 = vpack.c.b16 %v9461, %v9460
  %v9491 = vpack.c.b16 %v9463, %v9462
  %v9492 = vpack.c.b16 %v9465, %v9464
  %v9493 = vpack.c.b16 %v9467, %v9466
  %v9494 = vpack.c.b16 %v9469, %v9468
  %v9495 = vpack.c.b16 %v9471, %v9470
  %v9496 = vpack.c.b16 %v9473, %v9472
  %v9497 = vpack.c.b16 %v9475, %v9474
  %v9498 = vpack.c.b16 %v9477, %v9476
  %v9499 = vpack.c.b16 %v9479, %v9478
  %v9500 = vpack.c.b16 %v9481, %v9480
  %v9501 = vpack.c.b16 %v9483, %v9482
  %v9502 = vpack.c.b16 %v9485, %v9484
  %v9503 = vpack.c.b16 %v9487, %v9486
  %v9505 = vsel %vm8790, %v9488, 0
  %v9508 = vsel %vm8790, %v9489, 0
  %v9511 = vsel %vm8790, %v9490, 0
  %v9514 = vsel %vm8790, %v9491, 0
  %v9517 = vsel %vm8790, %v9492, 0
  %v9520 = vsel %vm8790, %v9493, 0
  %v9523 = vsel %vm8790, %v9494, 0
  %v9526 = vsel %vm8790, %v9495, 0
  %v9529 = vsel %vm8790, %v9496, 0
  %v9532 = vsel %vm8790, %v9497, 0
  %v9535 = vsel %vm8790, %v9498, 0
  %v9538 = vsel %vm8790, %v9499, 0
  %v9541 = vsel %vm8790, %v9500, 0
  %v9544 = vsel %vm8790, %v9501, 0
  %v9547 = vsel %vm8790, %v9502, 0
  %v9550 = vsel %vm8790, %v9503, 0
  %9552 = vmatprep.subr.bf16.mxu0 0
  %9553 = vmatpush1.bf16.msra.mxu0 %v9420
  %9554 = vmatprep.subr.bf16.mxu0 0
  %9555 = vmatpush1.bf16.msra.mxu0 %v9421
  %9556 = vmatprep.subr.bf16.mxu0 0
  %9557 = vmatpush1.bf16.msra.mxu0 %v9422
  %9558 = vmatprep.subr.bf16.mxu0 0
  %9559 = vmatpush1.bf16.msra.mxu0 %v9423
  %9560 = vmatprep.subr.bf16.mxu0 0
  %9561 = vmatpush1.bf16.msra.mxu0 0
  %9562 = vmatprep.subr.bf16.mxu0 0
  %9563 = vmatpush1.bf16.msra.mxu0 0
  %9564 = vmatprep.subr.bf16.mxu0 0
  %9565 = vmatpush1.bf16.msra.mxu0 0
  %9566 = vmatprep.subr.bf16.mxu0 0
  %9567 = vmatpush1.bf16.msra.mxu0 0
  %9568 = vmatprep.subr.bf16.mxu0 0
  %9569 = vmatpush1.bf16.msra.mxu0 0
  %9570 = vmatprep.subr.bf16.mxu0 0
  %9571 = vmatpush1.bf16.msra.mxu0 0
  %9572 = vmatprep.subr.bf16.mxu0 0
  %9573 = vmatpush1.bf16.msra.mxu0 0
  %9574 = vmatprep.subr.bf16.mxu0 0
  %9575 = vmatpush1.bf16.msra.mxu0 0
  %9576 = vmatprep.subr.bf16.mxu0 0
  %9577 = vmatpush1.bf16.msra.mxu0 0
  %9578 = vmatprep.subr.bf16.mxu0 0
  %9579 = vmatpush1.bf16.msra.mxu0 0
  %9580 = vmatprep.subr.bf16.mxu0 0
  %9581 = vmatpush1.bf16.msra.mxu0 0
  %9582 = vmatprep.subr.bf16.mxu0 0
  %9583 = vmatpush1.bf16.msra.mxu0 0
  %9584 = vmatprep.mubr.bf16.mxu0 0
  %9585 = vmatmul.mubr.bf16.gmra.mrb[0].mxu0 %v9505
  %v9586 = vpop.f32.mrb[0].mxu0
  %v9587 = vadd.f32 0.0, %v9586
  %v9588 = vpop.f32.mrb[0].mxu0
  %v9589 = vpop.f32.mrb[0].mxu0
  %v9590 = vadd.f32 0.0, %v9589
  %v9591 = vpop.f32.mrb[0].mxu0
  %9592 = vmatprep.mubr.bf16.mxu0 0
  %9593 = vmatmul.mubr.bf16.gmra.mrb[0].mxu0 %v9508
  %v9594 = vpop.f32.mrb[0].mxu0
  %v9595 = vadd.f32 0.0, %v9594
  %v9596 = vpop.f32.mrb[0].mxu0
  %v9597 = vpop.f32.mrb[0].mxu0
  %v9598 = vadd.f32 0.0, %v9597
  %v9599 = vpop.f32.mrb[0].mxu0
  %9600 = vmatprep.mubr.bf16.mxu0 0
  %9601 = vmatmul.mubr.bf16.gmra.mrb[0].mxu0 %v9511
  %v9602 = vpop.f32.mrb[0].mxu0
  %v9603 = vadd.f32 0.0, %v9602
  %v9604 = vpop.f32.mrb[0].mxu0
  %v9605 = vpop.f32.mrb[0].mxu0
  %v9606 = vadd.f32 0.0, %v9605
  %v9607 = vpop.f32.mrb[0].mxu0
  %9608 = vmatprep.mubr.bf16.mxu0 0
  %9609 = vmatmul.mubr.bf16.gmra.mrb[0].mxu0 %v9514
  %v9610 = vpop.f32.mrb[0].mxu0
  %v9611 = vadd.f32 0.0, %v9610
  %v9612 = vpop.f32.mrb[0].mxu0
  %v9613 = vpop.f32.mrb[0].mxu0
  %v9614 = vadd.f32 0.0, %v9613
  %v9615 = vpop.f32.mrb[0].mxu0
  %9616 = vmatprep.mubr.bf16.mxu0 0
  %9617 = vmatmul.mubr.bf16.gmra.mrb[0].mxu0 %v9517
  %v9618 = vpop.f32.mrb[0].mxu0
  %v9619 = vadd.f32 0.0, %v9618
  %v9620 = vpop.f32.mrb[0].mxu0
  %v9621 = vpop.f32.mrb[0].mxu0
  %v9622 = vadd.f32 0.0, %v9621
  %v9623 = vpop.f32.mrb[0].mxu0
  %9624 = vmatprep.mubr.bf16.mxu0 0
  %9625 = vmatmul.mubr.bf16.gmra.mrb[0].mxu0 %v9520
  %v9626 = vpop.f32.mrb[0].mxu0
  %v9627 = vadd.f32 0.0, %v9626
  %v9628 = vpop.f32.mrb[0].mxu0
  %v9629 = vpop.f32.mrb[0].mxu0
  %v9630 = vadd.f32 0.0, %v9629
  %v9631 = vpop.f32.mrb[0].mxu0
  %9632 = vmatprep.mubr.bf16.mxu0 0
  %9633 = vmatmul.mubr.bf16.gmra.mrb[0].mxu0 %v9523
  %v9634 = vpop.f32.mrb[0].mxu0
  %v9635 = vadd.f32 0.0, %v9634
  %v9636 = vpop.f32.mrb[0].mxu0
  %v9637 = vpop.f32.mrb[0].mxu0
  %v9638 = vadd.f32 0.0, %v9637
  %v9639 = vpop.f32.mrb[0].mxu0
  %9640 = vmatprep.mubr.bf16.mxu0 0
  %9641 = vmatmul.mubr.bf16.gmra.mrb[0].mxu0 %v9526
  %v9642 = vpop.f32.mrb[0].mxu0
  %v9643 = vadd.f32 0.0, %v9642
  %v9644 = vpop.f32.mrb[0].mxu0
  %v9645 = vpop.f32.mrb[0].mxu0
  %v9646 = vadd.f32 0.0, %v9645
  %v9647 = vpop.f32.mrb[0].mxu0
  %9648 = vmatprep.mubr.bf16.mxu0 0
  %9649 = vmatmul.mubr.bf16.gmra.mrb[0].mxu0 %v9529
  %v9650 = vpop.f32.mrb[0].mxu0
  %v9651 = vadd.f32 0.0, %v9650
  %v9652 = vpop.f32.mrb[0].mxu0
  %v9653 = vpop.f32.mrb[0].mxu0
  %v9654 = vadd.f32 0.0, %v9653
  %v9655 = vpop.f32.mrb[0].mxu0
  %9656 = vmatprep.mubr.bf16.mxu0 0
  %9657 = vmatmul.mubr.bf16.gmra.mrb[0].mxu0 %v9532
  %v9658 = vpop.f32.mrb[0].mxu0
  %v9659 = vadd.f32 0.0, %v9658
  %v9660 = vpop.f32.mrb[0].mxu0
  %v9661 = vpop.f32.mrb[0].mxu0
  %v9662 = vadd.f32 0.0, %v9661
  %v9663 = vpop.f32.mrb[0].mxu0
  %9664 = vmatprep.mubr.bf16.mxu0 0
  %9665 = vmatmul.mubr.bf16.gmra.mrb[0].mxu0 %v9535
  %v9666 = vpop.f32.mrb[0].mxu0
  %v9667 = vadd.f32 0.0, %v9666
  %v9668 = vpop.f32.mrb[0].mxu0
  %v9669 = vpop.f32.mrb[0].mxu0
  %v9670 = vadd.f32 0.0, %v9669
  %v9671 = vpop.f32.mrb[0].mxu0
  %9672 = vmatprep.mubr.bf16.mxu0 0
  %9673 = vmatmul.mubr.bf16.gmra.mrb[0].mxu0 %v9538
  %v9674 = vpop.f32.mrb[0].mxu0
  %v9675 = vadd.f32 0.0, %v9674
  %v9676 = vpop.f32.mrb[0].mxu0
  %v9677 = vpop.f32.mrb[0].mxu0
  %v9678 = vadd.f32 0.0, %v9677
  %v9679 = vpop.f32.mrb[0].mxu0
  %9680 = vmatprep.mubr.bf16.mxu0 0
  %9681 = vmatmul.mubr.bf16.gmra.mrb[0].mxu0 %v9541
  %v9682 = vpop.f32.mrb[0].mxu0
  %v9683 = vadd.f32 0.0, %v9682
  %v9684 = vpop.f32.mrb[0].mxu0
  %v9685 = vpop.f32.mrb[0].mxu0
  %v9686 = vadd.f32 0.0, %v9685
  %v9687 = vpop.f32.mrb[0].mxu0
  %9688 = vmatprep.mubr.bf16.mxu0 0
  %9689 = vmatmul.mubr.bf16.gmra.mrb[0].mxu0 %v9544
  %v9690 = vpop.f32.mrb[0].mxu0
  %v9691 = vadd.f32 0.0, %v9690
  %v9692 = vpop.f32.mrb[0].mxu0
  %v9693 = vpop.f32.mrb[0].mxu0
  %v9694 = vadd.f32 0.0, %v9693
  %v9695 = vpop.f32.mrb[0].mxu0
  %9696 = vmatprep.mubr.bf16.mxu0 0
  %9697 = vmatmul.mubr.bf16.gmra.mrb[0].mxu0 %v9547
  %v9698 = vpop.f32.mrb[0].mxu0
  %v9699 = vadd.f32 0.0, %v9698
  %v9700 = vpop.f32.mrb[0].mxu0
  %v9701 = vpop.f32.mrb[0].mxu0
  %v9702 = vadd.f32 0.0, %v9701
  %v9703 = vpop.f32.mrb[0].mxu0
  %9704 = vmatprep.mubr.bf16.mxu0 0
  %9705 = vmatmul.mubr.bf16.gmra.mrb[0].mxu0 %v9550
  %v9706 = vpop.f32.mrb[0].mxu0
  %v9707 = vadd.f32 0.0, %v9706
  %v9708 = vpop.f32.mrb[0].mxu0
  %v9709 = vpop.f32.mrb[0].mxu0
  %v9710 = vadd.f32 0.0, %v9709
  %v9711 = vpop.f32.mrb[0].mxu0
  %9712 = vdwg.mxu0
  %v9713 = vpack.c.bf16 %v9590, %v9587
  %v9714 = vpack.c.bf16 %v9598, %v9595
  %v9715 = vpack.c.bf16 %v9606, %v9603
  %v9716 = vpack.c.bf16 %v9614, %v9611
  %v9717 = vpack.c.bf16 %v9622, %v9619
  %v9718 = vpack.c.bf16 %v9630, %v9627
  %v9719 = vpack.c.bf16 %v9638, %v9635
  %v9720 = vpack.c.bf16 %v9646, %v9643
  %v9721 = vpack.c.bf16 %v9654, %v9651
  %v9722 = vpack.c.bf16 %v9662, %v9659
  %v9723 = vpack.c.bf16 %v9670, %v9667
  %v9724 = vpack.c.bf16 %v9678, %v9675
  %v9725 = vpack.c.bf16 %v9686, %v9683
  %v9726 = vpack.c.bf16 %v9694, %v9691
  %v9727 = vpack.c.bf16 %v9702, %v9699
  %v9728 = vpack.c.bf16 %v9710, %v9707
  %v9745 = vunpack.c.l.b16 %v9713
  %v9746 = vunpack.c.h.b16 %v9713
  %v9747 = vunpack.c.l.b16 %v9714
  %v9748 = vunpack.c.h.b16 %v9714
  %v9749 = vunpack.c.l.b16 %v9715
  %v9750 = vunpack.c.h.b16 %v9715
  %v9751 = vunpack.c.l.b16 %v9716
  %v9752 = vunpack.c.h.b16 %v9716
  %v9753 = vunpack.c.l.b16 %v9717
  %v9754 = vunpack.c.h.b16 %v9717
  %v9755 = vunpack.c.l.b16 %v9718
  %v9756 = vunpack.c.h.b16 %v9718
  %v9757 = vunpack.c.l.b16 %v9719
  %v9758 = vunpack.c.h.b16 %v9719
  %v9759 = vunpack.c.l.b16 %v9720
  %v9760 = vunpack.c.h.b16 %v9720
  %v9761 = vunpack.c.l.b16 %v9721
  %v9762 = vunpack.c.h.b16 %v9721
  %v9763 = vunpack.c.l.b16 %v9722
  %v9764 = vunpack.c.h.b16 %v9722
  %v9765 = vunpack.c.l.b16 %v9723
  %v9766 = vunpack.c.h.b16 %v9723
  %v9767 = vunpack.c.l.b16 %v9724
  %v9768 = vunpack.c.h.b16 %v9724
  %v9769 = vunpack.c.l.b16 %v9725
  %v9770 = vunpack.c.h.b16 %v9725
  %v9771 = vunpack.c.l.b16 %v9726
  %v9772 = vunpack.c.h.b16 %v9726
  %v9773 = vunpack.c.l.b16 %v9727
  %v9774 = vunpack.c.h.b16 %v9727
  %v9775 = vunpack.c.l.b16 %v9728
  %v9776 = vunpack.c.h.b16 %v9728
  %v9777 = vpack.i.b16 %v9747, %v9745
  %v9778 = vpack.i.b16 %v9748, %v9746
  %v9779 = vpack.i.b16 %v9751, %v9749
  %v9780 = vpack.i.b16 %v9752, %v9750
  %v9781 = vpack.i.b16 %v9755, %v9753
  %v9782 = vpack.i.b16 %v9756, %v9754
  %v9783 = vpack.i.b16 %v9759, %v9757
  %v9784 = vpack.i.b16 %v9760, %v9758
  %v9785 = vpack.i.b16 %v9763, %v9761
  %v9786 = vpack.i.b16 %v9764, %v9762
  %v9787 = vpack.i.b16 %v9767, %v9765
  %v9788 = vpack.i.b16 %v9768, %v9766
  %v9789 = vpack.i.b16 %v9771, %v9769
  %v9790 = vpack.i.b16 %v9772, %v9770
  %v9791 = vpack.i.b16 %v9775, %v9773
  %v9792 = vpack.i.b16 %v9776, %v9774
  %v9793 = vcombine.low %v9777, %v9779
  %v9794 = vcombine.high %v9777, %v9779
  %v9795 = vcombine.low %v9781, %v9783
  %v9796 = vcombine.high %v9781, %v9783
  %v9797 = vcombine.low %v9785, %v9787
  %v9798 = vcombine.high %v9785, %v9787
  %v9799 = vcombine.low %v9789, %v9791
  %v9800 = vcombine.high %v9789, %v9791
  %v9802 = vunpack.c.l.s4 1966171168
  %v9803 = vunpack.c.0.s8 %v9802
  %v9804 = vlaneseq
  %v9805 = vshrl.u32 %v9804, 7
  %v9806 = vsub.s32 %v9803, %v9805
  %v9807 = vrot.slane %v9793, %v9806
  %v9809 = vunpack.c.l.s4 1966171168
  %v9810 = vunpack.c.0.s8 %v9809
  %v9811 = vlaneseq
  %v9812 = vshrl.u32 %v9811, 7
  %v9813 = vsub.s32 %v9810, %v9812
  %v9814 = vrot.slane %v9794, %v9813
  %v9816 = vunpack.c.l.s4 1966171168
  %v9817 = vunpack.c.0.s8 %v9816
  %v9818 = vlaneseq
  %v9819 = vshrl.u32 %v9818, 7
  %v9820 = vsub.s32 %v9817, %v9819
  %v9821 = vrot.slane %v9795, %v9820
  %v9823 = vunpack.c.l.s4 1966171168
  %v9824 = vunpack.c.0.s8 %v9823
  %v9825 = vlaneseq
  %v9826 = vshrl.u32 %v9825, 7
  %v9827 = vsub.s32 %v9824, %v9826
  %v9828 = vrot.slane %v9796, %v9827
  %v9830 = vunpack.c.l.s4 1966171168
  %v9831 = vunpack.c.0.s8 %v9830
  %v9832 = vlaneseq
  %v9833 = vshrl.u32 %v9832, 7
  %v9834 = vsub.s32 %v9831, %v9833
  %v9835 = vrot.slane %v9797, %v9834
  %v9837 = vunpack.c.l.s4 1966171168
  %v9838 = vunpack.c.0.s8 %v9837
  %v9839 = vlaneseq
  %v9840 = vshrl.u32 %v9839, 7
  %v9841 = vsub.s32 %v9838, %v9840
  %v9842 = vrot.slane %v9798, %v9841
  %v9844 = vunpack.c.l.s4 1966171168
  %v9845 = vunpack.c.0.s8 %v9844
  %v9846 = vlaneseq
  %v9847 = vshrl.u32 %v9846, 7
  %v9848 = vsub.s32 %v9845, %v9847
  %v9849 = vrot.slane %v9799, %v9848
  %v9851 = vunpack.c.l.s4 1966171168
  %v9852 = vunpack.c.0.s8 %v9851
  %v9853 = vlaneseq
  %v9854 = vshrl.u32 %v9853, 7
  %v9855 = vsub.s32 %v9852, %v9854
  %v9856 = vrot.slane %v9800, %v9855
  %v9857 = vcombine.low %v9807, %v9821
  %v9858 = vcombine.high %v9807, %v9821
  %v9859 = vcombine.low %v9814, %v9828
  %v9860 = vcombine.high %v9814, %v9828
  %v9861 = vcombine.low %v9835, %v9849
  %v9862 = vcombine.high %v9835, %v9849
  %v9863 = vcombine.low %v9842, %v9856
  %v9864 = vcombine.high %v9842, %v9856
  %v9866 = vunpack.c.l.s4 1966171168
  %v9867 = vunpack.c.0.s8 %v9866
  %v9868 = vlaneseq
  %v9869 = vshrl.u32 %v9868, 7
  %v9870 = vsub.s32 %v9867, %v9869
  %v9871 = vrot.slane %v9857, %v9870
  %v9873 = vunpack.c.l.s4 1966171168
  %v9874 = vunpack.c.0.s8 %v9873
  %v9875 = vlaneseq
  %v9876 = vshrl.u32 %v9875, 7
  %v9877 = vsub.s32 %v9874, %v9876
  %v9878 = vrot.slane %v9859, %v9877
  %v9880 = vunpack.c.l.s4 1966171168
  %v9881 = vunpack.c.0.s8 %v9880
  %v9882 = vlaneseq
  %v9883 = vshrl.u32 %v9882, 7
  %v9884 = vsub.s32 %v9881, %v9883
  %v9885 = vrot.slane %v9858, %v9884
  %v9887 = vunpack.c.l.s4 1966171168
  %v9888 = vunpack.c.0.s8 %v9887
  %v9889 = vlaneseq
  %v9890 = vshrl.u32 %v9889, 7
  %v9891 = vsub.s32 %v9888, %v9890
  %v9892 = vrot.slane %v9860, %v9891
  %v9894 = vunpack.c.l.s4 1966171168
  %v9895 = vunpack.c.0.s8 %v9894
  %v9896 = vlaneseq
  %v9897 = vshrl.u32 %v9896, 7
  %v9898 = vsub.s32 %v9895, %v9897
  %v9899 = vrot.slane %v9861, %v9898
  %v9901 = vunpack.c.l.s4 1966171168
  %v9902 = vunpack.c.0.s8 %v9901
  %v9903 = vlaneseq
  %v9904 = vshrl.u32 %v9903, 7
  %v9905 = vsub.s32 %v9902, %v9904
  %v9906 = vrot.slane %v9863, %v9905
  %v9908 = vunpack.c.l.s4 1966171168
  %v9909 = vunpack.c.0.s8 %v9908
  %v9910 = vlaneseq
  %v9911 = vshrl.u32 %v9910, 7
  %v9912 = vsub.s32 %v9909, %v9911
  %v9913 = vrot.slane %v9862, %v9912
  %v9915 = vunpack.c.l.s4 1966171168
  %v9916 = vunpack.c.0.s8 %v9915
  %v9917 = vlaneseq
  %v9918 = vshrl.u32 %v9917, 7
  %v9919 = vsub.s32 %v9916, %v9918
  %v9920 = vrot.slane %v9864, %v9919
  %v9921 = vcombine.low %v9871, %v9899
  %v9922 = vcombine.high %v9871, %v9899
  %v9923 = vcombine.low %v9878, %v9906
  %v9924 = vcombine.high %v9878, %v9906
  %v9925 = vcombine.low %v9885, %v9913
  %v9926 = vcombine.high %v9885, %v9913
  %v9927 = vcombine.low %v9892, %v9920
  %v9928 = vcombine.high %v9892, %v9920
  %v9929 = vcombine.low %v9778, %v9780
  %v9930 = vcombine.high %v9778, %v9780
  %v9931 = vcombine.low %v9782, %v9784
  %v9932 = vcombine.high %v9782, %v9784
  %v9933 = vcombine.low %v9786, %v9788
  %v9934 = vcombine.high %v9786, %v9788
  %v9935 = vcombine.low %v9790, %v9792
  %v9936 = vcombine.high %v9790, %v9792
  %v9938 = vunpack.c.l.s4 1966171168
  %v9939 = vunpack.c.0.s8 %v9938
  %v9940 = vlaneseq
  %v9941 = vshrl.u32 %v9940, 7
  %v9942 = vsub.s32 %v9939, %v9941
  %v9943 = vrot.slane %v9929, %v9942
  %v9945 = vunpack.c.l.s4 1966171168
  %v9946 = vunpack.c.0.s8 %v9945
  %v9947 = vlaneseq
  %v9948 = vshrl.u32 %v9947, 7
  %v9949 = vsub.s32 %v9946, %v9948
  %v9950 = vrot.slane %v9930, %v9949
  %v9952 = vunpack.c.l.s4 1966171168
  %v9953 = vunpack.c.0.s8 %v9952
  %v9954 = vlaneseq
  %v9955 = vshrl.u32 %v9954, 7
  %v9956 = vsub.s32 %v9953, %v9955
  %v9957 = vrot.slane %v9931, %v9956
  %v9959 = vunpack.c.l.s4 1966171168
  %v9960 = vunpack.c.0.s8 %v9959
  %v9961 = vlaneseq
  %v9962 = vshrl.u32 %v9961, 7
  %v9963 = vsub.s32 %v9960, %v9962
  %v9964 = vrot.slane %v9932, %v9963
  %v9966 = vunpack.c.l.s4 1966171168
  %v9967 = vunpack.c.0.s8 %v9966
  %v9968 = vlaneseq
  %v9969 = vshrl.u32 %v9968, 7
  %v9970 = vsub.s32 %v9967, %v9969
  %v9971 = vrot.slane %v9933, %v9970
  %v9973 = vunpack.c.l.s4 1966171168
  %v9974 = vunpack.c.0.s8 %v9973
  %v9975 = vlaneseq
  %v9976 = vshrl.u32 %v9975, 7
  %v9977 = vsub.s32 %v9974, %v9976
  %v9978 = vrot.slane %v9934, %v9977
  %v9980 = vunpack.c.l.s4 1966171168
  %v9981 = vunpack.c.0.s8 %v9980
  %v9982 = vlaneseq
  %v9983 = vshrl.u32 %v9982, 7
  %v9984 = vsub.s32 %v9981, %v9983
  %v9985 = vrot.slane %v9935, %v9984
  %v9987 = vunpack.c.l.s4 1966171168
  %v9988 = vunpack.c.0.s8 %v9987
  %v9989 = vlaneseq
  %v9990 = vshrl.u32 %v9989, 7
  %v9991 = vsub.s32 %v9988, %v9990
  %v9992 = vrot.slane %v9936, %v9991
  %v9993 = vcombine.low %v9943, %v9957
  %v9994 = vcombine.high %v9943, %v9957
  %v9995 = vcombine.low %v9950, %v9964
  %v9996 = vcombine.high %v9950, %v9964
  %v9997 = vcombine.low %v9971, %v9985
  %v9998 = vcombine.high %v9971, %v9985
  %v9999 = vcombine.low %v9978, %v9992
  %v10000 = vcombine.high %v9978, %v9992
  %v10002 = vunpack.c.l.s4 1966171168
  %v10003 = vunpack.c.0.s8 %v10002
  %v10004 = vlaneseq
  %v10005 = vshrl.u32 %v10004, 7
  %v10006 = vsub.s32 %v10003, %v10005
  %v10007 = vrot.slane %v9993, %v10006
  %v10009 = vunpack.c.l.s4 1966171168
  %v10010 = vunpack.c.0.s8 %v10009
  %v10011 = vlaneseq
  %v10012 = vshrl.u32 %v10011, 7
  %v10013 = vsub.s32 %v10010, %v10012
  %v10014 = vrot.slane %v9995, %v10013
  %v10016 = vunpack.c.l.s4 1966171168
  %v10017 = vunpack.c.0.s8 %v10016
  %v10018 = vlaneseq
  %v10019 = vshrl.u32 %v10018, 7
  %v10020 = vsub.s32 %v10017, %v10019
  %v10021 = vrot.slane %v9994, %v10020
  %v10023 = vunpack.c.l.s4 1966171168
  %v10024 = vunpack.c.0.s8 %v10023
  %v10025 = vlaneseq
  %v10026 = vshrl.u32 %v10025, 7
  %v10027 = vsub.s32 %v10024, %v10026
  %v10028 = vrot.slane %v9996, %v10027
  %v10030 = vunpack.c.l.s4 1966171168
  %v10031 = vunpack.c.0.s8 %v10030
  %v10032 = vlaneseq
  %v10033 = vshrl.u32 %v10032, 7
  %v10034 = vsub.s32 %v10031, %v10033
  %v10035 = vrot.slane %v9997, %v10034
  %v10037 = vunpack.c.l.s4 1966171168
  %v10038 = vunpack.c.0.s8 %v10037
  %v10039 = vlaneseq
  %v10040 = vshrl.u32 %v10039, 7
  %v10041 = vsub.s32 %v10038, %v10040
  %v10042 = vrot.slane %v9999, %v10041
  %v10044 = vunpack.c.l.s4 1966171168
  %v10045 = vunpack.c.0.s8 %v10044
  %v10046 = vlaneseq
  %v10047 = vshrl.u32 %v10046, 7
  %v10048 = vsub.s32 %v10045, %v10047
  %v10049 = vrot.slane %v9998, %v10048
  %v10051 = vunpack.c.l.s4 1966171168
  %v10052 = vunpack.c.0.s8 %v10051
  %v10053 = vlaneseq
  %v10054 = vshrl.u32 %v10053, 7
  %v10055 = vsub.s32 %v10052, %v10054
  %v10056 = vrot.slane %v10000, %v10055
  %v10057 = vcombine.low %v10007, %v10035
  %v10058 = vcombine.high %v10007, %v10035
  %v10059 = vcombine.low %v10014, %v10042
  %v10060 = vcombine.high %v10014, %v10042
  %v10061 = vcombine.low %v10021, %v10049
  %v10062 = vcombine.high %v10021, %v10049
  %v10063 = vcombine.low %v10028, %v10056
  %v10064 = vcombine.high %v10028, %v10056
  %s10081 = smul.u32 1, 16
  %s10082 = smul.addr %s10081, 8
  %s10083 = scalar_lea.vmem [#allocation5], %s10082
  %10084 = vst [vmem:[%s10083] sm:$0xff] %v9921
  %10085 = vst [vmem:[%s10083 + $0x8] sm:$0xff] %v9925
  %10086 = vst [vmem:[%s10083 + $0x10] sm:$0xff] %v9922
  %10087 = vst [vmem:[%s10083 + $0x18] sm:$0xff] %v9926
  %10088 = vst [vmem:[%s10083 + $0x20] sm:$0xff] %v9923
  %10089 = vst [vmem:[%s10083 + $0x28] sm:$0xff] %v9927
  %10090 = vst [vmem:[%s10083 + $0x30] sm:$0xff] %v9924
  %10091 = vst [vmem:[%s10083 + $0x38] sm:$0xff] %v9928
  %10092 = vst [vmem:[%s10083 + $0x40] sm:$0xff] %v10057
  %10093 = vst [vmem:[%s10083 + $0x48] sm:$0xff] %v10061
  %10094 = vst [vmem:[%s10083 + $0x50] sm:$0xff] %v10058
  %10095 = vst [vmem:[%s10083 + $0x58] sm:$0xff] %v10062
  %10096 = vst [vmem:[%s10083 + $0x60] sm:$0xff] %v10059
  %10097 = vst [vmem:[%s10083 + $0x68] sm:$0xff] %v10063
  %10098 = vst [vmem:[%s10083 + $0x70] sm:$0xff] %v10060
  %10099 = vst [vmem:[%s10083 + $0x78] sm:$0xff] %v10064
  %v10100 = vld [vmem:[#allocation5] sm:$0xff]
  %v10101 = vld [vmem:[#allocation5 + $0x8] sm:$0xff]
  %v10102 = vld [vmem:[#allocation5 + $0x10] sm:$0xff]
  %v10103 = vld [vmem:[#allocation5 + $0x18] sm:$0xff]
  %v10104 = vld [vmem:[#allocation5 + $0x20] sm:$0xff]
  %v10105 = vld [vmem:[#allocation5 + $0x28] sm:$0xff]
  %v10106 = vld [vmem:[#allocation5 + $0x30] sm:$0xff]
  %v10107 = vld [vmem:[#allocation5 + $0x38] sm:$0xff]
  %v10108 = vld [vmem:[#allocation5 + $0x40] sm:$0xff]
  %v10109 = vld [vmem:[#allocation5 + $0x48] sm:$0xff]
  %v10110 = vld [vmem:[#allocation5 + $0x50] sm:$0xff]
  %v10111 = vld [vmem:[#allocation5 + $0x58] sm:$0xff]
  %v10112 = vld [vmem:[#allocation5 + $0x60] sm:$0xff]
  %v10113 = vld [vmem:[#allocation5 + $0x68] sm:$0xff]
  %v10114 = vld [vmem:[#allocation5 + $0x70] sm:$0xff]
  %v10115 = vld [vmem:[#allocation5 + $0x78] sm:$0xff]
  %v10116 = vld [vmem:[#allocation5 + $0x80] sm:$0xff]
  %v10117 = vld [vmem:[#allocation5 + $0x88] sm:$0xff]
  %v10118 = vld [vmem:[#allocation5 + $0x90] sm:$0xff]
  %v10119 = vld [vmem:[#allocation5 + $0x98] sm:$0xff]
  %v10120 = vld [vmem:[#allocation5 + $0xa0] sm:$0xff]
  %v10121 = vld [vmem:[#allocation5 + $0xa8] sm:$0xff]
  %v10122 = vld [vmem:[#allocation5 + $0xb0] sm:$0xff]
  %v10123 = vld [vmem:[#allocation5 + $0xb8] sm:$0xff]
  %v10124 = vld [vmem:[#allocation5 + $0xc0] sm:$0xff]
  %v10125 = vld [vmem:[#allocation5 + $0xc8] sm:$0xff]
  %v10126 = vld [vmem:[#allocation5 + $0xd0] sm:$0xff]
  %v10127 = vld [vmem:[#allocation5 + $0xd8] sm:$0xff]
  %v10128 = vld [vmem:[#allocation5 + $0xe0] sm:$0xff]
  %v10129 = vld [vmem:[#allocation5 + $0xe8] sm:$0xff]
  %v10130 = vld [vmem:[#allocation5 + $0xf0] sm:$0xff]
  %v10131 = vld [vmem:[#allocation5 + $0xf8] sm:$0xff]
  %v10132 = vld [vmem:[%s7] sm:$0xff]
  %v10133 = vld [vmem:[%s7 + $0x8] sm:$0xff]
  %v10134 = vld [vmem:[%s7 + $0x10] sm:$0xff]
  %v10135 = vld [vmem:[%s7 + $0x18] sm:$0xff]
  %v10136 = vld [vmem:[%s7 + $0x20] sm:$0xff]
  %v10137 = vld [vmem:[%s7 + $0x28] sm:$0xff]
  %v10138 = vld [vmem:[%s7 + $0x30] sm:$0xff]
  %v10139 = vld [vmem:[%s7 + $0x38] sm:$0xff]
  %v10140 = vld [vmem:[%s7 + $0x40] sm:$0xff]
  %v10141 = vld [vmem:[%s7 + $0x48] sm:$0xff]
  %v10142 = vld [vmem:[%s7 + $0x50] sm:$0xff]
  %v10143 = vld [vmem:[%s7 + $0x58] sm:$0xff]
  %v10144 = vld [vmem:[%s7 + $0x60] sm:$0xff]
  %v10145 = vld [vmem:[%s7 + $0x68] sm:$0xff]
  %v10146 = vld [vmem:[%s7 + $0x70] sm:$0xff]
  %v10147 = vld [vmem:[%s7 + $0x78] sm:$0xff]
  %v10148 = vld [vmem:[%s7 + $0x80] sm:$0xff]
  %v10149 = vld [vmem:[%s7 + $0x88] sm:$0xff]
  %v10150 = vld [vmem:[%s7 + $0x90] sm:$0xff]
  %v10151 = vld [vmem:[%s7 + $0x98] sm:$0xff]
  %v10152 = vld [vmem:[%s7 + $0xa0] sm:$0xff]
  %v10153 = vld [vmem:[%s7 + $0xa8] sm:$0xff]
  %v10154 = vld [vmem:[%s7 + $0xb0] sm:$0xff]
  %v10155 = vld [vmem:[%s7 + $0xb8] sm:$0xff]
  %v10156 = vld [vmem:[%s7 + $0xc0] sm:$0xff]
  %v10157 = vld [vmem:[%s7 + $0xc8] sm:$0xff]
  %v10158 = vld [vmem:[%s7 + $0xd0] sm:$0xff]
  %v10159 = vld [vmem:[%s7 + $0xd8] sm:$0xff]
  %v10160 = vld [vmem:[%s7 + $0xe0] sm:$0xff]
  %v10161 = vld [vmem:[%s7 + $0xe8] sm:$0xff]
  %v10162 = vld [vmem:[%s7 + $0xf0] sm:$0xff]
  %v10163 = vld [vmem:[%s7 + $0xf8] sm:$0xff]
  %v10164 = vld [vmem:[%s7 + $0x100] sm:$0xff]
  %v10165 = vld [vmem:[%s7 + $0x108] sm:$0xff]
  %v10166 = vld [vmem:[%s7 + $0x110] sm:$0xff]
  %v10167 = vld [vmem:[%s7 + $0x118] sm:$0xff]
  %v10168 = vld [vmem:[%s7 + $0x120] sm:$0xff]
  %v10169 = vld [vmem:[%s7 + $0x128] sm:$0xff]
  %v10170 = vld [vmem:[%s7 + $0x130] sm:$0xff]
  %v10171 = vld [vmem:[%s7 + $0x138] sm:$0xff]
  %v10172 = vld [vmem:[%s7 + $0x140] sm:$0xff]
  %v10173 = vld [vmem:[%s7 + $0x148] sm:$0xff]
  %v10174 = vld [vmem:[%s7 + $0x150] sm:$0xff]
  %v10175 = vld [vmem:[%s7 + $0x158] sm:$0xff]
  %v10176 = vld [vmem:[%s7 + $0x160] sm:$0xff]
  %v10177 = vld [vmem:[%s7 + $0x168] sm:$0xff]
  %v10178 = vld [vmem:[%s7 + $0x170] sm:$0xff]
  %v10179 = vld [vmem:[%s7 + $0x178] sm:$0xff]
  %v10180 = vld [vmem:[%s7 + $0x180] sm:$0xff]
  %v10181 = vld [vmem:[%s7 + $0x188] sm:$0xff]
  %v10182 = vld [vmem:[%s7 + $0x190] sm:$0xff]
  %v10183 = vld [vmem:[%s7 + $0x198] sm:$0xff]
  %v10184 = vld [vmem:[%s7 + $0x1a0] sm:$0xff]
  %v10185 = vld [vmem:[%s7 + $0x1a8] sm:$0xff]
  %v10186 = vld [vmem:[%s7 + $0x1b0] sm:$0xff]
  %v10187 = vld [vmem:[%s7 + $0x1b8] sm:$0xff]
  %v10188 = vld [vmem:[%s7 + $0x1c0] sm:$0xff]
  %v10189 = vld [vmem:[%s7 + $0x1c8] sm:$0xff]
  %v10190 = vld [vmem:[%s7 + $0x1d0] sm:$0xff]
  %v10191 = vld [vmem:[%s7 + $0x1d8] sm:$0xff]
  %v10192 = vld [vmem:[%s7 + $0x1e0] sm:$0xff]
  %v10193 = vld [vmem:[%s7 + $0x1e8] sm:$0xff]
  %v10194 = vld [vmem:[%s7 + $0x1f0] sm:$0xff]
  %v10195 = vld [vmem:[%s7 + $0x1f8] sm:$0xff]
  %v10196 = vld [vmem:[%s7 + $0x200] sm:$0xff]
  %v10197 = vld [vmem:[%s7 + $0x208] sm:$0xff]
  %v10198 = vld [vmem:[%s7 + $0x210] sm:$0xff]
  %v10199 = vld [vmem:[%s7 + $0x218] sm:$0xff]
  %v10200 = vld [vmem:[%s7 + $0x220] sm:$0xff]
  %v10201 = vld [vmem:[%s7 + $0x228] sm:$0xff]
  %v10202 = vld [vmem:[%s7 + $0x230] sm:$0xff]
  %v10203 = vld [vmem:[%s7 + $0x238] sm:$0xff]
  %v10204 = vld [vmem:[%s7 + $0x240] sm:$0xff]
  %v10205 = vld [vmem:[%s7 + $0x248] sm:$0xff]
  %v10206 = vld [vmem:[%s7 + $0x250] sm:$0xff]
  %v10207 = vld [vmem:[%s7 + $0x258] sm:$0xff]
  %v10208 = vld [vmem:[%s7 + $0x260] sm:$0xff]
  %v10209 = vld [vmem:[%s7 + $0x268] sm:$0xff]
  %v10210 = vld [vmem:[%s7 + $0x270] sm:$0xff]
  %v10211 = vld [vmem:[%s7 + $0x278] sm:$0xff]
  %v10212 = vld [vmem:[%s7 + $0x280] sm:$0xff]
  %v10213 = vld [vmem:[%s7 + $0x288] sm:$0xff]
  %v10214 = vld [vmem:[%s7 + $0x290] sm:$0xff]
  %v10215 = vld [vmem:[%s7 + $0x298] sm:$0xff]
  %v10216 = vld [vmem:[%s7 + $0x2a0] sm:$0xff]
  %v10217 = vld [vmem:[%s7 + $0x2a8] sm:$0xff]
  %v10218 = vld [vmem:[%s7 + $0x2b0] sm:$0xff]
  %v10219 = vld [vmem:[%s7 + $0x2b8] sm:$0xff]
  %v10220 = vld [vmem:[%s7 + $0x2c0] sm:$0xff]
  %v10221 = vld [vmem:[%s7 + $0x2c8] sm:$0xff]
  %v10222 = vld [vmem:[%s7 + $0x2d0] sm:$0xff]
  %v10223 = vld [vmem:[%s7 + $0x2d8] sm:$0xff]
  %v10224 = vld [vmem:[%s7 + $0x2e0] sm:$0xff]
  %v10225 = vld [vmem:[%s7 + $0x2e8] sm:$0xff]
  %v10226 = vld [vmem:[%s7 + $0x2f0] sm:$0xff]
  %v10227 = vld [vmem:[%s7 + $0x2f8] sm:$0xff]
  %v10228 = vld [vmem:[%s7 + $0x300] sm:$0xff]
  %v10229 = vld [vmem:[%s7 + $0x308] sm:$0xff]
  %v10230 = vld [vmem:[%s7 + $0x310] sm:$0xff]
  %v10231 = vld [vmem:[%s7 + $0x318] sm:$0xff]
  %v10232 = vld [vmem:[%s7 + $0x320] sm:$0xff]
  %v10233 = vld [vmem:[%s7 + $0x328] sm:$0xff]
  %v10234 = vld [vmem:[%s7 + $0x330] sm:$0xff]
  %v10235 = vld [vmem:[%s7 + $0x338] sm:$0xff]
  %v10236 = vld [vmem:[%s7 + $0x340] sm:$0xff]
  %v10237 = vld [vmem:[%s7 + $0x348] sm:$0xff]
  %v10238 = vld [vmem:[%s7 + $0x350] sm:$0xff]
  %v10239 = vld [vmem:[%s7 + $0x358] sm:$0xff]
  %v10240 = vld [vmem:[%s7 + $0x360] sm:$0xff]
  %v10241 = vld [vmem:[%s7 + $0x368] sm:$0xff]
  %v10242 = vld [vmem:[%s7 + $0x370] sm:$0xff]
  %v10243 = vld [vmem:[%s7 + $0x378] sm:$0xff]
  %v10244 = vld [vmem:[%s7 + $0x380] sm:$0xff]
  %v10245 = vld [vmem:[%s7 + $0x388] sm:$0xff]
  %v10246 = vld [vmem:[%s7 + $0x390] sm:$0xff]
  %v10247 = vld [vmem:[%s7 + $0x398] sm:$0xff]
  %v10248 = vld [vmem:[%s7 + $0x3a0] sm:$0xff]
  %v10249 = vld [vmem:[%s7 + $0x3a8] sm:$0xff]
  %v10250 = vld [vmem:[%s7 + $0x3b0] sm:$0xff]
  %v10251 = vld [vmem:[%s7 + $0x3b8] sm:$0xff]
  %v10252 = vld [vmem:[%s7 + $0x3c0] sm:$0xff]
  %v10253 = vld [vmem:[%s7 + $0x3c8] sm:$0xff]
  %v10254 = vld [vmem:[%s7 + $0x3d0] sm:$0xff]
  %v10255 = vld [vmem:[%s7 + $0x3d8] sm:$0xff]
  %v10256 = vld [vmem:[%s7 + $0x3e0] sm:$0xff]
  %v10257 = vld [vmem:[%s7 + $0x3e8] sm:$0xff]
  %v10258 = vld [vmem:[%s7 + $0x3f0] sm:$0xff]
  %v10259 = vld [vmem:[%s7 + $0x3f8] sm:$0xff]
  %v10260 = vld [vmem:[%s7 + $0x400] sm:$0xff]
  %v10261 = vld [vmem:[%s7 + $0x408] sm:$0xff]
  %v10262 = vld [vmem:[%s7 + $0x410] sm:$0xff]
  %v10263 = vld [vmem:[%s7 + $0x418] sm:$0xff]
  %v10264 = vld [vmem:[%s7 + $0x420] sm:$0xff]
  %v10265 = vld [vmem:[%s7 + $0x428] sm:$0xff]
  %v10266 = vld [vmem:[%s7 + $0x430] sm:$0xff]
  %v10267 = vld [vmem:[%s7 + $0x438] sm:$0xff]
  %v10268 = vld [vmem:[%s7 + $0x440] sm:$0xff]
  %v10269 = vld [vmem:[%s7 + $0x448] sm:$0xff]
  %v10270 = vld [vmem:[%s7 + $0x450] sm:$0xff]
  %v10271 = vld [vmem:[%s7 + $0x458] sm:$0xff]
  %v10272 = vld [vmem:[%s7 + $0x460] sm:$0xff]
  %v10273 = vld [vmem:[%s7 + $0x468] sm:$0xff]
  %v10274 = vld [vmem:[%s7 + $0x470] sm:$0xff]
  %v10275 = vld [vmem:[%s7 + $0x478] sm:$0xff]
  %v10276 = vld [vmem:[%s7 + $0x480] sm:$0xff]
  %v10277 = vld [vmem:[%s7 + $0x488] sm:$0xff]
  %v10278 = vld [vmem:[%s7 + $0x490] sm:$0xff]
  %v10279 = vld [vmem:[%s7 + $0x498] sm:$0xff]
  %v10280 = vld [vmem:[%s7 + $0x4a0] sm:$0xff]
  %v10281 = vld [vmem:[%s7 + $0x4a8] sm:$0xff]
  %v10282 = vld [vmem:[%s7 + $0x4b0] sm:$0xff]
  %v10283 = vld [vmem:[%s7 + $0x4b8] sm:$0xff]
  %v10284 = vld [vmem:[%s7 + $0x4c0] sm:$0xff]
  %v10285 = vld [vmem:[%s7 + $0x4c8] sm:$0xff]
  %v10286 = vld [vmem:[%s7 + $0x4d0] sm:$0xff]
  %v10287 = vld [vmem:[%s7 + $0x4d8] sm:$0xff]
  %v10288 = vld [vmem:[%s7 + $0x4e0] sm:$0xff]
  %v10289 = vld [vmem:[%s7 + $0x4e8] sm:$0xff]
  %v10290 = vld [vmem:[%s7 + $0x4f0] sm:$0xff]
  %v10291 = vld [vmem:[%s7 + $0x4f8] sm:$0xff]
  %v10292 = vld [vmem:[%s7 + $0x500] sm:$0xff]
  %v10293 = vld [vmem:[%s7 + $0x508] sm:$0xff]
  %v10294 = vld [vmem:[%s7 + $0x510] sm:$0xff]
  %v10295 = vld [vmem:[%s7 + $0x518] sm:$0xff]
  %v10296 = vld [vmem:[%s7 + $0x520] sm:$0xff]
  %v10297 = vld [vmem:[%s7 + $0x528] sm:$0xff]
  %v10298 = vld [vmem:[%s7 + $0x530] sm:$0xff]
  %v10299 = vld [vmem:[%s7 + $0x538] sm:$0xff]
  %v10300 = vld [vmem:[%s7 + $0x540] sm:$0xff]
  %v10301 = vld [vmem:[%s7 + $0x548] sm:$0xff]
  %v10302 = vld [vmem:[%s7 + $0x550] sm:$0xff]
  %v10303 = vld [vmem:[%s7 + $0x558] sm:$0xff]
  %v10304 = vld [vmem:[%s7 + $0x560] sm:$0xff]
  %v10305 = vld [vmem:[%s7 + $0x568] sm:$0xff]
  %v10306 = vld [vmem:[%s7 + $0x570] sm:$0xff]
  %v10307 = vld [vmem:[%s7 + $0x578] sm:$0xff]
  %v10308 = vld [vmem:[%s7 + $0x580] sm:$0xff]
  %v10309 = vld [vmem:[%s7 + $0x588] sm:$0xff]
  %v10310 = vld [vmem:[%s7 + $0x590] sm:$0xff]
  %v10311 = vld [vmem:[%s7 + $0x598] sm:$0xff]
  %v10312 = vld [vmem:[%s7 + $0x5a0] sm:$0xff]
  %v10313 = vld [vmem:[%s7 + $0x5a8] sm:$0xff]
  %v10314 = vld [vmem:[%s7 + $0x5b0] sm:$0xff]
  %v10315 = vld [vmem:[%s7 + $0x5b8] sm:$0xff]
  %v10316 = vld [vmem:[%s7 + $0x5c0] sm:$0xff]
  %v10317 = vld [vmem:[%s7 + $0x5c8] sm:$0xff]
  %v10318 = vld [vmem:[%s7 + $0x5d0] sm:$0xff]
  %v10319 = vld [vmem:[%s7 + $0x5d8] sm:$0xff]
  %v10320 = vld [vmem:[%s7 + $0x5e0] sm:$0xff]
  %v10321 = vld [vmem:[%s7 + $0x5e8] sm:$0xff]
  %v10322 = vld [vmem:[%s7 + $0x5f0] sm:$0xff]
  %v10323 = vld [vmem:[%s7 + $0x5f8] sm:$0xff]
  %v10324 = vld [vmem:[%s7 + $0x600] sm:$0xff]
  %v10325 = vld [vmem:[%s7 + $0x608] sm:$0xff]
  %v10326 = vld [vmem:[%s7 + $0x610] sm:$0xff]
  %v10327 = vld [vmem:[%s7 + $0x618] sm:$0xff]
  %v10328 = vld [vmem:[%s7 + $0x620] sm:$0xff]
  %v10329 = vld [vmem:[%s7 + $0x628] sm:$0xff]
  %v10330 = vld [vmem:[%s7 + $0x630] sm:$0xff]
  %v10331 = vld [vmem:[%s7 + $0x638] sm:$0xff]
  %v10332 = vld [vmem:[%s7 + $0x640] sm:$0xff]
  %v10333 = vld [vmem:[%s7 + $0x648] sm:$0xff]
  %v10334 = vld [vmem:[%s7 + $0x650] sm:$0xff]
  %v10335 = vld [vmem:[%s7 + $0x658] sm:$0xff]
  %v10336 = vld [vmem:[%s7 + $0x660] sm:$0xff]
  %v10337 = vld [vmem:[%s7 + $0x668] sm:$0xff]
  %v10338 = vld [vmem:[%s7 + $0x670] sm:$0xff]
  %v10339 = vld [vmem:[%s7 + $0x678] sm:$0xff]
  %v10340 = vld [vmem:[%s7 + $0x680] sm:$0xff]
  %v10341 = vld [vmem:[%s7 + $0x688] sm:$0xff]
  %v10342 = vld [vmem:[%s7 + $0x690] sm:$0xff]
  %v10343 = vld [vmem:[%s7 + $0x698] sm:$0xff]
  %v10344 = vld [vmem:[%s7 + $0x6a0] sm:$0xff]
  %v10345 = vld [vmem:[%s7 + $0x6a8] sm:$0xff]
  %v10346 = vld [vmem:[%s7 + $0x6b0] sm:$0xff]
  %v10347 = vld [vmem:[%s7 + $0x6b8] sm:$0xff]
  %v10348 = vld [vmem:[%s7 + $0x6c0] sm:$0xff]
  %v10349 = vld [vmem:[%s7 + $0x6c8] sm:$0xff]
  %v10350 = vld [vmem:[%s7 + $0x6d0] sm:$0xff]
  %v10351 = vld [vmem:[%s7 + $0x6d8] sm:$0xff]
  %v10352 = vld [vmem:[%s7 + $0x6e0] sm:$0xff]
  %v10353 = vld [vmem:[%s7 + $0x6e8] sm:$0xff]
  %v10354 = vld [vmem:[%s7 + $0x6f0] sm:$0xff]
  %v10355 = vld [vmem:[%s7 + $0x6f8] sm:$0xff]
  %v10356 = vld [vmem:[%s7 + $0x700] sm:$0xff]
  %v10357 = vld [vmem:[%s7 + $0x708] sm:$0xff]
  %v10358 = vld [vmem:[%s7 + $0x710] sm:$0xff]
  %v10359 = vld [vmem:[%s7 + $0x718] sm:$0xff]
  %v10360 = vld [vmem:[%s7 + $0x720] sm:$0xff]
  %v10361 = vld [vmem:[%s7 + $0x728] sm:$0xff]
  %v10362 = vld [vmem:[%s7 + $0x730] sm:$0xff]
  %v10363 = vld [vmem:[%s7 + $0x738] sm:$0xff]
  %v10364 = vld [vmem:[%s7 + $0x740] sm:$0xff]
  %v10365 = vld [vmem:[%s7 + $0x748] sm:$0xff]
  %v10366 = vld [vmem:[%s7 + $0x750] sm:$0xff]
  %v10367 = vld [vmem:[%s7 + $0x758] sm:$0xff]
  %v10368 = vld [vmem:[%s7 + $0x760] sm:$0xff]
  %v10369 = vld [vmem:[%s7 + $0x768] sm:$0xff]
  %v10370 = vld [vmem:[%s7 + $0x770] sm:$0xff]
  %v10371 = vld [vmem:[%s7 + $0x778] sm:$0xff]
  %v10372 = vld [vmem:[%s7 + $0x780] sm:$0xff]
  %v10373 = vld [vmem:[%s7 + $0x788] sm:$0xff]
  %v10374 = vld [vmem:[%s7 + $0x790] sm:$0xff]
  %v10375 = vld [vmem:[%s7 + $0x798] sm:$0xff]
  %v10376 = vld [vmem:[%s7 + $0x7a0] sm:$0xff]
  %v10377 = vld [vmem:[%s7 + $0x7a8] sm:$0xff]
  %v10378 = vld [vmem:[%s7 + $0x7b0] sm:$0xff]
  %v10379 = vld [vmem:[%s7 + $0x7b8] sm:$0xff]
  %v10380 = vld [vmem:[%s7 + $0x7c0] sm:$0xff]
  %v10381 = vld [vmem:[%s7 + $0x7c8] sm:$0xff]
  %v10382 = vld [vmem:[%s7 + $0x7d0] sm:$0xff]
  %v10383 = vld [vmem:[%s7 + $0x7d8] sm:$0xff]
  %v10384 = vld [vmem:[%s7 + $0x7e0] sm:$0xff]
  %v10385 = vld [vmem:[%s7 + $0x7e8] sm:$0xff]
  %v10386 = vld [vmem:[%s7 + $0x7f0] sm:$0xff]
  %v10387 = vld [vmem:[%s7 + $0x7f8] sm:$0xff]
  %v10388 = vld [vmem:[%s8] sm:$0x3]
  %v10390 = vlaneseq
  %v10391 = vshrl.u32 %v10390, 7
  %v10392 = vsub.s32 0, %v10391
  %v10393 = vrot.slane %v10388, %v10392
  %v10394 = vlaneseq
  %v10395 = vshrl.u32 %v10394, 7
  %v10396 = vsub.s32 1, %v10395
  %v10397 = vrot.slane %v10388, %v10396
  %v10656 = vunpack.c.l.b16 %v10132
  %v10657 = vunpack.c.h.b16 %v10132
  %v10658 = vunpack.c.l.b16 %v10133
  %v10659 = vunpack.c.h.b16 %v10133
  %v10660 = vunpack.c.l.b16 %v10134
  %v10661 = vunpack.c.h.b16 %v10134
  %v10662 = vunpack.c.l.b16 %v10135
  %v10663 = vunpack.c.h.b16 %v10135
  %v10664 = vunpack.c.l.b16 %v10136
  %v10665 = vunpack.c.h.b16 %v10136
  %v10666 = vunpack.c.l.b16 %v10137
  %v10667 = vunpack.c.h.b16 %v10137
  %v10668 = vunpack.c.l.b16 %v10138
  %v10669 = vunpack.c.h.b16 %v10138
  %v10670 = vunpack.c.l.b16 %v10139
  %v10671 = vunpack.c.h.b16 %v10139
  %v10672 = vunpack.c.l.b16 %v10140
  %v10673 = vunpack.c.h.b16 %v10140
  %v10674 = vunpack.c.l.b16 %v10141
  %v10675 = vunpack.c.h.b16 %v10141
  %v10676 = vunpack.c.l.b16 %v10142
  %v10677 = vunpack.c.h.b16 %v10142
  %v10678 = vunpack.c.l.b16 %v10143
  %v10679 = vunpack.c.h.b16 %v10143
  %v10680 = vunpack.c.l.b16 %v10144
  %v10681 = vunpack.c.h.b16 %v10144
  %v10682 = vunpack.c.l.b16 %v10145
  %v10683 = vunpack.c.h.b16 %v10145
  %v10684 = vunpack.c.l.b16 %v10146
  %v10685 = vunpack.c.h.b16 %v10146
  %v10686 = vunpack.c.l.b16 %v10147
  %v10687 = vunpack.c.h.b16 %v10147
  %v10688 = vunpack.c.l.b16 %v10148
  %v10689 = vunpack.c.h.b16 %v10148
  %v10690 = vunpack.c.l.b16 %v10149
  %v10691 = vunpack.c.h.b16 %v10149
  %v10692 = vunpack.c.l.b16 %v10150
  %v10693 = vunpack.c.h.b16 %v10150
  %v10694 = vunpack.c.l.b16 %v10151
  %v10695 = vunpack.c.h.b16 %v10151
  %v10696 = vunpack.c.l.b16 %v10152
  %v10697 = vunpack.c.h.b16 %v10152
  %v10698 = vunpack.c.l.b16 %v10153
  %v10699 = vunpack.c.h.b16 %v10153
  %v10700 = vunpack.c.l.b16 %v10154
  %v10701 = vunpack.c.h.b16 %v10154
  %v10702 = vunpack.c.l.b16 %v10155
  %v10703 = vunpack.c.h.b16 %v10155
  %v10704 = vunpack.c.l.b16 %v10156
  %v10705 = vunpack.c.h.b16 %v10156
  %v10706 = vunpack.c.l.b16 %v10157
  %v10707 = vunpack.c.h.b16 %v10157
  %v10708 = vunpack.c.l.b16 %v10158
  %v10709 = vunpack.c.h.b16 %v10158
  %v10710 = vunpack.c.l.b16 %v10159
  %v10711 = vunpack.c.h.b16 %v10159
  %v10712 = vunpack.c.l.b16 %v10160
  %v10713 = vunpack.c.h.b16 %v10160
  %v10714 = vunpack.c.l.b16 %v10161
  %v10715 = vunpack.c.h.b16 %v10161
  %v10716 = vunpack.c.l.b16 %v10162
  %v10717 = vunpack.c.h.b16 %v10162
  %v10718 = vunpack.c.l.b16 %v10163
  %v10719 = vunpack.c.h.b16 %v10163
  %v10720 = vunpack.c.l.b16 %v10164
  %v10721 = vunpack.c.h.b16 %v10164
  %v10722 = vunpack.c.l.b16 %v10165
  %v10723 = vunpack.c.h.b16 %v10165
  %v10724 = vunpack.c.l.b16 %v10166
  %v10725 = vunpack.c.h.b16 %v10166
  %v10726 = vunpack.c.l.b16 %v10167
  %v10727 = vunpack.c.h.b16 %v10167
  %v10728 = vunpack.c.l.b16 %v10168
  %v10729 = vunpack.c.h.b16 %v10168
  %v10730 = vunpack.c.l.b16 %v10169
  %v10731 = vunpack.c.h.b16 %v10169
  %v10732 = vunpack.c.l.b16 %v10170
  %v10733 = vunpack.c.h.b16 %v10170
  %v10734 = vunpack.c.l.b16 %v10171
  %v10735 = vunpack.c.h.b16 %v10171
  %v10736 = vunpack.c.l.b16 %v10172
  %v10737 = vunpack.c.h.b16 %v10172
  %v10738 = vunpack.c.l.b16 %v10173
  %v10739 = vunpack.c.h.b16 %v10173
  %v10740 = vunpack.c.l.b16 %v10174
  %v10741 = vunpack.c.h.b16 %v10174
  %v10742 = vunpack.c.l.b16 %v10175
  %v10743 = vunpack.c.h.b16 %v10175
  %v10744 = vunpack.c.l.b16 %v10176
  %v10745 = vunpack.c.h.b16 %v10176
  %v10746 = vunpack.c.l.b16 %v10177
  %v10747 = vunpack.c.h.b16 %v10177
  %v10748 = vunpack.c.l.b16 %v10178
  %v10749 = vunpack.c.h.b16 %v10178
  %v10750 = vunpack.c.l.b16 %v10179
  %v10751 = vunpack.c.h.b16 %v10179
  %v10752 = vunpack.c.l.b16 %v10180
  %v10753 = vunpack.c.h.b16 %v10180
  %v10754 = vunpack.c.l.b16 %v10181
  %v10755 = vunpack.c.h.b16 %v10181
  %v10756 = vunpack.c.l.b16 %v10182
  %v10757 = vunpack.c.h.b16 %v10182
  %v10758 = vunpack.c.l.b16 %v10183
  %v10759 = vunpack.c.h.b16 %v10183
  %v10760 = vunpack.c.l.b16 %v10184
  %v10761 = vunpack.c.h.b16 %v10184
  %v10762 = vunpack.c.l.b16 %v10185
  %v10763 = vunpack.c.h.b16 %v10185
  %v10764 = vunpack.c.l.b16 %v10186
  %v10765 = vunpack.c.h.b16 %v10186
  %v10766 = vunpack.c.l.b16 %v10187
  %v10767 = vunpack.c.h.b16 %v10187
  %v10768 = vunpack.c.l.b16 %v10188
  %v10769 = vunpack.c.h.b16 %v10188
  %v10770 = vunpack.c.l.b16 %v10189
  %v10771 = vunpack.c.h.b16 %v10189
  %v10772 = vunpack.c.l.b16 %v10190
  %v10773 = vunpack.c.h.b16 %v10190
  %v10774 = vunpack.c.l.b16 %v10191
  %v10775 = vunpack.c.h.b16 %v10191
  %v10776 = vunpack.c.l.b16 %v10192
  %v10777 = vunpack.c.h.b16 %v10192
  %v10778 = vunpack.c.l.b16 %v10193
  %v10779 = vunpack.c.h.b16 %v10193
  %v10780 = vunpack.c.l.b16 %v10194
  %v10781 = vunpack.c.h.b16 %v10194
  %v10782 = vunpack.c.l.b16 %v10195
  %v10783 = vunpack.c.h.b16 %v10195
  %v10784 = vunpack.c.l.b16 %v10196
  %v10785 = vunpack.c.h.b16 %v10196
  %v10786 = vunpack.c.l.b16 %v10197
  %v10787 = vunpack.c.h.b16 %v10197
  %v10788 = vunpack.c.l.b16 %v10198
  %v10789 = vunpack.c.h.b16 %v10198
  %v10790 = vunpack.c.l.b16 %v10199
  %v10791 = vunpack.c.h.b16 %v10199
  %v10792 = vunpack.c.l.b16 %v10200
  %v10793 = vunpack.c.h.b16 %v10200
  %v10794 = vunpack.c.l.b16 %v10201
  %v10795 = vunpack.c.h.b16 %v10201
  %v10796 = vunpack.c.l.b16 %v10202
  %v10797 = vunpack.c.h.b16 %v10202
  %v10798 = vunpack.c.l.b16 %v10203
  %v10799 = vunpack.c.h.b16 %v10203
  %v10800 = vunpack.c.l.b16 %v10204
  %v10801 = vunpack.c.h.b16 %v10204
  %v10802 = vunpack.c.l.b16 %v10205
  %v10803 = vunpack.c.h.b16 %v10205
  %v10804 = vunpack.c.l.b16 %v10206
  %v10805 = vunpack.c.h.b16 %v10206
  %v10806 = vunpack.c.l.b16 %v10207
  %v10807 = vunpack.c.h.b16 %v10207
  %v10808 = vunpack.c.l.b16 %v10208
  %v10809 = vunpack.c.h.b16 %v10208
  %v10810 = vunpack.c.l.b16 %v10209
  %v10811 = vunpack.c.h.b16 %v10209
  %v10812 = vunpack.c.l.b16 %v10210
  %v10813 = vunpack.c.h.b16 %v10210
  %v10814 = vunpack.c.l.b16 %v10211
  %v10815 = vunpack.c.h.b16 %v10211
  %v10816 = vunpack.c.l.b16 %v10212
  %v10817 = vunpack.c.h.b16 %v10212
  %v10818 = vunpack.c.l.b16 %v10213
  %v10819 = vunpack.c.h.b16 %v10213
  %v10820 = vunpack.c.l.b16 %v10214
  %v10821 = vunpack.c.h.b16 %v10214
  %v10822 = vunpack.c.l.b16 %v10215
  %v10823 = vunpack.c.h.b16 %v10215
  %v10824 = vunpack.c.l.b16 %v10216
  %v10825 = vunpack.c.h.b16 %v10216
  %v10826 = vunpack.c.l.b16 %v10217
  %v10827 = vunpack.c.h.b16 %v10217
  %v10828 = vunpack.c.l.b16 %v10218
  %v10829 = vunpack.c.h.b16 %v10218
  %v10830 = vunpack.c.l.b16 %v10219
  %v10831 = vunpack.c.h.b16 %v10219
  %v10832 = vunpack.c.l.b16 %v10220
  %v10833 = vunpack.c.h.b16 %v10220
  %v10834 = vunpack.c.l.b16 %v10221
  %v10835 = vunpack.c.h.b16 %v10221
  %v10836 = vunpack.c.l.b16 %v10222
  %v10837 = vunpack.c.h.b16 %v10222
  %v10838 = vunpack.c.l.b16 %v10223
  %v10839 = vunpack.c.h.b16 %v10223
  %v10840 = vunpack.c.l.b16 %v10224
  %v10841 = vunpack.c.h.b16 %v10224
  %v10842 = vunpack.c.l.b16 %v10225
  %v10843 = vunpack.c.h.b16 %v10225
  %v10844 = vunpack.c.l.b16 %v10226
  %v10845 = vunpack.c.h.b16 %v10226
  %v10846 = vunpack.c.l.b16 %v10227
  %v10847 = vunpack.c.h.b16 %v10227
  %v10848 = vunpack.c.l.b16 %v10228
  %v10849 = vunpack.c.h.b16 %v10228
  %v10850 = vunpack.c.l.b16 %v10229
  %v10851 = vunpack.c.h.b16 %v10229
  %v10852 = vunpack.c.l.b16 %v10230
  %v10853 = vunpack.c.h.b16 %v10230
  %v10854 = vunpack.c.l.b16 %v10231
  %v10855 = vunpack.c.h.b16 %v10231
  %v10856 = vunpack.c.l.b16 %v10232
  %v10857 = vunpack.c.h.b16 %v10232
  %v10858 = vunpack.c.l.b16 %v10233
  %v10859 = vunpack.c.h.b16 %v10233
  %v10860 = vunpack.c.l.b16 %v10234
  %v10861 = vunpack.c.h.b16 %v10234
  %v10862 = vunpack.c.l.b16 %v10235
  %v10863 = vunpack.c.h.b16 %v10235
  %v10864 = vunpack.c.l.b16 %v10236
  %v10865 = vunpack.c.h.b16 %v10236
  %v10866 = vunpack.c.l.b16 %v10237
  %v10867 = vunpack.c.h.b16 %v10237
  %v10868 = vunpack.c.l.b16 %v10238
  %v10869 = vunpack.c.h.b16 %v10238
  %v10870 = vunpack.c.l.b16 %v10239
  %v10871 = vunpack.c.h.b16 %v10239
  %v10872 = vunpack.c.l.b16 %v10240
  %v10873 = vunpack.c.h.b16 %v10240
  %v10874 = vunpack.c.l.b16 %v10241
  %v10875 = vunpack.c.h.b16 %v10241
  %v10876 = vunpack.c.l.b16 %v10242
  %v10877 = vunpack.c.h.b16 %v10242
  %v10878 = vunpack.c.l.b16 %v10243
  %v10879 = vunpack.c.h.b16 %v10243
  %v10880 = vunpack.c.l.b16 %v10244
  %v10881 = vunpack.c.h.b16 %v10244
  %v10882 = vunpack.c.l.b16 %v10245
  %v10883 = vunpack.c.h.b16 %v10245
  %v10884 = vunpack.c.l.b16 %v10246
  %v10885 = vunpack.c.h.b16 %v10246
  %v10886 = vunpack.c.l.b16 %v10247
  %v10887 = vunpack.c.h.b16 %v10247
  %v10888 = vunpack.c.l.b16 %v10248
  %v10889 = vunpack.c.h.b16 %v10248
  %v10890 = vunpack.c.l.b16 %v10249
  %v10891 = vunpack.c.h.b16 %v10249
  %v10892 = vunpack.c.l.b16 %v10250
  %v10893 = vunpack.c.h.b16 %v10250
  %v10894 = vunpack.c.l.b16 %v10251
  %v10895 = vunpack.c.h.b16 %v10251
  %v10896 = vunpack.c.l.b16 %v10252
  %v10897 = vunpack.c.h.b16 %v10252
  %v10898 = vunpack.c.l.b16 %v10253
  %v10899 = vunpack.c.h.b16 %v10253
  %v10900 = vunpack.c.l.b16 %v10254
  %v10901 = vunpack.c.h.b16 %v10254
  %v10902 = vunpack.c.l.b16 %v10255
  %v10903 = vunpack.c.h.b16 %v10255
  %v10904 = vunpack.c.l.b16 %v10256
  %v10905 = vunpack.c.h.b16 %v10256
  %v10906 = vunpack.c.l.b16 %v10257
  %v10907 = vunpack.c.h.b16 %v10257
  %v10908 = vunpack.c.l.b16 %v10258
  %v10909 = vunpack.c.h.b16 %v10258
  %v10910 = vunpack.c.l.b16 %v10259
  %v10911 = vunpack.c.h.b16 %v10259
  %v10912 = vunpack.c.l.b16 %v10260
  %v10913 = vunpack.c.h.b16 %v10260
  %v10914 = vunpack.c.l.b16 %v10261
  %v10915 = vunpack.c.h.b16 %v10261
  %v10916 = vunpack.c.l.b16 %v10262
  %v10917 = vunpack.c.h.b16 %v10262
  %v10918 = vunpack.c.l.b16 %v10263
  %v10919 = vunpack.c.h.b16 %v10263
  %v10920 = vunpack.c.l.b16 %v10264
  %v10921 = vunpack.c.h.b16 %v10264
  %v10922 = vunpack.c.l.b16 %v10265
  %v10923 = vunpack.c.h.b16 %v10265
  %v10924 = vunpack.c.l.b16 %v10266
  %v10925 = vunpack.c.h.b16 %v10266
  %v10926 = vunpack.c.l.b16 %v10267
  %v10927 = vunpack.c.h.b16 %v10267
  %v10928 = vunpack.c.l.b16 %v10268
  %v10929 = vunpack.c.h.b16 %v10268
  %v10930 = vunpack.c.l.b16 %v10269
  %v10931 = vunpack.c.h.b16 %v10269
  %v10932 = vunpack.c.l.b16 %v10270
  %v10933 = vunpack.c.h.b16 %v10270
  %v10934 = vunpack.c.l.b16 %v10271
  %v10935 = vunpack.c.h.b16 %v10271
  %v10936 = vunpack.c.l.b16 %v10272
  %v10937 = vunpack.c.h.b16 %v10272
  %v10938 = vunpack.c.l.b16 %v10273
  %v10939 = vunpack.c.h.b16 %v10273
  %v10940 = vunpack.c.l.b16 %v10274
  %v10941 = vunpack.c.h.b16 %v10274
  %v10942 = vunpack.c.l.b16 %v10275
  %v10943 = vunpack.c.h.b16 %v10275
  %v10944 = vunpack.c.l.b16 %v10276
  %v10945 = vunpack.c.h.b16 %v10276
  %v10946 = vunpack.c.l.b16 %v10277
  %v10947 = vunpack.c.h.b16 %v10277
  %v10948 = vunpack.c.l.b16 %v10278
  %v10949 = vunpack.c.h.b16 %v10278
  %v10950 = vunpack.c.l.b16 %v10279
  %v10951 = vunpack.c.h.b16 %v10279
  %v10952 = vunpack.c.l.b16 %v10280
  %v10953 = vunpack.c.h.b16 %v10280
  %v10954 = vunpack.c.l.b16 %v10281
  %v10955 = vunpack.c.h.b16 %v10281
  %v10956 = vunpack.c.l.b16 %v10282
  %v10957 = vunpack.c.h.b16 %v10282
  %v10958 = vunpack.c.l.b16 %v10283
  %v10959 = vunpack.c.h.b16 %v10283
  %v10960 = vunpack.c.l.b16 %v10284
  %v10961 = vunpack.c.h.b16 %v10284
  %v10962 = vunpack.c.l.b16 %v10285
  %v10963 = vunpack.c.h.b16 %v10285
  %v10964 = vunpack.c.l.b16 %v10286
  %v10965 = vunpack.c.h.b16 %v10286
  %v10966 = vunpack.c.l.b16 %v10287
  %v10967 = vunpack.c.h.b16 %v10287
  %v10968 = vunpack.c.l.b16 %v10288
  %v10969 = vunpack.c.h.b16 %v10288
  %v10970 = vunpack.c.l.b16 %v10289
  %v10971 = vunpack.c.h.b16 %v10289
  %v10972 = vunpack.c.l.b16 %v10290
  %v10973 = vunpack.c.h.b16 %v10290
  %v10974 = vunpack.c.l.b16 %v10291
  %v10975 = vunpack.c.h.b16 %v10291
  %v10976 = vunpack.c.l.b16 %v10292
  %v10977 = vunpack.c.h.b16 %v10292
  %v10978 = vunpack.c.l.b16 %v10293
  %v10979 = vunpack.c.h.b16 %v10293
  %v10980 = vunpack.c.l.b16 %v10294
  %v10981 = vunpack.c.h.b16 %v10294
  %v10982 = vunpack.c.l.b16 %v10295
  %v10983 = vunpack.c.h.b16 %v10295
  %v10984 = vunpack.c.l.b16 %v10296
  %v10985 = vunpack.c.h.b16 %v10296
  %v10986 = vunpack.c.l.b16 %v10297
  %v10987 = vunpack.c.h.b16 %v10297
  %v10988 = vunpack.c.l.b16 %v10298
  %v10989 = vunpack.c.h.b16 %v10298
  %v10990 = vunpack.c.l.b16 %v10299
  %v10991 = vunpack.c.h.b16 %v10299
  %v10992 = vunpack.c.l.b16 %v10300
  %v10993 = vunpack.c.h.b16 %v10300
  %v10994 = vunpack.c.l.b16 %v10301
  %v10995 = vunpack.c.h.b16 %v10301
  %v10996 = vunpack.c.l.b16 %v10302
  %v10997 = vunpack.c.h.b16 %v10302
  %v10998 = vunpack.c.l.b16 %v10303
  %v10999 = vunpack.c.h.b16 %v10303
  %v11000 = vunpack.c.l.b16 %v10304
  %v11001 = vunpack.c.h.b16 %v10304
  %v11002 = vunpack.c.l.b16 %v10305
  %v11003 = vunpack.c.h.b16 %v10305
  %v11004 = vunpack.c.l.b16 %v10306
  %v11005 = vunpack.c.h.b16 %v10306
  %v11006 = vunpack.c.l.b16 %v10307
  %v11007 = vunpack.c.h.b16 %v10307
  %v11008 = vunpack.c.l.b16 %v10308
  %v11009 = vunpack.c.h.b16 %v10308
  %v11010 = vunpack.c.l.b16 %v10309
  %v11011 = vunpack.c.h.b16 %v10309
  %v11012 = vunpack.c.l.b16 %v10310
  %v11013 = vunpack.c.h.b16 %v10310
  %v11014 = vunpack.c.l.b16 %v10311
  %v11015 = vunpack.c.h.b16 %v10311
  %v11016 = vunpack.c.l.b16 %v10312
  %v11017 = vunpack.c.h.b16 %v10312
  %v11018 = vunpack.c.l.b16 %v10313
  %v11019 = vunpack.c.h.b16 %v10313
  %v11020 = vunpack.c.l.b16 %v10314
  %v11021 = vunpack.c.h.b16 %v10314
  %v11022 = vunpack.c.l.b16 %v10315
  %v11023 = vunpack.c.h.b16 %v10315
  %v11024 = vunpack.c.l.b16 %v10316
  %v11025 = vunpack.c.h.b16 %v10316
  %v11026 = vunpack.c.l.b16 %v10317
  %v11027 = vunpack.c.h.b16 %v10317
  %v11028 = vunpack.c.l.b16 %v10318
  %v11029 = vunpack.c.h.b16 %v10318
  %v11030 = vunpack.c.l.b16 %v10319
  %v11031 = vunpack.c.h.b16 %v10319
  %v11032 = vunpack.c.l.b16 %v10320
  %v11033 = vunpack.c.h.b16 %v10320
  %v11034 = vunpack.c.l.b16 %v10321
  %v11035 = vunpack.c.h.b16 %v10321
  %v11036 = vunpack.c.l.b16 %v10322
  %v11037 = vunpack.c.h.b16 %v10322
  %v11038 = vunpack.c.l.b16 %v10323
  %v11039 = vunpack.c.h.b16 %v10323
  %v11040 = vunpack.c.l.b16 %v10324
  %v11041 = vunpack.c.h.b16 %v10324
  %v11042 = vunpack.c.l.b16 %v10325
  %v11043 = vunpack.c.h.b16 %v10325
  %v11044 = vunpack.c.l.b16 %v10326
  %v11045 = vunpack.c.h.b16 %v10326
  %v11046 = vunpack.c.l.b16 %v10327
  %v11047 = vunpack.c.h.b16 %v10327
  %v11048 = vunpack.c.l.b16 %v10328
  %v11049 = vunpack.c.h.b16 %v10328
  %v11050 = vunpack.c.l.b16 %v10329
  %v11051 = vunpack.c.h.b16 %v10329
  %v11052 = vunpack.c.l.b16 %v10330
  %v11053 = vunpack.c.h.b16 %v10330
  %v11054 = vunpack.c.l.b16 %v10331
  %v11055 = vunpack.c.h.b16 %v10331
  %v11056 = vunpack.c.l.b16 %v10332
  %v11057 = vunpack.c.h.b16 %v10332
  %v11058 = vunpack.c.l.b16 %v10333
  %v11059 = vunpack.c.h.b16 %v10333
  %v11060 = vunpack.c.l.b16 %v10334
  %v11061 = vunpack.c.h.b16 %v10334
  %v11062 = vunpack.c.l.b16 %v10335
  %v11063 = vunpack.c.h.b16 %v10335
  %v11064 = vunpack.c.l.b16 %v10336
  %v11065 = vunpack.c.h.b16 %v10336
  %v11066 = vunpack.c.l.b16 %v10337
  %v11067 = vunpack.c.h.b16 %v10337
  %v11068 = vunpack.c.l.b16 %v10338
  %v11069 = vunpack.c.h.b16 %v10338
  %v11070 = vunpack.c.l.b16 %v10339
  %v11071 = vunpack.c.h.b16 %v10339
  %v11072 = vunpack.c.l.b16 %v10340
  %v11073 = vunpack.c.h.b16 %v10340
  %v11074 = vunpack.c.l.b16 %v10341
  %v11075 = vunpack.c.h.b16 %v10341
  %v11076 = vunpack.c.l.b16 %v10342
  %v11077 = vunpack.c.h.b16 %v10342
  %v11078 = vunpack.c.l.b16 %v10343
  %v11079 = vunpack.c.h.b16 %v10343
  %v11080 = vunpack.c.l.b16 %v10344
  %v11081 = vunpack.c.h.b16 %v10344
  %v11082 = vunpack.c.l.b16 %v10345
  %v11083 = vunpack.c.h.b16 %v10345
  %v11084 = vunpack.c.l.b16 %v10346
  %v11085 = vunpack.c.h.b16 %v10346
  %v11086 = vunpack.c.l.b16 %v10347
  %v11087 = vunpack.c.h.b16 %v10347
  %v11088 = vunpack.c.l.b16 %v10348
  %v11089 = vunpack.c.h.b16 %v10348
  %v11090 = vunpack.c.l.b16 %v10349
  %v11091 = vunpack.c.h.b16 %v10349
  %v11092 = vunpack.c.l.b16 %v10350
  %v11093 = vunpack.c.h.b16 %v10350
  %v11094 = vunpack.c.l.b16 %v10351
  %v11095 = vunpack.c.h.b16 %v10351
  %v11096 = vunpack.c.l.b16 %v10352
  %v11097 = vunpack.c.h.b16 %v10352
  %v11098 = vunpack.c.l.b16 %v10353
  %v11099 = vunpack.c.h.b16 %v10353
  %v11100 = vunpack.c.l.b16 %v10354
  %v11101 = vunpack.c.h.b16 %v10354
  %v11102 = vunpack.c.l.b16 %v10355
  %v11103 = vunpack.c.h.b16 %v10355
  %v11104 = vunpack.c.l.b16 %v10356
  %v11105 = vunpack.c.h.b16 %v10356
  %v11106 = vunpack.c.l.b16 %v10357
  %v11107 = vunpack.c.h.b16 %v10357
  %v11108 = vunpack.c.l.b16 %v10358
  %v11109 = vunpack.c.h.b16 %v10358
  %v11110 = vunpack.c.l.b16 %v10359
  %v11111 = vunpack.c.h.b16 %v10359
  %v11112 = vunpack.c.l.b16 %v10360
  %v11113 = vunpack.c.h.b16 %v10360
  %v11114 = vunpack.c.l.b16 %v10361
  %v11115 = vunpack.c.h.b16 %v10361
  %v11116 = vunpack.c.l.b16 %v10362
  %v11117 = vunpack.c.h.b16 %v10362
  %v11118 = vunpack.c.l.b16 %v10363
  %v11119 = vunpack.c.h.b16 %v10363
  %v11120 = vunpack.c.l.b16 %v10364
  %v11121 = vunpack.c.h.b16 %v10364
  %v11122 = vunpack.c.l.b16 %v10365
  %v11123 = vunpack.c.h.b16 %v10365
  %v11124 = vunpack.c.l.b16 %v10366
  %v11125 = vunpack.c.h.b16 %v10366
  %v11126 = vunpack.c.l.b16 %v10367
  %v11127 = vunpack.c.h.b16 %v10367
  %v11128 = vunpack.c.l.b16 %v10368
  %v11129 = vunpack.c.h.b16 %v10368
  %v11130 = vunpack.c.l.b16 %v10369
  %v11131 = vunpack.c.h.b16 %v10369
  %v11132 = vunpack.c.l.b16 %v10370
  %v11133 = vunpack.c.h.b16 %v10370
  %v11134 = vunpack.c.l.b16 %v10371
  %v11135 = vunpack.c.h.b16 %v10371
  %v11136 = vunpack.c.l.b16 %v10372
  %v11137 = vunpack.c.h.b16 %v10372
  %v11138 = vunpack.c.l.b16 %v10373
  %v11139 = vunpack.c.h.b16 %v10373
  %v11140 = vunpack.c.l.b16 %v10374
  %v11141 = vunpack.c.h.b16 %v10374
  %v11142 = vunpack.c.l.b16 %v10375
  %v11143 = vunpack.c.h.b16 %v10375
  %v11144 = vunpack.c.l.b16 %v10376
  %v11145 = vunpack.c.h.b16 %v10376
  %v11146 = vunpack.c.l.b16 %v10377
  %v11147 = vunpack.c.h.b16 %v10377
  %v11148 = vunpack.c.l.b16 %v10378
  %v11149 = vunpack.c.h.b16 %v10378
  %v11150 = vunpack.c.l.b16 %v10379
  %v11151 = vunpack.c.h.b16 %v10379
  %v11152 = vunpack.c.l.b16 %v10380
  %v11153 = vunpack.c.h.b16 %v10380
  %v11154 = vunpack.c.l.b16 %v10381
  %v11155 = vunpack.c.h.b16 %v10381
  %v11156 = vunpack.c.l.b16 %v10382
  %v11157 = vunpack.c.h.b16 %v10382
  %v11158 = vunpack.c.l.b16 %v10383
  %v11159 = vunpack.c.h.b16 %v10383
  %v11160 = vunpack.c.l.b16 %v10384
  %v11161 = vunpack.c.h.b16 %v10384
  %v11162 = vunpack.c.l.b16 %v10385
  %v11163 = vunpack.c.h.b16 %v10385
  %v11164 = vunpack.c.l.b16 %v10386
  %v11165 = vunpack.c.h.b16 %v10386
  %v11166 = vunpack.c.l.b16 %v10387
  %v11167 = vunpack.c.h.b16 %v10387
  %v11168 = vpack.c.b16 %v10658, %v10656
  %v11169 = vpack.c.b16 %v10659, %v10657
  %v11170 = vpack.c.b16 %v10662, %v10660
  %v11171 = vpack.c.b16 %v10663, %v10661
  %v11172 = vpack.c.b16 %v10666, %v10664
  %v11173 = vpack.c.b16 %v10667, %v10665
  %v11174 = vpack.c.b16 %v10670, %v10668
  %v11175 = vpack.c.b16 %v10671, %v10669
  %v11176 = vpack.c.b16 %v10674, %v10672
  %v11177 = vpack.c.b16 %v10675, %v10673
  %v11178 = vpack.c.b16 %v10678, %v10676
  %v11179 = vpack.c.b16 %v10679, %v10677
  %v11180 = vpack.c.b16 %v10682, %v10680
  %v11181 = vpack.c.b16 %v10683, %v10681
  %v11182 = vpack.c.b16 %v10686, %v10684
  %v11183 = vpack.c.b16 %v10687, %v10685
  %v11184 = vpack.c.b16 %v10690, %v10688
  %v11185 = vpack.c.b16 %v10691, %v10689
  %v11186 = vpack.c.b16 %v10694, %v10692
  %v11187 = vpack.c.b16 %v10695, %v10693
  %v11188 = vpack.c.b16 %v10698, %v10696
  %v11189 = vpack.c.b16 %v10699, %v10697
  %v11190 = vpack.c.b16 %v10702, %v10700
  %v11191 = vpack.c.b16 %v10703, %v10701
  %v11192 = vpack.c.b16 %v10706, %v10704
  %v11193 = vpack.c.b16 %v10707, %v10705
  %v11194 = vpack.c.b16 %v10710, %v10708
  %v11195 = vpack.c.b16 %v10711, %v10709
  %v11196 = vpack.c.b16 %v10714, %v10712
  %v11197 = vpack.c.b16 %v10715, %v10713
  %v11198 = vpack.c.b16 %v10718, %v10716
  %v11199 = vpack.c.b16 %v10719, %v10717
  %v11200 = vpack.c.b16 %v10722, %v10720
  %v11201 = vpack.c.b16 %v10723, %v10721
  %v11202 = vpack.c.b16 %v10726, %v10724
  %v11203 = vpack.c.b16 %v10727, %v10725
  %v11204 = vpack.c.b16 %v10730, %v10728
  %v11205 = vpack.c.b16 %v10731, %v10729
  %v11206 = vpack.c.b16 %v10734, %v10732
  %v11207 = vpack.c.b16 %v10735, %v10733
  %v11208 = vpack.c.b16 %v10738, %v10736
  %v11209 = vpack.c.b16 %v10739, %v10737
  %v11210 = vpack.c.b16 %v10742, %v10740
  %v11211 = vpack.c.b16 %v10743, %v10741
  %v11212 = vpack.c.b16 %v10746, %v10744
  %v11213 = vpack.c.b16 %v10747, %v10745
  %v11214 = vpack.c.b16 %v10750, %v10748
  %v11215 = vpack.c.b16 %v10751, %v10749
  %v11216 = vpack.c.b16 %v10754, %v10752
  %v11217 = vpack.c.b16 %v10755, %v10753
  %v11218 = vpack.c.b16 %v10758, %v10756
  %v11219 = vpack.c.b16 %v10759, %v10757
  %v11220 = vpack.c.b16 %v10762, %v10760
  %v11221 = vpack.c.b16 %v10763, %v10761
  %v11222 = vpack.c.b16 %v10766, %v10764
  %v11223 = vpack.c.b16 %v10767, %v10765
  %v11224 = vpack.c.b16 %v10770, %v10768
  %v11225 = vpack.c.b16 %v10771, %v10769
  %v11226 = vpack.c.b16 %v10774, %v10772
  %v11227 = vpack.c.b16 %v10775, %v10773
  %v11228 = vpack.c.b16 %v10778, %v10776
  %v11229 = vpack.c.b16 %v10779, %v10777
  %v11230 = vpack.c.b16 %v10782, %v10780
  %v11231 = vpack.c.b16 %v10783, %v10781
  %v11232 = vpack.c.b16 %v10786, %v10784
  %v11233 = vpack.c.b16 %v10787, %v10785
  %v11234 = vpack.c.b16 %v10790, %v10788
  %v11235 = vpack.c.b16 %v10791, %v10789
  %v11236 = vpack.c.b16 %v10794, %v10792
  %v11237 = vpack.c.b16 %v10795, %v10793
  %v11238 = vpack.c.b16 %v10798, %v10796
  %v11239 = vpack.c.b16 %v10799, %v10797
  %v11240 = vpack.c.b16 %v10802, %v10800
  %v11241 = vpack.c.b16 %v10803, %v10801
  %v11242 = vpack.c.b16 %v10806, %v10804
  %v11243 = vpack.c.b16 %v10807, %v10805
  %v11244 = vpack.c.b16 %v10810, %v10808
  %v11245 = vpack.c.b16 %v10811, %v10809
  %v11246 = vpack.c.b16 %v10814, %v10812
  %v11247 = vpack.c.b16 %v10815, %v10813
  %v11248 = vpack.c.b16 %v10818, %v10816
  %v11249 = vpack.c.b16 %v10819, %v10817
  %v11250 = vpack.c.b16 %v10822, %v10820
  %v11251 = vpack.c.b16 %v10823, %v10821
  %v11252 = vpack.c.b16 %v10826, %v10824
  %v11253 = vpack.c.b16 %v10827, %v10825
  %v11254 = vpack.c.b16 %v10830, %v10828
  %v11255 = vpack.c.b16 %v10831, %v10829
  %v11256 = vpack.c.b16 %v10834, %v10832
  %v11257 = vpack.c.b16 %v10835, %v10833
  %v11258 = vpack.c.b16 %v10838, %v10836
  %v11259 = vpack.c.b16 %v10839, %v10837
  %v11260 = vpack.c.b16 %v10842, %v10840
  %v11261 = vpack.c.b16 %v10843, %v10841
  %v11262 = vpack.c.b16 %v10846, %v10844
  %v11263 = vpack.c.b16 %v10847, %v10845
  %v11264 = vpack.c.b16 %v10850, %v10848
  %v11265 = vpack.c.b16 %v10851, %v10849
  %v11266 = vpack.c.b16 %v10854, %v10852
  %v11267 = vpack.c.b16 %v10855, %v10853
  %v11268 = vpack.c.b16 %v10858, %v10856
  %v11269 = vpack.c.b16 %v10859, %v10857
  %v11270 = vpack.c.b16 %v10862, %v10860
  %v11271 = vpack.c.b16 %v10863, %v10861
  %v11272 = vpack.c.b16 %v10866, %v10864
  %v11273 = vpack.c.b16 %v10867, %v10865
  %v11274 = vpack.c.b16 %v10870, %v10868
  %v11275 = vpack.c.b16 %v10871, %v10869
  %v11276 = vpack.c.b16 %v10874, %v10872
  %v11277 = vpack.c.b16 %v10875, %v10873
  %v11278 = vpack.c.b16 %v10878, %v10876
  %v11279 = vpack.c.b16 %v10879, %v10877
  %v11280 = vpack.c.b16 %v10882, %v10880
  %v11281 = vpack.c.b16 %v10883, %v10881
  %v11282 = vpack.c.b16 %v10886, %v10884
  %v11283 = vpack.c.b16 %v10887, %v10885
  %v11284 = vpack.c.b16 %v10890, %v10888
  %v11285 = vpack.c.b16 %v10891, %v10889
  %v11286 = vpack.c.b16 %v10894, %v10892
  %v11287 = vpack.c.b16 %v10895, %v10893
  %v11288 = vpack.c.b16 %v10898, %v10896
  %v11289 = vpack.c.b16 %v10899, %v10897
  %v11290 = vpack.c.b16 %v10902, %v10900
  %v11291 = vpack.c.b16 %v10903, %v10901
  %v11292 = vpack.c.b16 %v10906, %v10904
  %v11293 = vpack.c.b16 %v10907, %v10905
  %v11294 = vpack.c.b16 %v10910, %v10908
  %v11295 = vpack.c.b16 %v10911, %v10909
  %v11296 = vpack.c.b16 %v10914, %v10912
  %v11297 = vpack.c.b16 %v10915, %v10913
  %v11298 = vpack.c.b16 %v10918, %v10916
  %v11299 = vpack.c.b16 %v10919, %v10917
  %v11300 = vpack.c.b16 %v10922, %v10920
  %v11301 = vpack.c.b16 %v10923, %v10921
  %v11302 = vpack.c.b16 %v10926, %v10924
  %v11303 = vpack.c.b16 %v10927, %v10925
  %v11304 = vpack.c.b16 %v10930, %v10928
  %v11305 = vpack.c.b16 %v10931, %v10929
  %v11306 = vpack.c.b16 %v10934, %v10932
  %v11307 = vpack.c.b16 %v10935, %v10933
  %v11308 = vpack.c.b16 %v10938, %v10936
  %v11309 = vpack.c.b16 %v10939, %v10937
  %v11310 = vpack.c.b16 %v10942, %v10940
  %v11311 = vpack.c.b16 %v10943, %v10941
  %v11312 = vpack.c.b16 %v10946, %v10944
  %v11313 = vpack.c.b16 %v10947, %v10945
  %v11314 = vpack.c.b16 %v10950, %v10948
  %v11315 = vpack.c.b16 %v10951, %v10949
  %v11316 = vpack.c.b16 %v10954, %v10952
  %v11317 = vpack.c.b16 %v10955, %v10953
  %v11318 = vpack.c.b16 %v10958, %v10956
  %v11319 = vpack.c.b16 %v10959, %v10957
  %v11320 = vpack.c.b16 %v10962, %v10960
  %v11321 = vpack.c.b16 %v10963, %v10961
  %v11322 = vpack.c.b16 %v10966, %v10964
  %v11323 = vpack.c.b16 %v10967, %v10965
  %v11324 = vpack.c.b16 %v10970, %v10968
  %v11325 = vpack.c.b16 %v10971, %v10969
  %v11326 = vpack.c.b16 %v10974, %v10972
  %v11327 = vpack.c.b16 %v10975, %v10973
  %v11328 = vpack.c.b16 %v10978, %v10976
  %v11329 = vpack.c.b16 %v10979, %v10977
  %v11330 = vpack.c.b16 %v10982, %v10980
  %v11331 = vpack.c.b16 %v10983, %v10981
  %v11332 = vpack.c.b16 %v10986, %v10984
  %v11333 = vpack.c.b16 %v10987, %v10985
  %v11334 = vpack.c.b16 %v10990, %v10988
  %v11335 = vpack.c.b16 %v10991, %v10989
  %v11336 = vpack.c.b16 %v10994, %v10992
  %v11337 = vpack.c.b16 %v10995, %v10993
  %v11338 = vpack.c.b16 %v10998, %v10996
  %v11339 = vpack.c.b16 %v10999, %v10997
  %v11340 = vpack.c.b16 %v11002, %v11000
  %v11341 = vpack.c.b16 %v11003, %v11001
  %v11342 = vpack.c.b16 %v11006, %v11004
  %v11343 = vpack.c.b16 %v11007, %v11005
  %v11344 = vpack.c.b16 %v11010, %v11008
  %v11345 = vpack.c.b16 %v11011, %v11009
  %v11346 = vpack.c.b16 %v11014, %v11012
  %v11347 = vpack.c.b16 %v11015, %v11013
  %v11348 = vpack.c.b16 %v11018, %v11016
  %v11349 = vpack.c.b16 %v11019, %v11017
  %v11350 = vpack.c.b16 %v11022, %v11020
  %v11351 = vpack.c.b16 %v11023, %v11021
  %v11352 = vpack.c.b16 %v11026, %v11024
  %v11353 = vpack.c.b16 %v11027, %v11025
  %v11354 = vpack.c.b16 %v11030, %v11028
  %v11355 = vpack.c.b16 %v11031, %v11029
  %v11356 = vpack.c.b16 %v11034, %v11032
  %v11357 = vpack.c.b16 %v11035, %v11033
  %v11358 = vpack.c.b16 %v11038, %v11036
  %v11359 = vpack.c.b16 %v11039, %v11037
  %v11360 = vpack.c.b16 %v11042, %v11040
  %v11361 = vpack.c.b16 %v11043, %v11041
  %v11362 = vpack.c.b16 %v11046, %v11044
  %v11363 = vpack.c.b16 %v11047, %v11045
  %v11364 = vpack.c.b16 %v11050, %v11048
  %v11365 = vpack.c.b16 %v11051, %v11049
  %v11366 = vpack.c.b16 %v11054, %v11052
  %v11367 = vpack.c.b16 %v11055, %v11053
  %v11368 = vpack.c.b16 %v11058, %v11056
  %v11369 = vpack.c.b16 %v11059, %v11057
  %v11370 = vpack.c.b16 %v11062, %v11060
  %v11371 = vpack.c.b16 %v11063, %v11061
  %v11372 = vpack.c.b16 %v11066, %v11064
  %v11373 = vpack.c.b16 %v11067, %v11065
  %v11374 = vpack.c.b16 %v11070, %v11068
  %v11375 = vpack.c.b16 %v11071, %v11069
  %v11376 = vpack.c.b16 %v11074, %v11072
  %v11377 = vpack.c.b16 %v11075, %v11073
  %v11378 = vpack.c.b16 %v11078, %v11076
  %v11379 = vpack.c.b16 %v11079, %v11077
  %v11380 = vpack.c.b16 %v11082, %v11080
  %v11381 = vpack.c.b16 %v11083, %v11081
  %v11382 = vpack.c.b16 %v11086, %v11084
  %v11383 = vpack.c.b16 %v11087, %v11085
  %v11384 = vpack.c.b16 %v11090, %v11088
  %v11385 = vpack.c.b16 %v11091, %v11089
  %v11386 = vpack.c.b16 %v11094, %v11092
  %v11387 = vpack.c.b16 %v11095, %v11093
  %v11388 = vpack.c.b16 %v11098, %v11096
  %v11389 = vpack.c.b16 %v11099, %v11097
  %v11390 = vpack.c.b16 %v11102, %v11100
  %v11391 = vpack.c.b16 %v11103, %v11101
  %v11392 = vpack.c.b16 %v11106, %v11104
  %v11393 = vpack.c.b16 %v11107, %v11105
  %v11394 = vpack.c.b16 %v11110, %v11108
  %v11395 = vpack.c.b16 %v11111, %v11109
  %v11396 = vpack.c.b16 %v11114, %v11112
  %v11397 = vpack.c.b16 %v11115, %v11113
  %v11398 = vpack.c.b16 %v11118, %v11116
  %v11399 = vpack.c.b16 %v11119, %v11117
  %v11400 = vpack.c.b16 %v11122, %v11120
  %v11401 = vpack.c.b16 %v11123, %v11121
  %v11402 = vpack.c.b16 %v11126, %v11124
  %v11403 = vpack.c.b16 %v11127, %v11125
  %v11404 = vpack.c.b16 %v11130, %v11128
  %v11405 = vpack.c.b16 %v11131, %v11129
  %v11406 = vpack.c.b16 %v11134, %v11132
  %v11407 = vpack.c.b16 %v11135, %v11133
  %v11408 = vpack.c.b16 %v11138, %v11136
  %v11409 = vpack.c.b16 %v11139, %v11137
  %v11410 = vpack.c.b16 %v11142, %v11140
  %v11411 = vpack.c.b16 %v11143, %v11141
  %v11412 = vpack.c.b16 %v11146, %v11144
  %v11413 = vpack.c.b16 %v11147, %v11145
  %v11414 = vpack.c.b16 %v11150, %v11148
  %v11415 = vpack.c.b16 %v11151, %v11149
  %v11416 = vpack.c.b16 %v11154, %v11152
  %v11417 = vpack.c.b16 %v11155, %v11153
  %v11418 = vpack.c.b16 %v11158, %v11156
  %v11419 = vpack.c.b16 %v11159, %v11157
  %v11420 = vpack.c.b16 %v11162, %v11160
  %v11421 = vpack.c.b16 %v11163, %v11161
  %v11422 = vpack.c.b16 %v11166, %v11164
  %v11423 = vpack.c.b16 %v11167, %v11165
  %11680 = vmatprep.subr.bf16.mxu0 %v11169
  %11681 = vmatpush1.bf16.msra.mxu0 %v11168
  %11682 = vmatprep.subr.bf16.mxu0 %v11171
  %11683 = vmatpush1.bf16.msra.mxu0 %v11170
  %11684 = vmatprep.subr.bf16.mxu0 %v11173
  %11685 = vmatpush1.bf16.msra.mxu0 %v11172
  %11686 = vmatprep.subr.bf16.mxu0 %v11175
  %11687 = vmatpush1.bf16.msra.mxu0 %v11174
  %11688 = vmatprep.subr.bf16.mxu0 %v11177
  %11689 = vmatpush1.bf16.msra.mxu0 %v11176
  %11690 = vmatprep.subr.bf16.mxu0 %v11179
  %11691 = vmatpush1.bf16.msra.mxu0 %v11178
  %11692 = vmatprep.subr.bf16.mxu0 %v11181
  %11693 = vmatpush1.bf16.msra.mxu0 %v11180
  %11694 = vmatprep.subr.bf16.mxu0 %v11183
  %11695 = vmatpush1.bf16.msra.mxu0 %v11182
  %11696 = vmatprep.subr.bf16.mxu0 %v11185
  %11697 = vmatpush1.bf16.msra.mxu0 %v11184
  %11698 = vmatprep.subr.bf16.mxu0 %v11187
  %11699 = vmatpush1.bf16.msra.mxu0 %v11186
  %11700 = vmatprep.subr.bf16.mxu0 %v11189
  %11701 = vmatpush1.bf16.msra.mxu0 %v11188
  %11702 = vmatprep.subr.bf16.mxu0 %v11191
  %11703 = vmatpush1.bf16.msra.mxu0 %v11190
  %11704 = vmatprep.subr.bf16.mxu0 %v11193
  %11705 = vmatpush1.bf16.msra.mxu0 %v11192
  %11706 = vmatprep.subr.bf16.mxu0 %v11195
  %11707 = vmatpush1.bf16.msra.mxu0 %v11194
  %11708 = vmatprep.subr.bf16.mxu0 %v11197
  %11709 = vmatpush1.bf16.msra.mxu0 %v11196
  %11710 = vmatprep.subr.bf16.mxu0 %v11199
  %11711 = vmatpush1.bf16.msra.mxu0 %v11198
  %11712 = vmatprep.mubr.bf16.mxu0 %v10101
  %11713 = vmatmul.mubr.bf16.gmra.mrb[0].mxu0 %v10100
  %v11714 = vpop.f32.mrb[0].mxu0
  %v11715 = vadd.f32 %v10393, %v11714
  %v11716 = vpop.f32.mrb[0].mxu0
  %v11717 = vadd.f32 %v10397, %v11716
  %v11718 = vpop.f32.mrb[0].mxu0
  %v11719 = vadd.f32 %v10393, %v11718
  %v11720 = vpop.f32.mrb[0].mxu0
  %v11721 = vadd.f32 %v10397, %v11720
  %11722 = vmatprep.mubr.bf16.mxu0 %v10117
  %11723 = vmatmul.mubr.bf16.gmra.mrb[0].mxu0 %v10116
  %v11724 = vpop.f32.mrb[0].mxu0
  %v11725 = vadd.f32 %v10393, %v11724
  %v11726 = vpop.f32.mrb[0].mxu0
  %v11727 = vadd.f32 %v10397, %v11726
  %v11728 = vpop.f32.mrb[0].mxu0
  %v11729 = vadd.f32 %v10393, %v11728
  %v11730 = vpop.f32.mrb[0].mxu0
  %v11731 = vadd.f32 %v10397, %v11730
  %11732 = vdwg.mxu0
  %11733 = vmatprep.subr.bf16.mxu0 %v11201
  %11734 = vmatpush1.bf16.msra.mxu0 %v11200
  %11735 = vmatprep.subr.bf16.mxu0 %v11203
  %11736 = vmatpush1.bf16.msra.mxu0 %v11202
  %11737 = vmatprep.subr.bf16.mxu0 %v11205
  %11738 = vmatpush1.bf16.msra.mxu0 %v11204
  %11739 = vmatprep.subr.bf16.mxu0 %v11207
  %11740 = vmatpush1.bf16.msra.mxu0 %v11206
  %11741 = vmatprep.subr.bf16.mxu0 %v11209
  %11742 = vmatpush1.bf16.msra.mxu0 %v11208
  %11743 = vmatprep.subr.bf16.mxu0 %v11211
  %11744 = vmatpush1.bf16.msra.mxu0 %v11210
  %11745 = vmatprep.subr.bf16.mxu0 %v11213
  %11746 = vmatpush1.bf16.msra.mxu0 %v11212
  %11747 = vmatprep.subr.bf16.mxu0 %v11215
  %11748 = vmatpush1.bf16.msra.mxu0 %v11214
  %11749 = vmatprep.subr.bf16.mxu0 %v11217
  %11750 = vmatpush1.bf16.msra.mxu0 %v11216
  %11751 = vmatprep.subr.bf16.mxu0 %v11219
  %11752 = vmatpush1.bf16.msra.mxu0 %v11218
  %11753 = vmatprep.subr.bf16.mxu0 %v11221
  %11754 = vmatpush1.bf16.msra.mxu0 %v11220
  %11755 = vmatprep.subr.bf16.mxu0 %v11223
  %11756 = vmatpush1.bf16.msra.mxu0 %v11222
  %11757 = vmatprep.subr.bf16.mxu0 %v11225
  %11758 = vmatpush1.bf16.msra.mxu0 %v11224
  %11759 = vmatprep.subr.bf16.mxu0 %v11227
  %11760 = vmatpush1.bf16.msra.mxu0 %v11226
  %11761 = vmatprep.subr.bf16.mxu0 %v11229
  %11762 = vmatpush1.bf16.msra.mxu0 %v11228
  %11763 = vmatprep.subr.bf16.mxu0 %v11231
  %11764 = vmatpush1.bf16.msra.mxu0 %v11230
  %11765 = vmatprep.mubr.bf16.mxu0 %v10103
  %11766 = vmatmul.mubr.bf16.gmra.mrb[0].mxu0 %v10102
  %v11767 = vpop.f32.mrb[0].mxu0
  %v11768 = vadd.f32 %v11715, %v11767
  %v11769 = vpop.f32.mrb[0].mxu0
  %v11770 = vadd.f32 %v11717, %v11769
  %v11771 = vpop.f32.mrb[0].mxu0
  %v11772 = vadd.f32 %v11719, %v11771
  %v11773 = vpop.f32.mrb[0].mxu0
  %v11774 = vadd.f32 %v11721, %v11773
  %11775 = vmatprep.mubr.bf16.mxu0 %v10119
  %11776 = vmatmul.mubr.bf16.gmra.mrb[0].mxu0 %v10118
  %v11777 = vpop.f32.mrb[0].mxu0
  %v11778 = vadd.f32 %v11725, %v11777
  %v11779 = vpop.f32.mrb[0].mxu0
  %v11780 = vadd.f32 %v11727, %v11779
  %v11781 = vpop.f32.mrb[0].mxu0
  %v11782 = vadd.f32 %v11729, %v11781
  %v11783 = vpop.f32.mrb[0].mxu0
  %v11784 = vadd.f32 %v11731, %v11783
  %11785 = vdwg.mxu0
  %11786 = vmatprep.subr.bf16.mxu0 %v11233
  %11787 = vmatpush1.bf16.msra.mxu0 %v11232
  %11788 = vmatprep.subr.bf16.mxu0 %v11235
  %11789 = vmatpush1.bf16.msra.mxu0 %v11234
  %11790 = vmatprep.subr.bf16.mxu0 %v11237
  %11791 = vmatpush1.bf16.msra.mxu0 %v11236
  %11792 = vmatprep.subr.bf16.mxu0 %v11239
  %11793 = vmatpush1.bf16.msra.mxu0 %v11238
  %11794 = vmatprep.subr.bf16.mxu0 %v11241
  %11795 = vmatpush1.bf16.msra.mxu0 %v11240
  %11796 = vmatprep.subr.bf16.mxu0 %v11243
  %11797 = vmatpush1.bf16.msra.mxu0 %v11242
  %11798 = vmatprep.subr.bf16.mxu0 %v11245
  %11799 = vmatpush1.bf16.msra.mxu0 %v11244
  %11800 = vmatprep.subr.bf16.mxu0 %v11247
  %11801 = vmatpush1.bf16.msra.mxu0 %v11246
  %11802 = vmatprep.subr.bf16.mxu0 %v11249
  %11803 = vmatpush1.bf16.msra.mxu0 %v11248
  %11804 = vmatprep.subr.bf16.mxu0 %v11251
  %11805 = vmatpush1.bf16.msra.mxu0 %v11250
  %11806 = vmatprep.subr.bf16.mxu0 %v11253
  %11807 = vmatpush1.bf16.msra.mxu0 %v11252
  %11808 = vmatprep.subr.bf16.mxu0 %v11255
  %11809 = vmatpush1.bf16.msra.mxu0 %v11254
  %11810 = vmatprep.subr.bf16.mxu0 %v11257
  %11811 = vmatpush1.bf16.msra.mxu0 %v11256
  %11812 = vmatprep.subr.bf16.mxu0 %v11259
  %11813 = vmatpush1.bf16.msra.mxu0 %v11258
  %11814 = vmatprep.subr.bf16.mxu0 %v11261
  %11815 = vmatpush1.bf16.msra.mxu0 %v11260
  %11816 = vmatprep.subr.bf16.mxu0 %v11263
  %11817 = vmatpush1.bf16.msra.mxu0 %v11262
  %11818 = vmatprep.mubr.bf16.mxu0 %v10105
  %11819 = vmatmul.mubr.bf16.gmra.mrb[0].mxu0 %v10104
  %v11820 = vpop.f32.mrb[0].mxu0
  %v11821 = vadd.f32 %v11768, %v11820
  %v11822 = vpop.f32.mrb[0].mxu0
  %v11823 = vadd.f32 %v11770, %v11822
  %v11824 = vpop.f32.mrb[0].mxu0
  %v11825 = vadd.f32 %v11772, %v11824
  %v11826 = vpop.f32.mrb[0].mxu0
  %v11827 = vadd.f32 %v11774, %v11826
  %11828 = vmatprep.mubr.bf16.mxu0 %v10121
  %11829 = vmatmul.mubr.bf16.gmra.mrb[0].mxu0 %v10120
  %v11830 = vpop.f32.mrb[0].mxu0
  %v11831 = vadd.f32 %v11778, %v11830
  %v11832 = vpop.f32.mrb[0].mxu0
  %v11833 = vadd.f32 %v11780, %v11832
  %v11834 = vpop.f32.mrb[0].mxu0
  %v11835 = vadd.f32 %v11782, %v11834
  %v11836 = vpop.f32.mrb[0].mxu0
  %v11837 = vadd.f32 %v11784, %v11836
  %11838 = vdwg.mxu0
  %11839 = vmatprep.subr.bf16.mxu0 %v11265
  %11840 = vmatpush1.bf16.msra.mxu0 %v11264
  %11841 = vmatprep.subr.bf16.mxu0 %v11267
  %11842 = vmatpush1.bf16.msra.mxu0 %v11266
  %11843 = vmatprep.subr.bf16.mxu0 %v11269
  %11844 = vmatpush1.bf16.msra.mxu0 %v11268
  %11845 = vmatprep.subr.bf16.mxu0 %v11271
  %11846 = vmatpush1.bf16.msra.mxu0 %v11270
  %11847 = vmatprep.subr.bf16.mxu0 %v11273
  %11848 = vmatpush1.bf16.msra.mxu0 %v11272
  %11849 = vmatprep.subr.bf16.mxu0 %v11275
  %11850 = vmatpush1.bf16.msra.mxu0 %v11274
  %11851 = vmatprep.subr.bf16.mxu0 %v11277
  %11852 = vmatpush1.bf16.msra.mxu0 %v11276
  %11853 = vmatprep.subr.bf16.mxu0 %v11279
  %11854 = vmatpush1.bf16.msra.mxu0 %v11278
  %11855 = vmatprep.subr.bf16.mxu0 %v11281
  %11856 = vmatpush1.bf16.msra.mxu0 %v11280
  %11857 = vmatprep.subr.bf16.mxu0 %v11283
  %11858 = vmatpush1.bf16.msra.mxu0 %v11282
  %11859 = vmatprep.subr.bf16.mxu0 %v11285
  %11860 = vmatpush1.bf16.msra.mxu0 %v11284
  %11861 = vmatprep.subr.bf16.mxu0 %v11287
  %11862 = vmatpush1.bf16.msra.mxu0 %v11286
  %11863 = vmatprep.subr.bf16.mxu0 %v11289
  %11864 = vmatpush1.bf16.msra.mxu0 %v11288
  %11865 = vmatprep.subr.bf16.mxu0 %v11291
  %11866 = vmatpush1.bf16.msra.mxu0 %v11290
  %11867 = vmatprep.subr.bf16.mxu0 %v11293
  %11868 = vmatpush1.bf16.msra.mxu0 %v11292
  %11869 = vmatprep.subr.bf16.mxu0 %v11295
  %11870 = vmatpush1.bf16.msra.mxu0 %v11294
  %11871 = vmatprep.mubr.bf16.mxu0 %v10107
  %11872 = vmatmul.mubr.bf16.gmra.mrb[0].mxu0 %v10106
  %v11873 = vpop.f32.mrb[0].mxu0
  %v11874 = vadd.f32 %v11821, %v11873
  %v11875 = vpop.f32.mrb[0].mxu0
  %v11876 = vadd.f32 %v11823, %v11875
  %v11877 = vpop.f32.mrb[0].mxu0
  %v11878 = vadd.f32 %v11825, %v11877
  %v11879 = vpop.f32.mrb[0].mxu0
  %v11880 = vadd.f32 %v11827, %v11879
  %11881 = vmatprep.mubr.bf16.mxu0 %v10123
  %11882 = vmatmul.mubr.bf16.gmra.mrb[0].mxu0 %v10122
  %v11883 = vpop.f32.mrb[0].mxu0
  %v11884 = vadd.f32 %v11831, %v11883
  %v11885 = vpop.f32.mrb[0].mxu0
  %v11886 = vadd.f32 %v11833, %v11885
  %v11887 = vpop.f32.mrb[0].mxu0
  %v11888 = vadd.f32 %v11835, %v11887
  %v11889 = vpop.f32.mrb[0].mxu0
  %v11890 = vadd.f32 %v11837, %v11889
  %11891 = vdwg.mxu0
  %11892 = vmatprep.subr.bf16.mxu0 %v11297
  %11893 = vmatpush1.bf16.msra.mxu0 %v11296
  %11894 = vmatprep.subr.bf16.mxu0 %v11299
  %11895 = vmatpush1.bf16.msra.mxu0 %v11298
  %11896 = vmatprep.subr.bf16.mxu0 %v11301
  %11897 = vmatpush1.bf16.msra.mxu0 %v11300
  %11898 = vmatprep.subr.bf16.mxu0 %v11303
  %11899 = vmatpush1.bf16.msra.mxu0 %v11302
  %11900 = vmatprep.subr.bf16.mxu0 %v11305
  %11901 = vmatpush1.bf16.msra.mxu0 %v11304
  %11902 = vmatprep.subr.bf16.mxu0 %v11307
  %11903 = vmatpush1.bf16.msra.mxu0 %v11306
  %11904 = vmatprep.subr.bf16.mxu0 %v11309
  %11905 = vmatpush1.bf16.msra.mxu0 %v11308
  %11906 = vmatprep.subr.bf16.mxu0 %v11311
  %11907 = vmatpush1.bf16.msra.mxu0 %v11310
  %11908 = vmatprep.subr.bf16.mxu0 %v11313
  %11909 = vmatpush1.bf16.msra.mxu0 %v11312
  %11910 = vmatprep.subr.bf16.mxu0 %v11315
  %11911 = vmatpush1.bf16.msra.mxu0 %v11314
  %11912 = vmatprep.subr.bf16.mxu0 %v11317
  %11913 = vmatpush1.bf16.msra.mxu0 %v11316
  %11914 = vmatprep.subr.bf16.mxu0 %v11319
  %11915 = vmatpush1.bf16.msra.mxu0 %v11318
  %11916 = vmatprep.subr.bf16.mxu0 %v11321
  %11917 = vmatpush1.bf16.msra.mxu0 %v11320
  %11918 = vmatprep.subr.bf16.mxu0 %v11323
  %11919 = vmatpush1.bf16.msra.mxu0 %v11322
  %11920 = vmatprep.subr.bf16.mxu0 %v11325
  %11921 = vmatpush1.bf16.msra.mxu0 %v11324
  %11922 = vmatprep.subr.bf16.mxu0 %v11327
  %11923 = vmatpush1.bf16.msra.mxu0 %v11326
  %11924 = vmatprep.mubr.bf16.mxu0 %v10109
  %11925 = vmatmul.mubr.bf16.gmra.mrb[0].mxu0 %v10108
  %v11926 = vpop.f32.mrb[0].mxu0
  %v11927 = vadd.f32 %v11874, %v11926
  %v11928 = vpop.f32.mrb[0].mxu0
  %v11929 = vadd.f32 %v11876, %v11928
  %v11930 = vpop.f32.mrb[0].mxu0
  %v11931 = vadd.f32 %v11878, %v11930
  %v11932 = vpop.f32.mrb[0].mxu0
  %v11933 = vadd.f32 %v11880, %v11932
  %11934 = vmatprep.mubr.bf16.mxu0 %v10125
  %11935 = vmatmul.mubr.bf16.gmra.mrb[0].mxu0 %v10124
  %v11936 = vpop.f32.mrb[0].mxu0
  %v11937 = vadd.f32 %v11884, %v11936
  %v11938 = vpop.f32.mrb[0].mxu0
  %v11939 = vadd.f32 %v11886, %v11938
  %v11940 = vpop.f32.mrb[0].mxu0
  %v11941 = vadd.f32 %v11888, %v11940
  %v11942 = vpop.f32.mrb[0].mxu0
  %v11943 = vadd.f32 %v11890, %v11942
  %11944 = vdwg.mxu0
  %11945 = vmatprep.subr.bf16.mxu0 %v11329
  %11946 = vmatpush1.bf16.msra.mxu0 %v11328
  %11947 = vmatprep.subr.bf16.mxu0 %v11331
  %11948 = vmatpush1.bf16.msra.mxu0 %v11330
  %11949 = vmatprep.subr.bf16.mxu0 %v11333
  %11950 = vmatpush1.bf16.msra.mxu0 %v11332
  %11951 = vmatprep.subr.bf16.mxu0 %v11335
  %11952 = vmatpush1.bf16.msra.mxu0 %v11334
  %11953 = vmatprep.subr.bf16.mxu0 %v11337
  %11954 = vmatpush1.bf16.msra.mxu0 %v11336
  %11955 = vmatprep.subr.bf16.mxu0 %v11339
  %11956 = vmatpush1.bf16.msra.mxu0 %v11338
  %11957 = vmatprep.subr.bf16.mxu0 %v11341
  %11958 = vmatpush1.bf16.msra.mxu0 %v11340
  %11959 = vmatprep.subr.bf16.mxu0 %v11343
  %11960 = vmatpush1.bf16.msra.mxu0 %v11342
  %11961 = vmatprep.subr.bf16.mxu0 %v11345
  %11962 = vmatpush1.bf16.msra.mxu0 %v11344
  %11963 = vmatprep.subr.bf16.mxu0 %v11347
  %11964 = vmatpush1.bf16.msra.mxu0 %v11346
  %11965 = vmatprep.subr.bf16.mxu0 %v11349
  %11966 = vmatpush1.bf16.msra.mxu0 %v11348
  %11967 = vmatprep.subr.bf16.mxu0 %v11351
  %11968 = vmatpush1.bf16.msra.mxu0 %v11350
  %11969 = vmatprep.subr.bf16.mxu0 %v11353
  %11970 = vmatpush1.bf16.msra.mxu0 %v11352
  %11971 = vmatprep.subr.bf16.mxu0 %v11355
  %11972 = vmatpush1.bf16.msra.mxu0 %v11354
  %11973 = vmatprep.subr.bf16.mxu0 %v11357
  %11974 = vmatpush1.bf16.msra.mxu0 %v11356
  %11975 = vmatprep.subr.bf16.mxu0 %v11359
  %11976 = vmatpush1.bf16.msra.mxu0 %v11358
  %11977 = vmatprep.mubr.bf16.mxu0 %v10111
  %11978 = vmatmul.mubr.bf16.gmra.mrb[0].mxu0 %v10110
  %v11979 = vpop.f32.mrb[0].mxu0
  %v11980 = vadd.f32 %v11927, %v11979
  %v11981 = vpop.f32.mrb[0].mxu0
  %v11982 = vadd.f32 %v11929, %v11981
  %v11983 = vpop.f32.mrb[0].mxu0
  %v11984 = vadd.f32 %v11931, %v11983
  %v11985 = vpop.f32.mrb[0].mxu0
  %v11986 = vadd.f32 %v11933, %v11985
  %11987 = vmatprep.mubr.bf16.mxu0 %v10127
  %11988 = vmatmul.mubr.bf16.gmra.mrb[0].mxu0 %v10126
  %v11989 = vpop.f32.mrb[0].mxu0
  %v11990 = vadd.f32 %v11937, %v11989
  %v11991 = vpop.f32.mrb[0].mxu0
  %v11992 = vadd.f32 %v11939, %v11991
  %v11993 = vpop.f32.mrb[0].mxu0
  %v11994 = vadd.f32 %v11941, %v11993
  %v11995 = vpop.f32.mrb[0].mxu0
  %v11996 = vadd.f32 %v11943, %v11995
  %11997 = vdwg.mxu0
  %11998 = vmatprep.subr.bf16.mxu0 %v11361
  %11999 = vmatpush1.bf16.msra.mxu0 %v11360
  %12000 = vmatprep.subr.bf16.mxu0 %v11363
  %12001 = vmatpush1.bf16.msra.mxu0 %v11362
  %12002 = vmatprep.subr.bf16.mxu0 %v11365
  %12003 = vmatpush1.bf16.msra.mxu0 %v11364
  %12004 = vmatprep.subr.bf16.mxu0 %v11367
  %12005 = vmatpush1.bf16.msra.mxu0 %v11366
  %12006 = vmatprep.subr.bf16.mxu0 %v11369
  %12007 = vmatpush1.bf16.msra.mxu0 %v11368
  %12008 = vmatprep.subr.bf16.mxu0 %v11371
  %12009 = vmatpush1.bf16.msra.mxu0 %v11370
  %12010 = vmatprep.subr.bf16.mxu0 %v11373
  %12011 = vmatpush1.bf16.msra.mxu0 %v11372
  %12012 = vmatprep.subr.bf16.mxu0 %v11375
  %12013 = vmatpush1.bf16.msra.mxu0 %v11374
  %12014 = vmatprep.subr.bf16.mxu0 %v11377
  %12015 = vmatpush1.bf16.msra.mxu0 %v11376
  %12016 = vmatprep.subr.bf16.mxu0 %v11379
  %12017 = vmatpush1.bf16.msra.mxu0 %v11378
  %12018 = vmatprep.subr.bf16.mxu0 %v11381
  %12019 = vmatpush1.bf16.msra.mxu0 %v11380
  %12020 = vmatprep.subr.bf16.mxu0 %v11383
  %12021 = vmatpush1.bf16.msra.mxu0 %v11382
  %12022 = vmatprep.subr.bf16.mxu0 %v11385
  %12023 = vmatpush1.bf16.msra.mxu0 %v11384
  %12024 = vmatprep.subr.bf16.mxu0 %v11387
  %12025 = vmatpush1.bf16.msra.mxu0 %v11386
  %12026 = vmatprep.subr.bf16.mxu0 %v11389
  %12027 = vmatpush1.bf16.msra.mxu0 %v11388
  %12028 = vmatprep.subr.bf16.mxu0 %v11391
  %12029 = vmatpush1.bf16.msra.mxu0 %v11390
  %12030 = vmatprep.mubr.bf16.mxu0 %v10113
  %12031 = vmatmul.mubr.bf16.gmra.mrb[0].mxu0 %v10112
  %v12032 = vpop.f32.mrb[0].mxu0
  %v12033 = vadd.f32 %v11980, %v12032
  %v12034 = vpop.f32.mrb[0].mxu0
  %v12035 = vadd.f32 %v11982, %v12034
  %v12036 = vpop.f32.mrb[0].mxu0
  %v12037 = vadd.f32 %v11984, %v12036
  %v12038 = vpop.f32.mrb[0].mxu0
  %v12039 = vadd.f32 %v11986, %v12038
  %12040 = vmatprep.mubr.bf16.mxu0 %v10129
  %12041 = vmatmul.mubr.bf16.gmra.mrb[0].mxu0 %v10128
  %v12042 = vpop.f32.mrb[0].mxu0
  %v12043 = vadd.f32 %v11990, %v12042
  %v12044 = vpop.f32.mrb[0].mxu0
  %v12045 = vadd.f32 %v11992, %v12044
  %v12046 = vpop.f32.mrb[0].mxu0
  %v12047 = vadd.f32 %v11994, %v12046
  %v12048 = vpop.f32.mrb[0].mxu0
  %v12049 = vadd.f32 %v11996, %v12048
  %12050 = vdwg.mxu0
  %12051 = vmatprep.subr.bf16.mxu0 %v11393
  %12052 = vmatpush1.bf16.msra.mxu0 %v11392
  %12053 = vmatprep.subr.bf16.mxu0 %v11395
  %12054 = vmatpush1.bf16.msra.mxu0 %v11394
  %12055 = vmatprep.subr.bf16.mxu0 %v11397
  %12056 = vmatpush1.bf16.msra.mxu0 %v11396
  %12057 = vmatprep.subr.bf16.mxu0 %v11399
  %12058 = vmatpush1.bf16.msra.mxu0 %v11398
  %12059 = vmatprep.subr.bf16.mxu0 %v11401
  %12060 = vmatpush1.bf16.msra.mxu0 %v11400
  %12061 = vmatprep.subr.bf16.mxu0 %v11403
  %12062 = vmatpush1.bf16.msra.mxu0 %v11402
  %12063 = vmatprep.subr.bf16.mxu0 %v11405
  %12064 = vmatpush1.bf16.msra.mxu0 %v11404
  %12065 = vmatprep.subr.bf16.mxu0 %v11407
  %12066 = vmatpush1.bf16.msra.mxu0 %v11406
  %12067 = vmatprep.subr.bf16.mxu0 %v11409
  %12068 = vmatpush1.bf16.msra.mxu0 %v11408
  %12069 = vmatprep.subr.bf16.mxu0 %v11411
  %12070 = vmatpush1.bf16.msra.mxu0 %v11410
  %12071 = vmatprep.subr.bf16.mxu0 %v11413
  %12072 = vmatpush1.bf16.msra.mxu0 %v11412
  %12073 = vmatprep.subr.bf16.mxu0 %v11415
  %12074 = vmatpush1.bf16.msra.mxu0 %v11414
  %12075 = vmatprep.subr.bf16.mxu0 %v11417
  %12076 = vmatpush1.bf16.msra.mxu0 %v11416
  %12077 = vmatprep.subr.bf16.mxu0 %v11419
  %12078 = vmatpush1.bf16.msra.mxu0 %v11418
  %12079 = vmatprep.subr.bf16.mxu0 %v11421
  %12080 = vmatpush1.bf16.msra.mxu0 %v11420
  %12081 = vmatprep.subr.bf16.mxu0 %v11423
  %12082 = vmatpush1.bf16.msra.mxu0 %v11422
  %12083 = vmatprep.mubr.bf16.mxu0 %v10115
  %12084 = vmatmul.mubr.bf16.gmra.mrb[0].mxu0 %v10114
  %v12085 = vpop.f32.mrb[0].mxu0
  %v12086 = vadd.f32 %v12033, %v12085
  %v12087 = vpop.f32.mrb[0].mxu0
  %v12088 = vadd.f32 %v12035, %v12087
  %v12089 = vpop.f32.mrb[0].mxu0
  %v12090 = vadd.f32 %v12037, %v12089
  %v12091 = vpop.f32.mrb[0].mxu0
  %v12092 = vadd.f32 %v12039, %v12091
  %12093 = vmatprep.mubr.bf16.mxu0 %v10131
  %12094 = vmatmul.mubr.bf16.gmra.mrb[0].mxu0 %v10130
  %v12095 = vpop.f32.mrb[0].mxu0
  %v12096 = vadd.f32 %v12043, %v12095
  %v12097 = vpop.f32.mrb[0].mxu0
  %v12098 = vadd.f32 %v12045, %v12097
  %v12099 = vpop.f32.mrb[0].mxu0
  %v12100 = vadd.f32 %v12047, %v12099
  %v12101 = vpop.f32.mrb[0].mxu0
  %v12102 = vadd.f32 %v12049, %v12101
  %12103 = vdwg.mxu0
  %vm12104 = vcmp.ge.f32.partialorder %v12086, 0.0
  %vm12105 = vcmp.ge.f32.partialorder %v12088, 0.0
  %vm12106 = vcmp.ge.f32.partialorder %v12090, 0.0
  %vm12107 = vcmp.ge.f32.partialorder %v12092, 0.0
  %vm12108 = vcmp.ge.f32.partialorder %v12096, 0.0
  %vm12109 = vcmp.ge.f32.partialorder %v12098, 0.0
  %vm12110 = vcmp.ge.f32.partialorder %v12100, 0.0
  %vm12111 = vcmp.ge.f32.partialorder %v12102, 0.0
  %v12112 = vmul.f32 %v12086, 0.2
  %v12113 = vmul.f32 %v12088, 0.2
  %v12114 = vmul.f32 %v12090, 0.2
  %v12115 = vmul.f32 %v12092, 0.2
  %v12116 = vmul.f32 %v12096, 0.2
  %v12117 = vmul.f32 %v12098, 0.2
  %v12118 = vmul.f32 %v12100, 0.2
  %v12119 = vmul.f32 %v12102, 0.2
  %v12120 = vsel %vm12104, %v12086, %v12112
  %v12121 = vsel %vm12105, %v12088, %v12113
  %v12122 = vsel %vm12106, %v12090, %v12114
  %v12123 = vsel %vm12107, %v12092, %v12115
  %v12124 = vsel %vm12108, %v12096, %v12116
  %v12125 = vsel %vm12109, %v12098, %v12117
  %v12126 = vsel %vm12110, %v12100, %v12118
  %v12127 = vsel %vm12111, %v12102, %v12119
  %v12128 = vld [vmem:[%s9] sm:$0xff]
  %v12129 = vld [vmem:[%s9 + $0x8] sm:$0xff]
  %v12130 = vld [vmem:[%s9 + $0x10] sm:$0xff]
  %v12131 = vld [vmem:[%s9 + $0x18] sm:$0xff]
  %v12132 = vmul.f32 %v12120, %v12128
  %v12133 = vmul.f32 %v12121, %v12129
  %v12134 = vmul.f32 %v12122, %v12130
  %v12135 = vmul.f32 %v12123, %v12131
  %v12136 = vmul.f32 %v12124, %v12128
  %v12137 = vmul.f32 %v12125, %v12129
  %v12138 = vmul.f32 %v12126, %v12130
  %v12139 = vmul.f32 %v12127, %v12131
  %v12140 = vadd.f32 %v12132, %v12133
  %12141 = vadd.xlane.f32.xlu0 %v12140
  %v12142 = vpop.xlane.xlu0 %12141
  %v12143 = vadd.f32 %v12134, %v12135
  %12144 = vadd.xlane.f32.xlu0 %v12143
  %v12145 = vpop.xlane.xlu0 %12144
  %v12146 = vadd.f32 %v12136, %v12137
  %12147 = vadd.xlane.f32.xlu0 %v12146
  %v12148 = vpop.xlane.xlu0 %12147
  %v12149 = vadd.f32 %v12138, %v12139
  %12150 = vadd.xlane.f32.xlu0 %v12149
  %v12151 = vpop.xlane.xlu0 %12150
  %v12156 = vlaneseq
  %v12157 = vand.u32 %v12156, 127
  %v12158 = vlaneseq
  %v12159 = vshrl.u32 %v12158, 7
  %v12160 = vsub.s32 %v12157, %v12159
  %v12161 = vrot.slane %v12142, %v12160
  %v12162 = vadd.s32 %v12157, 4294967288
  %v12163 = vlaneseq
  %v12164 = vshrl.u32 %v12163, 7
  %v12165 = vsub.s32 %v12162, %v12164
  %v12166 = vrot.slane %v12145, %v12165
  %vm12167 = vcmask 130112
  %v12168 = vsel %vm12167, %v12166, %v12161
  %v12169 = vlaneseq
  %v12170 = vshrl.u32 %v12169, 7
  %v12171 = vsub.s32 %v12157, %v12170
  %v12172 = vrot.slane %v12148, %v12171
  %v12173 = vlaneseq
  %v12174 = vshrl.u32 %v12173, 7
  %v12175 = vsub.s32 %v12162, %v12174
  %v12176 = vrot.slane %v12151, %v12175
  %v12177 = vsel %vm12167, %v12176, %v12172
  %vm12178 = vcmask 1041409
  %v12179 = vsel %vm12178, %v12177, %v12168
  %vm12181 = vcmask 123904
  %v12182 = vsel %vm12181, %v12179, 0.0
  %12183 = vadd.xlane.f32.xlu0 %v12182
  %v12184 = vpop.xlane.xlu0 %12183
  %v12185 = vld [vmem:[#allocation6] sm:$0x1]
  %v12187 = vlaneseq
  %v12188 = vshrl.u32 %v12187, 7
  %v12189 = vsub.s32 0, %v12188
  %v12190 = vrot.slane %v12185, %v12189
  %v12192 = vadd.f32 %v12184, %v12190
  %12194 = vset.pattern.permute.xlu0 0
  %12195 = vperm.xlu0 %12194, %v12192
  %v12196 = vpop.permute.xlu0 %12195
  %12198 = vst [vmem:[%s11] sm:$0x3] %v12196
  // Predicated region
  $region46: #{discriminator_forward.1} parent=0 // pred_check
    _
  $region47: #{discriminator_forward.1} parent=0 // pred_check_branch
    %12200 = sbr.rel (0) target = $region49
  $region48: #{discriminator_forward.1} parent=0 // pred_region
    _
  $region49: #{discriminator_forward.1} parent=0 // pred_fallthru
    _
  // Predicated region
  $region50: #{discriminator_forward.1} parent=0 // pred_check
    _
  $region51: #{discriminator_forward.1} parent=0 // pred_check_branch
    %12202 = sbr.rel (0) target = $region53
  $region52: #{discriminator_forward.1} parent=0 // pred_region
    _
  $region53: #{discriminator_forward.1} parent=0 // pred_fallthru
    _

</llo_original>
